<compile_context>
chip_gen: v7x
topology: tpu7x:2x2x1
jax: 0.10.0
libtpu: 0.0.40
codegen_flags: <defaults>
</compile_context>

<pallas_src>
import functools

import jax
import jax.numpy as jnp
from jax import lax
from jax.experimental import pallas as pl
from jax.experimental.pallas import tpu as pltpu


_VMEM_LIMIT = 48 * 1024 * 1024      # stay well under v7x's 64 MiB/TC physical VMEM
_NEG_SLOPE = 0.2                    # nn.LeakyReLU(0.2)
_IN_EPS = 1e-5                      # nn.InstanceNorm3d default eps


def _round_up(v, m):
    return (v + m - 1) // m * m


def _choose_m_tile(m_true, k_dim):
    # Lane-dense tiles (multiple of 128); keep the (K, Mt) bf16 patch block <= ~4 MiB.
    cap = max(128, ((4 * 1024 * 1024) // (2 * k_dim)) // 128 * 128)
    return max(128, min(512, cap, _round_up(m_true, 128)))


# ----------------------------------------------------------------------------
# Pass 1: matmul (MXU) + bias [+ LeakyReLU if no norm] [+ per-channel stats]
# ----------------------------------------------------------------------------
def _conv_mm_kernel(p_ref, w_ref, b_ref, y_ref, *stat_refs, norm, act):
    # p_ref : (1, K, Mt) bf16 im2col patch tile
    # w_ref : (Cout, K)  bf16 flattened conv weight
    # b_ref : (Cout, 1)  f32 bias (zeros for bias-free layers)
    # y_ref : (1, Cout, Mt) bf16 output tile (lane-dense)
    # stat_refs (norm only): sum_ref, sq_ref each (1, Cout, 1) f32 accumulators
    y = jnp.dot(w_ref[...], p_ref[0], preferred_element_type=jnp.float32)
    y = y + b_ref[...]
    if norm:
        sum_ref, sq_ref = stat_refs

        @pl.when(pl.program_id(1) == 0)
        def _init():
            sum_ref[...] = jnp.zeros_like(sum_ref)
            sq_ref[...] = jnp.zeros_like(sq_ref)

        # Padded M columns are exactly zero (zero patches, zero bias on the
        # bias-free norm layers), so they do not perturb the sums.
        sum_ref[0] += jnp.sum(y, axis=1, keepdims=True)
        sq_ref[0] += jnp.sum(y * y, axis=1, keepdims=True)
    if act and not norm:
        y = jnp.where(y >= 0.0, y, _NEG_SLOPE * y)
    y_ref[0] = y.astype(y_ref.dtype)


# ----------------------------------------------------------------------------
# Pass 2: InstanceNorm3d (per sample/channel, biased var, eps=1e-5) + LeakyReLU
# ----------------------------------------------------------------------------
def _in_act_kernel(y_ref, sum_ref, sq_ref, o_ref, *, inv_m, act):
    y = y_ref[0].astype(jnp.float32)                       # (Cout, Mt)
    mean = sum_ref[0] * inv_m                              # (Cout, 1)
    var = jnp.maximum(sq_ref[0] * inv_m - mean * mean, 0.0)
    y = (y - mean) * lax.rsqrt(var + _IN_EPS)
    if act:
        y = jnp.where(y >= 0.0, y, _NEG_SLOPE * y)
    o_ref[0] = y.astype(o_ref.dtype)


def conv3d_block(x, w, b, *, stride, ksize, pad, norm, act):
    """Conv3d(k, stride, pad) [+ InstanceNorm3d] [+ LeakyReLU(0.2)] on NCDHW."""
    N, C, D, H, W = x.shape
    Cout = w.shape[-1]
    k, s, p = ksize, stride, pad
    Do = (D + 2 * p - k) // s + 1
    Ho = (H + 2 * p - k) // s + 1
    Wo = (W + 2 * p - k) // s + 1
    Mo = Do * Ho * Wo
    K = k * k * k * C

    # --- XLA glue: zero-pad + im2col, channels-first (K, M), bf16 -------------
    xp = jnp.pad(x.astype(jnp.bfloat16),
                 ((0, 0), (0, 0), (p, p), (p, p), (p, p)))
    taps = []
    for kd in range(k):
        for kh in range(k):
            for kw in range(k):
                taps.append(xp[:, :, kd:kd + s * (Do - 1) + 1:s,
                                     kh:kh + s * (Ho - 1) + 1:s,
                                     kw:kw + s * (Wo - 1) + 1:s])
    pat = jnp.stack(taps, axis=1).reshape(N, K, Mo)        # K ordered (tap, cin)

    mt = _choose_m_tile(Mo, K)
    Mp = _round_up(Mo, mt)
    if Mp != Mo:
        pat = jnp.pad(pat, ((0, 0), (0, 0), (0, Mp - Mo)))

    wf = jnp.transpose(w.reshape(K, Cout)).astype(jnp.bfloat16)        # (Cout, K)
    if b is None:
        bf = jnp.zeros((Cout, 1), jnp.float32)
    else:
        bf = b.astype(jnp.float32).reshape(Cout, 1)

    grid = (N, Mp // mt)

    y_struct = jax.ShapeDtypeStruct((N, Cout, Mp), jnp.bfloat16)
    y_spec = pl.BlockSpec((1, Cout, mt), lambda n, m: (n, 0, m))
    stat_struct = jax.ShapeDtypeStruct((N, Cout, 1), jnp.float32)
    stat_spec = pl.BlockSpec((1, Cout, 1), lambda n, m: (n, 0, 0))

    if norm:
        out_shape = (y_struct, stat_struct, stat_struct)
        out_specs = (y_spec, stat_spec, stat_spec)
    else:
        out_shape = y_struct
        out_specs = y_spec

    bytes_accessed = (N * K * Mp * 2 + Cout * K * 2 + Cout * 4
                      + N * Cout * Mp * 2 + (N * Cout * 2 * 4 if norm else 0))

    res = pl.pallas_call(
        functools.partial(_conv_mm_kernel, norm=norm, act=act),
        out_shape=out_shape,
        grid_spec=pltpu.PrefetchScalarGridSpec(
            num_scalar_prefetch=0,
            grid=grid,
            in_specs=[
                pl.BlockSpec((1, K, mt), lambda n, m: (n, 0, m)),
                pl.BlockSpec((Cout, K), lambda n, m: (0, 0)),
                pl.BlockSpec((Cout, 1), lambda n, m: (0, 0)),
            ],
            out_specs=out_specs,
        ),
        compiler_params=pltpu.CompilerParams(
            dimension_semantics=("parallel", "arbitrary" if norm else "parallel"),
            vmem_limit_bytes=_VMEM_LIMIT,
        ),
        cost_estimate=pl.CostEstimate(
            flops=2 * N * Mp * K * Cout,
            transcendentals=0,
            bytes_accessed=bytes_accessed),
    )(pat, wf, bf)

    if norm:
        y, ssum, ssq = res
        y = pl.pallas_call(
            functools.partial(_in_act_kernel, inv_m=1.0 / Mo, act=act),
            out_shape=y_struct,
            grid_spec=pltpu.PrefetchScalarGridSpec(
                num_scalar_prefetch=0,
                grid=grid,
                in_specs=[y_spec, stat_spec, stat_spec],
                out_specs=y_spec,
            ),
            compiler_params=pltpu.CompilerParams(
                dimension_semantics=("parallel", "parallel"),
                vmem_limit_bytes=_VMEM_LIMIT,
            ),
        )(y, ssum, ssq)
    else:
        y = res

    return y[:, :, :Mo].reshape(N, Cout, Do, Ho, Wo)


def avg_pool3d(x, q):
    """nn.AvgPool3d(q) (kernel=q, stride=q, no padding) as a depthwise
    averaging convolution, run through the same Pallas matmul kernel."""
    C = x.shape[1]
    w = jnp.broadcast_to(jnp.eye(C, dtype=jnp.float32) / float(q ** 3),
                         (q, q, q, C, C))
    return conv3d_block(x, w, None, stride=q, ksize=q, pad=0,
                        norm=False, act=False)


def _init_conv(key, cin, cout, k, bias):
    # torch Conv3d default init (uniform, bound = 1/sqrt(fan_in)).
    kw, kb = jax.random.split(key)
    fan_in = cin * k ** 3
    bound = 1.0 / (fan_in ** 0.5)
    w = jax.random.uniform(kw, (k, k, k, cin, cout), jnp.float32, -bound, bound)
    b = (jax.random.uniform(kb, (cout,), jnp.float32, -bound, bound)
         if bias else None)
    return w, b


class DiscriminatorPallas:
    """Pallas port of `Discriminator` (norm='IN' / no-norm paths)."""

    def __init__(self, key, cdim=1, num_channels=16, kernel_size=4,
                 apply_norm=True, norm='IN', skip_connect=True):
        if apply_norm and norm != 'IN':
            # TODO(synk): BatchNorm3d ('BN') branch not implemented; only 'IN'/no-norm.
            raise NotImplementedError("only norm='IN' or apply_norm=False supported")
        nf = num_channels
        self.k = kernel_size
        self.p = kernel_size // 2
        self.skip_connect = skip_connect
        self.apply_norm = bool(apply_norm)
        keys = jax.random.split(key, 7)
        self.w0, _ = _init_conv(keys[0], cdim, nf, kernel_size, bias=False)
        self.w1, _ = _init_conv(keys[1], nf, nf * 2, kernel_size, bias=False)
        self.w2, _ = _init_conv(keys[2], nf * 2, nf * 4, kernel_size, bias=False)
        self.w3, _ = _init_conv(keys[3], nf * 4, nf * 8, kernel_size, bias=False)
        self.wf1, self.bf1 = _init_conv(keys[4], nf * 2, 1, kernel_size, bias=True)
        self.wf2, self.bf2 = _init_conv(keys[5], nf * 4, 1, kernel_size, bias=True)
        self.wf3, self.bf3 = _init_conv(keys[6], nf * 8, 1, kernel_size, bias=True)

    def __call__(self, x_ncdhw):
        k, p, nrm = self.k, self.p, self.apply_norm
        h = x_ncdhw.astype(jnp.bfloat16)
        x0 = conv3d_block(h, self.w0, None, stride=2, ksize=k, pad=p,
                          norm=False, act=True)                 # conv0 + LeakyReLU
        x1 = conv3d_block(x0, self.w1, None, stride=2, ksize=k, pad=p,
                          norm=nrm, act=True)                   # conv1 + IN + LeakyReLU
        x2 = conv3d_block(x1, self.w2, None, stride=2, ksize=k, pad=p,
                          norm=nrm, act=True)                   # conv2 + IN + LeakyReLU
        x3 = conv3d_block(x2, self.w3, None, stride=2, ksize=k, pad=p,
                          norm=nrm, act=True)                   # conv3 + IN + LeakyReLU
        if not self.skip_connect:
            return [x3.astype(jnp.float32)]
        f3 = conv3d_block(x3, self.wf3, self.bf3, stride=1, ksize=k, pad=p,
                          norm=False, act=False)
        f2 = conv3d_block(avg_pool3d(x2, 2), self.wf2, self.bf2, stride=1,
                          ksize=k, pad=p, norm=False, act=False)
        f1 = conv3d_block(avg_pool3d(x1, 4), self.wf1, self.bf1, stride=1,
                          ksize=k, pad=p, norm=False, act=False)
        out = jnp.concatenate([f3, f2, f1], axis=1).astype(jnp.float32)
        return [out]


if __name__ == "__main__":
    key = jax.random.PRNGKey(0)
    kparam_a, kparam_b, kdata = jax.random.split(key, 3)

    # Config A: default kernel_size=4 backbone.  (The reference's skip-connect
    # torch.cat is shape-inconsistent for k=4, so this config uses
    # skip_connect=False and returns [x3] — exactly the reference's behavior.)
    disc_a = DiscriminatorPallas(kparam_a, cdim=1, num_channels=16,
                                 kernel_size=4, skip_connect=False)
    xa = jax.random.normal(kdata, (2, 1, 16, 16, 16), jnp.float32)
    out_a = jax.block_until_ready(jax.jit(disc_a.__call__)(xa))
    assert tuple(out_a[0].shape) == (2, 128, 2, 2, 2), out_a[0].shape
    assert bool(jnp.all(jnp.isfinite(out_a[0])))

    # Config B: kernel_size=3 — the configuration under which the reference
    # skip-connect forward is well-defined — exercises the full path:
    # conv0..conv3 (+IN+LeakyReLU), AvgPool3d(2)/(4), conv_final1..3, concat.
    disc_b = DiscriminatorPallas(kparam_b, cdim=1, num_channels=16,
                                 kernel_size=3, skip_connect=True)
    xb = jax.random.normal(kdata, (2, 1, 32, 32, 32), jnp.float32)
    out_b = jax.block_until_ready(jax.jit(disc_b.__call__)(xb))
    assert tuple(out_b[0].shape) == (2, 3, 2, 2, 2), out_b[0].shape
    assert bool(jnp.all(jnp.isfinite(out_b[0])))

    print("KERNEL_OK")
</pallas_src>

<mosaic_0001>
module attributes {stable_mosaic.version = 11 : i64} {
  func.func @_conv_mm_kernel(%arg0: i32, %arg1: i32, %arg2: memref<1x64x512xbf16, #tpu.memory_space<vmem>>, %arg3: memref<16x64xbf16, #tpu.memory_space<vmem>>, %arg4: memref<16x1xf32, #tpu.memory_space<vmem>>, %arg5: memref<1x16x512xbf16, #tpu.memory_space<vmem>>) attributes {dimension_semantics = [#tpu.dimension_semantics<parallel>, #tpu.dimension_semantics<parallel>], iteration_bounds = array<i64: 2, 2>, scalar_prefetch = 0 : i64, scratch_operands = 0 : i64, tpu.core_type = #tpu.core_type<tc>, window_params = [{transform_indices = @transform_0, window_bounds = array<i64: 1, 64, 512>}, {pipeline_mode = #tpu.pipeline_mode<synchronous>, transform_indices = @transform_1, window_bounds = array<i64: 16, 64>}, {pipeline_mode = #tpu.pipeline_mode<synchronous>, transform_indices = @transform_2, window_bounds = array<i64: 16, 1>}, {transform_indices = @transform_3, window_bounds = array<i64: 1, 16, 512>}]} {
    %c0 = arith.constant 0 : index
    %c0_0 = arith.constant 0 : index
    %0 = vector.load %arg3[%c0, %c0_0] : memref<16x64xbf16, #tpu.memory_space<vmem>>, vector<16x64xbf16>
    %c0_1 = arith.constant 0 : index
    %c0_2 = arith.constant 0 : index
    %c0_3 = arith.constant 0 : index
    %1 = vector.load %arg2[%c0_1, %c0_2, %c0_3] : memref<1x64x512xbf16, #tpu.memory_space<vmem>>, vector<1x64x512xbf16>
    %2 = vector.shape_cast %1 : vector<1x64x512xbf16> to vector<64x512xbf16>
    %cst = arith.constant dense<0.000000e+00> : vector<16x512xf32>
    %3 = tpu.matmul %0, %2, %cst {dimension_numbers = #tpu.dot_dimension_numbers<[1], [0], [0], [1], [0, 0, 1, 1], [], []>} : vector<16x64xbf16>, vector<64x512xbf16>, vector<16x512xf32> -> vector<16x512xf32>
    %c0_4 = arith.constant 0 : index
    %c0_5 = arith.constant 0 : index
    %4 = vector.load %arg4[%c0_4, %c0_5] : memref<16x1xf32, #tpu.memory_space<vmem>>, vector<16x1xf32>
    %5 = vector.broadcast %4 : vector<16x1xf32> to vector<16x512xf32>
    %6 = arith.addf %3, %5 : vector<16x512xf32>
    %cst_6 = arith.constant 0.000000e+00 : f32
    %7 = vector.broadcast %cst_6 : f32 to vector<16x512xf32>
    %8 = arith.cmpf oge, %6, %7 : vector<16x512xf32>
    %cst_7 = arith.constant 2.000000e-01 : f32
    %9 = vector.broadcast %cst_7 : f32 to vector<16x512xf32>
    %10 = arith.mulf %9, %6 : vector<16x512xf32>
    %11 = arith.select %8, %6, %10 : vector<16x512xi1>, vector<16x512xf32>
    %12 = arith.truncf %11 : vector<16x512xf32> to vector<16x512xbf16>
    %c0_8 = arith.constant 0 : index
    %c0_9 = arith.constant 0 : index
    %c0_10 = arith.constant 0 : index
    %13 = vector.load %arg5[%c0_8, %c0_9, %c0_10] : memref<1x16x512xbf16, #tpu.memory_space<vmem>>, vector<1x16x512xbf16>
    %14 = vector.shape_cast %13 : vector<1x16x512xbf16> to vector<16x512xbf16>
    %15 = vector.shape_cast %12 : vector<16x512xbf16> to vector<1x16x512xbf16>
    tpu.vector_store %arg5[%c0_8, %c0_9, %c0_10], %15 {strides = array<i32>} : memref<1x16x512xbf16, #tpu.memory_space<vmem>>, vector<1x16x512xbf16>,
    return
  }
  func.func @transform_0(%arg0: i32, %arg1: i32) -> (i32, i32, i32) {
    %c0_i32 = arith.constant 0 : i32
    %c0_i32_0 = arith.constant 0 : i32
    return %arg0, %c0_i32, %arg1 : i32, i32, i32
  }
  func.func @transform_1(%arg0: i32, %arg1: i32) -> (i32, i32) {
    %c0_i32 = arith.constant 0 : i32
    %c0_i32_0 = arith.constant 0 : i32
    %c0_i32_1 = arith.constant 0 : i32
    return %c0_i32, %c0_i32_0 : i32, i32
  }
  func.func @transform_2(%arg0: i32, %arg1: i32) -> (i32, i32) {
    %c0_i32 = arith.constant 0 : i32
    %c0_i32_0 = arith.constant 0 : i32
    %c0_i32_1 = arith.constant 0 : i32
    return %c0_i32, %c0_i32_0 : i32, i32
  }
  func.func @transform_3(%arg0: i32, %arg1: i32) -> (i32, i32, i32) {
    %c0_i32 = arith.constant 0 : i32
    %c0_i32_0 = arith.constant 0 : i32
    return %arg0, %c0_i32, %arg1 : i32, i32, i32
  }
}

module attributes {stable_mosaic.version = 11 : i64} {
  func.func @_conv_mm_kernel(%arg0: i32, %arg1: i32, %arg2: memref<1x1024x128xbf16, #tpu.memory_space<vmem>>, %arg3: memref<32x1024xbf16, #tpu.memory_space<vmem>>, %arg4: memref<32x1xf32, #tpu.memory_space<vmem>>, %arg5: memref<1x32x128xbf16, #tpu.memory_space<vmem>>, %arg6: memref<1x32x1xf32, #tpu.memory_space<vmem>>, %arg7: memref<1x32x1xf32, #tpu.memory_space<vmem>>) attributes {dimension_semantics = [#tpu.dimension_semantics<parallel>, #tpu.dimension_semantics<arbitrary>], iteration_bounds = array<i64: 2, 1>, scalar_prefetch = 0 : i64, scratch_operands = 0 : i64, tpu.core_type = #tpu.core_type<tc>, window_params = [{transform_indices = @transform_0, window_bounds = array<i64: 1, 1024, 128>}, {pipeline_mode = #tpu.pipeline_mode<synchronous>, transform_indices = @transform_1, window_bounds = array<i64: 32, 1024>}, {pipeline_mode = #tpu.pipeline_mode<synchronous>, transform_indices = @transform_2, window_bounds = array<i64: 32, 1>}, {transform_indices = @transform_3, window_bounds = array<i64: 1, 32, 128>}, {transform_indices = @transform_4, window_bounds = array<i64: 1, 32, 1>}, {transform_indices = @transform_5, window_bounds = array<i64: 1, 32, 1>}]} {
    %c0 = arith.constant 0 : index
    %c0_0 = arith.constant 0 : index
    %0 = vector.load %arg3[%c0, %c0_0] : memref<32x1024xbf16, #tpu.memory_space<vmem>>, vector<32x1024xbf16>
    %c0_1 = arith.constant 0 : index
    %c0_2 = arith.constant 0 : index
    %c0_3 = arith.constant 0 : index
    %1 = vector.load %arg2[%c0_1, %c0_2, %c0_3] : memref<1x1024x128xbf16, #tpu.memory_space<vmem>>, vector<1x1024x128xbf16>
    %2 = vector.shape_cast %1 : vector<1x1024x128xbf16> to vector<1024x128xbf16>
    %cst = arith.constant dense<0.000000e+00> : vector<32x128xf32>
    %3 = tpu.matmul %0, %2, %cst {dimension_numbers = #tpu.dot_dimension_numbers<[1], [0], [0], [1], [0, 0, 1, 1], [], []>} : vector<32x1024xbf16>, vector<1024x128xbf16>, vector<32x128xf32> -> vector<32x128xf32>
    %c0_4 = arith.constant 0 : index
    %c0_5 = arith.constant 0 : index
    %4 = vector.load %arg4[%c0_4, %c0_5] : memref<32x1xf32, #tpu.memory_space<vmem>>, vector<32x1xf32>
    %5 = vector.broadcast %4 : vector<32x1xf32> to vector<32x128xf32>
    %6 = arith.addf %3, %5 : vector<32x128xf32>
    %c0_i32 = arith.constant 0 : i32
    %7 = arith.cmpi eq, %arg1, %c0_i32 : i32
    %8 = arith.extui %7 : i1 to i32
    %c0_i32_6 = arith.constant 0 : i32
    %9 = arith.cmpi ne, %8, %c0_i32_6 : i32
    scf.if %9 {
      %cst_24 = arith.constant 0.000000e+00 : f32
      %31 = vector.broadcast %cst_24 : f32 to vector<1x32x1xf32>
      %c0_25 = arith.constant 0 : index
      %c0_26 = arith.constant 0 : index
      %c0_27 = arith.constant 0 : index
      %32 = vector.load %arg6[%c0_25, %c0_26, %c0_27] : memref<1x32x1xf32, #tpu.memory_space<vmem>>, vector<1x32x1xf32>
      tpu.vector_store %arg6[%c0_25, %c0_26, %c0_27], %31 {strides = array<i32>} : memref<1x32x1xf32, #tpu.memory_space<vmem>>, vector<1x32x1xf32>,
      %cst_28 = arith.constant 0.000000e+00 : f32
      %33 = vector.broadcast %cst_28 : f32 to vector<1x32x1xf32>
      %c0_29 = arith.constant 0 : index
      %c0_30 = arith.constant 0 : index
      %c0_31 = arith.constant 0 : index
      %34 = vector.load %arg7[%c0_29, %c0_30, %c0_31] : memref<1x32x1xf32, #tpu.memory_space<vmem>>, vector<1x32x1xf32>
      tpu.vector_store %arg7[%c0_29, %c0_30, %c0_31], %33 {strides = array<i32>} : memref<1x32x1xf32, #tpu.memory_space<vmem>>, vector<1x32x1xf32>,
    } else {
    }
    %c0_7 = arith.constant 0 : index
    %c0_8 = arith.constant 0 : index
    %c0_9 = arith.constant 0 : index
    %10 = vector.load %arg6[%c0_7, %c0_8, %c0_9] : memref<1x32x1xf32, #tpu.memory_space<vmem>>, vector<1x32x1xf32>
    %11 = vector.shape_cast %10 : vector<1x32x1xf32> to vector<32x1xf32>
    %cst_10 = arith.constant dense<0.000000e+00> : vector<32xf32>
    %12 = vector.multi_reduction <add>, %6, %cst_10 [1] : vector<32x128xf32> to vector<32xf32>
    %13 = vector.shape_cast %12 : vector<32xf32> to vector<32x1xf32>
    %14 = arith.addf %11, %13 : vector<32x1xf32>
    %c0_11 = arith.constant 0 : index
    %c0_12 = arith.constant 0 : index
    %c0_13 = arith.constant 0 : index
    %15 = vector.load %arg6[%c0_11, %c0_12, %c0_13] : memref<1x32x1xf32, #tpu.memory_space<vmem>>, vector<1x32x1xf32>
    %16 = vector.shape_cast %15 : vector<1x32x1xf32> to vector<32x1xf32>
    %17 = vector.shape_cast %14 : vector<32x1xf32> to vector<1x32x1xf32>
    tpu.vector_store %arg6[%c0_11, %c0_12, %c0_13], %17 {strides = array<i32>} : memref<1x32x1xf32, #tpu.memory_space<vmem>>, vector<1x32x1xf32>,
    %c0_14 = arith.constant 0 : index
    %c0_15 = arith.constant 0 : index
    %c0_16 = arith.constant 0 : index
    %18 = vector.load %arg7[%c0_14, %c0_15, %c0_16] : memref<1x32x1xf32, #tpu.memory_space<vmem>>, vector<1x32x1xf32>
    %19 = vector.shape_cast %18 : vector<1x32x1xf32> to vector<32x1xf32>
    %20 = arith.mulf %6, %6 : vector<32x128xf32>
    %cst_17 = arith.constant dense<0.000000e+00> : vector<32xf32>
    %21 = vector.multi_reduction <add>, %20, %cst_17 [1] : vector<32x128xf32> to vector<32xf32>
    %22 = vector.shape_cast %21 : vector<32xf32> to vector<32x1xf32>
    %23 = arith.addf %19, %22 : vector<32x1xf32>
    %c0_18 = arith.constant 0 : index
    %c0_19 = arith.constant 0 : index
    %c0_20 = arith.constant 0 : index
    %24 = vector.load %arg7[%c0_18, %c0_19, %c0_20] : memref<1x32x1xf32, #tpu.memory_space<vmem>>, vector<1x32x1xf32>
    %25 = vector.shape_cast %24 : vector<1x32x1xf32> to vector<32x1xf32>
    %26 = vector.shape_cast %23 : vector<32x1xf32> to vector<1x32x1xf32>
    tpu.vector_store %arg7[%c0_18, %c0_19, %c0_20], %26 {strides = array<i32>} : memref<1x32x1xf32, #tpu.memory_space<vmem>>, vector<1x32x1xf32>,
    %27 = arith.truncf %6 : vector<32x128xf32> to vector<32x128xbf16>
    %c0_21 = arith.constant 0 : index
    %c0_22 = arith.constant 0 : index
    %c0_23 = arith.constant 0 : index
    %28 = vector.load %arg5[%c0_21, %c0_22, %c0_23] : memref<1x32x128xbf16, #tpu.memory_space<vmem>>, vector<1x32x128xbf16>
    %29 = vector.shape_cast %28 : vector<1x32x128xbf16> to vector<32x128xbf16>
    %30 = vector.shape_cast %27 : vector<32x128xbf16> to vector<1x32x128xbf16>
    tpu.vector_store %arg5[%c0_21, %c0_22, %c0_23], %30 {strides = array<i32>} : memref<1x32x128xbf16, #tpu.memory_space<vmem>>, vector<1x32x128xbf16>,
    return
  }
  func.func @transform_0(%arg0: i32, %arg1: i32) -> (i32, i32, i32) {
    %c0_i32 = arith.constant 0 : i32
    %c0_i32_0 = arith.constant 0 : i32
    return %arg0, %c0_i32, %arg1 : i32, i32, i32
  }
  func.func @transform_1(%arg0: i32, %arg1: i32) -> (i32, i32) {
    %c0_i32 = arith.constant 0 : i32
    %c0_i32_0 = arith.constant 0 : i32
    %c0_i32_1 = arith.constant 0 : i32
    return %c0_i32, %c0_i32_0 : i32, i32
  }
  func.func @transform_2(%arg0: i32, %arg1: i32) -> (i32, i32) {
    %c0_i32 = arith.constant 0 : i32
    %c0_i32_0 = arith.constant 0 : i32
    %c0_i32_1 = arith.constant 0 : i32
    return %c0_i32, %c0_i32_0 : i32, i32
  }
  func.func @transform_3(%arg0: i32, %arg1: i32) -> (i32, i32, i32) {
    %c0_i32 = arith.constant 0 : i32
    %c0_i32_0 = arith.constant 0 : i32
    return %arg0, %c0_i32, %arg1 : i32, i32, i32
  }
  func.func @transform_4(%arg0: i32, %arg1: i32) -> (i32, i32, i32) {
    %c0_i32 = arith.constant 0 : i32
    %c0_i32_0 = arith.constant 0 : i32
    %c0_i32_1 = arith.constant 0 : i32
    return %arg0, %c0_i32, %c0_i32_0 : i32, i32, i32
  }
  func.func @transform_5(%arg0: i32, %arg1: i32) -> (i32, i32, i32) {
    %c0_i32 = arith.constant 0 : i32
    %c0_i32_0 = arith.constant 0 : i32
    %c0_i32_1 = arith.constant 0 : i32
    return %arg0, %c0_i32, %c0_i32_0 : i32, i32, i32
  }
}

module attributes {stable_mosaic.version = 11 : i64} {
  func.func @_in_act_kernel(%arg0: i32, %arg1: i32, %arg2: memref<1x32x128xbf16, #tpu.memory_space<vmem>>, %arg3: memref<1x32x1xf32, #tpu.memory_space<vmem>>, %arg4: memref<1x32x1xf32, #tpu.memory_space<vmem>>, %arg5: memref<1x32x128xbf16, #tpu.memory_space<vmem>>) attributes {dimension_semantics = [#tpu.dimension_semantics<parallel>, #tpu.dimension_semantics<parallel>], iteration_bounds = array<i64: 2, 1>, scalar_prefetch = 0 : i64, scratch_operands = 0 : i64, tpu.core_type = #tpu.core_type<tc>, window_params = [{transform_indices = @transform_0, window_bounds = array<i64: 1, 32, 128>}, {transform_indices = @transform_1, window_bounds = array<i64: 1, 32, 1>}, {transform_indices = @transform_2, window_bounds = array<i64: 1, 32, 1>}, {transform_indices = @transform_3, window_bounds = array<i64: 1, 32, 128>}]} {
    %c0 = arith.constant 0 : index
    %c0_0 = arith.constant 0 : index
    %c0_1 = arith.constant 0 : index
    %0 = vector.load %arg2[%c0, %c0_0, %c0_1] : memref<1x32x128xbf16, #tpu.memory_space<vmem>>, vector<1x32x128xbf16>
    %1 = vector.shape_cast %0 : vector<1x32x128xbf16> to vector<32x128xbf16>
    %2 = arith.extf %1 : vector<32x128xbf16> to vector<32x128xf32>
    %c0_2 = arith.constant 0 : index
    %c0_3 = arith.constant 0 : index
    %c0_4 = arith.constant 0 : index
    %3 = vector.load %arg3[%c0_2, %c0_3, %c0_4] : memref<1x32x1xf32, #tpu.memory_space<vmem>>, vector<1x32x1xf32>
    %4 = vector.shape_cast %3 : vector<1x32x1xf32> to vector<32x1xf32>
    %cst = arith.constant 8.000000e-03 : f32
    %5 = vector.broadcast %cst : f32 to vector<32x1xf32>
    %6 = arith.mulf %4, %5 : vector<32x1xf32>
    %c0_5 = arith.constant 0 : index
    %c0_6 = arith.constant 0 : index
    %c0_7 = arith.constant 0 : index
    %7 = vector.load %arg4[%c0_5, %c0_6, %c0_7] : memref<1x32x1xf32, #tpu.memory_space<vmem>>, vector<1x32x1xf32>
    %8 = vector.shape_cast %7 : vector<1x32x1xf32> to vector<32x1xf32>
    %cst_8 = arith.constant 8.000000e-03 : f32
    %9 = vector.broadcast %cst_8 : f32 to vector<32x1xf32>
    %10 = arith.mulf %8, %9 : vector<32x1xf32>
    %11 = arith.mulf %6, %6 : vector<32x1xf32>
    %12 = arith.subf %10, %11 : vector<32x1xf32>
    %cst_9 = arith.constant 0.000000e+00 : f32
    %13 = vector.broadcast %cst_9 : f32 to vector<32x1xf32>
    %14 = arith.maximumf %12, %13 : vector<32x1xf32>
    %15 = vector.broadcast %6 : vector<32x1xf32> to vector<32x128xf32>
    %16 = arith.subf %2, %15 : vector<32x128xf32>
    %cst_10 = arith.constant 9.99999974E-6 : f32
    %17 = vector.broadcast %cst_10 : f32 to vector<32x1xf32>
    %18 = arith.addf %14, %17 : vector<32x1xf32>
    %19 = math.rsqrt %18 : vector<32x1xf32>
    %20 = vector.broadcast %19 : vector<32x1xf32> to vector<32x128xf32>
    %21 = arith.mulf %16, %20 : vector<32x128xf32>
    %cst_11 = arith.constant 0.000000e+00 : f32
    %22 = vector.broadcast %cst_11 : f32 to vector<32x128xf32>
    %23 = arith.cmpf oge, %21, %22 : vector<32x128xf32>
    %cst_12 = arith.constant 2.000000e-01 : f32
    %24 = vector.broadcast %cst_12 : f32 to vector<32x128xf32>
    %25 = arith.mulf %24, %21 : vector<32x128xf32>
    %26 = arith.select %23, %21, %25 : vector<32x128xi1>, vector<32x128xf32>
    %27 = arith.truncf %26 : vector<32x128xf32> to vector<32x128xbf16>
    %c0_13 = arith.constant 0 : index
    %c0_14 = arith.constant 0 : index
    %c0_15 = arith.constant 0 : index
    %28 = vector.load %arg5[%c0_13, %c0_14, %c0_15] : memref<1x32x128xbf16, #tpu.memory_space<vmem>>, vector<1x32x128xbf16>
    %29 = vector.shape_cast %28 : vector<1x32x128xbf16> to vector<32x128xbf16>
    %30 = vector.shape_cast %27 : vector<32x128xbf16> to vector<1x32x128xbf16>
    tpu.vector_store %arg5[%c0_13, %c0_14, %c0_15], %30 {strides = array<i32>} : memref<1x32x128xbf16, #tpu.memory_space<vmem>>, vector<1x32x128xbf16>,
    return
  }
  func.func @transform_0(%arg0: i32, %arg1: i32) -> (i32, i32, i32) {
    %c0_i32 = arith.constant 0 : i32
    %c0_i32_0 = arith.constant 0 : i32
    return %arg0, %c0_i32, %arg1 : i32, i32, i32
  }
  func.func @transform_1(%arg0: i32, %arg1: i32) -> (i32, i32, i32) {
    %c0_i32 = arith.constant 0 : i32
    %c0_i32_0 = arith.constant 0 : i32
    %c0_i32_1 = arith.constant 0 : i32
    return %arg0, %c0_i32, %c0_i32_0 : i32, i32, i32
  }
  func.func @transform_2(%arg0: i32, %arg1: i32) -> (i32, i32, i32) {
    %c0_i32 = arith.constant 0 : i32
    %c0_i32_0 = arith.constant 0 : i32
    %c0_i32_1 = arith.constant 0 : i32
    return %arg0, %c0_i32, %c0_i32_0 : i32, i32, i32
  }
  func.func @transform_3(%arg0: i32, %arg1: i32) -> (i32, i32, i32) {
    %c0_i32 = arith.constant 0 : i32
    %c0_i32_0 = arith.constant 0 : i32
    return %arg0, %c0_i32, %arg1 : i32, i32, i32
  }
}

module attributes {stable_mosaic.version = 11 : i64} {
  func.func @_conv_mm_kernel(%arg0: i32, %arg1: i32, %arg2: memref<1x2048x128xbf16, #tpu.memory_space<vmem>>, %arg3: memref<64x2048xbf16, #tpu.memory_space<vmem>>, %arg4: memref<64x1xf32, #tpu.memory_space<vmem>>, %arg5: memref<1x64x128xbf16, #tpu.memory_space<vmem>>, %arg6: memref<1x64x1xf32, #tpu.memory_space<vmem>>, %arg7: memref<1x64x1xf32, #tpu.memory_space<vmem>>) attributes {dimension_semantics = [#tpu.dimension_semantics<parallel>, #tpu.dimension_semantics<arbitrary>], iteration_bounds = array<i64: 2, 1>, scalar_prefetch = 0 : i64, scratch_operands = 0 : i64, tpu.core_type = #tpu.core_type<tc>, window_params = [{transform_indices = @transform_0, window_bounds = array<i64: 1, 2048, 128>}, {pipeline_mode = #tpu.pipeline_mode<synchronous>, transform_indices = @transform_1, window_bounds = array<i64: 64, 2048>}, {pipeline_mode = #tpu.pipeline_mode<synchronous>, transform_indices = @transform_2, window_bounds = array<i64: 64, 1>}, {transform_indices = @transform_3, window_bounds = array<i64: 1, 64, 128>}, {transform_indices = @transform_4, window_bounds = array<i64: 1, 64, 1>}, {transform_indices = @transform_5, window_bounds = array<i64: 1, 64, 1>}]} {
    %c0 = arith.constant 0 : index
    %c0_0 = arith.constant 0 : index
    %0 = vector.load %arg3[%c0, %c0_0] : memref<64x2048xbf16, #tpu.memory_space<vmem>>, vector<64x2048xbf16>
    %c0_1 = arith.constant 0 : index
    %c0_2 = arith.constant 0 : index
    %c0_3 = arith.constant 0 : index
    %1 = vector.load %arg2[%c0_1, %c0_2, %c0_3] : memref<1x2048x128xbf16, #tpu.memory_space<vmem>>, vector<1x2048x128xbf16>
    %2 = vector.shape_cast %1 : vector<1x2048x128xbf16> to vector<2048x128xbf16>
    %cst = arith.constant dense<0.000000e+00> : vector<64x128xf32>
    %3 = tpu.matmul %0, %2, %cst {dimension_numbers = #tpu.dot_dimension_numbers<[1], [0], [0], [1], [0, 0, 1, 1], [], []>} : vector<64x2048xbf16>, vector<2048x128xbf16>, vector<64x128xf32> -> vector<64x128xf32>
    %c0_4 = arith.constant 0 : index
    %c0_5 = arith.constant 0 : index
    %4 = vector.load %arg4[%c0_4, %c0_5] : memref<64x1xf32, #tpu.memory_space<vmem>>, vector<64x1xf32>
    %5 = vector.broadcast %4 : vector<64x1xf32> to vector<64x128xf32>
    %6 = arith.addf %3, %5 : vector<64x128xf32>
    %c0_i32 = arith.constant 0 : i32
    %7 = arith.cmpi eq, %arg1, %c0_i32 : i32
    %8 = arith.extui %7 : i1 to i32
    %c0_i32_6 = arith.constant 0 : i32
    %9 = arith.cmpi ne, %8, %c0_i32_6 : i32
    scf.if %9 {
      %cst_24 = arith.constant 0.000000e+00 : f32
      %31 = vector.broadcast %cst_24 : f32 to vector<1x64x1xf32>
      %c0_25 = arith.constant 0 : index
      %c0_26 = arith.constant 0 : index
      %c0_27 = arith.constant 0 : index
      %32 = vector.load %arg6[%c0_25, %c0_26, %c0_27] : memref<1x64x1xf32, #tpu.memory_space<vmem>>, vector<1x64x1xf32>
      tpu.vector_store %arg6[%c0_25, %c0_26, %c0_27], %31 {strides = array<i32>} : memref<1x64x1xf32, #tpu.memory_space<vmem>>, vector<1x64x1xf32>,
      %cst_28 = arith.constant 0.000000e+00 : f32
      %33 = vector.broadcast %cst_28 : f32 to vector<1x64x1xf32>
      %c0_29 = arith.constant 0 : index
      %c0_30 = arith.constant 0 : index
      %c0_31 = arith.constant 0 : index
      %34 = vector.load %arg7[%c0_29, %c0_30, %c0_31] : memref<1x64x1xf32, #tpu.memory_space<vmem>>, vector<1x64x1xf32>
      tpu.vector_store %arg7[%c0_29, %c0_30, %c0_31], %33 {strides = array<i32>} : memref<1x64x1xf32, #tpu.memory_space<vmem>>, vector<1x64x1xf32>,
    } else {
    }
    %c0_7 = arith.constant 0 : index
    %c0_8 = arith.constant 0 : index
    %c0_9 = arith.constant 0 : index
    %10 = vector.load %arg6[%c0_7, %c0_8, %c0_9] : memref<1x64x1xf32, #tpu.memory_space<vmem>>, vector<1x64x1xf32>
    %11 = vector.shape_cast %10 : vector<1x64x1xf32> to vector<64x1xf32>
    %cst_10 = arith.constant dense<0.000000e+00> : vector<64xf32>
    %12 = vector.multi_reduction <add>, %6, %cst_10 [1] : vector<64x128xf32> to vector<64xf32>
    %13 = vector.shape_cast %12 : vector<64xf32> to vector<64x1xf32>
    %14 = arith.addf %11, %13 : vector<64x1xf32>
    %c0_11 = arith.constant 0 : index
    %c0_12 = arith.constant 0 : index
    %c0_13 = arith.constant 0 : index
    %15 = vector.load %arg6[%c0_11, %c0_12, %c0_13] : memref<1x64x1xf32, #tpu.memory_space<vmem>>, vector<1x64x1xf32>
    %16 = vector.shape_cast %15 : vector<1x64x1xf32> to vector<64x1xf32>
    %17 = vector.shape_cast %14 : vector<64x1xf32> to vector<1x64x1xf32>
    tpu.vector_store %arg6[%c0_11, %c0_12, %c0_13], %17 {strides = array<i32>} : memref<1x64x1xf32, #tpu.memory_space<vmem>>, vector<1x64x1xf32>,
    %c0_14 = arith.constant 0 : index
    %c0_15 = arith.constant 0 : index
    %c0_16 = arith.constant 0 : index
    %18 = vector.load %arg7[%c0_14, %c0_15, %c0_16] : memref<1x64x1xf32, #tpu.memory_space<vmem>>, vector<1x64x1xf32>
    %19 = vector.shape_cast %18 : vector<1x64x1xf32> to vector<64x1xf32>
    %20 = arith.mulf %6, %6 : vector<64x128xf32>
    %cst_17 = arith.constant dense<0.000000e+00> : vector<64xf32>
    %21 = vector.multi_reduction <add>, %20, %cst_17 [1] : vector<64x128xf32> to vector<64xf32>
    %22 = vector.shape_cast %21 : vector<64xf32> to vector<64x1xf32>
    %23 = arith.addf %19, %22 : vector<64x1xf32>
    %c0_18 = arith.constant 0 : index
    %c0_19 = arith.constant 0 : index
    %c0_20 = arith.constant 0 : index
    %24 = vector.load %arg7[%c0_18, %c0_19, %c0_20] : memref<1x64x1xf32, #tpu.memory_space<vmem>>, vector<1x64x1xf32>
    %25 = vector.shape_cast %24 : vector<1x64x1xf32> to vector<64x1xf32>
    %26 = vector.shape_cast %23 : vector<64x1xf32> to vector<1x64x1xf32>
    tpu.vector_store %arg7[%c0_18, %c0_19, %c0_20], %26 {strides = array<i32>} : memref<1x64x1xf32, #tpu.memory_space<vmem>>, vector<1x64x1xf32>,
    %27 = arith.truncf %6 : vector<64x128xf32> to vector<64x128xbf16>
    %c0_21 = arith.constant 0 : index
    %c0_22 = arith.constant 0 : index
    %c0_23 = arith.constant 0 : index
    %28 = vector.load %arg5[%c0_21, %c0_22, %c0_23] : memref<1x64x128xbf16, #tpu.memory_space<vmem>>, vector<1x64x128xbf16>
    %29 = vector.shape_cast %28 : vector<1x64x128xbf16> to vector<64x128xbf16>
    %30 = vector.shape_cast %27 : vector<64x128xbf16> to vector<1x64x128xbf16>
    tpu.vector_store %arg5[%c0_21, %c0_22, %c0_23], %30 {strides = array<i32>} : memref<1x64x128xbf16, #tpu.memory_space<vmem>>, vector<1x64x128xbf16>,
    return
  }
  func.func @transform_0(%arg0: i32, %arg1: i32) -> (i32, i32, i32) {
    %c0_i32 = arith.constant 0 : i32
    %c0_i32_0 = arith.constant 0 : i32
    return %arg0, %c0_i32, %arg1 : i32, i32, i32
  }
  func.func @transform_1(%arg0: i32, %arg1: i32) -> (i32, i32) {
    %c0_i32 = arith.constant 0 : i32
    %c0_i32_0 = arith.constant 0 : i32
    %c0_i32_1 = arith.constant 0 : i32
    return %c0_i32, %c0_i32_0 : i32, i32
  }
  func.func @transform_2(%arg0: i32, %arg1: i32) -> (i32, i32) {
    %c0_i32 = arith.constant 0 : i32
    %c0_i32_0 = arith.constant 0 : i32
    %c0_i32_1 = arith.constant 0 : i32
    return %c0_i32, %c0_i32_0 : i32, i32
  }
  func.func @transform_3(%arg0: i32, %arg1: i32) -> (i32, i32, i32) {
    %c0_i32 = arith.constant 0 : i32
    %c0_i32_0 = arith.constant 0 : i32
    return %arg0, %c0_i32, %arg1 : i32, i32, i32
  }
  func.func @transform_4(%arg0: i32, %arg1: i32) -> (i32, i32, i32) {
    %c0_i32 = arith.constant 0 : i32
    %c0_i32_0 = arith.constant 0 : i32
    %c0_i32_1 = arith.constant 0 : i32
    return %arg0, %c0_i32, %c0_i32_0 : i32, i32, i32
  }
  func.func @transform_5(%arg0: i32, %arg1: i32) -> (i32, i32, i32) {
    %c0_i32 = arith.constant 0 : i32
    %c0_i32_0 = arith.constant 0 : i32
    %c0_i32_1 = arith.constant 0 : i32
    return %arg0, %c0_i32, %c0_i32_0 : i32, i32, i32
  }
}

module attributes {stable_mosaic.version = 11 : i64} {
  func.func @_in_act_kernel(%arg0: i32, %arg1: i32, %arg2: memref<1x64x128xbf16, #tpu.memory_space<vmem>>, %arg3: memref<1x64x1xf32, #tpu.memory_space<vmem>>, %arg4: memref<1x64x1xf32, #tpu.memory_space<vmem>>, %arg5: memref<1x64x128xbf16, #tpu.memory_space<vmem>>) attributes {dimension_semantics = [#tpu.dimension_semantics<parallel>, #tpu.dimension_semantics<parallel>], iteration_bounds = array<i64: 2, 1>, scalar_prefetch = 0 : i64, scratch_operands = 0 : i64, tpu.core_type = #tpu.core_type<tc>, window_params = [{transform_indices = @transform_0, window_bounds = array<i64: 1, 64, 128>}, {transform_indices = @transform_1, window_bounds = array<i64: 1, 64, 1>}, {transform_indices = @transform_2, window_bounds = array<i64: 1, 64, 1>}, {transform_indices = @transform_3, window_bounds = array<i64: 1, 64, 128>}]} {
    %c0 = arith.constant 0 : index
    %c0_0 = arith.constant 0 : index
    %c0_1 = arith.constant 0 : index
    %0 = vector.load %arg2[%c0, %c0_0, %c0_1] : memref<1x64x128xbf16, #tpu.memory_space<vmem>>, vector<1x64x128xbf16>
    %1 = vector.shape_cast %0 : vector<1x64x128xbf16> to vector<64x128xbf16>
    %2 = arith.extf %1 : vector<64x128xbf16> to vector<64x128xf32>
    %c0_2 = arith.constant 0 : index
    %c0_3 = arith.constant 0 : index
    %c0_4 = arith.constant 0 : index
    %3 = vector.load %arg3[%c0_2, %c0_3, %c0_4] : memref<1x64x1xf32, #tpu.memory_space<vmem>>, vector<1x64x1xf32>
    %4 = vector.shape_cast %3 : vector<1x64x1xf32> to vector<64x1xf32>
    %cst = arith.constant 0.0370370373 : f32
    %5 = vector.broadcast %cst : f32 to vector<64x1xf32>
    %6 = arith.mulf %4, %5 : vector<64x1xf32>
    %c0_5 = arith.constant 0 : index
    %c0_6 = arith.constant 0 : index
    %c0_7 = arith.constant 0 : index
    %7 = vector.load %arg4[%c0_5, %c0_6, %c0_7] : memref<1x64x1xf32, #tpu.memory_space<vmem>>, vector<1x64x1xf32>
    %8 = vector.shape_cast %7 : vector<1x64x1xf32> to vector<64x1xf32>
    %cst_8 = arith.constant 0.0370370373 : f32
    %9 = vector.broadcast %cst_8 : f32 to vector<64x1xf32>
    %10 = arith.mulf %8, %9 : vector<64x1xf32>
    %11 = arith.mulf %6, %6 : vector<64x1xf32>
    %12 = arith.subf %10, %11 : vector<64x1xf32>
    %cst_9 = arith.constant 0.000000e+00 : f32
    %13 = vector.broadcast %cst_9 : f32 to vector<64x1xf32>
    %14 = arith.maximumf %12, %13 : vector<64x1xf32>
    %15 = vector.broadcast %6 : vector<64x1xf32> to vector<64x128xf32>
    %16 = arith.subf %2, %15 : vector<64x128xf32>
    %cst_10 = arith.constant 9.99999974E-6 : f32
    %17 = vector.broadcast %cst_10 : f32 to vector<64x1xf32>
    %18 = arith.addf %14, %17 : vector<64x1xf32>
    %19 = math.rsqrt %18 : vector<64x1xf32>
    %20 = vector.broadcast %19 : vector<64x1xf32> to vector<64x128xf32>
    %21 = arith.mulf %16, %20 : vector<64x128xf32>
    %cst_11 = arith.constant 0.000000e+00 : f32
    %22 = vector.broadcast %cst_11 : f32 to vector<64x128xf32>
    %23 = arith.cmpf oge, %21, %22 : vector<64x128xf32>
    %cst_12 = arith.constant 2.000000e-01 : f32
    %24 = vector.broadcast %cst_12 : f32 to vector<64x128xf32>
    %25 = arith.mulf %24, %21 : vector<64x128xf32>
    %26 = arith.select %23, %21, %25 : vector<64x128xi1>, vector<64x128xf32>
    %27 = arith.truncf %26 : vector<64x128xf32> to vector<64x128xbf16>
    %c0_13 = arith.constant 0 : index
    %c0_14 = arith.constant 0 : index
    %c0_15 = arith.constant 0 : index
    %28 = vector.load %arg5[%c0_13, %c0_14, %c0_15] : memref<1x64x128xbf16, #tpu.memory_space<vmem>>, vector<1x64x128xbf16>
    %29 = vector.shape_cast %28 : vector<1x64x128xbf16> to vector<64x128xbf16>
    %30 = vector.shape_cast %27 : vector<64x128xbf16> to vector<1x64x128xbf16>
    tpu.vector_store %arg5[%c0_13, %c0_14, %c0_15], %30 {strides = array<i32>} : memref<1x64x128xbf16, #tpu.memory_space<vmem>>, vector<1x64x128xbf16>,
    return
  }
  func.func @transform_0(%arg0: i32, %arg1: i32) -> (i32, i32, i32) {
    %c0_i32 = arith.constant 0 : i32
    %c0_i32_0 = arith.constant 0 : i32
    return %arg0, %c0_i32, %arg1 : i32, i32, i32
  }
  func.func @transform_1(%arg0: i32, %arg1: i32) -> (i32, i32, i32) {
    %c0_i32 = arith.constant 0 : i32
    %c0_i32_0 = arith.constant 0 : i32
    %c0_i32_1 = arith.constant 0 : i32
    return %arg0, %c0_i32, %c0_i32_0 : i32, i32, i32
  }
  func.func @transform_2(%arg0: i32, %arg1: i32) -> (i32, i32, i32) {
    %c0_i32 = arith.constant 0 : i32
    %c0_i32_0 = arith.constant 0 : i32
    %c0_i32_1 = arith.constant 0 : i32
    return %arg0, %c0_i32, %c0_i32_0 : i32, i32, i32
  }
  func.func @transform_3(%arg0: i32, %arg1: i32) -> (i32, i32, i32) {
    %c0_i32 = arith.constant 0 : i32
    %c0_i32_0 = arith.constant 0 : i32
    return %arg0, %c0_i32, %arg1 : i32, i32, i32
  }
}

module attributes {stable_mosaic.version = 11 : i64} {
  func.func @_conv_mm_kernel(%arg0: i32, %arg1: i32, %arg2: memref<1x4096x128xbf16, #tpu.memory_space<vmem>>, %arg3: memref<128x4096xbf16, #tpu.memory_space<vmem>>, %arg4: memref<128x1xf32, #tpu.memory_space<vmem>>, %arg5: memref<1x128x128xbf16, #tpu.memory_space<vmem>>, %arg6: memref<1x128x1xf32, #tpu.memory_space<vmem>>, %arg7: memref<1x128x1xf32, #tpu.memory_space<vmem>>) attributes {dimension_semantics = [#tpu.dimension_semantics<parallel>, #tpu.dimension_semantics<arbitrary>], iteration_bounds = array<i64: 2, 1>, scalar_prefetch = 0 : i64, scratch_operands = 0 : i64, tpu.core_type = #tpu.core_type<tc>, window_params = [{transform_indices = @transform_0, window_bounds = array<i64: 1, 4096, 128>}, {pipeline_mode = #tpu.pipeline_mode<synchronous>, transform_indices = @transform_1, window_bounds = array<i64: 128, 4096>}, {pipeline_mode = #tpu.pipeline_mode<synchronous>, transform_indices = @transform_2, window_bounds = array<i64: 128, 1>}, {transform_indices = @transform_3, window_bounds = array<i64: 1, 128, 128>}, {transform_indices = @transform_4, window_bounds = array<i64: 1, 128, 1>}, {transform_indices = @transform_5, window_bounds = array<i64: 1, 128, 1>}]} {
    %c0 = arith.constant 0 : index
    %c0_0 = arith.constant 0 : index
    %0 = vector.load %arg3[%c0, %c0_0] : memref<128x4096xbf16, #tpu.memory_space<vmem>>, vector<128x4096xbf16>
    %c0_1 = arith.constant 0 : index
    %c0_2 = arith.constant 0 : index
    %c0_3 = arith.constant 0 : index
    %1 = vector.load %arg2[%c0_1, %c0_2, %c0_3] : memref<1x4096x128xbf16, #tpu.memory_space<vmem>>, vector<1x4096x128xbf16>
    %2 = vector.shape_cast %1 : vector<1x4096x128xbf16> to vector<4096x128xbf16>
    %cst = arith.constant dense<0.000000e+00> : vector<128x128xf32>
    %3 = tpu.matmul %0, %2, %cst {dimension_numbers = #tpu.dot_dimension_numbers<[1], [0], [0], [1], [0, 0, 1, 1], [], []>} : vector<128x4096xbf16>, vector<4096x128xbf16>, vector<128x128xf32> -> vector<128x128xf32>
    %c0_4 = arith.constant 0 : index
    %c0_5 = arith.constant 0 : index
    %4 = vector.load %arg4[%c0_4, %c0_5] : memref<128x1xf32, #tpu.memory_space<vmem>>, vector<128x1xf32>
    %5 = vector.broadcast %4 : vector<128x1xf32> to vector<128x128xf32>
    %6 = arith.addf %3, %5 : vector<128x128xf32>
    %c0_i32 = arith.constant 0 : i32
    %7 = arith.cmpi eq, %arg1, %c0_i32 : i32
    %8 = arith.extui %7 : i1 to i32
    %c0_i32_6 = arith.constant 0 : i32
    %9 = arith.cmpi ne, %8, %c0_i32_6 : i32
    scf.if %9 {
      %cst_24 = arith.constant 0.000000e+00 : f32
      %31 = vector.broadcast %cst_24 : f32 to vector<1x128x1xf32>
      %c0_25 = arith.constant 0 : index
      %c0_26 = arith.constant 0 : index
      %c0_27 = arith.constant 0 : index
      %32 = vector.load %arg6[%c0_25, %c0_26, %c0_27] : memref<1x128x1xf32, #tpu.memory_space<vmem>>, vector<1x128x1xf32>
      tpu.vector_store %arg6[%c0_25, %c0_26, %c0_27], %31 {strides = array<i32>} : memref<1x128x1xf32, #tpu.memory_space<vmem>>, vector<1x128x1xf32>,
      %cst_28 = arith.constant 0.000000e+00 : f32
      %33 = vector.broadcast %cst_28 : f32 to vector<1x128x1xf32>
      %c0_29 = arith.constant 0 : index
      %c0_30 = arith.constant 0 : index
      %c0_31 = arith.constant 0 : index
      %34 = vector.load %arg7[%c0_29, %c0_30, %c0_31] : memref<1x128x1xf32, #tpu.memory_space<vmem>>, vector<1x128x1xf32>
      tpu.vector_store %arg7[%c0_29, %c0_30, %c0_31], %33 {strides = array<i32>} : memref<1x128x1xf32, #tpu.memory_space<vmem>>, vector<1x128x1xf32>,
    } else {
    }
    %c0_7 = arith.constant 0 : index
    %c0_8 = arith.constant 0 : index
    %c0_9 = arith.constant 0 : index
    %10 = vector.load %arg6[%c0_7, %c0_8, %c0_9] : memref<1x128x1xf32, #tpu.memory_space<vmem>>, vector<1x128x1xf32>
    %11 = vector.shape_cast %10 : vector<1x128x1xf32> to vector<128x1xf32>
    %cst_10 = arith.constant dense<0.000000e+00> : vector<128xf32>
    %12 = vector.multi_reduction <add>, %6, %cst_10 [1] : vector<128x128xf32> to vector<128xf32>
    %13 = vector.shape_cast %12 : vector<128xf32> to vector<128x1xf32>
    %14 = arith.addf %11, %13 : vector<128x1xf32>
    %c0_11 = arith.constant 0 : index
    %c0_12 = arith.constant 0 : index
    %c0_13 = arith.constant 0 : index
    %15 = vector.load %arg6[%c0_11, %c0_12, %c0_13] : memref<1x128x1xf32, #tpu.memory_space<vmem>>, vector<1x128x1xf32>
    %16 = vector.shape_cast %15 : vector<1x128x1xf32> to vector<128x1xf32>
    %17 = vector.shape_cast %14 : vector<128x1xf32> to vector<1x128x1xf32>
    tpu.vector_store %arg6[%c0_11, %c0_12, %c0_13], %17 {strides = array<i32>} : memref<1x128x1xf32, #tpu.memory_space<vmem>>, vector<1x128x1xf32>,
    %c0_14 = arith.constant 0 : index
    %c0_15 = arith.constant 0 : index
    %c0_16 = arith.constant 0 : index
    %18 = vector.load %arg7[%c0_14, %c0_15, %c0_16] : memref<1x128x1xf32, #tpu.memory_space<vmem>>, vector<1x128x1xf32>
    %19 = vector.shape_cast %18 : vector<1x128x1xf32> to vector<128x1xf32>
    %20 = arith.mulf %6, %6 : vector<128x128xf32>
    %cst_17 = arith.constant dense<0.000000e+00> : vector<128xf32>
    %21 = vector.multi_reduction <add>, %20, %cst_17 [1] : vector<128x128xf32> to vector<128xf32>
    %22 = vector.shape_cast %21 : vector<128xf32> to vector<128x1xf32>
    %23 = arith.addf %19, %22 : vector<128x1xf32>
    %c0_18 = arith.constant 0 : index
    %c0_19 = arith.constant 0 : index
    %c0_20 = arith.constant 0 : index
    %24 = vector.load %arg7[%c0_18, %c0_19, %c0_20] : memref<1x128x1xf32, #tpu.memory_space<vmem>>, vector<1x128x1xf32>
    %25 = vector.shape_cast %24 : vector<1x128x1xf32> to vector<128x1xf32>
    %26 = vector.shape_cast %23 : vector<128x1xf32> to vector<1x128x1xf32>
    tpu.vector_store %arg7[%c0_18, %c0_19, %c0_20], %26 {strides = array<i32>} : memref<1x128x1xf32, #tpu.memory_space<vmem>>, vector<1x128x1xf32>,
    %27 = arith.truncf %6 : vector<128x128xf32> to vector<128x128xbf16>
    %c0_21 = arith.constant 0 : index
    %c0_22 = arith.constant 0 : index
    %c0_23 = arith.constant 0 : index
    %28 = vector.load %arg5[%c0_21, %c0_22, %c0_23] : memref<1x128x128xbf16, #tpu.memory_space<vmem>>, vector<1x128x128xbf16>
    %29 = vector.shape_cast %28 : vector<1x128x128xbf16> to vector<128x128xbf16>
    %30 = vector.shape_cast %27 : vector<128x128xbf16> to vector<1x128x128xbf16>
    tpu.vector_store %arg5[%c0_21, %c0_22, %c0_23], %30 {strides = array<i32>} : memref<1x128x128xbf16, #tpu.memory_space<vmem>>, vector<1x128x128xbf16>,
    return
  }
  func.func @transform_0(%arg0: i32, %arg1: i32) -> (i32, i32, i32) {
    %c0_i32 = arith.constant 0 : i32
    %c0_i32_0 = arith.constant 0 : i32
    return %arg0, %c0_i32, %arg1 : i32, i32, i32
  }
  func.func @transform_1(%arg0: i32, %arg1: i32) -> (i32, i32) {
    %c0_i32 = arith.constant 0 : i32
    %c0_i32_0 = arith.constant 0 : i32
    %c0_i32_1 = arith.constant 0 : i32
    return %c0_i32, %c0_i32_0 : i32, i32
  }
  func.func @transform_2(%arg0: i32, %arg1: i32) -> (i32, i32) {
    %c0_i32 = arith.constant 0 : i32
    %c0_i32_0 = arith.constant 0 : i32
    %c0_i32_1 = arith.constant 0 : i32
    return %c0_i32, %c0_i32_0 : i32, i32
  }
  func.func @transform_3(%arg0: i32, %arg1: i32) -> (i32, i32, i32) {
    %c0_i32 = arith.constant 0 : i32
    %c0_i32_0 = arith.constant 0 : i32
    return %arg0, %c0_i32, %arg1 : i32, i32, i32
  }
  func.func @transform_4(%arg0: i32, %arg1: i32) -> (i32, i32, i32) {
    %c0_i32 = arith.constant 0 : i32
    %c0_i32_0 = arith.constant 0 : i32
    %c0_i32_1 = arith.constant 0 : i32
    return %arg0, %c0_i32, %c0_i32_0 : i32, i32, i32
  }
  func.func @transform_5(%arg0: i32, %arg1: i32) -> (i32, i32, i32) {
    %c0_i32 = arith.constant 0 : i32
    %c0_i32_0 = arith.constant 0 : i32
    %c0_i32_1 = arith.constant 0 : i32
    return %arg0, %c0_i32, %c0_i32_0 : i32, i32, i32
  }
}

module attributes {stable_mosaic.version = 11 : i64} {
  func.func @_in_act_kernel(%arg0: i32, %arg1: i32, %arg2: memref<1x128x128xbf16, #tpu.memory_space<vmem>>, %arg3: memref<1x128x1xf32, #tpu.memory_space<vmem>>, %arg4: memref<1x128x1xf32, #tpu.memory_space<vmem>>, %arg5: memref<1x128x128xbf16, #tpu.memory_space<vmem>>) attributes {dimension_semantics = [#tpu.dimension_semantics<parallel>, #tpu.dimension_semantics<parallel>], iteration_bounds = array<i64: 2, 1>, scalar_prefetch = 0 : i64, scratch_operands = 0 : i64, tpu.core_type = #tpu.core_type<tc>, window_params = [{transform_indices = @transform_0, window_bounds = array<i64: 1, 128, 128>}, {transform_indices = @transform_1, window_bounds = array<i64: 1, 128, 1>}, {transform_indices = @transform_2, window_bounds = array<i64: 1, 128, 1>}, {transform_indices = @transform_3, window_bounds = array<i64: 1, 128, 128>}]} {
    %c0 = arith.constant 0 : index
    %c0_0 = arith.constant 0 : index
    %c0_1 = arith.constant 0 : index
    %0 = vector.load %arg2[%c0, %c0_0, %c0_1] : memref<1x128x128xbf16, #tpu.memory_space<vmem>>, vector<1x128x128xbf16>
    %1 = vector.shape_cast %0 : vector<1x128x128xbf16> to vector<128x128xbf16>
    %2 = arith.extf %1 : vector<128x128xbf16> to vector<128x128xf32>
    %c0_2 = arith.constant 0 : index
    %c0_3 = arith.constant 0 : index
    %c0_4 = arith.constant 0 : index
    %3 = vector.load %arg3[%c0_2, %c0_3, %c0_4] : memref<1x128x1xf32, #tpu.memory_space<vmem>>, vector<1x128x1xf32>
    %4 = vector.shape_cast %3 : vector<1x128x1xf32> to vector<128x1xf32>
    %cst = arith.constant 1.250000e-01 : f32
    %5 = vector.broadcast %cst : f32 to vector<128x1xf32>
    %6 = arith.mulf %4, %5 : vector<128x1xf32>
    %c0_5 = arith.constant 0 : index
    %c0_6 = arith.constant 0 : index
    %c0_7 = arith.constant 0 : index
    %7 = vector.load %arg4[%c0_5, %c0_6, %c0_7] : memref<1x128x1xf32, #tpu.memory_space<vmem>>, vector<1x128x1xf32>
    %8 = vector.shape_cast %7 : vector<1x128x1xf32> to vector<128x1xf32>
    %cst_8 = arith.constant 1.250000e-01 : f32
    %9 = vector.broadcast %cst_8 : f32 to vector<128x1xf32>
    %10 = arith.mulf %8, %9 : vector<128x1xf32>
    %11 = arith.mulf %6, %6 : vector<128x1xf32>
    %12 = arith.subf %10, %11 : vector<128x1xf32>
    %cst_9 = arith.constant 0.000000e+00 : f32
    %13 = vector.broadcast %cst_9 : f32 to vector<128x1xf32>
    %14 = arith.maximumf %12, %13 : vector<128x1xf32>
    %15 = vector.broadcast %6 : vector<128x1xf32> to vector<128x128xf32>
    %16 = arith.subf %2, %15 : vector<128x128xf32>
    %cst_10 = arith.constant 9.99999974E-6 : f32
    %17 = vector.broadcast %cst_10 : f32 to vector<128x1xf32>
    %18 = arith.addf %14, %17 : vector<128x1xf32>
    %19 = math.rsqrt %18 : vector<128x1xf32>
    %20 = vector.broadcast %19 : vector<128x1xf32> to vector<128x128xf32>
    %21 = arith.mulf %16, %20 : vector<128x128xf32>
    %cst_11 = arith.constant 0.000000e+00 : f32
    %22 = vector.broadcast %cst_11 : f32 to vector<128x128xf32>
    %23 = arith.cmpf oge, %21, %22 : vector<128x128xf32>
    %cst_12 = arith.constant 2.000000e-01 : f32
    %24 = vector.broadcast %cst_12 : f32 to vector<128x128xf32>
    %25 = arith.mulf %24, %21 : vector<128x128xf32>
    %26 = arith.select %23, %21, %25 : vector<128x128xi1>, vector<128x128xf32>
    %27 = arith.truncf %26 : vector<128x128xf32> to vector<128x128xbf16>
    %c0_13 = arith.constant 0 : index
    %c0_14 = arith.constant 0 : index
    %c0_15 = arith.constant 0 : index
    %28 = vector.load %arg5[%c0_13, %c0_14, %c0_15] : memref<1x128x128xbf16, #tpu.memory_space<vmem>>, vector<1x128x128xbf16>
    %29 = vector.shape_cast %28 : vector<1x128x128xbf16> to vector<128x128xbf16>
    %30 = vector.shape_cast %27 : vector<128x128xbf16> to vector<1x128x128xbf16>
    tpu.vector_store %arg5[%c0_13, %c0_14, %c0_15], %30 {strides = array<i32>} : memref<1x128x128xbf16, #tpu.memory_space<vmem>>, vector<1x128x128xbf16>,
    return
  }
  func.func @transform_0(%arg0: i32, %arg1: i32) -> (i32, i32, i32) {
    %c0_i32 = arith.constant 0 : i32
    %c0_i32_0 = arith.constant 0 : i32
    return %arg0, %c0_i32, %arg1 : i32, i32, i32
  }
  func.func @transform_1(%arg0: i32, %arg1: i32) -> (i32, i32, i32) {
    %c0_i32 = arith.constant 0 : i32
    %c0_i32_0 = arith.constant 0 : i32
    %c0_i32_1 = arith.constant 0 : i32
    return %arg0, %c0_i32, %c0_i32_0 : i32, i32, i32
  }
  func.func @transform_2(%arg0: i32, %arg1: i32) -> (i32, i32, i32) {
    %c0_i32 = arith.constant 0 : i32
    %c0_i32_0 = arith.constant 0 : i32
    %c0_i32_1 = arith.constant 0 : i32
    return %arg0, %c0_i32, %c0_i32_0 : i32, i32, i32
  }
  func.func @transform_3(%arg0: i32, %arg1: i32) -> (i32, i32, i32) {
    %c0_i32 = arith.constant 0 : i32
    %c0_i32_0 = arith.constant 0 : i32
    return %arg0, %c0_i32, %arg1 : i32, i32, i32
  }
}

</mosaic_0001>

<llo_original>
// kernel: a_call__.7
$region0: #{a_call__.7}
  #allocation0 [shape = 'u32[]', space=smem, size = 0x4, offset = 0x4, fixed_abs, tag = 'smem constant byte address 0x4 - core index']
  #allocation1 [shape = 'u32[144,128]{1,0:T(1,128)}', space=vmem, size = 0x12000, scoped, tag = 'internal scratch']
  %s0 = inlined_call_operand.vmem [shape: bf16[2,64,1024], index: 0, kind: input, shape index: {}]
  %s1 = inlined_call_operand.vmem [shape: bf16[16,64], index: 1, kind: input, shape index: {}]
  %s2 = inlined_call_operand.vmem [shape: f32[16,1], index: 2, kind: input, shape index: {}]
  %s3 = inlined_call_operand.vmem [shape: bf16[2,16,1024], index: 3, kind: output, shape index: {}]
  %s4 = sld [smem:[#allocation0]]
  $region87: #{a_call__.7} parent=0
    _
  %s6 = ssub.s32 1, %s4
  %s7 = scalar_select 0, %s6, %s4
  $region1: #{a_call__.7} parent=0
    #allocation2 [shape = 'u8[131072]{0}', space=vmem, size = 0x20000, scoped, tag = 'input window, operand 0']
    #allocation3 [shape = 'u8[32768]{0}', space=vmem, size = 0x8000, scoped, tag = 'output window, operand 0']
    loop: start=0, step=1, limit=6
    $region2: #{a_call__.7} parent=1 // loop_pre_header
      _
    $region3: #{a_call__.7} parent=1 // loop_header
      %s9 = sphi 0, %s13
      %p10 = scmp.ge.s32.totalorder %s9, 6
      %s16 = sphi 0, %s28
      %s17 = sphi 0, %s24
      %s18 = sphi 0, %s16
      %s19 = sphi 0, %s17
      %s20 = sphi 0, %s18
      %s21 = sphi 0, %s19
      %s33 = sphi 0, %s35
      %s36 = sphi 0, %s33
      %s37 = sphi 0, %s36
      %s53 = sphi 0, %s37
      %s57 = sphi 0, %s57
      %s59 = sphi 0, %s57
      %s60 = sphi 0, %s59
      %s74 = sphi 0, %s60
      %s78 = sphi 0, %s78
      %s80 = sphi 0, %s78
      %s81 = sphi 0, %s80
      %s95 = sphi 0, %s81
      %s103 = sphi 0, %s105
      %s106 = sphi 0, %s103
      %s107 = sphi 0, %s106
      %s123 = sphi 0, %s107
    $region4: #{a_call__.7} parent=1 // loop_header_branch
      %12 = sbr.rel (%p10) target = $region8
    $region5: #{a_call__.7} parent=1 // loop_body
      %s14 = ssub.s32 %s9, 1
      %s15 = ssub.s32 %s9, 2
      %s22 = sadd.s32 1, %s17
      %p23 = scmp.ge.s32.totalorder %s22, 2
      %s24 = scalar_select %p23, 0, %s22
      %s25 = sadd.s32 1, %s16
      %s26 = scalar_select %p23, %s25, %s16
      %p27 = scmp.ge.s32.totalorder %s26, 2
      %s28 = scalar_select %p27, 0, %s26
      %s29 = ssub.s32 %s16, %s28
      %s30 = ssub.s32 %s17, %s24
      %s31 = sor.u32 %s29, %s30
      %p32 = scmp.eq.s32.totalorder %s31, 0
      %s34 = sadd.s32 %s33, 1
      %s35 = scalar_select %p32, %s33, %s34
      %p38 = pneg %p32
      %p39 = scmp.eq.s32.totalorder %s9, 3
      %p40 = por %p38, %p39
      %p41 = scmp.ne.s32.totalorder %s33, %s36
      %p42 = scmp.eq.s32.totalorder %s9, 0
      %p43 = por %p41, %p42
      %p44 = scmp.ne.s32.totalorder %s33, %s36
      %p45 = scmp.eq.s32.totalorder %s14, 3
      %p46 = por %p44, %p45
      %p47 = scmp.ne.s32.totalorder %s36, %s37
      %p48 = scmp.eq.s32.totalorder %s14, 0
      %p49 = por %p47, %p48
      %p50 = scmp.ne.s32.totalorder %s36, %s37
      %p51 = scmp.eq.s32.totalorder %s15, 3
      %p52 = por %p50, %p51
      %p54 = scmp.ne.s32.totalorder %s37, %s53
      %p55 = scmp.eq.s32.totalorder %s15, 0
      %p56 = por %p54, %p55
      %s58 = sadd.s32 %s57, 1
      %p61 = scmp.eq.s32.totalorder %s9, 3
      %p62 = scmp.ne.s32.totalorder %s57, %s59
      %p63 = scmp.eq.s32.totalorder %s9, 0
      %p64 = por %p62, %p63
      %p65 = scmp.ne.s32.totalorder %s57, %s59
      %p66 = scmp.eq.s32.totalorder %s14, 3
      %p67 = por %p65, %p66
      %p68 = scmp.ne.s32.totalorder %s59, %s60
      %p69 = scmp.eq.s32.totalorder %s14, 0
      %p70 = por %p68, %p69
      %p71 = scmp.ne.s32.totalorder %s59, %s60
      %p72 = scmp.eq.s32.totalorder %s15, 3
      %p73 = por %p71, %p72
      %p75 = scmp.ne.s32.totalorder %s60, %s74
      %p76 = scmp.eq.s32.totalorder %s15, 0
      %p77 = por %p75, %p76
      %s79 = sadd.s32 %s78, 1
      %p82 = scmp.eq.s32.totalorder %s9, 3
      %p83 = scmp.ne.s32.totalorder %s78, %s80
      %p84 = scmp.eq.s32.totalorder %s9, 0
      %p85 = por %p83, %p84
      %p86 = scmp.ne.s32.totalorder %s78, %s80
      %p87 = scmp.eq.s32.totalorder %s14, 3
      %p88 = por %p86, %p87
      %p89 = scmp.ne.s32.totalorder %s80, %s81
      %p90 = scmp.eq.s32.totalorder %s14, 0
      %p91 = por %p89, %p90
      %p92 = scmp.ne.s32.totalorder %s80, %s81
      %p93 = scmp.eq.s32.totalorder %s15, 3
      %p94 = por %p92, %p93
      %p96 = scmp.ne.s32.totalorder %s81, %s95
      %p97 = scmp.eq.s32.totalorder %s15, 0
      %p98 = por %p96, %p97
      %s99 = ssub.s32 %s16, %s28
      %s100 = ssub.s32 %s17, %s24
      %s101 = sor.u32 %s99, %s100
      %p102 = scmp.eq.s32.totalorder %s101, 0
      %s104 = sadd.s32 %s103, 1
      %s105 = scalar_select %p102, %s103, %s104
      %p108 = pneg %p102
      %p109 = scmp.eq.s32.totalorder %s9, 3
      %p110 = por %p108, %p109
      %p111 = scmp.ne.s32.totalorder %s103, %s106
      %p112 = scmp.eq.s32.totalorder %s9, 0
      %p113 = por %p111, %p112
      %p114 = scmp.ne.s32.totalorder %s103, %s106
      %p115 = scmp.eq.s32.totalorder %s14, 3
      %p116 = por %p114, %p115
      %p117 = scmp.ne.s32.totalorder %s106, %s107
      %p118 = scmp.eq.s32.totalorder %s14, 0
      %p119 = por %p117, %p118
      %p120 = scmp.ne.s32.totalorder %s106, %s107
      %p121 = scmp.eq.s32.totalorder %s15, 3
      %p122 = por %p120, %p121
      %p124 = scmp.ne.s32.totalorder %s107, %s123
      %p125 = scmp.eq.s32.totalorder %s15, 0
      %p126 = por %p124, %p125
      %p127 = scmp.le.s32.totalorder 1, %s9
      %p128 = scmp.lt.s32.totalorder %s9, 5
      %p129 = pnand %p127, %p128
      %p130 = pneg %p129
      // Predicated region
      $region9: #{a_call__.7} parent=5 // pred_check
        _
      $region10: #{a_call__.7} parent=5 // pred_check_branch
        %132 = sbr.rel (%p129) target = $region12
      $region11: #{a_call__.7} parent=5 // pred_region
        %s133 = ssub.s32 %s9, 1
        // Predicated region
        $region13: #{a_call__.7} parent=11 // pred_check
          %p134 = pneg %p70
        $region14: #{a_call__.7} parent=11 // pred_check_branch
          %136 = sbr.rel (%p134) target = $region16
        $region15: #{a_call__.7} parent=11 // pred_region
          _
        $region16: #{a_call__.7} parent=11 // pred_fallthru
          _
        // Predicated region
        $region17: #{a_call__.7} parent=11 // pred_check
          %p137 = pneg %p91
        $region18: #{a_call__.7} parent=11 // pred_check_branch
          %139 = sbr.rel (%p137) target = $region20
        $region19: #{a_call__.7} parent=11 // pred_region
          _
        $region20: #{a_call__.7} parent=11 // pred_fallthru
          _
      $region12: #{a_call__.7} parent=5 // pred_fallthru
        _
      %p140 = scmp.lt.s32.totalorder %s9, 4
      // Predicated region
      $region21: #{a_call__.7} parent=5 // pred_check
        %p141 = pneg %p140
      $region22: #{a_call__.7} parent=5 // pred_check_branch
        %143 = sbr.rel (%p141) target = $region24
      $region23: #{a_call__.7} parent=5 // pred_region
        // Predicated region
        $region25: #{a_call__.7} parent=23 // pred_check
          %p144 = pneg %p43
        $region26: #{a_call__.7} parent=23 // pred_check_branch
          %146 = sbr.rel (%p144) target = $region28
        $region27: #{a_call__.7} parent=23 // pred_region
          %s147 = sand.u32 %s33, 1
          %s148 = sand.u32 %s33, 1
          %s149 = smul.addr %s148, 128
          %s150 = scalar_lea.vmem [#allocation2], %s149
          %s151 = smul.u32 4, %s17
          %s152 = smul.addr %s16, 64
          %s153 = sadd.s32 %s151, %s152
          %s154 = smul.addr %s153, 4
          %s155 = scalar_lea.vmem %s0, %s154
          // Predicated region
          $region29: #{a_call__.7} parent=27 // pred_check
            _
          $region30: #{a_call__.7} parent=27 // pred_check_branch
            %157 = sbr.rel (0) target = $region32
          $region31: #{a_call__.7} parent=27 // pred_region
            // Predicated region
            $region33: #{a_call__.7} parent=31 // pred_check
              _
            $region34: #{a_call__.7} parent=31 // pred_check_branch
              %159 = sbr.rel (0) target = $region36
            $region35: #{a_call__.7} parent=31 // pred_region
              loop: start=0, step=1, limit=1
              $region37: #{a_call__.7} parent=35 // loop_pre_header
                _
              $region38: #{a_call__.7} parent=35 // loop_header
                %s161 = sphi 0, %s165
                %p162 = scmp.ge.s32.totalorder %s161, 1
                %s166 = sphi %s155, %s155
                %s167 = sphi %s150, %s150
              $region39: #{a_call__.7} parent=35 // loop_header_branch
                %164 = sbr.rel (%p162) target = $region43
              $region40: #{a_call__.7} parent=35 // loop_body
                %v168 = vld [vmem:[%s166] sm:$0xff]
                %169 = vst [vmem:[%s167] sm:$0xff] %v168
                %v170 = vld [vmem:[%s166 + $0x8] sm:$0xff]
                %171 = vst [vmem:[%s167 + $0x8] sm:$0xff] %v170
                %v172 = vld [vmem:[%s166 + $0x20] sm:$0xff]
                %173 = vst [vmem:[%s167 + $0x10] sm:$0xff] %v172
                %v174 = vld [vmem:[%s166 + $0x28] sm:$0xff]
                %175 = vst [vmem:[%s167 + $0x18] sm:$0xff] %v174
                %v176 = vld [vmem:[%s166 + $0x40] sm:$0xff]
                %177 = vst [vmem:[%s167 + $0x20] sm:$0xff] %v176
                %v178 = vld [vmem:[%s166 + $0x48] sm:$0xff]
                %179 = vst [vmem:[%s167 + $0x28] sm:$0xff] %v178
                %v180 = vld [vmem:[%s166 + $0x60] sm:$0xff]
                %181 = vst [vmem:[%s167 + $0x30] sm:$0xff] %v180
                %v182 = vld [vmem:[%s166 + $0x68] sm:$0xff]
                %183 = vst [vmem:[%s167 + $0x38] sm:$0xff] %v182
                %v184 = vld [vmem:[%s166 + $0x80] sm:$0xff]
                %185 = vst [vmem:[%s167 + $0x40] sm:$0xff] %v184
                %v186 = vld [vmem:[%s166 + $0x88] sm:$0xff]
                %187 = vst [vmem:[%s167 + $0x48] sm:$0xff] %v186
                %v188 = vld [vmem:[%s166 + $0xa0] sm:$0xff]
                %189 = vst [vmem:[%s167 + $0x50] sm:$0xff] %v188
                %v190 = vld [vmem:[%s166 + $0xa8] sm:$0xff]
                %191 = vst [vmem:[%s167 + $0x58] sm:$0xff] %v190
                %v192 = vld [vmem:[%s166 + $0xc0] sm:$0xff]
                %193 = vst [vmem:[%s167 + $0x60] sm:$0xff] %v192
                %v194 = vld [vmem:[%s166 + $0xc8] sm:$0xff]
                %195 = vst [vmem:[%s167 + $0x68] sm:$0xff] %v194
                %v196 = vld [vmem:[%s166 + $0xe0] sm:$0xff]
                %197 = vst [vmem:[%s167 + $0x70] sm:$0xff] %v196
                %v198 = vld [vmem:[%s166 + $0xe8] sm:$0xff]
                %199 = vst [vmem:[%s167 + $0x78] sm:$0xff] %v198
              $region41: #{a_call__.7} parent=35 // loop_footer
                %s165 = sadd.s32 1, %s161
              $region42: #{a_call__.7} parent=35 // loop_footer_branch
                %160 = sbr.rel target = $region38
              $region43: #{a_call__.7} parent=35 // loop_exit
                _
            $region36: #{a_call__.7} parent=31 // pred_fallthru
              _
            // Predicated region
            $region44: #{a_call__.7} parent=31 // pred_check
              _
            $region45: #{a_call__.7} parent=31 // pred_check_branch
              %201 = sbr.rel target = $region47
            $region46: #{a_call__.7} parent=31 // pred_region
              _
            $region47: #{a_call__.7} parent=31 // pred_fallthru
              _
          $region32: #{a_call__.7} parent=27 // pred_fallthru
            _
          %202 = vnop
        $region28: #{a_call__.7} parent=23 // pred_fallthru
          _
      $region24: #{a_call__.7} parent=5 // pred_fallthru
        _
      %p203 = scmp.le.s32.totalorder 1, %s9
      %p204 = scmp.lt.s32.totalorder %s9, 5
      %p205 = pnand %p203, %p204
      %p206 = pneg %p205
      // Predicated region
      $region48: #{a_call__.7} parent=5 // pred_check
        _
      $region49: #{a_call__.7} parent=5 // pred_check_branch
        %208 = sbr.rel (%p205) target = $region51
      $region50: #{a_call__.7} parent=5 // pred_region
        %s209 = ssub.s32 %s9, 1
        %s210 = sand.u32 %s36, 1
        %s211 = sand.u32 %s36, 1
        %s212 = smul.addr %s211, 128
        %s213 = scalar_lea.vmem [#allocation2], %s212
        // Predicated region
        $region52: #{a_call__.7} parent=50 // pred_check
          %p214 = pneg %p49
        $region53: #{a_call__.7} parent=50 // pred_check_branch
          %216 = sbr.rel (%p214) target = $region55
        $region54: #{a_call__.7} parent=50 // pred_region
          _
        $region55: #{a_call__.7} parent=50 // pred_fallthru
          _
        %s217 = sand.u32 %s36, 1
        %s218 = sand.u32 %s36, 1
        %s219 = smul.addr %s218, 128
        %s220 = scalar_lea.vmem [#allocation2], %s219
        %p221 = pneg %p49
        %p222 = pneg %p46
        %p223 = pneg %p70
        %p224 = pneg %p67
        %p225 = pneg %p91
        %p226 = pneg %p88
        %p227 = pneg %p119
        %p228 = pneg %p116
        %s229 = sand.u32 %s106, 1
        %s230 = sand.u32 %s106, 1
        %s231 = smul.addr %s230, 32
        %s232 = scalar_lea.vmem [#allocation3], %s231
        %s233 = smul.u32 4, %s19
        %s234 = smul.u32 4, %s19
        %v236 = vld [vmem:[%s1] sm:$0xf]
        %v237 = vld [vmem:[%s1 + $0x4] sm:$0xf]
        %v238 = vld [vmem:[%s213] sm:$0xff]
        %v239 = vld [vmem:[%s213 + $0x8] sm:$0xff]
        %v240 = vld [vmem:[%s213 + $0x10] sm:$0xff]
        %v241 = vld [vmem:[%s213 + $0x18] sm:$0xff]
        %v242 = vld [vmem:[%s213 + $0x20] sm:$0xff]
        %v243 = vld [vmem:[%s213 + $0x28] sm:$0xff]
        %v244 = vld [vmem:[%s213 + $0x30] sm:$0xff]
        %v245 = vld [vmem:[%s213 + $0x38] sm:$0xff]
        %v246 = vld [vmem:[%s213 + $0x40] sm:$0xff]
        %v247 = vld [vmem:[%s213 + $0x48] sm:$0xff]
        %v248 = vld [vmem:[%s213 + $0x50] sm:$0xff]
        %v249 = vld [vmem:[%s213 + $0x58] sm:$0xff]
        %v250 = vld [vmem:[%s213 + $0x60] sm:$0xff]
        %v251 = vld [vmem:[%s213 + $0x68] sm:$0xff]
        %v252 = vld [vmem:[%s213 + $0x70] sm:$0xff]
        %v253 = vld [vmem:[%s213 + $0x78] sm:$0xff]
        %v254 = vld [vmem:[%s2] sm:$0xff]
        %v255 = vld [vmem:[%s2 + $0x8] sm:$0xff]
        %257 = vset.pattern.permute.xlu0 0
        %258 = vperm.xlu0 %257, %v254
        %v259 = vpop.permute.xlu0 %258
        %262 = vset.pattern.permute.xlu0 0
        %263 = vperm.xlu0 %262, %v255
        %v264 = vpop.permute.xlu0 %263
        %v268 = vunpack.c.l.b16 %v236
        %v269 = vunpack.c.l.b16 %v237
        %v270 = vpack.c.b16 %v269, %v268
        %v287 = vunpack.c.l.b16 %v238
        %v288 = vunpack.c.h.b16 %v238
        %v289 = vunpack.c.l.b16 %v239
        %v290 = vunpack.c.h.b16 %v239
        %v291 = vunpack.c.l.b16 %v240
        %v292 = vunpack.c.h.b16 %v240
        %v293 = vunpack.c.l.b16 %v241
        %v294 = vunpack.c.h.b16 %v241
        %v295 = vunpack.c.l.b16 %v242
        %v296 = vunpack.c.h.b16 %v242
        %v297 = vunpack.c.l.b16 %v243
        %v298 = vunpack.c.h.b16 %v243
        %v299 = vunpack.c.l.b16 %v244
        %v300 = vunpack.c.h.b16 %v244
        %v301 = vunpack.c.l.b16 %v245
        %v302 = vunpack.c.h.b16 %v245
        %v303 = vunpack.c.l.b16 %v246
        %v304 = vunpack.c.h.b16 %v246
        %v305 = vunpack.c.l.b16 %v247
        %v306 = vunpack.c.h.b16 %v247
        %v307 = vunpack.c.l.b16 %v248
        %v308 = vunpack.c.h.b16 %v248
        %v309 = vunpack.c.l.b16 %v249
        %v310 = vunpack.c.h.b16 %v249
        %v311 = vunpack.c.l.b16 %v250
        %v312 = vunpack.c.h.b16 %v250
        %v313 = vunpack.c.l.b16 %v251
        %v314 = vunpack.c.h.b16 %v251
        %v315 = vunpack.c.l.b16 %v252
        %v316 = vunpack.c.h.b16 %v252
        %v317 = vunpack.c.l.b16 %v253
        %v318 = vunpack.c.h.b16 %v253
        %v319 = vpack.c.b16 %v291, %v287
        %v320 = vpack.c.b16 %v292, %v288
        %v321 = vpack.c.b16 %v293, %v289
        %v322 = vpack.c.b16 %v294, %v290
        %v323 = vpack.c.b16 %v299, %v295
        %v324 = vpack.c.b16 %v300, %v296
        %v325 = vpack.c.b16 %v301, %v297
        %v326 = vpack.c.b16 %v302, %v298
        %v327 = vpack.c.b16 %v307, %v303
        %v328 = vpack.c.b16 %v308, %v304
        %v329 = vpack.c.b16 %v309, %v305
        %v330 = vpack.c.b16 %v310, %v306
        %v331 = vpack.c.b16 %v315, %v311
        %v332 = vpack.c.b16 %v316, %v312
        %v333 = vpack.c.b16 %v317, %v313
        %v334 = vpack.c.b16 %v318, %v314
        %vm351 = vcmask 523264
        %v353 = vsel %vm351, %v270, 0
        %355 = vmatprep.subr.bf16.mxu0 %v320
        %356 = vmatpush1.bf16.msra.mxu0 %v319
        %357 = vmatprep.subr.bf16.mxu0 %v324
        %358 = vmatpush1.bf16.msra.mxu0 %v323
        %359 = vmatprep.subr.bf16.mxu0 %v328
        %360 = vmatpush1.bf16.msra.mxu0 %v327
        %361 = vmatprep.subr.bf16.mxu0 %v332
        %362 = vmatpush1.bf16.msra.mxu0 %v331
        %363 = vmatprep.subr.bf16.mxu0 0
        %364 = vmatpush1.bf16.msra.mxu0 0
        %365 = vmatprep.subr.bf16.mxu0 0
        %366 = vmatpush1.bf16.msra.mxu0 0
        %367 = vmatprep.subr.bf16.mxu0 0
        %368 = vmatpush1.bf16.msra.mxu0 0
        %369 = vmatprep.subr.bf16.mxu0 0
        %370 = vmatpush1.bf16.msra.mxu0 0
        %371 = vmatprep.subr.bf16.mxu0 0
        %372 = vmatpush1.bf16.msra.mxu0 0
        %373 = vmatprep.subr.bf16.mxu0 0
        %374 = vmatpush1.bf16.msra.mxu0 0
        %375 = vmatprep.subr.bf16.mxu0 0
        %376 = vmatpush1.bf16.msra.mxu0 0
        %377 = vmatprep.subr.bf16.mxu0 0
        %378 = vmatpush1.bf16.msra.mxu0 0
        %379 = vmatprep.subr.bf16.mxu0 0
        %380 = vmatpush1.bf16.msra.mxu0 0
        %381 = vmatprep.subr.bf16.mxu0 0
        %382 = vmatpush1.bf16.msra.mxu0 0
        %383 = vmatprep.subr.bf16.mxu0 0
        %384 = vmatpush1.bf16.msra.mxu0 0
        %385 = vmatprep.subr.bf16.mxu0 0
        %386 = vmatpush1.bf16.msra.mxu0 0
        %387 = vmatprep.mubr.bf16.mxu0 0
        %388 = vmatmul.mubr.bf16.gmra.mrb[0].mxu0 %v353
        %v389 = vpop.f32.mrb[0].mxu0
        %v390 = vadd.f32 %v259, %v389
        %v391 = vpop.f32.mrb[0].mxu0
        %v392 = vadd.f32 %v259, %v391
        %v393 = vpop.f32.mrb[0].mxu0
        %v394 = vadd.f32 %v264, %v393
        %v395 = vpop.f32.mrb[0].mxu0
        %v396 = vadd.f32 %v264, %v395
        %397 = vdwg.mxu0
        %398 = vmatprep.subr.bf16.mxu0 %v322
        %399 = vmatpush1.bf16.msra.mxu0 %v321
        %400 = vmatprep.subr.bf16.mxu0 %v326
        %401 = vmatpush1.bf16.msra.mxu0 %v325
        %402 = vmatprep.subr.bf16.mxu0 %v330
        %403 = vmatpush1.bf16.msra.mxu0 %v329
        %404 = vmatprep.subr.bf16.mxu0 %v334
        %405 = vmatpush1.bf16.msra.mxu0 %v333
        %406 = vmatprep.subr.bf16.mxu0 0
        %407 = vmatpush1.bf16.msra.mxu0 0
        %408 = vmatprep.subr.bf16.mxu0 0
        %409 = vmatpush1.bf16.msra.mxu0 0
        %410 = vmatprep.subr.bf16.mxu0 0
        %411 = vmatpush1.bf16.msra.mxu0 0
        %412 = vmatprep.subr.bf16.mxu0 0
        %413 = vmatpush1.bf16.msra.mxu0 0
        %414 = vmatprep.subr.bf16.mxu0 0
        %415 = vmatpush1.bf16.msra.mxu0 0
        %416 = vmatprep.subr.bf16.mxu0 0
        %417 = vmatpush1.bf16.msra.mxu0 0
        %418 = vmatprep.subr.bf16.mxu0 0
        %419 = vmatpush1.bf16.msra.mxu0 0
        %420 = vmatprep.subr.bf16.mxu0 0
        %421 = vmatpush1.bf16.msra.mxu0 0
        %422 = vmatprep.subr.bf16.mxu0 0
        %423 = vmatpush1.bf16.msra.mxu0 0
        %424 = vmatprep.subr.bf16.mxu0 0
        %425 = vmatpush1.bf16.msra.mxu0 0
        %426 = vmatprep.subr.bf16.mxu0 0
        %427 = vmatpush1.bf16.msra.mxu0 0
        %428 = vmatprep.subr.bf16.mxu0 0
        %429 = vmatpush1.bf16.msra.mxu0 0
        %430 = vmatprep.mubr.bf16.mxu0 0
        %431 = vmatmul.mubr.bf16.gmra.mrb[0].mxu0 %v353
        %v432 = vpop.f32.mrb[0].mxu0
        %v433 = vadd.f32 %v259, %v432
        %v434 = vpop.f32.mrb[0].mxu0
        %v435 = vadd.f32 %v259, %v434
        %v436 = vpop.f32.mrb[0].mxu0
        %v437 = vadd.f32 %v264, %v436
        %v438 = vpop.f32.mrb[0].mxu0
        %v439 = vadd.f32 %v264, %v438
        %440 = vdwg.mxu0
        %vm441 = vcmp.ge.f32.partialorder %v390, 0.0
        %vm442 = vcmp.ge.f32.partialorder %v392, 0.0
        %vm443 = vcmp.ge.f32.partialorder %v433, 0.0
        %vm444 = vcmp.ge.f32.partialorder %v435, 0.0
        %vm445 = vcmp.ge.f32.partialorder %v394, 0.0
        %vm446 = vcmp.ge.f32.partialorder %v396, 0.0
        %vm447 = vcmp.ge.f32.partialorder %v437, 0.0
        %vm448 = vcmp.ge.f32.partialorder %v439, 0.0
        %v449 = vmul.f32 %v390, 0.2
        %v450 = vmul.f32 %v392, 0.2
        %v451 = vmul.f32 %v433, 0.2
        %v452 = vmul.f32 %v435, 0.2
        %v453 = vmul.f32 %v394, 0.2
        %v454 = vmul.f32 %v396, 0.2
        %v455 = vmul.f32 %v437, 0.2
        %v456 = vmul.f32 %v439, 0.2
        %v457 = vsel %vm441, %v390, %v449
        %v458 = vsel %vm442, %v392, %v450
        %v459 = vsel %vm443, %v433, %v451
        %v460 = vsel %vm444, %v435, %v452
        %v461 = vsel %vm445, %v394, %v453
        %v462 = vsel %vm446, %v396, %v454
        %v463 = vsel %vm447, %v437, %v455
        %v464 = vsel %vm448, %v439, %v456
        %v465 = vpack.c.bf16 %v461, %v457
        %v466 = vpack.c.bf16 %v462, %v458
        %v467 = vpack.c.bf16 %v463, %v459
        %v468 = vpack.c.bf16 %v464, %v460
        %v473 = vunpack.c.l.b16 %v465
        %v474 = vunpack.c.l.b16 %v466
        %v475 = vunpack.c.l.b16 %v467
        %v476 = vunpack.c.l.b16 %v468
        %v477 = vunpack.c.h.b16 %v465
        %v478 = vunpack.c.h.b16 %v466
        %v479 = vunpack.c.h.b16 %v467
        %v480 = vunpack.c.h.b16 %v468
        %v481 = vpack.c.b16 %v474, %v473
        %v482 = vpack.c.b16 %v476, %v475
        %v483 = vpack.c.b16 %v478, %v477
        %v484 = vpack.c.b16 %v480, %v479
        %489 = vst [vmem:[%s232] sm:$0xff] %v481
        %490 = vst [vmem:[%s232 + $0x8] sm:$0xff] %v482
        %491 = vst [vmem:[%s232 + $0x10] sm:$0xff] %v483
        %492 = vst [vmem:[%s232 + $0x18] sm:$0xff] %v484
        %s493 = sand.u32 %s106, 1
        %s494 = sand.u32 %s106, 1
        %s495 = smul.addr %s494, 32
        %s496 = scalar_lea.vmem [#allocation3], %s495
        // Predicated region
        $region56: #{a_call__.7} parent=50 // pred_check
          %p497 = pneg %p116
        $region57: #{a_call__.7} parent=50 // pred_check_branch
          %499 = sbr.rel (%p497) target = $region59
        $region58: #{a_call__.7} parent=50 // pred_region
          %s500 = smul.u32 4, %s19
          %s501 = smul.addr %s18, 16
          %s502 = sadd.s32 %s500, %s501
          %s503 = smul.addr %s502, 4
          %s504 = scalar_lea.vmem %s3, %s503
          // Predicated region
          $region60: #{a_call__.7} parent=58 // pred_check
            _
          $region61: #{a_call__.7} parent=58 // pred_check_branch
            %506 = sbr.rel (0) target = $region63
          $region62: #{a_call__.7} parent=58 // pred_region
            // Predicated region
            $region64: #{a_call__.7} parent=62 // pred_check
              _
            $region65: #{a_call__.7} parent=62 // pred_check_branch
              %508 = sbr.rel (0) target = $region67
            $region66: #{a_call__.7} parent=62 // pred_region
              loop: start=0, step=1, limit=1
              $region68: #{a_call__.7} parent=66 // loop_pre_header
                _
              $region69: #{a_call__.7} parent=66 // loop_header
                %s510 = sphi 0, %s514
                %p511 = scmp.ge.s32.totalorder %s510, 1
                %s515 = sphi %s496, %s496
                %s516 = sphi %s504, %s504
              $region70: #{a_call__.7} parent=66 // loop_header_branch
                %513 = sbr.rel (%p511) target = $region74
              $region71: #{a_call__.7} parent=66 // loop_body
                %v517 = vld [vmem:[%s515] sm:$0xff]
                %518 = vst [vmem:[%s516] sm:$0xff] %v517
                %v519 = vld [vmem:[%s515 + $0x8] sm:$0xff]
                %520 = vst [vmem:[%s516 + $0x8] sm:$0xff] %v519
                %v521 = vld [vmem:[%s515 + $0x10] sm:$0xff]
                %522 = vst [vmem:[%s516 + $0x20] sm:$0xff] %v521
                %v523 = vld [vmem:[%s515 + $0x18] sm:$0xff]
                %524 = vst [vmem:[%s516 + $0x28] sm:$0xff] %v523
              $region72: #{a_call__.7} parent=66 // loop_footer
                %s514 = sadd.s32 1, %s510
              $region73: #{a_call__.7} parent=66 // loop_footer_branch
                %509 = sbr.rel target = $region69
              $region74: #{a_call__.7} parent=66 // loop_exit
                _
            $region67: #{a_call__.7} parent=62 // pred_fallthru
              _
            // Predicated region
            $region75: #{a_call__.7} parent=62 // pred_check
              _
            $region76: #{a_call__.7} parent=62 // pred_check_branch
              %526 = sbr.rel target = $region78
            $region77: #{a_call__.7} parent=62 // pred_region
              _
            $region78: #{a_call__.7} parent=62 // pred_fallthru
              _
          $region63: #{a_call__.7} parent=58 // pred_fallthru
            _
          %527 = vnop
        $region59: #{a_call__.7} parent=50 // pred_fallthru
          _
      $region51: #{a_call__.7} parent=5 // pred_fallthru
        _
      %p528 = scmp.le.s32.totalorder 2, %s9
      // Predicated region
      $region79: #{a_call__.7} parent=5 // pred_check
        %p529 = pneg %p528
      $region80: #{a_call__.7} parent=5 // pred_check_branch
        %531 = sbr.rel (%p529) target = $region82
      $region81: #{a_call__.7} parent=5 // pred_region
        %s532 = ssub.s32 %s9, 2
        // Predicated region
        $region83: #{a_call__.7} parent=81 // pred_check
          %p533 = pneg %p122
        $region84: #{a_call__.7} parent=81 // pred_check_branch
          %535 = sbr.rel (%p533) target = $region86
        $region85: #{a_call__.7} parent=81 // pred_region
          %s536 = sand.u32 %s107, 1
          %s537 = sand.u32 %s107, 1
          %s538 = smul.addr %s537, 32
          %s539 = scalar_lea.vmem [#allocation3], %s538
        $region86: #{a_call__.7} parent=81 // pred_fallthru
          _
      $region82: #{a_call__.7} parent=5 // pred_fallthru
        _
    $region6: #{a_call__.7} parent=1 // loop_footer
      %s13 = sadd.s32 1, %s9
    $region7: #{a_call__.7} parent=1 // loop_footer_branch
      %8 = sbr.rel target = $region3
    $region8: #{a_call__.7} parent=1 // loop_exit
      _

// kernel: a_call__.8
$region0: #{a_call__.8}
  #allocation0 [shape = 'u32[]', space=smem, size = 0x4, offset = 0x4, fixed_abs, tag = 'smem constant byte address 0x4 - core index']
  #allocation1 [shape = 'u32[144,128]{1,0:T(1,128)}', space=vmem, size = 0x12000, scoped, tag = 'internal scratch']
  %s0 = inlined_call_operand.vmem [shape: bf16[2,1024,128], index: 0, kind: input, shape index: {}]
  %s1 = inlined_call_operand.vmem [shape: bf16[32,1024], index: 1, kind: input, shape index: {}]
  %s2 = inlined_call_operand.vmem [shape: f32[32,1], index: 2, kind: input, shape index: {}]
  %s3 = inlined_call_operand.vmem [shape: bf16[2,32,128], index: 3, kind: output, shape index: {0}]
  %s4 = inlined_call_operand.vmem [shape: f32[2,32,1], index: 4, kind: output, shape index: {1}]
  %s5 = inlined_call_operand.vmem [shape: f32[2,32,1], index: 5, kind: output, shape index: {2}]
  %6 = xla_tuple %s3, %s4, %s5
  %s7 = sld [smem:[#allocation0]]
  $region65: #{a_call__.8} parent=0
    _
  %s9 = ssub.s32 1, %s7
  %s10 = scalar_select 0, %s9, %s7
  loop: start=0, step=1, limit=4
  $region2: #{a_call__.8} parent=0 // loop_pre_header
    _
  $region3: #{a_call__.8} parent=0 // loop_header
    %s12 = sphi 0, %s16
    %p13 = scmp.ge.s32.totalorder %s12, 4
    %s19 = sphi 0, %s31
    %s20 = sphi 0, %s27
    %s21 = sphi 0, %s19
    %s22 = sphi 0, %s20
    %s23 = sphi 0, %s21
    %s24 = sphi 0, %s22
    %s36 = sphi 0, %s38
    %s39 = sphi 0, %s36
    %s40 = sphi 0, %s39
    %s56 = sphi 0, %s40
    %s60 = sphi 0, %s60
    %s62 = sphi 0, %s60
    %s63 = sphi 0, %s62
    %s77 = sphi 0, %s63
    %s81 = sphi 0, %s81
    %s83 = sphi 0, %s81
    %s84 = sphi 0, %s83
    %s98 = sphi 0, %s84
    %s106 = sphi 0, %s108
    %s109 = sphi 0, %s106
    %s110 = sphi 0, %s109
    %s126 = sphi 0, %s110
    %s132 = sphi 0, %s134
    %s135 = sphi 0, %s132
    %s136 = sphi 0, %s135
    %s152 = sphi 0, %s136
    %s158 = sphi 0, %s160
    %s161 = sphi 0, %s158
    %s162 = sphi 0, %s161
    %s178 = sphi 0, %s162
  $region4: #{a_call__.8} parent=0 // loop_header_branch
    %15 = sbr.rel (%p13) target = $region8
  $region5: #{a_call__.8} parent=0 // loop_body
    %s17 = ssub.s32 %s12, 1
    %s18 = ssub.s32 %s12, 2
    %s25 = sadd.s32 1, %s20
    %p26 = scmp.ge.s32.totalorder %s25, 1
    %s27 = scalar_select %p26, 0, %s25
    %s28 = sadd.s32 1, %s19
    %s29 = scalar_select %p26, %s28, %s19
    %p30 = scmp.ge.s32.totalorder %s29, 2
    %s31 = scalar_select %p30, 0, %s29
    %s32 = ssub.s32 %s19, %s31
    %s33 = ssub.s32 %s20, %s27
    %s34 = sor.u32 %s32, %s33
    %p35 = scmp.eq.s32.totalorder %s34, 0
    %s37 = sadd.s32 %s36, 1
    %s38 = scalar_select %p35, %s36, %s37
    %p41 = pneg %p35
    %p42 = scmp.eq.s32.totalorder %s12, 1
    %p43 = por %p41, %p42
    %p44 = scmp.ne.s32.totalorder %s36, %s39
    %p45 = scmp.eq.s32.totalorder %s12, 0
    %p46 = por %p44, %p45
    %p47 = scmp.ne.s32.totalorder %s36, %s39
    %p48 = scmp.eq.s32.totalorder %s17, 1
    %p49 = por %p47, %p48
    %p50 = scmp.ne.s32.totalorder %s39, %s40
    %p51 = scmp.eq.s32.totalorder %s17, 0
    %p52 = por %p50, %p51
    %p53 = scmp.ne.s32.totalorder %s39, %s40
    %p54 = scmp.eq.s32.totalorder %s18, 1
    %p55 = por %p53, %p54
    %p57 = scmp.ne.s32.totalorder %s40, %s56
    %p58 = scmp.eq.s32.totalorder %s18, 0
    %p59 = por %p57, %p58
    %s61 = sadd.s32 %s60, 1
    %p64 = scmp.eq.s32.totalorder %s12, 1
    %p65 = scmp.ne.s32.totalorder %s60, %s62
    %p66 = scmp.eq.s32.totalorder %s12, 0
    %p67 = por %p65, %p66
    %p68 = scmp.ne.s32.totalorder %s60, %s62
    %p69 = scmp.eq.s32.totalorder %s17, 1
    %p70 = por %p68, %p69
    %p71 = scmp.ne.s32.totalorder %s62, %s63
    %p72 = scmp.eq.s32.totalorder %s17, 0
    %p73 = por %p71, %p72
    %p74 = scmp.ne.s32.totalorder %s62, %s63
    %p75 = scmp.eq.s32.totalorder %s18, 1
    %p76 = por %p74, %p75
    %p78 = scmp.ne.s32.totalorder %s63, %s77
    %p79 = scmp.eq.s32.totalorder %s18, 0
    %p80 = por %p78, %p79
    %s82 = sadd.s32 %s81, 1
    %p85 = scmp.eq.s32.totalorder %s12, 1
    %p86 = scmp.ne.s32.totalorder %s81, %s83
    %p87 = scmp.eq.s32.totalorder %s12, 0
    %p88 = por %p86, %p87
    %p89 = scmp.ne.s32.totalorder %s81, %s83
    %p90 = scmp.eq.s32.totalorder %s17, 1
    %p91 = por %p89, %p90
    %p92 = scmp.ne.s32.totalorder %s83, %s84
    %p93 = scmp.eq.s32.totalorder %s17, 0
    %p94 = por %p92, %p93
    %p95 = scmp.ne.s32.totalorder %s83, %s84
    %p96 = scmp.eq.s32.totalorder %s18, 1
    %p97 = por %p95, %p96
    %p99 = scmp.ne.s32.totalorder %s84, %s98
    %p100 = scmp.eq.s32.totalorder %s18, 0
    %p101 = por %p99, %p100
    %s102 = ssub.s32 %s19, %s31
    %s103 = ssub.s32 %s20, %s27
    %s104 = sor.u32 %s102, %s103
    %p105 = scmp.eq.s32.totalorder %s104, 0
    %s107 = sadd.s32 %s106, 1
    %s108 = scalar_select %p105, %s106, %s107
    %p111 = pneg %p105
    %p112 = scmp.eq.s32.totalorder %s12, 1
    %p113 = por %p111, %p112
    %p114 = scmp.ne.s32.totalorder %s106, %s109
    %p115 = scmp.eq.s32.totalorder %s12, 0
    %p116 = por %p114, %p115
    %p117 = scmp.ne.s32.totalorder %s106, %s109
    %p118 = scmp.eq.s32.totalorder %s17, 1
    %p119 = por %p117, %p118
    %p120 = scmp.ne.s32.totalorder %s109, %s110
    %p121 = scmp.eq.s32.totalorder %s17, 0
    %p122 = por %p120, %p121
    %p123 = scmp.ne.s32.totalorder %s109, %s110
    %p124 = scmp.eq.s32.totalorder %s18, 1
    %p125 = por %p123, %p124
    %p127 = scmp.ne.s32.totalorder %s110, %s126
    %p128 = scmp.eq.s32.totalorder %s18, 0
    %p129 = por %p127, %p128
    %s130 = ssub.s32 %s19, %s31
    %p131 = scmp.eq.s32.totalorder %s130, 0
    %s133 = sadd.s32 %s132, 1
    %s134 = scalar_select %p131, %s132, %s133
    %p137 = pneg %p131
    %p138 = scmp.eq.s32.totalorder %s12, 1
    %p139 = por %p137, %p138
    %p140 = scmp.ne.s32.totalorder %s132, %s135
    %p141 = scmp.eq.s32.totalorder %s12, 0
    %p142 = por %p140, %p141
    %p143 = scmp.ne.s32.totalorder %s132, %s135
    %p144 = scmp.eq.s32.totalorder %s17, 1
    %p145 = por %p143, %p144
    %p146 = scmp.ne.s32.totalorder %s135, %s136
    %p147 = scmp.eq.s32.totalorder %s17, 0
    %p148 = por %p146, %p147
    %p149 = scmp.ne.s32.totalorder %s135, %s136
    %p150 = scmp.eq.s32.totalorder %s18, 1
    %p151 = por %p149, %p150
    %p153 = scmp.ne.s32.totalorder %s136, %s152
    %p154 = scmp.eq.s32.totalorder %s18, 0
    %p155 = por %p153, %p154
    %s156 = ssub.s32 %s19, %s31
    %p157 = scmp.eq.s32.totalorder %s156, 0
    %s159 = sadd.s32 %s158, 1
    %s160 = scalar_select %p157, %s158, %s159
    %p163 = pneg %p157
    %p164 = scmp.eq.s32.totalorder %s12, 1
    %p165 = por %p163, %p164
    %p166 = scmp.ne.s32.totalorder %s158, %s161
    %p167 = scmp.eq.s32.totalorder %s12, 0
    %p168 = por %p166, %p167
    %p169 = scmp.ne.s32.totalorder %s158, %s161
    %p170 = scmp.eq.s32.totalorder %s17, 1
    %p171 = por %p169, %p170
    %p172 = scmp.ne.s32.totalorder %s161, %s162
    %p173 = scmp.eq.s32.totalorder %s17, 0
    %p174 = por %p172, %p173
    %p175 = scmp.ne.s32.totalorder %s161, %s162
    %p176 = scmp.eq.s32.totalorder %s18, 1
    %p177 = por %p175, %p176
    %p179 = scmp.ne.s32.totalorder %s162, %s178
    %p180 = scmp.eq.s32.totalorder %s18, 0
    %p181 = por %p179, %p180
    %p182 = scmp.le.s32.totalorder 1, %s12
    %p183 = scmp.lt.s32.totalorder %s12, 3
    %p184 = pnand %p182, %p183
    %p185 = pneg %p184
    // Predicated region
    $region9: #{a_call__.8} parent=5 // pred_check
      _
    $region10: #{a_call__.8} parent=5 // pred_check_branch
      %187 = sbr.rel (%p184) target = $region12
    $region11: #{a_call__.8} parent=5 // pred_region
      %s188 = ssub.s32 %s12, 1
      // Predicated region
      $region13: #{a_call__.8} parent=11 // pred_check
        %p189 = pneg %p73
      $region14: #{a_call__.8} parent=11 // pred_check_branch
        %191 = sbr.rel (%p189) target = $region16
      $region15: #{a_call__.8} parent=11 // pred_region
        _
      $region16: #{a_call__.8} parent=11 // pred_fallthru
        _
      // Predicated region
      $region17: #{a_call__.8} parent=11 // pred_check
        %p192 = pneg %p94
      $region18: #{a_call__.8} parent=11 // pred_check_branch
        %194 = sbr.rel (%p192) target = $region20
      $region19: #{a_call__.8} parent=11 // pred_region
        _
      $region20: #{a_call__.8} parent=11 // pred_fallthru
        _
    $region12: #{a_call__.8} parent=5 // pred_fallthru
      _
    %p195 = scmp.lt.s32.totalorder %s12, 2
    // Predicated region
    $region21: #{a_call__.8} parent=5 // pred_check
      %p196 = pneg %p195
    $region22: #{a_call__.8} parent=5 // pred_check_branch
      %198 = sbr.rel (%p196) target = $region24
    $region23: #{a_call__.8} parent=5 // pred_region
      // Predicated region
      $region25: #{a_call__.8} parent=23 // pred_check
        %p199 = pneg %p46
      $region26: #{a_call__.8} parent=23 // pred_check_branch
        %201 = sbr.rel (%p199) target = $region28
      $region27: #{a_call__.8} parent=23 // pred_region
        %p202 = scmp.lt.s32.totalorder %s19, 1
        %s203 = scalar_select %p202, %s19, 1
        %p204 = scmp.lt.s32.totalorder %s20, 0
        %s205 = scalar_select %p204, %s20, 0
        %s206 = smul.addr %s203, 128
        %s207 = sadd.s32 %s205, %s206
        %s208 = smul.addr %s207, 4
        %s209 = scalar_lea.vmem %s0, %s208
      $region28: #{a_call__.8} parent=23 // pred_fallthru
        _
    $region24: #{a_call__.8} parent=5 // pred_fallthru
      _
    %p210 = scmp.le.s32.totalorder 1, %s12
    %p211 = scmp.lt.s32.totalorder %s12, 3
    %p212 = pnand %p210, %p211
    %p213 = pneg %p212
    // Predicated region
    $region29: #{a_call__.8} parent=5 // pred_check
      _
    $region30: #{a_call__.8} parent=5 // pred_check_branch
      %215 = sbr.rel (%p212) target = $region32
    $region31: #{a_call__.8} parent=5 // pred_region
      %s216 = ssub.s32 %s12, 1
      %p217 = scmp.lt.s32.totalorder %s21, 1
      %s218 = scalar_select %p217, %s21, 1
      %p219 = scmp.lt.s32.totalorder %s22, 0
      %s220 = scalar_select %p219, %s22, 0
      %s221 = smul.addr %s218, 128
      %s222 = sadd.s32 %s220, %s221
      %s223 = smul.addr %s222, 4
      %s224 = scalar_lea.vmem %s0, %s223
      %p225 = pneg %p52
      %p226 = pneg %p49
      %p227 = pneg %p73
      %p228 = pneg %p70
      %p229 = pneg %p94
      %p230 = pneg %p91
      %p231 = pneg %p122
      %p232 = pneg %p119
      %p233 = scmp.lt.s32.totalorder %s21, 1
      %s234 = scalar_select %p233, %s21, 1
      %p235 = scmp.lt.s32.totalorder %s22, 0
      %s236 = scalar_select %p235, %s22, 0
      %s237 = smul.addr %s234, 4
      %s238 = sadd.s32 %s236, %s237
      %s239 = smul.addr %s238, 4
      %s240 = scalar_lea.vmem %s3, %s239
      %p241 = pneg %p148
      %p242 = pneg %p145
      %p243 = scmp.lt.s32.totalorder %s21, 1
      %s244 = scalar_select %p243, %s21, 1
      %s245 = smul.addr %s244, 4
      %s246 = smul.addr %s245, 8
      %s247 = scalar_lea.vmem %s4, %s246
      %p248 = pneg %p174
      %p249 = pneg %p171
      %p250 = scmp.lt.s32.totalorder %s21, 1
      %s251 = scalar_select %p250, %s21, 1
      %s252 = smul.addr %s251, 4
      %s253 = smul.addr %s252, 8
      %s254 = scalar_lea.vmem %s5, %s253
      %p255 = scmp.lt.s32.totalorder %s21, 1
      %s256 = scalar_select %p255, %s21, 1
      %p257 = scmp.lt.s32.totalorder %s22, 0
      %s258 = scalar_select %p257, %s22, 0
      %s259 = smul.addr %s256, 128
      %s260 = sadd.s32 %s258, %s259
      %s261 = smul.addr %s260, 4
      %s262 = scalar_lea.vmem %s0, %s261
      %p263 = scmp.lt.s32.totalorder %s21, 1
      %s264 = scalar_select %p263, %s21, 1
      %p265 = scmp.lt.s32.totalorder %s22, 0
      %s266 = scalar_select %p265, %s22, 0
      %s267 = smul.addr %s264, 4
      %s268 = sadd.s32 %s266, %s267
      %s269 = smul.addr %s268, 4
      %s270 = scalar_lea.vmem %s3, %s269
      %p271 = scmp.lt.s32.totalorder %s21, 1
      %s272 = scalar_select %p271, %s21, 1
      %s273 = smul.addr %s272, 4
      %s274 = smul.addr %s273, 8
      %s275 = scalar_lea.vmem %s4, %s274
      %p276 = scmp.lt.s32.totalorder %s21, 1
      %s277 = scalar_select %p276, %s21, 1
      %s278 = smul.addr %s277, 4
      %s279 = smul.addr %s278, 8
      %s280 = scalar_lea.vmem %s5, %s279
      %v282 = vld [vmem:[%s1] sm:$0xff]
      %v283 = vld [vmem:[%s1 + $0x8] sm:$0xff]
      %v284 = vld [vmem:[%s1 + $0x10] sm:$0xff]
      %v285 = vld [vmem:[%s1 + $0x18] sm:$0xff]
      %v286 = vld [vmem:[%s1 + $0x20] sm:$0xff]
      %v287 = vld [vmem:[%s1 + $0x28] sm:$0xff]
      %v288 = vld [vmem:[%s1 + $0x30] sm:$0xff]
      %v289 = vld [vmem:[%s1 + $0x38] sm:$0xff]
      %v290 = vld [vmem:[%s1 + $0x40] sm:$0xff]
      %v291 = vld [vmem:[%s1 + $0x48] sm:$0xff]
      %v292 = vld [vmem:[%s1 + $0x50] sm:$0xff]
      %v293 = vld [vmem:[%s1 + $0x58] sm:$0xff]
      %v294 = vld [vmem:[%s1 + $0x60] sm:$0xff]
      %v295 = vld [vmem:[%s1 + $0x68] sm:$0xff]
      %v296 = vld [vmem:[%s1 + $0x70] sm:$0xff]
      %v297 = vld [vmem:[%s1 + $0x78] sm:$0xff]
      %v298 = vld [vmem:[%s262] sm:$0xf]
      %v299 = vld [vmem:[%s262 + $0x4] sm:$0xf]
      %v300 = vld [vmem:[%s262 + $0x8] sm:$0xf]
      %v301 = vld [vmem:[%s262 + $0xc] sm:$0xf]
      %v302 = vld [vmem:[%s262 + $0x10] sm:$0xf]
      %v303 = vld [vmem:[%s262 + $0x14] sm:$0xf]
      %v304 = vld [vmem:[%s262 + $0x18] sm:$0xf]
      %v305 = vld [vmem:[%s262 + $0x1c] sm:$0xf]
      %v306 = vld [vmem:[%s262 + $0x20] sm:$0xf]
      %v307 = vld [vmem:[%s262 + $0x24] sm:$0xf]
      %v308 = vld [vmem:[%s262 + $0x28] sm:$0xf]
      %v309 = vld [vmem:[%s262 + $0x2c] sm:$0xf]
      %v310 = vld [vmem:[%s262 + $0x30] sm:$0xf]
      %v311 = vld [vmem:[%s262 + $0x34] sm:$0xf]
      %v312 = vld [vmem:[%s262 + $0x38] sm:$0xf]
      %v313 = vld [vmem:[%s262 + $0x3c] sm:$0xf]
      %v314 = vld [vmem:[%s262 + $0x40] sm:$0xf]
      %v315 = vld [vmem:[%s262 + $0x44] sm:$0xf]
      %v316 = vld [vmem:[%s262 + $0x48] sm:$0xf]
      %v317 = vld [vmem:[%s262 + $0x4c] sm:$0xf]
      %v318 = vld [vmem:[%s262 + $0x50] sm:$0xf]
      %v319 = vld [vmem:[%s262 + $0x54] sm:$0xf]
      %v320 = vld [vmem:[%s262 + $0x58] sm:$0xf]
      %v321 = vld [vmem:[%s262 + $0x5c] sm:$0xf]
      %v322 = vld [vmem:[%s262 + $0x60] sm:$0xf]
      %v323 = vld [vmem:[%s262 + $0x64] sm:$0xf]
      %v324 = vld [vmem:[%s262 + $0x68] sm:$0xf]
      %v325 = vld [vmem:[%s262 + $0x6c] sm:$0xf]
      %v326 = vld [vmem:[%s262 + $0x70] sm:$0xf]
      %v327 = vld [vmem:[%s262 + $0x74] sm:$0xf]
      %v328 = vld [vmem:[%s262 + $0x78] sm:$0xf]
      %v329 = vld [vmem:[%s262 + $0x7c] sm:$0xf]
      %v330 = vld [vmem:[%s262 + $0x80] sm:$0xf]
      %v331 = vld [vmem:[%s262 + $0x84] sm:$0xf]
      %v332 = vld [vmem:[%s262 + $0x88] sm:$0xf]
      %v333 = vld [vmem:[%s262 + $0x8c] sm:$0xf]
      %v334 = vld [vmem:[%s262 + $0x90] sm:$0xf]
      %v335 = vld [vmem:[%s262 + $0x94] sm:$0xf]
      %v336 = vld [vmem:[%s262 + $0x98] sm:$0xf]
      %v337 = vld [vmem:[%s262 + $0x9c] sm:$0xf]
      %v338 = vld [vmem:[%s262 + $0xa0] sm:$0xf]
      %v339 = vld [vmem:[%s262 + $0xa4] sm:$0xf]
      %v340 = vld [vmem:[%s262 + $0xa8] sm:$0xf]
      %v341 = vld [vmem:[%s262 + $0xac] sm:$0xf]
      %v342 = vld [vmem:[%s262 + $0xb0] sm:$0xf]
      %v343 = vld [vmem:[%s262 + $0xb4] sm:$0xf]
      %v344 = vld [vmem:[%s262 + $0xb8] sm:$0xf]
      %v345 = vld [vmem:[%s262 + $0xbc] sm:$0xf]
      %v346 = vld [vmem:[%s262 + $0xc0] sm:$0xf]
      %v347 = vld [vmem:[%s262 + $0xc4] sm:$0xf]
      %v348 = vld [vmem:[%s262 + $0xc8] sm:$0xf]
      %v349 = vld [vmem:[%s262 + $0xcc] sm:$0xf]
      %v350 = vld [vmem:[%s262 + $0xd0] sm:$0xf]
      %v351 = vld [vmem:[%s262 + $0xd4] sm:$0xf]
      %v352 = vld [vmem:[%s262 + $0xd8] sm:$0xf]
      %v353 = vld [vmem:[%s262 + $0xdc] sm:$0xf]
      %v354 = vld [vmem:[%s262 + $0xe0] sm:$0xf]
      %v355 = vld [vmem:[%s262 + $0xe4] sm:$0xf]
      %v356 = vld [vmem:[%s262 + $0xe8] sm:$0xf]
      %v357 = vld [vmem:[%s262 + $0xec] sm:$0xf]
      %v358 = vld [vmem:[%s262 + $0xf0] sm:$0xf]
      %v359 = vld [vmem:[%s262 + $0xf4] sm:$0xf]
      %v360 = vld [vmem:[%s262 + $0xf8] sm:$0xf]
      %v361 = vld [vmem:[%s262 + $0xfc] sm:$0xf]
      %v362 = vld [vmem:[%s262 + $0x100] sm:$0xf]
      %v363 = vld [vmem:[%s262 + $0x104] sm:$0xf]
      %v364 = vld [vmem:[%s262 + $0x108] sm:$0xf]
      %v365 = vld [vmem:[%s262 + $0x10c] sm:$0xf]
      %v366 = vld [vmem:[%s262 + $0x110] sm:$0xf]
      %v367 = vld [vmem:[%s262 + $0x114] sm:$0xf]
      %v368 = vld [vmem:[%s262 + $0x118] sm:$0xf]
      %v369 = vld [vmem:[%s262 + $0x11c] sm:$0xf]
      %v370 = vld [vmem:[%s262 + $0x120] sm:$0xf]
      %v371 = vld [vmem:[%s262 + $0x124] sm:$0xf]
      %v372 = vld [vmem:[%s262 + $0x128] sm:$0xf]
      %v373 = vld [vmem:[%s262 + $0x12c] sm:$0xf]
      %v374 = vld [vmem:[%s262 + $0x130] sm:$0xf]
      %v375 = vld [vmem:[%s262 + $0x134] sm:$0xf]
      %v376 = vld [vmem:[%s262 + $0x138] sm:$0xf]
      %v377 = vld [vmem:[%s262 + $0x13c] sm:$0xf]
      %v378 = vld [vmem:[%s262 + $0x140] sm:$0xf]
      %v379 = vld [vmem:[%s262 + $0x144] sm:$0xf]
      %v380 = vld [vmem:[%s262 + $0x148] sm:$0xf]
      %v381 = vld [vmem:[%s262 + $0x14c] sm:$0xf]
      %v382 = vld [vmem:[%s262 + $0x150] sm:$0xf]
      %v383 = vld [vmem:[%s262 + $0x154] sm:$0xf]
      %v384 = vld [vmem:[%s262 + $0x158] sm:$0xf]
      %v385 = vld [vmem:[%s262 + $0x15c] sm:$0xf]
      %v386 = vld [vmem:[%s262 + $0x160] sm:$0xf]
      %v387 = vld [vmem:[%s262 + $0x164] sm:$0xf]
      %v388 = vld [vmem:[%s262 + $0x168] sm:$0xf]
      %v389 = vld [vmem:[%s262 + $0x16c] sm:$0xf]
      %v390 = vld [vmem:[%s262 + $0x170] sm:$0xf]
      %v391 = vld [vmem:[%s262 + $0x174] sm:$0xf]
      %v392 = vld [vmem:[%s262 + $0x178] sm:$0xf]
      %v393 = vld [vmem:[%s262 + $0x17c] sm:$0xf]
      %v394 = vld [vmem:[%s262 + $0x180] sm:$0xf]
      %v395 = vld [vmem:[%s262 + $0x184] sm:$0xf]
      %v396 = vld [vmem:[%s262 + $0x188] sm:$0xf]
      %v397 = vld [vmem:[%s262 + $0x18c] sm:$0xf]
      %v398 = vld [vmem:[%s262 + $0x190] sm:$0xf]
      %v399 = vld [vmem:[%s262 + $0x194] sm:$0xf]
      %v400 = vld [vmem:[%s262 + $0x198] sm:$0xf]
      %v401 = vld [vmem:[%s262 + $0x19c] sm:$0xf]
      %v402 = vld [vmem:[%s262 + $0x1a0] sm:$0xf]
      %v403 = vld [vmem:[%s262 + $0x1a4] sm:$0xf]
      %v404 = vld [vmem:[%s262 + $0x1a8] sm:$0xf]
      %v405 = vld [vmem:[%s262 + $0x1ac] sm:$0xf]
      %v406 = vld [vmem:[%s262 + $0x1b0] sm:$0xf]
      %v407 = vld [vmem:[%s262 + $0x1b4] sm:$0xf]
      %v408 = vld [vmem:[%s262 + $0x1b8] sm:$0xf]
      %v409 = vld [vmem:[%s262 + $0x1bc] sm:$0xf]
      %v410 = vld [vmem:[%s262 + $0x1c0] sm:$0xf]
      %v411 = vld [vmem:[%s262 + $0x1c4] sm:$0xf]
      %v412 = vld [vmem:[%s262 + $0x1c8] sm:$0xf]
      %v413 = vld [vmem:[%s262 + $0x1cc] sm:$0xf]
      %v414 = vld [vmem:[%s262 + $0x1d0] sm:$0xf]
      %v415 = vld [vmem:[%s262 + $0x1d4] sm:$0xf]
      %v416 = vld [vmem:[%s262 + $0x1d8] sm:$0xf]
      %v417 = vld [vmem:[%s262 + $0x1dc] sm:$0xf]
      %v418 = vld [vmem:[%s262 + $0x1e0] sm:$0xf]
      %v419 = vld [vmem:[%s262 + $0x1e4] sm:$0xf]
      %v420 = vld [vmem:[%s262 + $0x1e8] sm:$0xf]
      %v421 = vld [vmem:[%s262 + $0x1ec] sm:$0xf]
      %v422 = vld [vmem:[%s262 + $0x1f0] sm:$0xf]
      %v423 = vld [vmem:[%s262 + $0x1f4] sm:$0xf]
      %v424 = vld [vmem:[%s262 + $0x1f8] sm:$0xf]
      %v425 = vld [vmem:[%s262 + $0x1fc] sm:$0xf]
      %v426 = vld [vmem:[%s2] sm:$0xff]
      %v427 = vld [vmem:[%s2 + $0x8] sm:$0xff]
      %v428 = vld [vmem:[%s2 + $0x10] sm:$0xff]
      %v429 = vld [vmem:[%s2 + $0x18] sm:$0xff]
      %431 = vset.pattern.permute.xlu0 0
      %432 = vperm.xlu0 %431, %v426
      %v433 = vpop.permute.xlu0 %432
      %436 = vset.pattern.permute.xlu0 0
      %437 = vperm.xlu0 %436, %v427
      %v438 = vpop.permute.xlu0 %437
      %441 = vset.pattern.permute.xlu0 0
      %442 = vperm.xlu0 %441, %v428
      %v443 = vpop.permute.xlu0 %442
      %446 = vset.pattern.permute.xlu0 0
      %447 = vperm.xlu0 %446, %v429
      %v448 = vpop.permute.xlu0 %447
      %v466 = vunpack.c.l.b16 %v282
      %v467 = vunpack.c.h.b16 %v282
      %v468 = vunpack.c.l.b16 %v283
      %v469 = vunpack.c.h.b16 %v283
      %v470 = vunpack.c.l.b16 %v284
      %v471 = vunpack.c.h.b16 %v284
      %v472 = vunpack.c.l.b16 %v285
      %v473 = vunpack.c.h.b16 %v285
      %v474 = vunpack.c.l.b16 %v286
      %v475 = vunpack.c.h.b16 %v286
      %v476 = vunpack.c.l.b16 %v287
      %v477 = vunpack.c.h.b16 %v287
      %v478 = vunpack.c.l.b16 %v288
      %v479 = vunpack.c.h.b16 %v288
      %v480 = vunpack.c.l.b16 %v289
      %v481 = vunpack.c.h.b16 %v289
      %v482 = vunpack.c.l.b16 %v290
      %v483 = vunpack.c.h.b16 %v290
      %v484 = vunpack.c.l.b16 %v291
      %v485 = vunpack.c.h.b16 %v291
      %v486 = vunpack.c.l.b16 %v292
      %v487 = vunpack.c.h.b16 %v292
      %v488 = vunpack.c.l.b16 %v293
      %v489 = vunpack.c.h.b16 %v293
      %v490 = vunpack.c.l.b16 %v294
      %v491 = vunpack.c.h.b16 %v294
      %v492 = vunpack.c.l.b16 %v295
      %v493 = vunpack.c.h.b16 %v295
      %v494 = vunpack.c.l.b16 %v296
      %v495 = vunpack.c.h.b16 %v296
      %v496 = vunpack.c.l.b16 %v297
      %v497 = vunpack.c.h.b16 %v297
      %v498 = vpack.c.b16 %v474, %v466
      %v499 = vpack.c.b16 %v475, %v467
      %v500 = vpack.c.b16 %v476, %v468
      %v501 = vpack.c.b16 %v477, %v469
      %v502 = vpack.c.b16 %v478, %v470
      %v503 = vpack.c.b16 %v479, %v471
      %v504 = vpack.c.b16 %v480, %v472
      %v505 = vpack.c.b16 %v481, %v473
      %v506 = vpack.c.b16 %v490, %v482
      %v507 = vpack.c.b16 %v491, %v483
      %v508 = vpack.c.b16 %v492, %v484
      %v509 = vpack.c.b16 %v493, %v485
      %v510 = vpack.c.b16 %v494, %v486
      %v511 = vpack.c.b16 %v495, %v487
      %v512 = vpack.c.b16 %v496, %v488
      %v513 = vpack.c.b16 %v497, %v489
      %v658 = vunpack.c.l.b16 %v298
      %v659 = vunpack.c.l.b16 %v299
      %v660 = vunpack.c.l.b16 %v300
      %v661 = vunpack.c.l.b16 %v301
      %v662 = vunpack.c.l.b16 %v302
      %v663 = vunpack.c.l.b16 %v303
      %v664 = vunpack.c.l.b16 %v304
      %v665 = vunpack.c.l.b16 %v305
      %v666 = vunpack.c.l.b16 %v306
      %v667 = vunpack.c.l.b16 %v307
      %v668 = vunpack.c.l.b16 %v308
      %v669 = vunpack.c.l.b16 %v309
      %v670 = vunpack.c.l.b16 %v310
      %v671 = vunpack.c.l.b16 %v311
      %v672 = vunpack.c.l.b16 %v312
      %v673 = vunpack.c.l.b16 %v313
      %v674 = vunpack.c.l.b16 %v314
      %v675 = vunpack.c.l.b16 %v315
      %v676 = vunpack.c.l.b16 %v316
      %v677 = vunpack.c.l.b16 %v317
      %v678 = vunpack.c.l.b16 %v318
      %v679 = vunpack.c.l.b16 %v319
      %v680 = vunpack.c.l.b16 %v320
      %v681 = vunpack.c.l.b16 %v321
      %v682 = vunpack.c.l.b16 %v322
      %v683 = vunpack.c.l.b16 %v323
      %v684 = vunpack.c.l.b16 %v324
      %v685 = vunpack.c.l.b16 %v325
      %v686 = vunpack.c.l.b16 %v326
      %v687 = vunpack.c.l.b16 %v327
      %v688 = vunpack.c.l.b16 %v328
      %v689 = vunpack.c.l.b16 %v329
      %v690 = vunpack.c.l.b16 %v330
      %v691 = vunpack.c.l.b16 %v331
      %v692 = vunpack.c.l.b16 %v332
      %v693 = vunpack.c.l.b16 %v333
      %v694 = vunpack.c.l.b16 %v334
      %v695 = vunpack.c.l.b16 %v335
      %v696 = vunpack.c.l.b16 %v336
      %v697 = vunpack.c.l.b16 %v337
      %v698 = vunpack.c.l.b16 %v338
      %v699 = vunpack.c.l.b16 %v339
      %v700 = vunpack.c.l.b16 %v340
      %v701 = vunpack.c.l.b16 %v341
      %v702 = vunpack.c.l.b16 %v342
      %v703 = vunpack.c.l.b16 %v343
      %v704 = vunpack.c.l.b16 %v344
      %v705 = vunpack.c.l.b16 %v345
      %v706 = vunpack.c.l.b16 %v346
      %v707 = vunpack.c.l.b16 %v347
      %v708 = vunpack.c.l.b16 %v348
      %v709 = vunpack.c.l.b16 %v349
      %v710 = vunpack.c.l.b16 %v350
      %v711 = vunpack.c.l.b16 %v351
      %v712 = vunpack.c.l.b16 %v352
      %v713 = vunpack.c.l.b16 %v353
      %v714 = vunpack.c.l.b16 %v354
      %v715 = vunpack.c.l.b16 %v355
      %v716 = vunpack.c.l.b16 %v356
      %v717 = vunpack.c.l.b16 %v357
      %v718 = vunpack.c.l.b16 %v358
      %v719 = vunpack.c.l.b16 %v359
      %v720 = vunpack.c.l.b16 %v360
      %v721 = vunpack.c.l.b16 %v361
      %v722 = vunpack.c.l.b16 %v362
      %v723 = vunpack.c.l.b16 %v363
      %v724 = vunpack.c.l.b16 %v364
      %v725 = vunpack.c.l.b16 %v365
      %v726 = vunpack.c.l.b16 %v366
      %v727 = vunpack.c.l.b16 %v367
      %v728 = vunpack.c.l.b16 %v368
      %v729 = vunpack.c.l.b16 %v369
      %v730 = vunpack.c.l.b16 %v370
      %v731 = vunpack.c.l.b16 %v371
      %v732 = vunpack.c.l.b16 %v372
      %v733 = vunpack.c.l.b16 %v373
      %v734 = vunpack.c.l.b16 %v374
      %v735 = vunpack.c.l.b16 %v375
      %v736 = vunpack.c.l.b16 %v376
      %v737 = vunpack.c.l.b16 %v377
      %v738 = vunpack.c.l.b16 %v378
      %v739 = vunpack.c.l.b16 %v379
      %v740 = vunpack.c.l.b16 %v380
      %v741 = vunpack.c.l.b16 %v381
      %v742 = vunpack.c.l.b16 %v382
      %v743 = vunpack.c.l.b16 %v383
      %v744 = vunpack.c.l.b16 %v384
      %v745 = vunpack.c.l.b16 %v385
      %v746 = vunpack.c.l.b16 %v386
      %v747 = vunpack.c.l.b16 %v387
      %v748 = vunpack.c.l.b16 %v388
      %v749 = vunpack.c.l.b16 %v389
      %v750 = vunpack.c.l.b16 %v390
      %v751 = vunpack.c.l.b16 %v391
      %v752 = vunpack.c.l.b16 %v392
      %v753 = vunpack.c.l.b16 %v393
      %v754 = vunpack.c.l.b16 %v394
      %v755 = vunpack.c.l.b16 %v395
      %v756 = vunpack.c.l.b16 %v396
      %v757 = vunpack.c.l.b16 %v397
      %v758 = vunpack.c.l.b16 %v398
      %v759 = vunpack.c.l.b16 %v399
      %v760 = vunpack.c.l.b16 %v400
      %v761 = vunpack.c.l.b16 %v401
      %v762 = vunpack.c.l.b16 %v402
      %v763 = vunpack.c.l.b16 %v403
      %v764 = vunpack.c.l.b16 %v404
      %v765 = vunpack.c.l.b16 %v405
      %v766 = vunpack.c.l.b16 %v406
      %v767 = vunpack.c.l.b16 %v407
      %v768 = vunpack.c.l.b16 %v408
      %v769 = vunpack.c.l.b16 %v409
      %v770 = vunpack.c.l.b16 %v410
      %v771 = vunpack.c.l.b16 %v411
      %v772 = vunpack.c.l.b16 %v412
      %v773 = vunpack.c.l.b16 %v413
      %v774 = vunpack.c.l.b16 %v414
      %v775 = vunpack.c.l.b16 %v415
      %v776 = vunpack.c.l.b16 %v416
      %v777 = vunpack.c.l.b16 %v417
      %v778 = vunpack.c.l.b16 %v418
      %v779 = vunpack.c.l.b16 %v419
      %v780 = vunpack.c.l.b16 %v420
      %v781 = vunpack.c.l.b16 %v421
      %v782 = vunpack.c.l.b16 %v422
      %v783 = vunpack.c.l.b16 %v423
      %v784 = vunpack.c.l.b16 %v424
      %v785 = vunpack.c.l.b16 %v425
      %v786 = vpack.c.b16 %v659, %v658
      %v787 = vpack.c.b16 %v661, %v660
      %v788 = vpack.c.b16 %v663, %v662
      %v789 = vpack.c.b16 %v665, %v664
      %v790 = vpack.c.b16 %v667, %v666
      %v791 = vpack.c.b16 %v669, %v668
      %v792 = vpack.c.b16 %v671, %v670
      %v793 = vpack.c.b16 %v673, %v672
      %v794 = vpack.c.b16 %v675, %v674
      %v795 = vpack.c.b16 %v677, %v676
      %v796 = vpack.c.b16 %v679, %v678
      %v797 = vpack.c.b16 %v681, %v680
      %v798 = vpack.c.b16 %v683, %v682
      %v799 = vpack.c.b16 %v685, %v684
      %v800 = vpack.c.b16 %v687, %v686
      %v801 = vpack.c.b16 %v689, %v688
      %v802 = vpack.c.b16 %v691, %v690
      %v803 = vpack.c.b16 %v693, %v692
      %v804 = vpack.c.b16 %v695, %v694
      %v805 = vpack.c.b16 %v697, %v696
      %v806 = vpack.c.b16 %v699, %v698
      %v807 = vpack.c.b16 %v701, %v700
      %v808 = vpack.c.b16 %v703, %v702
      %v809 = vpack.c.b16 %v705, %v704
      %v810 = vpack.c.b16 %v707, %v706
      %v811 = vpack.c.b16 %v709, %v708
      %v812 = vpack.c.b16 %v711, %v710
      %v813 = vpack.c.b16 %v713, %v712
      %v814 = vpack.c.b16 %v715, %v714
      %v815 = vpack.c.b16 %v717, %v716
      %v816 = vpack.c.b16 %v719, %v718
      %v817 = vpack.c.b16 %v721, %v720
      %v818 = vpack.c.b16 %v723, %v722
      %v819 = vpack.c.b16 %v725, %v724
      %v820 = vpack.c.b16 %v727, %v726
      %v821 = vpack.c.b16 %v729, %v728
      %v822 = vpack.c.b16 %v731, %v730
      %v823 = vpack.c.b16 %v733, %v732
      %v824 = vpack.c.b16 %v735, %v734
      %v825 = vpack.c.b16 %v737, %v736
      %v826 = vpack.c.b16 %v739, %v738
      %v827 = vpack.c.b16 %v741, %v740
      %v828 = vpack.c.b16 %v743, %v742
      %v829 = vpack.c.b16 %v745, %v744
      %v830 = vpack.c.b16 %v747, %v746
      %v831 = vpack.c.b16 %v749, %v748
      %v832 = vpack.c.b16 %v751, %v750
      %v833 = vpack.c.b16 %v753, %v752
      %v834 = vpack.c.b16 %v755, %v754
      %v835 = vpack.c.b16 %v757, %v756
      %v836 = vpack.c.b16 %v759, %v758
      %v837 = vpack.c.b16 %v761, %v760
      %v838 = vpack.c.b16 %v763, %v762
      %v839 = vpack.c.b16 %v765, %v764
      %v840 = vpack.c.b16 %v767, %v766
      %v841 = vpack.c.b16 %v769, %v768
      %v842 = vpack.c.b16 %v771, %v770
      %v843 = vpack.c.b16 %v773, %v772
      %v844 = vpack.c.b16 %v775, %v774
      %v845 = vpack.c.b16 %v777, %v776
      %v846 = vpack.c.b16 %v779, %v778
      %v847 = vpack.c.b16 %v781, %v780
      %v848 = vpack.c.b16 %v783, %v782
      %v849 = vpack.c.b16 %v785, %v784
      %914 = vmatprep.subr.bf16.mxu0 0
      %915 = vmatpush1.bf16.msra.mxu0 %v786
      %916 = vmatprep.subr.bf16.mxu0 0
      %917 = vmatpush1.bf16.msra.mxu0 %v787
      %918 = vmatprep.subr.bf16.mxu0 0
      %919 = vmatpush1.bf16.msra.mxu0 %v788
      %920 = vmatprep.subr.bf16.mxu0 0
      %921 = vmatpush1.bf16.msra.mxu0 %v789
      %922 = vmatprep.subr.bf16.mxu0 0
      %923 = vmatpush1.bf16.msra.mxu0 %v790
      %924 = vmatprep.subr.bf16.mxu0 0
      %925 = vmatpush1.bf16.msra.mxu0 %v791
      %926 = vmatprep.subr.bf16.mxu0 0
      %927 = vmatpush1.bf16.msra.mxu0 %v792
      %928 = vmatprep.subr.bf16.mxu0 0
      %929 = vmatpush1.bf16.msra.mxu0 %v793
      %930 = vmatprep.subr.bf16.mxu0 0
      %931 = vmatpush1.bf16.msra.mxu0 %v794
      %932 = vmatprep.subr.bf16.mxu0 0
      %933 = vmatpush1.bf16.msra.mxu0 %v795
      %934 = vmatprep.subr.bf16.mxu0 0
      %935 = vmatpush1.bf16.msra.mxu0 %v796
      %936 = vmatprep.subr.bf16.mxu0 0
      %937 = vmatpush1.bf16.msra.mxu0 %v797
      %938 = vmatprep.subr.bf16.mxu0 0
      %939 = vmatpush1.bf16.msra.mxu0 %v798
      %940 = vmatprep.subr.bf16.mxu0 0
      %941 = vmatpush1.bf16.msra.mxu0 %v799
      %942 = vmatprep.subr.bf16.mxu0 0
      %943 = vmatpush1.bf16.msra.mxu0 %v800
      %944 = vmatprep.subr.bf16.mxu0 0
      %945 = vmatpush1.bf16.msra.mxu0 %v801
      %946 = vmatprep.mubr.bf16.mxu0 %v499
      %947 = vmatmul.mubr.bf16.gmra.mrb[0].mxu0 %v498
      %v948 = vpop.f32.mrb[0].mxu0
      %v949 = vadd.f32 %v433, %v948
      %v950 = vpop.f32.mrb[0].mxu0
      %v951 = vpop.f32.mrb[0].mxu0
      %v952 = vadd.f32 %v438, %v951
      %v953 = vpop.f32.mrb[0].mxu0
      %954 = vmatprep.mubr.bf16.mxu0 %v507
      %955 = vmatmul.mubr.bf16.gmra.mrb[0].mxu0 %v506
      %v956 = vpop.f32.mrb[0].mxu0
      %v957 = vadd.f32 %v443, %v956
      %v958 = vpop.f32.mrb[0].mxu0
      %v959 = vpop.f32.mrb[0].mxu0
      %v960 = vadd.f32 %v448, %v959
      %v961 = vpop.f32.mrb[0].mxu0
      %962 = vdwg.mxu0
      %963 = vmatprep.subr.bf16.mxu0 0
      %964 = vmatpush1.bf16.msra.mxu0 %v802
      %965 = vmatprep.subr.bf16.mxu0 0
      %966 = vmatpush1.bf16.msra.mxu0 %v803
      %967 = vmatprep.subr.bf16.mxu0 0
      %968 = vmatpush1.bf16.msra.mxu0 %v804
      %969 = vmatprep.subr.bf16.mxu0 0
      %970 = vmatpush1.bf16.msra.mxu0 %v805
      %971 = vmatprep.subr.bf16.mxu0 0
      %972 = vmatpush1.bf16.msra.mxu0 %v806
      %973 = vmatprep.subr.bf16.mxu0 0
      %974 = vmatpush1.bf16.msra.mxu0 %v807
      %975 = vmatprep.subr.bf16.mxu0 0
      %976 = vmatpush1.bf16.msra.mxu0 %v808
      %977 = vmatprep.subr.bf16.mxu0 0
      %978 = vmatpush1.bf16.msra.mxu0 %v809
      %979 = vmatprep.subr.bf16.mxu0 0
      %980 = vmatpush1.bf16.msra.mxu0 %v810
      %981 = vmatprep.subr.bf16.mxu0 0
      %982 = vmatpush1.bf16.msra.mxu0 %v811
      %983 = vmatprep.subr.bf16.mxu0 0
      %984 = vmatpush1.bf16.msra.mxu0 %v812
      %985 = vmatprep.subr.bf16.mxu0 0
      %986 = vmatpush1.bf16.msra.mxu0 %v813
      %987 = vmatprep.subr.bf16.mxu0 0
      %988 = vmatpush1.bf16.msra.mxu0 %v814
      %989 = vmatprep.subr.bf16.mxu0 0
      %990 = vmatpush1.bf16.msra.mxu0 %v815
      %991 = vmatprep.subr.bf16.mxu0 0
      %992 = vmatpush1.bf16.msra.mxu0 %v816
      %993 = vmatprep.subr.bf16.mxu0 0
      %994 = vmatpush1.bf16.msra.mxu0 %v817
      %995 = vmatprep.mubr.bf16.mxu0 %v501
      %996 = vmatmul.mubr.bf16.gmra.mrb[0].mxu0 %v500
      %v997 = vpop.f32.mrb[0].mxu0
      %v998 = vadd.f32 %v949, %v997
      %v999 = vpop.f32.mrb[0].mxu0
      %v1000 = vpop.f32.mrb[0].mxu0
      %v1001 = vadd.f32 %v952, %v1000
      %v1002 = vpop.f32.mrb[0].mxu0
      %1003 = vmatprep.mubr.bf16.mxu0 %v509
      %1004 = vmatmul.mubr.bf16.gmra.mrb[0].mxu0 %v508
      %v1005 = vpop.f32.mrb[0].mxu0
      %v1006 = vadd.f32 %v957, %v1005
      %v1007 = vpop.f32.mrb[0].mxu0
      %v1008 = vpop.f32.mrb[0].mxu0
      %v1009 = vadd.f32 %v960, %v1008
      %v1010 = vpop.f32.mrb[0].mxu0
      %1011 = vdwg.mxu0
      %1012 = vmatprep.subr.bf16.mxu0 0
      %1013 = vmatpush1.bf16.msra.mxu0 %v818
      %1014 = vmatprep.subr.bf16.mxu0 0
      %1015 = vmatpush1.bf16.msra.mxu0 %v819
      %1016 = vmatprep.subr.bf16.mxu0 0
      %1017 = vmatpush1.bf16.msra.mxu0 %v820
      %1018 = vmatprep.subr.bf16.mxu0 0
      %1019 = vmatpush1.bf16.msra.mxu0 %v821
      %1020 = vmatprep.subr.bf16.mxu0 0
      %1021 = vmatpush1.bf16.msra.mxu0 %v822
      %1022 = vmatprep.subr.bf16.mxu0 0
      %1023 = vmatpush1.bf16.msra.mxu0 %v823
      %1024 = vmatprep.subr.bf16.mxu0 0
      %1025 = vmatpush1.bf16.msra.mxu0 %v824
      %1026 = vmatprep.subr.bf16.mxu0 0
      %1027 = vmatpush1.bf16.msra.mxu0 %v825
      %1028 = vmatprep.subr.bf16.mxu0 0
      %1029 = vmatpush1.bf16.msra.mxu0 %v826
      %1030 = vmatprep.subr.bf16.mxu0 0
      %1031 = vmatpush1.bf16.msra.mxu0 %v827
      %1032 = vmatprep.subr.bf16.mxu0 0
      %1033 = vmatpush1.bf16.msra.mxu0 %v828
      %1034 = vmatprep.subr.bf16.mxu0 0
      %1035 = vmatpush1.bf16.msra.mxu0 %v829
      %1036 = vmatprep.subr.bf16.mxu0 0
      %1037 = vmatpush1.bf16.msra.mxu0 %v830
      %1038 = vmatprep.subr.bf16.mxu0 0
      %1039 = vmatpush1.bf16.msra.mxu0 %v831
      %1040 = vmatprep.subr.bf16.mxu0 0
      %1041 = vmatpush1.bf16.msra.mxu0 %v832
      %1042 = vmatprep.subr.bf16.mxu0 0
      %1043 = vmatpush1.bf16.msra.mxu0 %v833
      %1044 = vmatprep.mubr.bf16.mxu0 %v503
      %1045 = vmatmul.mubr.bf16.gmra.mrb[0].mxu0 %v502
      %v1046 = vpop.f32.mrb[0].mxu0
      %v1047 = vadd.f32 %v998, %v1046
      %v1048 = vpop.f32.mrb[0].mxu0
      %v1049 = vpop.f32.mrb[0].mxu0
      %v1050 = vadd.f32 %v1001, %v1049
      %v1051 = vpop.f32.mrb[0].mxu0
      %1052 = vmatprep.mubr.bf16.mxu0 %v511
      %1053 = vmatmul.mubr.bf16.gmra.mrb[0].mxu0 %v510
      %v1054 = vpop.f32.mrb[0].mxu0
      %v1055 = vadd.f32 %v1006, %v1054
      %v1056 = vpop.f32.mrb[0].mxu0
      %v1057 = vpop.f32.mrb[0].mxu0
      %v1058 = vadd.f32 %v1009, %v1057
      %v1059 = vpop.f32.mrb[0].mxu0
      %1060 = vdwg.mxu0
      %1061 = vmatprep.subr.bf16.mxu0 0
      %1062 = vmatpush1.bf16.msra.mxu0 %v834
      %1063 = vmatprep.subr.bf16.mxu0 0
      %1064 = vmatpush1.bf16.msra.mxu0 %v835
      %1065 = vmatprep.subr.bf16.mxu0 0
      %1066 = vmatpush1.bf16.msra.mxu0 %v836
      %1067 = vmatprep.subr.bf16.mxu0 0
      %1068 = vmatpush1.bf16.msra.mxu0 %v837
      %1069 = vmatprep.subr.bf16.mxu0 0
      %1070 = vmatpush1.bf16.msra.mxu0 %v838
      %1071 = vmatprep.subr.bf16.mxu0 0
      %1072 = vmatpush1.bf16.msra.mxu0 %v839
      %1073 = vmatprep.subr.bf16.mxu0 0
      %1074 = vmatpush1.bf16.msra.mxu0 %v840
      %1075 = vmatprep.subr.bf16.mxu0 0
      %1076 = vmatpush1.bf16.msra.mxu0 %v841
      %1077 = vmatprep.subr.bf16.mxu0 0
      %1078 = vmatpush1.bf16.msra.mxu0 %v842
      %1079 = vmatprep.subr.bf16.mxu0 0
      %1080 = vmatpush1.bf16.msra.mxu0 %v843
      %1081 = vmatprep.subr.bf16.mxu0 0
      %1082 = vmatpush1.bf16.msra.mxu0 %v844
      %1083 = vmatprep.subr.bf16.mxu0 0
      %1084 = vmatpush1.bf16.msra.mxu0 %v845
      %1085 = vmatprep.subr.bf16.mxu0 0
      %1086 = vmatpush1.bf16.msra.mxu0 %v846
      %1087 = vmatprep.subr.bf16.mxu0 0
      %1088 = vmatpush1.bf16.msra.mxu0 %v847
      %1089 = vmatprep.subr.bf16.mxu0 0
      %1090 = vmatpush1.bf16.msra.mxu0 %v848
      %1091 = vmatprep.subr.bf16.mxu0 0
      %1092 = vmatpush1.bf16.msra.mxu0 %v849
      %1093 = vmatprep.mubr.bf16.mxu0 %v505
      %1094 = vmatmul.mubr.bf16.gmra.mrb[0].mxu0 %v504
      %v1095 = vpop.f32.mrb[0].mxu0
      %v1096 = vadd.f32 %v1047, %v1095
      %v1097 = vpop.f32.mrb[0].mxu0
      %v1098 = vpop.f32.mrb[0].mxu0
      %v1099 = vadd.f32 %v1050, %v1098
      %v1100 = vpop.f32.mrb[0].mxu0
      %1101 = vmatprep.mubr.bf16.mxu0 %v513
      %1102 = vmatmul.mubr.bf16.gmra.mrb[0].mxu0 %v512
      %v1103 = vpop.f32.mrb[0].mxu0
      %v1104 = vadd.f32 %v1055, %v1103
      %v1105 = vpop.f32.mrb[0].mxu0
      %v1106 = vpop.f32.mrb[0].mxu0
      %v1107 = vadd.f32 %v1058, %v1106
      %v1108 = vpop.f32.mrb[0].mxu0
      %1109 = vdwg.mxu0
      %p1110 = scmp.eq.s32.totalorder %s22, 0
      // Predicated region
      $region33: #{a_call__.8} parent=31 // pred_check
        %p1111 = pneg %p1110
      $region34: #{a_call__.8} parent=31 // pred_check_branch
        %1113 = sbr.rel (%p1111) target = $region36
      $region35: #{a_call__.8} parent=31 // pred_region
        %vm1114 = vcmask 7168
        %1115 = vst.msk [vmem:[%s275] sm:$0xff] %vm1114, 0.0
        %1116 = vst.msk [vmem:[%s275 + $0x8] sm:$0xff] %vm1114, 0.0
        %1117 = vst.msk [vmem:[%s275 + $0x10] sm:$0xff] %vm1114, 0.0
        %1118 = vst.msk [vmem:[%s275 + $0x18] sm:$0xff] %vm1114, 0.0
        %1119 = vst.msk [vmem:[%s280] sm:$0xff] %vm1114, 0.0
        %1120 = vst.msk [vmem:[%s280 + $0x8] sm:$0xff] %vm1114, 0.0
        %1121 = vst.msk [vmem:[%s280 + $0x10] sm:$0xff] %vm1114, 0.0
        %1122 = vst.msk [vmem:[%s280 + $0x18] sm:$0xff] %vm1114, 0.0
      $region36: #{a_call__.8} parent=31 // pred_fallthru
        _
      %v1123 = vld [vmem:[%s275] sm:$0xff]
      %v1124 = vld [vmem:[%s275 + $0x8] sm:$0xff]
      %v1125 = vld [vmem:[%s275 + $0x10] sm:$0xff]
      %v1126 = vld [vmem:[%s275 + $0x18] sm:$0xff]
      %1127 = vadd.xlane.f32.xlu0 %v1096
      %v1128 = vpop.xlane.xlu0 %1127
      %1129 = vadd.xlane.f32.xlu0 %v1099
      %v1130 = vpop.xlane.xlu0 %1129
      %1131 = vadd.xlane.f32.xlu0 %v1104
      %v1132 = vpop.xlane.xlu0 %1131
      %1133 = vadd.xlane.f32.xlu0 %v1107
      %v1134 = vpop.xlane.xlu0 %1133
      %v1135 = vadd.f32 %v1123, %v1128
      %v1136 = vadd.f32 %v1124, %v1130
      %v1137 = vadd.f32 %v1125, %v1132
      %v1138 = vadd.f32 %v1126, %v1134
      %vm1139 = vcmask 7168
      %1140 = vst.msk [vmem:[%s275] sm:$0xff] %vm1139, %v1135
      %1141 = vst.msk [vmem:[%s275 + $0x8] sm:$0xff] %vm1139, %v1136
      %1142 = vst.msk [vmem:[%s275 + $0x10] sm:$0xff] %vm1139, %v1137
      %1143 = vst.msk [vmem:[%s275 + $0x18] sm:$0xff] %vm1139, %v1138
      %v1144 = vld [vmem:[%s280] sm:$0xff]
      %v1145 = vld [vmem:[%s280 + $0x8] sm:$0xff]
      %v1146 = vld [vmem:[%s280 + $0x10] sm:$0xff]
      %v1147 = vld [vmem:[%s280 + $0x18] sm:$0xff]
      %v1148 = vmul.f32 %v1096, %v1096
      %v1149 = vmul.f32 %v1099, %v1099
      %v1150 = vmul.f32 %v1104, %v1104
      %v1151 = vmul.f32 %v1107, %v1107
      %1152 = vadd.xlane.f32.xlu0 %v1148
      %v1153 = vpop.xlane.xlu0 %1152
      %1154 = vadd.xlane.f32.xlu0 %v1149
      %v1155 = vpop.xlane.xlu0 %1154
      %1156 = vadd.xlane.f32.xlu0 %v1150
      %v1157 = vpop.xlane.xlu0 %1156
      %1158 = vadd.xlane.f32.xlu0 %v1151
      %v1159 = vpop.xlane.xlu0 %1158
      %v1160 = vadd.f32 %v1144, %v1153
      %v1161 = vadd.f32 %v1145, %v1155
      %v1162 = vadd.f32 %v1146, %v1157
      %v1163 = vadd.f32 %v1147, %v1159
      %1164 = vst.msk [vmem:[%s280] sm:$0xff] %vm1139, %v1160
      %1165 = vst.msk [vmem:[%s280 + $0x8] sm:$0xff] %vm1139, %v1161
      %1166 = vst.msk [vmem:[%s280 + $0x10] sm:$0xff] %vm1139, %v1162
      %1167 = vst.msk [vmem:[%s280 + $0x18] sm:$0xff] %vm1139, %v1163
      %v1168 = vpack.c.bf16 %v1099, %v1096
      %v1169 = vpack.c.bf16 %v1107, %v1104
      %v1172 = vunpack.c.l.b16 %v1168
      %v1173 = vunpack.c.h.b16 %v1168
      %v1174 = vunpack.c.l.b16 %v1169
      %v1175 = vunpack.c.h.b16 %v1169
      %v1176 = vpack.c.b16 %v1172, %v1172
      %v1177 = vpack.c.b16 %v1173, %v1173
      %v1178 = vpack.c.b16 %v1174, %v1174
      %v1179 = vpack.c.b16 %v1175, %v1175
      %1184 = vst [vmem:[%s270] sm:$0xf] %v1176
      %1185 = vst [vmem:[%s270 + $0x4] sm:$0xf] %v1177
      %1186 = vst [vmem:[%s270 + $0x8] sm:$0xf] %v1178
      %1187 = vst [vmem:[%s270 + $0xc] sm:$0xf] %v1179
      %p1188 = scmp.lt.s32.totalorder %s21, 1
      %s1189 = scalar_select %p1188, %s21, 1
      %p1190 = scmp.lt.s32.totalorder %s22, 0
      %s1191 = scalar_select %p1190, %s22, 0
      %s1192 = smul.addr %s1189, 4
      %s1193 = sadd.s32 %s1191, %s1192
      %s1194 = smul.addr %s1193, 4
      %s1195 = scalar_lea.vmem %s3, %s1194
      %p1196 = scmp.lt.s32.totalorder %s21, 1
      %s1197 = scalar_select %p1196, %s21, 1
      %s1198 = smul.addr %s1197, 4
      %s1199 = smul.addr %s1198, 8
      %s1200 = scalar_lea.vmem %s4, %s1199
      %p1201 = scmp.lt.s32.totalorder %s21, 1
      %s1202 = scalar_select %p1201, %s21, 1
      %s1203 = smul.addr %s1202, 4
      %s1204 = smul.addr %s1203, 8
      %s1205 = scalar_lea.vmem %s5, %s1204
      // Predicated region
      $region37: #{a_call__.8} parent=31 // pred_check
        %p1206 = pneg %p119
      $region38: #{a_call__.8} parent=31 // pred_check_branch
        %1208 = sbr.rel (%p1206) target = $region40
      $region39: #{a_call__.8} parent=31 // pred_region
        _
      $region40: #{a_call__.8} parent=31 // pred_fallthru
        _
      // Predicated region
      $region41: #{a_call__.8} parent=31 // pred_check
        %p1209 = pneg %p145
      $region42: #{a_call__.8} parent=31 // pred_check_branch
        %1211 = sbr.rel (%p1209) target = $region44
      $region43: #{a_call__.8} parent=31 // pred_region
        _
      $region44: #{a_call__.8} parent=31 // pred_fallthru
        _
      // Predicated region
      $region45: #{a_call__.8} parent=31 // pred_check
        %p1212 = pneg %p171
      $region46: #{a_call__.8} parent=31 // pred_check_branch
        %1214 = sbr.rel (%p1212) target = $region48
      $region47: #{a_call__.8} parent=31 // pred_region
        _
      $region48: #{a_call__.8} parent=31 // pred_fallthru
        _
    $region32: #{a_call__.8} parent=5 // pred_fallthru
      _
    %p1215 = scmp.le.s32.totalorder 2, %s12
    // Predicated region
    $region49: #{a_call__.8} parent=5 // pred_check
      %p1216 = pneg %p1215
    $region50: #{a_call__.8} parent=5 // pred_check_branch
      %1218 = sbr.rel (%p1216) target = $region52
    $region51: #{a_call__.8} parent=5 // pred_region
      %s1219 = ssub.s32 %s12, 2
      // Predicated region
      $region53: #{a_call__.8} parent=51 // pred_check
        %p1220 = pneg %p125
      $region54: #{a_call__.8} parent=51 // pred_check_branch
        %1222 = sbr.rel (%p1220) target = $region56
      $region55: #{a_call__.8} parent=51 // pred_region
        %p1223 = scmp.lt.s32.totalorder %s23, 1
        %s1224 = scalar_select %p1223, %s23, 1
        %p1225 = scmp.lt.s32.totalorder %s24, 0
        %s1226 = scalar_select %p1225, %s24, 0
        %s1227 = smul.addr %s1224, 4
        %s1228 = sadd.s32 %s1226, %s1227
        %s1229 = smul.addr %s1228, 4
        %s1230 = scalar_lea.vmem %s3, %s1229
      $region56: #{a_call__.8} parent=51 // pred_fallthru
        _
      // Predicated region
      $region57: #{a_call__.8} parent=51 // pred_check
        %p1231 = pneg %p151
      $region58: #{a_call__.8} parent=51 // pred_check_branch
        %1233 = sbr.rel (%p1231) target = $region60
      $region59: #{a_call__.8} parent=51 // pred_region
        %p1234 = scmp.lt.s32.totalorder %s23, 1
        %s1235 = scalar_select %p1234, %s23, 1
        %s1236 = smul.addr %s1235, 4
        %s1237 = smul.addr %s1236, 8
        %s1238 = scalar_lea.vmem %s4, %s1237
      $region60: #{a_call__.8} parent=51 // pred_fallthru
        _
      // Predicated region
      $region61: #{a_call__.8} parent=51 // pred_check
        %p1239 = pneg %p177
      $region62: #{a_call__.8} parent=51 // pred_check_branch
        %1241 = sbr.rel (%p1239) target = $region64
      $region63: #{a_call__.8} parent=51 // pred_region
        %p1242 = scmp.lt.s32.totalorder %s23, 1
        %s1243 = scalar_select %p1242, %s23, 1
        %s1244 = smul.addr %s1243, 4
        %s1245 = smul.addr %s1244, 8
        %s1246 = scalar_lea.vmem %s5, %s1245
      $region64: #{a_call__.8} parent=51 // pred_fallthru
        _
    $region52: #{a_call__.8} parent=5 // pred_fallthru
      _
  $region6: #{a_call__.8} parent=0 // loop_footer
    %s16 = sadd.s32 1, %s12
  $region7: #{a_call__.8} parent=0 // loop_footer_branch
    %11 = sbr.rel target = $region3
  $region8: #{a_call__.8} parent=0 // loop_exit
    _

// kernel: a_call__.9
$region0: #{a_call__.9}
  #allocation0 [shape = 'u32[]', space=smem, size = 0x4, offset = 0x4, fixed_abs, tag = 'smem constant byte address 0x4 - core index']
  #allocation1 [shape = 'u32[144,128]{1,0:T(1,128)}', space=vmem, size = 0x12000, scoped, tag = 'internal scratch']
  %s0 = inlined_call_operand.vmem [shape: bf16[2,32,128], index: 0, kind: input, shape index: {}]
  %s1 = inlined_call_operand.vmem [shape: f32[2,32,1], index: 1, kind: input, shape index: {}]
  %s2 = inlined_call_operand.vmem [shape: f32[2,32,1], index: 2, kind: input, shape index: {}]
  %s3 = inlined_call_operand.vmem [shape: bf16[2,32,128], index: 3, kind: output, shape index: {}]
  %s4 = sld [smem:[#allocation0]]
  $region45: #{a_call__.9} parent=0
    _
  %s6 = ssub.s32 1, %s4
  %s7 = scalar_select 0, %s6, %s4
  loop: start=0, step=1, limit=4
  $region2: #{a_call__.9} parent=0 // loop_pre_header
    _
  $region3: #{a_call__.9} parent=0 // loop_header
    %s9 = sphi 0, %s13
    %p10 = scmp.ge.s32.totalorder %s9, 4
    %s16 = sphi 0, %s28
    %s17 = sphi 0, %s24
    %s18 = sphi 0, %s16
    %s19 = sphi 0, %s17
    %s20 = sphi 0, %s18
    %s21 = sphi 0, %s19
    %s33 = sphi 0, %s35
    %s36 = sphi 0, %s33
    %s37 = sphi 0, %s36
    %s53 = sphi 0, %s37
    %s59 = sphi 0, %s61
    %s62 = sphi 0, %s59
    %s63 = sphi 0, %s62
    %s79 = sphi 0, %s63
    %s85 = sphi 0, %s87
    %s88 = sphi 0, %s85
    %s89 = sphi 0, %s88
    %s105 = sphi 0, %s89
    %s113 = sphi 0, %s115
    %s116 = sphi 0, %s113
    %s117 = sphi 0, %s116
    %s133 = sphi 0, %s117
  $region4: #{a_call__.9} parent=0 // loop_header_branch
    %12 = sbr.rel (%p10) target = $region8
  $region5: #{a_call__.9} parent=0 // loop_body
    %s14 = ssub.s32 %s9, 1
    %s15 = ssub.s32 %s9, 2
    %s22 = sadd.s32 1, %s17
    %p23 = scmp.ge.s32.totalorder %s22, 1
    %s24 = scalar_select %p23, 0, %s22
    %s25 = sadd.s32 1, %s16
    %s26 = scalar_select %p23, %s25, %s16
    %p27 = scmp.ge.s32.totalorder %s26, 2
    %s28 = scalar_select %p27, 0, %s26
    %s29 = ssub.s32 %s16, %s28
    %s30 = ssub.s32 %s17, %s24
    %s31 = sor.u32 %s29, %s30
    %p32 = scmp.eq.s32.totalorder %s31, 0
    %s34 = sadd.s32 %s33, 1
    %s35 = scalar_select %p32, %s33, %s34
    %p38 = pneg %p32
    %p39 = scmp.eq.s32.totalorder %s9, 1
    %p40 = por %p38, %p39
    %p41 = scmp.ne.s32.totalorder %s33, %s36
    %p42 = scmp.eq.s32.totalorder %s9, 0
    %p43 = por %p41, %p42
    %p44 = scmp.ne.s32.totalorder %s33, %s36
    %p45 = scmp.eq.s32.totalorder %s14, 1
    %p46 = por %p44, %p45
    %p47 = scmp.ne.s32.totalorder %s36, %s37
    %p48 = scmp.eq.s32.totalorder %s14, 0
    %p49 = por %p47, %p48
    %p50 = scmp.ne.s32.totalorder %s36, %s37
    %p51 = scmp.eq.s32.totalorder %s15, 1
    %p52 = por %p50, %p51
    %p54 = scmp.ne.s32.totalorder %s37, %s53
    %p55 = scmp.eq.s32.totalorder %s15, 0
    %p56 = por %p54, %p55
    %s57 = ssub.s32 %s16, %s28
    %p58 = scmp.eq.s32.totalorder %s57, 0
    %s60 = sadd.s32 %s59, 1
    %s61 = scalar_select %p58, %s59, %s60
    %p64 = pneg %p58
    %p65 = scmp.eq.s32.totalorder %s9, 1
    %p66 = por %p64, %p65
    %p67 = scmp.ne.s32.totalorder %s59, %s62
    %p68 = scmp.eq.s32.totalorder %s9, 0
    %p69 = por %p67, %p68
    %p70 = scmp.ne.s32.totalorder %s59, %s62
    %p71 = scmp.eq.s32.totalorder %s14, 1
    %p72 = por %p70, %p71
    %p73 = scmp.ne.s32.totalorder %s62, %s63
    %p74 = scmp.eq.s32.totalorder %s14, 0
    %p75 = por %p73, %p74
    %p76 = scmp.ne.s32.totalorder %s62, %s63
    %p77 = scmp.eq.s32.totalorder %s15, 1
    %p78 = por %p76, %p77
    %p80 = scmp.ne.s32.totalorder %s63, %s79
    %p81 = scmp.eq.s32.totalorder %s15, 0
    %p82 = por %p80, %p81
    %s83 = ssub.s32 %s16, %s28
    %p84 = scmp.eq.s32.totalorder %s83, 0
    %s86 = sadd.s32 %s85, 1
    %s87 = scalar_select %p84, %s85, %s86
    %p90 = pneg %p84
    %p91 = scmp.eq.s32.totalorder %s9, 1
    %p92 = por %p90, %p91
    %p93 = scmp.ne.s32.totalorder %s85, %s88
    %p94 = scmp.eq.s32.totalorder %s9, 0
    %p95 = por %p93, %p94
    %p96 = scmp.ne.s32.totalorder %s85, %s88
    %p97 = scmp.eq.s32.totalorder %s14, 1
    %p98 = por %p96, %p97
    %p99 = scmp.ne.s32.totalorder %s88, %s89
    %p100 = scmp.eq.s32.totalorder %s14, 0
    %p101 = por %p99, %p100
    %p102 = scmp.ne.s32.totalorder %s88, %s89
    %p103 = scmp.eq.s32.totalorder %s15, 1
    %p104 = por %p102, %p103
    %p106 = scmp.ne.s32.totalorder %s89, %s105
    %p107 = scmp.eq.s32.totalorder %s15, 0
    %p108 = por %p106, %p107
    %s109 = ssub.s32 %s16, %s28
    %s110 = ssub.s32 %s17, %s24
    %s111 = sor.u32 %s109, %s110
    %p112 = scmp.eq.s32.totalorder %s111, 0
    %s114 = sadd.s32 %s113, 1
    %s115 = scalar_select %p112, %s113, %s114
    %p118 = pneg %p112
    %p119 = scmp.eq.s32.totalorder %s9, 1
    %p120 = por %p118, %p119
    %p121 = scmp.ne.s32.totalorder %s113, %s116
    %p122 = scmp.eq.s32.totalorder %s9, 0
    %p123 = por %p121, %p122
    %p124 = scmp.ne.s32.totalorder %s113, %s116
    %p125 = scmp.eq.s32.totalorder %s14, 1
    %p126 = por %p124, %p125
    %p127 = scmp.ne.s32.totalorder %s116, %s117
    %p128 = scmp.eq.s32.totalorder %s14, 0
    %p129 = por %p127, %p128
    %p130 = scmp.ne.s32.totalorder %s116, %s117
    %p131 = scmp.eq.s32.totalorder %s15, 1
    %p132 = por %p130, %p131
    %p134 = scmp.ne.s32.totalorder %s117, %s133
    %p135 = scmp.eq.s32.totalorder %s15, 0
    %p136 = por %p134, %p135
    %p137 = scmp.le.s32.totalorder 1, %s9
    %p138 = scmp.lt.s32.totalorder %s9, 3
    %p139 = pnand %p137, %p138
    %p140 = pneg %p139
    // Predicated region
    $region9: #{a_call__.9} parent=5 // pred_check
      _
    $region10: #{a_call__.9} parent=5 // pred_check_branch
      %142 = sbr.rel (%p139) target = $region12
    $region11: #{a_call__.9} parent=5 // pred_region
      %s143 = ssub.s32 %s9, 1
    $region12: #{a_call__.9} parent=5 // pred_fallthru
      _
    %p144 = scmp.lt.s32.totalorder %s9, 2
    // Predicated region
    $region13: #{a_call__.9} parent=5 // pred_check
      %p145 = pneg %p144
    $region14: #{a_call__.9} parent=5 // pred_check_branch
      %147 = sbr.rel (%p145) target = $region16
    $region15: #{a_call__.9} parent=5 // pred_region
      // Predicated region
      $region17: #{a_call__.9} parent=15 // pred_check
        %p148 = pneg %p43
      $region18: #{a_call__.9} parent=15 // pred_check_branch
        %150 = sbr.rel (%p148) target = $region20
      $region19: #{a_call__.9} parent=15 // pred_region
        %p151 = scmp.lt.s32.totalorder %s16, 1
        %s152 = scalar_select %p151, %s16, 1
        %p153 = scmp.lt.s32.totalorder %s17, 0
        %s154 = scalar_select %p153, %s17, 0
        %s155 = smul.addr %s152, 4
        %s156 = sadd.s32 %s154, %s155
        %s157 = smul.addr %s156, 4
        %s158 = scalar_lea.vmem %s0, %s157
      $region20: #{a_call__.9} parent=15 // pred_fallthru
        _
      // Predicated region
      $region21: #{a_call__.9} parent=15 // pred_check
        %p159 = pneg %p69
      $region22: #{a_call__.9} parent=15 // pred_check_branch
        %161 = sbr.rel (%p159) target = $region24
      $region23: #{a_call__.9} parent=15 // pred_region
        %p162 = scmp.lt.s32.totalorder %s16, 1
        %s163 = scalar_select %p162, %s16, 1
        %s164 = smul.addr %s163, 4
        %s165 = smul.addr %s164, 8
        %s166 = scalar_lea.vmem %s1, %s165
      $region24: #{a_call__.9} parent=15 // pred_fallthru
        _
      // Predicated region
      $region25: #{a_call__.9} parent=15 // pred_check
        %p167 = pneg %p95
      $region26: #{a_call__.9} parent=15 // pred_check_branch
        %169 = sbr.rel (%p167) target = $region28
      $region27: #{a_call__.9} parent=15 // pred_region
        %p170 = scmp.lt.s32.totalorder %s16, 1
        %s171 = scalar_select %p170, %s16, 1
        %s172 = smul.addr %s171, 4
        %s173 = smul.addr %s172, 8
        %s174 = scalar_lea.vmem %s2, %s173
      $region28: #{a_call__.9} parent=15 // pred_fallthru
        _
    $region16: #{a_call__.9} parent=5 // pred_fallthru
      _
    %p175 = scmp.le.s32.totalorder 1, %s9
    %p176 = scmp.lt.s32.totalorder %s9, 3
    %p177 = pnand %p175, %p176
    %p178 = pneg %p177
    // Predicated region
    $region29: #{a_call__.9} parent=5 // pred_check
      _
    $region30: #{a_call__.9} parent=5 // pred_check_branch
      %180 = sbr.rel (%p177) target = $region32
    $region31: #{a_call__.9} parent=5 // pred_region
      %s181 = ssub.s32 %s9, 1
      %p182 = scmp.lt.s32.totalorder %s18, 1
      %s183 = scalar_select %p182, %s18, 1
      %p184 = scmp.lt.s32.totalorder %s19, 0
      %s185 = scalar_select %p184, %s19, 0
      %s186 = smul.addr %s183, 4
      %s187 = sadd.s32 %s185, %s186
      %s188 = smul.addr %s187, 4
      %s189 = scalar_lea.vmem %s0, %s188
      %p190 = pneg %p49
      %p191 = pneg %p46
      %p192 = scmp.lt.s32.totalorder %s18, 1
      %s193 = scalar_select %p192, %s18, 1
      %s194 = smul.addr %s193, 4
      %s195 = smul.addr %s194, 8
      %s196 = scalar_lea.vmem %s1, %s195
      %p197 = pneg %p75
      %p198 = pneg %p72
      %p199 = scmp.lt.s32.totalorder %s18, 1
      %s200 = scalar_select %p199, %s18, 1
      %s201 = smul.addr %s200, 4
      %s202 = smul.addr %s201, 8
      %s203 = scalar_lea.vmem %s2, %s202
      %p204 = pneg %p101
      %p205 = pneg %p98
      %p206 = pneg %p129
      %p207 = pneg %p126
      %p208 = scmp.lt.s32.totalorder %s18, 1
      %s209 = scalar_select %p208, %s18, 1
      %p210 = scmp.lt.s32.totalorder %s19, 0
      %s211 = scalar_select %p210, %s19, 0
      %s212 = smul.addr %s209, 4
      %s213 = sadd.s32 %s211, %s212
      %s214 = smul.addr %s213, 4
      %s215 = scalar_lea.vmem %s3, %s214
      %p216 = scmp.lt.s32.totalorder %s18, 1
      %s217 = scalar_select %p216, %s18, 1
      %p218 = scmp.lt.s32.totalorder %s19, 0
      %s219 = scalar_select %p218, %s19, 0
      %s220 = smul.addr %s217, 4
      %s221 = sadd.s32 %s219, %s220
      %s222 = smul.addr %s221, 4
      %s223 = scalar_lea.vmem %s0, %s222
      %p224 = scmp.lt.s32.totalorder %s18, 1
      %s225 = scalar_select %p224, %s18, 1
      %s226 = smul.addr %s225, 4
      %s227 = smul.addr %s226, 8
      %s228 = scalar_lea.vmem %s1, %s227
      %p229 = scmp.lt.s32.totalorder %s18, 1
      %s230 = scalar_select %p229, %s18, 1
      %s231 = smul.addr %s230, 4
      %s232 = smul.addr %s231, 8
      %s233 = scalar_lea.vmem %s2, %s232
      %p234 = scmp.lt.s32.totalorder %s18, 1
      %s235 = scalar_select %p234, %s18, 1
      %p236 = scmp.lt.s32.totalorder %s19, 0
      %s237 = scalar_select %p236, %s19, 0
      %s238 = smul.addr %s235, 4
      %s239 = sadd.s32 %s237, %s238
      %s240 = smul.addr %s239, 4
      %s241 = scalar_lea.vmem %s3, %s240
      %v242 = vld [vmem:[%s223] sm:$0xf]
      %v243 = vld [vmem:[%s223 + $0x4] sm:$0xf]
      %v244 = vld [vmem:[%s223 + $0x8] sm:$0xf]
      %v245 = vld [vmem:[%s223 + $0xc] sm:$0xf]
      %v246 = vunpack.c.l.bf16 %v242
      %v247 = vunpack.c.l.bf16 %v243
      %v248 = vunpack.c.l.bf16 %v244
      %v249 = vunpack.c.l.bf16 %v245
      %v250 = vld [vmem:[%s228] sm:$0xff]
      %v251 = vld [vmem:[%s228 + $0x8] sm:$0xff]
      %v252 = vld [vmem:[%s228 + $0x10] sm:$0xff]
      %v253 = vld [vmem:[%s228 + $0x18] sm:$0xff]
      %v254 = vmul.f32 %v250, 0.008
      %v255 = vmul.f32 %v251, 0.008
      %v256 = vmul.f32 %v252, 0.008
      %v257 = vmul.f32 %v253, 0.008
      %v258 = vld [vmem:[%s233] sm:$0xff]
      %v259 = vld [vmem:[%s233 + $0x8] sm:$0xff]
      %v260 = vld [vmem:[%s233 + $0x10] sm:$0xff]
      %v261 = vld [vmem:[%s233 + $0x18] sm:$0xff]
      %v262 = vmul.f32 %v258, 0.008
      %v263 = vmul.f32 %v259, 0.008
      %v264 = vmul.f32 %v260, 0.008
      %v265 = vmul.f32 %v261, 0.008
      %v266 = vmul.f32 %v254, %v254
      %v267 = vmul.f32 %v255, %v255
      %v268 = vmul.f32 %v256, %v256
      %v269 = vmul.f32 %v257, %v257
      %v270 = vsub.f32 %v262, %v266
      %v271 = vsub.f32 %v263, %v267
      %v272 = vsub.f32 %v264, %v268
      %v273 = vsub.f32 %v265, %v269
      %v274 = vmax.f32 %v270, 0.0
      %v275 = vmax.f32 %v271, 0.0
      %v276 = vmax.f32 %v272, 0.0
      %v277 = vmax.f32 %v273, 0.0
      %279 = vset.pattern.permute.xlu0 0
      %280 = vperm.xlu0 %279, %v254
      %v281 = vpop.permute.xlu0 %280
      %284 = vset.pattern.permute.xlu0 0
      %285 = vperm.xlu0 %284, %v255
      %v286 = vpop.permute.xlu0 %285
      %289 = vset.pattern.permute.xlu0 0
      %290 = vperm.xlu0 %289, %v256
      %v291 = vpop.permute.xlu0 %290
      %294 = vset.pattern.permute.xlu0 0
      %295 = vperm.xlu0 %294, %v257
      %v296 = vpop.permute.xlu0 %295
      %v298 = vsub.f32 %v246, %v281
      %v299 = vsub.f32 %v247, %v286
      %v300 = vsub.f32 %v248, %v291
      %v301 = vsub.f32 %v249, %v296
      %v302 = vadd.f32 %v274, 1e-05
      %v303 = vadd.f32 %v275, 1e-05
      %v304 = vadd.f32 %v276, 1e-05
      %v305 = vadd.f32 %v277, 1e-05
      %v306 = vrsqrt.pop %v302
      %v307 = vrsqrt.pop %v303
      %v308 = vrsqrt.pop %v304
      %v309 = vrsqrt.pop %v305
      %311 = vset.pattern.permute.xlu0 0
      %312 = vperm.xlu0 %311, %v306
      %v313 = vpop.permute.xlu0 %312
      %316 = vset.pattern.permute.xlu0 0
      %317 = vperm.xlu0 %316, %v307
      %v318 = vpop.permute.xlu0 %317
      %321 = vset.pattern.permute.xlu0 0
      %322 = vperm.xlu0 %321, %v308
      %v323 = vpop.permute.xlu0 %322
      %326 = vset.pattern.permute.xlu0 0
      %327 = vperm.xlu0 %326, %v309
      %v328 = vpop.permute.xlu0 %327
      %v330 = vmul.f32 %v298, %v313
      %v331 = vmul.f32 %v299, %v318
      %v332 = vmul.f32 %v300, %v323
      %v333 = vmul.f32 %v301, %v328
      %vm334 = vcmp.ge.f32.partialorder %v330, 0.0
      %vm335 = vcmp.ge.f32.partialorder %v331, 0.0
      %vm336 = vcmp.ge.f32.partialorder %v332, 0.0
      %vm337 = vcmp.ge.f32.partialorder %v333, 0.0
      %v338 = vmul.f32 %v330, 0.2
      %v339 = vmul.f32 %v331, 0.2
      %v340 = vmul.f32 %v332, 0.2
      %v341 = vmul.f32 %v333, 0.2
      %v342 = vsel %vm334, %v330, %v338
      %v343 = vsel %vm335, %v331, %v339
      %v344 = vsel %vm336, %v332, %v340
      %v345 = vsel %vm337, %v333, %v341
      %v346 = vpack.c.bf16 %v343, %v342
      %v347 = vpack.c.bf16 %v345, %v344
      %v350 = vunpack.c.l.b16 %v346
      %v351 = vunpack.c.h.b16 %v346
      %v352 = vunpack.c.l.b16 %v347
      %v353 = vunpack.c.h.b16 %v347
      %v354 = vpack.c.b16 %v350, %v350
      %v355 = vpack.c.b16 %v351, %v351
      %v356 = vpack.c.b16 %v352, %v352
      %v357 = vpack.c.b16 %v353, %v353
      %362 = vst [vmem:[%s241] sm:$0xf] %v354
      %363 = vst [vmem:[%s241 + $0x4] sm:$0xf] %v355
      %364 = vst [vmem:[%s241 + $0x8] sm:$0xf] %v356
      %365 = vst [vmem:[%s241 + $0xc] sm:$0xf] %v357
      %p366 = scmp.lt.s32.totalorder %s18, 1
      %s367 = scalar_select %p366, %s18, 1
      %p368 = scmp.lt.s32.totalorder %s19, 0
      %s369 = scalar_select %p368, %s19, 0
      %s370 = smul.addr %s367, 4
      %s371 = sadd.s32 %s369, %s370
      %s372 = smul.addr %s371, 4
      %s373 = scalar_lea.vmem %s3, %s372
      // Predicated region
      $region33: #{a_call__.9} parent=31 // pred_check
        %p374 = pneg %p126
      $region34: #{a_call__.9} parent=31 // pred_check_branch
        %376 = sbr.rel (%p374) target = $region36
      $region35: #{a_call__.9} parent=31 // pred_region
        _
      $region36: #{a_call__.9} parent=31 // pred_fallthru
        _
    $region32: #{a_call__.9} parent=5 // pred_fallthru
      _
    %p377 = scmp.le.s32.totalorder 2, %s9
    // Predicated region
    $region37: #{a_call__.9} parent=5 // pred_check
      %p378 = pneg %p377
    $region38: #{a_call__.9} parent=5 // pred_check_branch
      %380 = sbr.rel (%p378) target = $region40
    $region39: #{a_call__.9} parent=5 // pred_region
      %s381 = ssub.s32 %s9, 2
      // Predicated region
      $region41: #{a_call__.9} parent=39 // pred_check
        %p382 = pneg %p132
      $region42: #{a_call__.9} parent=39 // pred_check_branch
        %384 = sbr.rel (%p382) target = $region44
      $region43: #{a_call__.9} parent=39 // pred_region
        %p385 = scmp.lt.s32.totalorder %s20, 1
        %s386 = scalar_select %p385, %s20, 1
        %p387 = scmp.lt.s32.totalorder %s21, 0
        %s388 = scalar_select %p387, %s21, 0
        %s389 = smul.addr %s386, 4
        %s390 = sadd.s32 %s388, %s389
        %s391 = smul.addr %s390, 4
        %s392 = scalar_lea.vmem %s3, %s391
      $region44: #{a_call__.9} parent=39 // pred_fallthru
        _
    $region40: #{a_call__.9} parent=5 // pred_fallthru
      _
  $region6: #{a_call__.9} parent=0 // loop_footer
    %s13 = sadd.s32 1, %s9
  $region7: #{a_call__.9} parent=0 // loop_footer_branch
    %8 = sbr.rel target = $region3
  $region8: #{a_call__.9} parent=0 // loop_exit
    _

// kernel: a_call__.11
$region0: #{a_call__.11}
  #allocation0 [shape = 'u32[]', space=smem, size = 0x4, offset = 0x4, fixed_abs, tag = 'smem constant byte address 0x4 - core index']
  #allocation1 [shape = 'u32[144,128]{1,0:T(1,128)}', space=vmem, size = 0x12000, scoped, tag = 'internal scratch']
  %s0 = inlined_call_operand.vmem [shape: bf16[2,64,128], index: 0, kind: input, shape index: {}]
  %s1 = inlined_call_operand.vmem [shape: f32[2,64,1], index: 1, kind: input, shape index: {}]
  %s2 = inlined_call_operand.vmem [shape: f32[2,64,1], index: 2, kind: input, shape index: {}]
  %s3 = inlined_call_operand.vmem [shape: bf16[2,64,128], index: 3, kind: output, shape index: {}]
  %s4 = sld [smem:[#allocation0]]
  $region45: #{a_call__.11} parent=0
    _
  %s6 = ssub.s32 1, %s4
  %s7 = scalar_select 0, %s6, %s4
  loop: start=0, step=1, limit=4
  $region2: #{a_call__.11} parent=0 // loop_pre_header
    _
  $region3: #{a_call__.11} parent=0 // loop_header
    %s9 = sphi 0, %s13
    %p10 = scmp.ge.s32.totalorder %s9, 4
    %s16 = sphi 0, %s28
    %s17 = sphi 0, %s24
    %s18 = sphi 0, %s16
    %s19 = sphi 0, %s17
    %s20 = sphi 0, %s18
    %s21 = sphi 0, %s19
    %s33 = sphi 0, %s35
    %s36 = sphi 0, %s33
    %s37 = sphi 0, %s36
    %s53 = sphi 0, %s37
    %s59 = sphi 0, %s61
    %s62 = sphi 0, %s59
    %s63 = sphi 0, %s62
    %s79 = sphi 0, %s63
    %s85 = sphi 0, %s87
    %s88 = sphi 0, %s85
    %s89 = sphi 0, %s88
    %s105 = sphi 0, %s89
    %s113 = sphi 0, %s115
    %s116 = sphi 0, %s113
    %s117 = sphi 0, %s116
    %s133 = sphi 0, %s117
  $region4: #{a_call__.11} parent=0 // loop_header_branch
    %12 = sbr.rel (%p10) target = $region8
  $region5: #{a_call__.11} parent=0 // loop_body
    %s14 = ssub.s32 %s9, 1
    %s15 = ssub.s32 %s9, 2
    %s22 = sadd.s32 1, %s17
    %p23 = scmp.ge.s32.totalorder %s22, 1
    %s24 = scalar_select %p23, 0, %s22
    %s25 = sadd.s32 1, %s16
    %s26 = scalar_select %p23, %s25, %s16
    %p27 = scmp.ge.s32.totalorder %s26, 2
    %s28 = scalar_select %p27, 0, %s26
    %s29 = ssub.s32 %s16, %s28
    %s30 = ssub.s32 %s17, %s24
    %s31 = sor.u32 %s29, %s30
    %p32 = scmp.eq.s32.totalorder %s31, 0
    %s34 = sadd.s32 %s33, 1
    %s35 = scalar_select %p32, %s33, %s34
    %p38 = pneg %p32
    %p39 = scmp.eq.s32.totalorder %s9, 1
    %p40 = por %p38, %p39
    %p41 = scmp.ne.s32.totalorder %s33, %s36
    %p42 = scmp.eq.s32.totalorder %s9, 0
    %p43 = por %p41, %p42
    %p44 = scmp.ne.s32.totalorder %s33, %s36
    %p45 = scmp.eq.s32.totalorder %s14, 1
    %p46 = por %p44, %p45
    %p47 = scmp.ne.s32.totalorder %s36, %s37
    %p48 = scmp.eq.s32.totalorder %s14, 0
    %p49 = por %p47, %p48
    %p50 = scmp.ne.s32.totalorder %s36, %s37
    %p51 = scmp.eq.s32.totalorder %s15, 1
    %p52 = por %p50, %p51
    %p54 = scmp.ne.s32.totalorder %s37, %s53
    %p55 = scmp.eq.s32.totalorder %s15, 0
    %p56 = por %p54, %p55
    %s57 = ssub.s32 %s16, %s28
    %p58 = scmp.eq.s32.totalorder %s57, 0
    %s60 = sadd.s32 %s59, 1
    %s61 = scalar_select %p58, %s59, %s60
    %p64 = pneg %p58
    %p65 = scmp.eq.s32.totalorder %s9, 1
    %p66 = por %p64, %p65
    %p67 = scmp.ne.s32.totalorder %s59, %s62
    %p68 = scmp.eq.s32.totalorder %s9, 0
    %p69 = por %p67, %p68
    %p70 = scmp.ne.s32.totalorder %s59, %s62
    %p71 = scmp.eq.s32.totalorder %s14, 1
    %p72 = por %p70, %p71
    %p73 = scmp.ne.s32.totalorder %s62, %s63
    %p74 = scmp.eq.s32.totalorder %s14, 0
    %p75 = por %p73, %p74
    %p76 = scmp.ne.s32.totalorder %s62, %s63
    %p77 = scmp.eq.s32.totalorder %s15, 1
    %p78 = por %p76, %p77
    %p80 = scmp.ne.s32.totalorder %s63, %s79
    %p81 = scmp.eq.s32.totalorder %s15, 0
    %p82 = por %p80, %p81
    %s83 = ssub.s32 %s16, %s28
    %p84 = scmp.eq.s32.totalorder %s83, 0
    %s86 = sadd.s32 %s85, 1
    %s87 = scalar_select %p84, %s85, %s86
    %p90 = pneg %p84
    %p91 = scmp.eq.s32.totalorder %s9, 1
    %p92 = por %p90, %p91
    %p93 = scmp.ne.s32.totalorder %s85, %s88
    %p94 = scmp.eq.s32.totalorder %s9, 0
    %p95 = por %p93, %p94
    %p96 = scmp.ne.s32.totalorder %s85, %s88
    %p97 = scmp.eq.s32.totalorder %s14, 1
    %p98 = por %p96, %p97
    %p99 = scmp.ne.s32.totalorder %s88, %s89
    %p100 = scmp.eq.s32.totalorder %s14, 0
    %p101 = por %p99, %p100
    %p102 = scmp.ne.s32.totalorder %s88, %s89
    %p103 = scmp.eq.s32.totalorder %s15, 1
    %p104 = por %p102, %p103
    %p106 = scmp.ne.s32.totalorder %s89, %s105
    %p107 = scmp.eq.s32.totalorder %s15, 0
    %p108 = por %p106, %p107
    %s109 = ssub.s32 %s16, %s28
    %s110 = ssub.s32 %s17, %s24
    %s111 = sor.u32 %s109, %s110
    %p112 = scmp.eq.s32.totalorder %s111, 0
    %s114 = sadd.s32 %s113, 1
    %s115 = scalar_select %p112, %s113, %s114
    %p118 = pneg %p112
    %p119 = scmp.eq.s32.totalorder %s9, 1
    %p120 = por %p118, %p119
    %p121 = scmp.ne.s32.totalorder %s113, %s116
    %p122 = scmp.eq.s32.totalorder %s9, 0
    %p123 = por %p121, %p122
    %p124 = scmp.ne.s32.totalorder %s113, %s116
    %p125 = scmp.eq.s32.totalorder %s14, 1
    %p126 = por %p124, %p125
    %p127 = scmp.ne.s32.totalorder %s116, %s117
    %p128 = scmp.eq.s32.totalorder %s14, 0
    %p129 = por %p127, %p128
    %p130 = scmp.ne.s32.totalorder %s116, %s117
    %p131 = scmp.eq.s32.totalorder %s15, 1
    %p132 = por %p130, %p131
    %p134 = scmp.ne.s32.totalorder %s117, %s133
    %p135 = scmp.eq.s32.totalorder %s15, 0
    %p136 = por %p134, %p135
    %p137 = scmp.le.s32.totalorder 1, %s9
    %p138 = scmp.lt.s32.totalorder %s9, 3
    %p139 = pnand %p137, %p138
    %p140 = pneg %p139
    // Predicated region
    $region9: #{a_call__.11} parent=5 // pred_check
      _
    $region10: #{a_call__.11} parent=5 // pred_check_branch
      %142 = sbr.rel (%p139) target = $region12
    $region11: #{a_call__.11} parent=5 // pred_region
      %s143 = ssub.s32 %s9, 1
    $region12: #{a_call__.11} parent=5 // pred_fallthru
      _
    %p144 = scmp.lt.s32.totalorder %s9, 2
    // Predicated region
    $region13: #{a_call__.11} parent=5 // pred_check
      %p145 = pneg %p144
    $region14: #{a_call__.11} parent=5 // pred_check_branch
      %147 = sbr.rel (%p145) target = $region16
    $region15: #{a_call__.11} parent=5 // pred_region
      // Predicated region
      $region17: #{a_call__.11} parent=15 // pred_check
        %p148 = pneg %p43
      $region18: #{a_call__.11} parent=15 // pred_check_branch
        %150 = sbr.rel (%p148) target = $region20
      $region19: #{a_call__.11} parent=15 // pred_region
        %p151 = scmp.lt.s32.totalorder %s16, 1
        %s152 = scalar_select %p151, %s16, 1
        %p153 = scmp.lt.s32.totalorder %s17, 0
        %s154 = scalar_select %p153, %s17, 0
        %s155 = smul.addr %s152, 8
        %s156 = sadd.s32 %s154, %s155
        %s157 = smul.addr %s156, 4
        %s158 = scalar_lea.vmem %s0, %s157
      $region20: #{a_call__.11} parent=15 // pred_fallthru
        _
      // Predicated region
      $region21: #{a_call__.11} parent=15 // pred_check
        %p159 = pneg %p69
      $region22: #{a_call__.11} parent=15 // pred_check_branch
        %161 = sbr.rel (%p159) target = $region24
      $region23: #{a_call__.11} parent=15 // pred_region
        %p162 = scmp.lt.s32.totalorder %s16, 1
        %s163 = scalar_select %p162, %s16, 1
        %s164 = smul.addr %s163, 8
        %s165 = smul.addr %s164, 8
        %s166 = scalar_lea.vmem %s1, %s165
      $region24: #{a_call__.11} parent=15 // pred_fallthru
        _
      // Predicated region
      $region25: #{a_call__.11} parent=15 // pred_check
        %p167 = pneg %p95
      $region26: #{a_call__.11} parent=15 // pred_check_branch
        %169 = sbr.rel (%p167) target = $region28
      $region27: #{a_call__.11} parent=15 // pred_region
        %p170 = scmp.lt.s32.totalorder %s16, 1
        %s171 = scalar_select %p170, %s16, 1
        %s172 = smul.addr %s171, 8
        %s173 = smul.addr %s172, 8
        %s174 = scalar_lea.vmem %s2, %s173
      $region28: #{a_call__.11} parent=15 // pred_fallthru
        _
    $region16: #{a_call__.11} parent=5 // pred_fallthru
      _
    %p175 = scmp.le.s32.totalorder 1, %s9
    %p176 = scmp.lt.s32.totalorder %s9, 3
    %p177 = pnand %p175, %p176
    %p178 = pneg %p177
    // Predicated region
    $region29: #{a_call__.11} parent=5 // pred_check
      _
    $region30: #{a_call__.11} parent=5 // pred_check_branch
      %180 = sbr.rel (%p177) target = $region32
    $region31: #{a_call__.11} parent=5 // pred_region
      %s181 = ssub.s32 %s9, 1
      %p182 = scmp.lt.s32.totalorder %s18, 1
      %s183 = scalar_select %p182, %s18, 1
      %p184 = scmp.lt.s32.totalorder %s19, 0
      %s185 = scalar_select %p184, %s19, 0
      %s186 = smul.addr %s183, 8
      %s187 = sadd.s32 %s185, %s186
      %s188 = smul.addr %s187, 4
      %s189 = scalar_lea.vmem %s0, %s188
      %p190 = pneg %p49
      %p191 = pneg %p46
      %p192 = scmp.lt.s32.totalorder %s18, 1
      %s193 = scalar_select %p192, %s18, 1
      %s194 = smul.addr %s193, 8
      %s195 = smul.addr %s194, 8
      %s196 = scalar_lea.vmem %s1, %s195
      %p197 = pneg %p75
      %p198 = pneg %p72
      %p199 = scmp.lt.s32.totalorder %s18, 1
      %s200 = scalar_select %p199, %s18, 1
      %s201 = smul.addr %s200, 8
      %s202 = smul.addr %s201, 8
      %s203 = scalar_lea.vmem %s2, %s202
      %p204 = pneg %p101
      %p205 = pneg %p98
      %p206 = pneg %p129
      %p207 = pneg %p126
      %p208 = scmp.lt.s32.totalorder %s18, 1
      %s209 = scalar_select %p208, %s18, 1
      %p210 = scmp.lt.s32.totalorder %s19, 0
      %s211 = scalar_select %p210, %s19, 0
      %s212 = smul.addr %s209, 8
      %s213 = sadd.s32 %s211, %s212
      %s214 = smul.addr %s213, 4
      %s215 = scalar_lea.vmem %s3, %s214
      %p216 = scmp.lt.s32.totalorder %s18, 1
      %s217 = scalar_select %p216, %s18, 1
      %p218 = scmp.lt.s32.totalorder %s19, 0
      %s219 = scalar_select %p218, %s19, 0
      %s220 = smul.addr %s217, 8
      %s221 = sadd.s32 %s219, %s220
      %s222 = smul.addr %s221, 4
      %s223 = scalar_lea.vmem %s0, %s222
      %p224 = scmp.lt.s32.totalorder %s18, 1
      %s225 = scalar_select %p224, %s18, 1
      %s226 = smul.addr %s225, 8
      %s227 = smul.addr %s226, 8
      %s228 = scalar_lea.vmem %s1, %s227
      %p229 = scmp.lt.s32.totalorder %s18, 1
      %s230 = scalar_select %p229, %s18, 1
      %s231 = smul.addr %s230, 8
      %s232 = smul.addr %s231, 8
      %s233 = scalar_lea.vmem %s2, %s232
      %p234 = scmp.lt.s32.totalorder %s18, 1
      %s235 = scalar_select %p234, %s18, 1
      %p236 = scmp.lt.s32.totalorder %s19, 0
      %s237 = scalar_select %p236, %s19, 0
      %s238 = smul.addr %s235, 8
      %s239 = sadd.s32 %s237, %s238
      %s240 = smul.addr %s239, 4
      %s241 = scalar_lea.vmem %s3, %s240
      %v242 = vld [vmem:[%s223] sm:$0xf]
      %v243 = vld [vmem:[%s223 + $0x4] sm:$0xf]
      %v244 = vld [vmem:[%s223 + $0x8] sm:$0xf]
      %v245 = vld [vmem:[%s223 + $0xc] sm:$0xf]
      %v246 = vld [vmem:[%s223 + $0x10] sm:$0xf]
      %v247 = vld [vmem:[%s223 + $0x14] sm:$0xf]
      %v248 = vld [vmem:[%s223 + $0x18] sm:$0xf]
      %v249 = vld [vmem:[%s223 + $0x1c] sm:$0xf]
      %v250 = vunpack.c.l.bf16 %v242
      %v251 = vunpack.c.l.bf16 %v243
      %v252 = vunpack.c.l.bf16 %v244
      %v253 = vunpack.c.l.bf16 %v245
      %v254 = vunpack.c.l.bf16 %v246
      %v255 = vunpack.c.l.bf16 %v247
      %v256 = vunpack.c.l.bf16 %v248
      %v257 = vunpack.c.l.bf16 %v249
      %v258 = vld [vmem:[%s228] sm:$0xff]
      %v259 = vld [vmem:[%s228 + $0x8] sm:$0xff]
      %v260 = vld [vmem:[%s228 + $0x10] sm:$0xff]
      %v261 = vld [vmem:[%s228 + $0x18] sm:$0xff]
      %v262 = vld [vmem:[%s228 + $0x20] sm:$0xff]
      %v263 = vld [vmem:[%s228 + $0x28] sm:$0xff]
      %v264 = vld [vmem:[%s228 + $0x30] sm:$0xff]
      %v265 = vld [vmem:[%s228 + $0x38] sm:$0xff]
      %v266 = vmul.f32 %v258, 0.037037037
      %v267 = vmul.f32 %v259, 0.037037037
      %v268 = vmul.f32 %v260, 0.037037037
      %v269 = vmul.f32 %v261, 0.037037037
      %v270 = vmul.f32 %v262, 0.037037037
      %v271 = vmul.f32 %v263, 0.037037037
      %v272 = vmul.f32 %v264, 0.037037037
      %v273 = vmul.f32 %v265, 0.037037037
      %v274 = vld [vmem:[%s233] sm:$0xff]
      %v275 = vld [vmem:[%s233 + $0x8] sm:$0xff]
      %v276 = vld [vmem:[%s233 + $0x10] sm:$0xff]
      %v277 = vld [vmem:[%s233 + $0x18] sm:$0xff]
      %v278 = vld [vmem:[%s233 + $0x20] sm:$0xff]
      %v279 = vld [vmem:[%s233 + $0x28] sm:$0xff]
      %v280 = vld [vmem:[%s233 + $0x30] sm:$0xff]
      %v281 = vld [vmem:[%s233 + $0x38] sm:$0xff]
      %v282 = vmul.f32 %v274, 0.037037037
      %v283 = vmul.f32 %v275, 0.037037037
      %v284 = vmul.f32 %v276, 0.037037037
      %v285 = vmul.f32 %v277, 0.037037037
      %v286 = vmul.f32 %v278, 0.037037037
      %v287 = vmul.f32 %v279, 0.037037037
      %v288 = vmul.f32 %v280, 0.037037037
      %v289 = vmul.f32 %v281, 0.037037037
      %v290 = vmul.f32 %v266, %v266
      %v291 = vmul.f32 %v267, %v267
      %v292 = vmul.f32 %v268, %v268
      %v293 = vmul.f32 %v269, %v269
      %v294 = vmul.f32 %v270, %v270
      %v295 = vmul.f32 %v271, %v271
      %v296 = vmul.f32 %v272, %v272
      %v297 = vmul.f32 %v273, %v273
      %v298 = vsub.f32 %v282, %v290
      %v299 = vsub.f32 %v283, %v291
      %v300 = vsub.f32 %v284, %v292
      %v301 = vsub.f32 %v285, %v293
      %v302 = vsub.f32 %v286, %v294
      %v303 = vsub.f32 %v287, %v295
      %v304 = vsub.f32 %v288, %v296
      %v305 = vsub.f32 %v289, %v297
      %v306 = vmax.f32 %v298, 0.0
      %v307 = vmax.f32 %v299, 0.0
      %v308 = vmax.f32 %v300, 0.0
      %v309 = vmax.f32 %v301, 0.0
      %v310 = vmax.f32 %v302, 0.0
      %v311 = vmax.f32 %v303, 0.0
      %v312 = vmax.f32 %v304, 0.0
      %v313 = vmax.f32 %v305, 0.0
      %315 = vset.pattern.permute.xlu0 0
      %316 = vperm.xlu0 %315, %v266
      %v317 = vpop.permute.xlu0 %316
      %320 = vset.pattern.permute.xlu0 0
      %321 = vperm.xlu0 %320, %v267
      %v322 = vpop.permute.xlu0 %321
      %325 = vset.pattern.permute.xlu0 0
      %326 = vperm.xlu0 %325, %v268
      %v327 = vpop.permute.xlu0 %326
      %330 = vset.pattern.permute.xlu0 0
      %331 = vperm.xlu0 %330, %v269
      %v332 = vpop.permute.xlu0 %331
      %335 = vset.pattern.permute.xlu0 0
      %336 = vperm.xlu0 %335, %v270
      %v337 = vpop.permute.xlu0 %336
      %340 = vset.pattern.permute.xlu0 0
      %341 = vperm.xlu0 %340, %v271
      %v342 = vpop.permute.xlu0 %341
      %345 = vset.pattern.permute.xlu0 0
      %346 = vperm.xlu0 %345, %v272
      %v347 = vpop.permute.xlu0 %346
      %350 = vset.pattern.permute.xlu0 0
      %351 = vperm.xlu0 %350, %v273
      %v352 = vpop.permute.xlu0 %351
      %v354 = vsub.f32 %v250, %v317
      %v355 = vsub.f32 %v251, %v322
      %v356 = vsub.f32 %v252, %v327
      %v357 = vsub.f32 %v253, %v332
      %v358 = vsub.f32 %v254, %v337
      %v359 = vsub.f32 %v255, %v342
      %v360 = vsub.f32 %v256, %v347
      %v361 = vsub.f32 %v257, %v352
      %v362 = vadd.f32 %v306, 1e-05
      %v363 = vadd.f32 %v307, 1e-05
      %v364 = vadd.f32 %v308, 1e-05
      %v365 = vadd.f32 %v309, 1e-05
      %v366 = vadd.f32 %v310, 1e-05
      %v367 = vadd.f32 %v311, 1e-05
      %v368 = vadd.f32 %v312, 1e-05
      %v369 = vadd.f32 %v313, 1e-05
      %v370 = vrsqrt.pop %v362
      %v371 = vrsqrt.pop %v363
      %v372 = vrsqrt.pop %v364
      %v373 = vrsqrt.pop %v365
      %v374 = vrsqrt.pop %v366
      %v375 = vrsqrt.pop %v367
      %v376 = vrsqrt.pop %v368
      %v377 = vrsqrt.pop %v369
      %379 = vset.pattern.permute.xlu0 0
      %380 = vperm.xlu0 %379, %v370
      %v381 = vpop.permute.xlu0 %380
      %384 = vset.pattern.permute.xlu0 0
      %385 = vperm.xlu0 %384, %v371
      %v386 = vpop.permute.xlu0 %385
      %389 = vset.pattern.permute.xlu0 0
      %390 = vperm.xlu0 %389, %v372
      %v391 = vpop.permute.xlu0 %390
      %394 = vset.pattern.permute.xlu0 0
      %395 = vperm.xlu0 %394, %v373
      %v396 = vpop.permute.xlu0 %395
      %399 = vset.pattern.permute.xlu0 0
      %400 = vperm.xlu0 %399, %v374
      %v401 = vpop.permute.xlu0 %400
      %404 = vset.pattern.permute.xlu0 0
      %405 = vperm.xlu0 %404, %v375
      %v406 = vpop.permute.xlu0 %405
      %409 = vset.pattern.permute.xlu0 0
      %410 = vperm.xlu0 %409, %v376
      %v411 = vpop.permute.xlu0 %410
      %414 = vset.pattern.permute.xlu0 0
      %415 = vperm.xlu0 %414, %v377
      %v416 = vpop.permute.xlu0 %415
      %v418 = vmul.f32 %v354, %v381
      %v419 = vmul.f32 %v355, %v386
      %v420 = vmul.f32 %v356, %v391
      %v421 = vmul.f32 %v357, %v396
      %v422 = vmul.f32 %v358, %v401
      %v423 = vmul.f32 %v359, %v406
      %v424 = vmul.f32 %v360, %v411
      %v425 = vmul.f32 %v361, %v416
      %vm426 = vcmp.ge.f32.partialorder %v418, 0.0
      %vm427 = vcmp.ge.f32.partialorder %v419, 0.0
      %vm428 = vcmp.ge.f32.partialorder %v420, 0.0
      %vm429 = vcmp.ge.f32.partialorder %v421, 0.0
      %vm430 = vcmp.ge.f32.partialorder %v422, 0.0
      %vm431 = vcmp.ge.f32.partialorder %v423, 0.0
      %vm432 = vcmp.ge.f32.partialorder %v424, 0.0
      %vm433 = vcmp.ge.f32.partialorder %v425, 0.0
      %v434 = vmul.f32 %v418, 0.2
      %v435 = vmul.f32 %v419, 0.2
      %v436 = vmul.f32 %v420, 0.2
      %v437 = vmul.f32 %v421, 0.2
      %v438 = vmul.f32 %v422, 0.2
      %v439 = vmul.f32 %v423, 0.2
      %v440 = vmul.f32 %v424, 0.2
      %v441 = vmul.f32 %v425, 0.2
      %v442 = vsel %vm426, %v418, %v434
      %v443 = vsel %vm427, %v419, %v435
      %v444 = vsel %vm428, %v420, %v436
      %v445 = vsel %vm429, %v421, %v437
      %v446 = vsel %vm430, %v422, %v438
      %v447 = vsel %vm431, %v423, %v439
      %v448 = vsel %vm432, %v424, %v440
      %v449 = vsel %vm433, %v425, %v441
      %v450 = vpack.c.bf16 %v443, %v442
      %v451 = vpack.c.bf16 %v445, %v444
      %v452 = vpack.c.bf16 %v447, %v446
      %v453 = vpack.c.bf16 %v449, %v448
      %v458 = vunpack.c.l.b16 %v450
      %v459 = vunpack.c.h.b16 %v450
      %v460 = vunpack.c.l.b16 %v451
      %v461 = vunpack.c.h.b16 %v451
      %v462 = vunpack.c.l.b16 %v452
      %v463 = vunpack.c.h.b16 %v452
      %v464 = vunpack.c.l.b16 %v453
      %v465 = vunpack.c.h.b16 %v453
      %v466 = vpack.c.b16 %v458, %v458
      %v467 = vpack.c.b16 %v459, %v459
      %v468 = vpack.c.b16 %v460, %v460
      %v469 = vpack.c.b16 %v461, %v461
      %v470 = vpack.c.b16 %v462, %v462
      %v471 = vpack.c.b16 %v463, %v463
      %v472 = vpack.c.b16 %v464, %v464
      %v473 = vpack.c.b16 %v465, %v465
      %482 = vst [vmem:[%s241] sm:$0xf] %v466
      %483 = vst [vmem:[%s241 + $0x4] sm:$0xf] %v467
      %484 = vst [vmem:[%s241 + $0x8] sm:$0xf] %v468
      %485 = vst [vmem:[%s241 + $0xc] sm:$0xf] %v469
      %486 = vst [vmem:[%s241 + $0x10] sm:$0xf] %v470
      %487 = vst [vmem:[%s241 + $0x14] sm:$0xf] %v471
      %488 = vst [vmem:[%s241 + $0x18] sm:$0xf] %v472
      %489 = vst [vmem:[%s241 + $0x1c] sm:$0xf] %v473
      %p490 = scmp.lt.s32.totalorder %s18, 1
      %s491 = scalar_select %p490, %s18, 1
      %p492 = scmp.lt.s32.totalorder %s19, 0
      %s493 = scalar_select %p492, %s19, 0
      %s494 = smul.addr %s491, 8
      %s495 = sadd.s32 %s493, %s494
      %s496 = smul.addr %s495, 4
      %s497 = scalar_lea.vmem %s3, %s496
      // Predicated region
      $region33: #{a_call__.11} parent=31 // pred_check
        %p498 = pneg %p126
      $region34: #{a_call__.11} parent=31 // pred_check_branch
        %500 = sbr.rel (%p498) target = $region36
      $region35: #{a_call__.11} parent=31 // pred_region
        _
      $region36: #{a_call__.11} parent=31 // pred_fallthru
        _
    $region32: #{a_call__.11} parent=5 // pred_fallthru
      _
    %p501 = scmp.le.s32.totalorder 2, %s9
    // Predicated region
    $region37: #{a_call__.11} parent=5 // pred_check
      %p502 = pneg %p501
    $region38: #{a_call__.11} parent=5 // pred_check_branch
      %504 = sbr.rel (%p502) target = $region40
    $region39: #{a_call__.11} parent=5 // pred_region
      %s505 = ssub.s32 %s9, 2
      // Predicated region
      $region41: #{a_call__.11} parent=39 // pred_check
        %p506 = pneg %p132
      $region42: #{a_call__.11} parent=39 // pred_check_branch
        %508 = sbr.rel (%p506) target = $region44
      $region43: #{a_call__.11} parent=39 // pred_region
        %p509 = scmp.lt.s32.totalorder %s20, 1
        %s510 = scalar_select %p509, %s20, 1
        %p511 = scmp.lt.s32.totalorder %s21, 0
        %s512 = scalar_select %p511, %s21, 0
        %s513 = smul.addr %s510, 8
        %s514 = sadd.s32 %s512, %s513
        %s515 = smul.addr %s514, 4
        %s516 = scalar_lea.vmem %s3, %s515
      $region44: #{a_call__.11} parent=39 // pred_fallthru
        _
    $region40: #{a_call__.11} parent=5 // pred_fallthru
      _
  $region6: #{a_call__.11} parent=0 // loop_footer
    %s13 = sadd.s32 1, %s9
  $region7: #{a_call__.11} parent=0 // loop_footer_branch
    %8 = sbr.rel target = $region3
  $region8: #{a_call__.11} parent=0 // loop_exit
    _

// kernel: a_call__.10
$region0: #{a_call__.10}
  #allocation0 [shape = 'u32[]', space=smem, size = 0x4, offset = 0x4, fixed_abs, tag = 'smem constant byte address 0x4 - core index']
  #allocation1 [shape = 'u32[144,128]{1,0:T(1,128)}', space=vmem, size = 0x12000, scoped, tag = 'internal scratch']
  %s0 = inlined_call_operand.vmem [shape: bf16[2,2048,128], index: 0, kind: input, shape index: {}]
  %s1 = inlined_call_operand.vmem [shape: bf16[64,2048], index: 1, kind: input, shape index: {}]
  %s2 = inlined_call_operand.vmem [shape: f32[64,1], index: 2, kind: input, shape index: {}]
  %s3 = inlined_call_operand.vmem [shape: bf16[2,64,128], index: 3, kind: output, shape index: {0}]
  %s4 = inlined_call_operand.vmem [shape: f32[2,64,1], index: 4, kind: output, shape index: {1}]
  %s5 = inlined_call_operand.vmem [shape: f32[2,64,1], index: 5, kind: output, shape index: {2}]
  %6 = xla_tuple %s3, %s4, %s5
  %s7 = sld [smem:[#allocation0]]
  $region65: #{a_call__.10} parent=0
    _
  %s9 = ssub.s32 1, %s7
  %s10 = scalar_select 0, %s9, %s7
  loop: start=0, step=1, limit=4
  $region2: #{a_call__.10} parent=0 // loop_pre_header
    _
  $region3: #{a_call__.10} parent=0 // loop_header
    %s12 = sphi 0, %s16
    %p13 = scmp.ge.s32.totalorder %s12, 4
    %s19 = sphi 0, %s31
    %s20 = sphi 0, %s27
    %s21 = sphi 0, %s19
    %s22 = sphi 0, %s20
    %s23 = sphi 0, %s21
    %s24 = sphi 0, %s22
    %s36 = sphi 0, %s38
    %s39 = sphi 0, %s36
    %s40 = sphi 0, %s39
    %s56 = sphi 0, %s40
    %s60 = sphi 0, %s60
    %s62 = sphi 0, %s60
    %s63 = sphi 0, %s62
    %s77 = sphi 0, %s63
    %s81 = sphi 0, %s81
    %s83 = sphi 0, %s81
    %s84 = sphi 0, %s83
    %s98 = sphi 0, %s84
    %s106 = sphi 0, %s108
    %s109 = sphi 0, %s106
    %s110 = sphi 0, %s109
    %s126 = sphi 0, %s110
    %s132 = sphi 0, %s134
    %s135 = sphi 0, %s132
    %s136 = sphi 0, %s135
    %s152 = sphi 0, %s136
    %s158 = sphi 0, %s160
    %s161 = sphi 0, %s158
    %s162 = sphi 0, %s161
    %s178 = sphi 0, %s162
  $region4: #{a_call__.10} parent=0 // loop_header_branch
    %15 = sbr.rel (%p13) target = $region8
  $region5: #{a_call__.10} parent=0 // loop_body
    %s17 = ssub.s32 %s12, 1
    %s18 = ssub.s32 %s12, 2
    %s25 = sadd.s32 1, %s20
    %p26 = scmp.ge.s32.totalorder %s25, 1
    %s27 = scalar_select %p26, 0, %s25
    %s28 = sadd.s32 1, %s19
    %s29 = scalar_select %p26, %s28, %s19
    %p30 = scmp.ge.s32.totalorder %s29, 2
    %s31 = scalar_select %p30, 0, %s29
    %s32 = ssub.s32 %s19, %s31
    %s33 = ssub.s32 %s20, %s27
    %s34 = sor.u32 %s32, %s33
    %p35 = scmp.eq.s32.totalorder %s34, 0
    %s37 = sadd.s32 %s36, 1
    %s38 = scalar_select %p35, %s36, %s37
    %p41 = pneg %p35
    %p42 = scmp.eq.s32.totalorder %s12, 1
    %p43 = por %p41, %p42
    %p44 = scmp.ne.s32.totalorder %s36, %s39
    %p45 = scmp.eq.s32.totalorder %s12, 0
    %p46 = por %p44, %p45
    %p47 = scmp.ne.s32.totalorder %s36, %s39
    %p48 = scmp.eq.s32.totalorder %s17, 1
    %p49 = por %p47, %p48
    %p50 = scmp.ne.s32.totalorder %s39, %s40
    %p51 = scmp.eq.s32.totalorder %s17, 0
    %p52 = por %p50, %p51
    %p53 = scmp.ne.s32.totalorder %s39, %s40
    %p54 = scmp.eq.s32.totalorder %s18, 1
    %p55 = por %p53, %p54
    %p57 = scmp.ne.s32.totalorder %s40, %s56
    %p58 = scmp.eq.s32.totalorder %s18, 0
    %p59 = por %p57, %p58
    %s61 = sadd.s32 %s60, 1
    %p64 = scmp.eq.s32.totalorder %s12, 1
    %p65 = scmp.ne.s32.totalorder %s60, %s62
    %p66 = scmp.eq.s32.totalorder %s12, 0
    %p67 = por %p65, %p66
    %p68 = scmp.ne.s32.totalorder %s60, %s62
    %p69 = scmp.eq.s32.totalorder %s17, 1
    %p70 = por %p68, %p69
    %p71 = scmp.ne.s32.totalorder %s62, %s63
    %p72 = scmp.eq.s32.totalorder %s17, 0
    %p73 = por %p71, %p72
    %p74 = scmp.ne.s32.totalorder %s62, %s63
    %p75 = scmp.eq.s32.totalorder %s18, 1
    %p76 = por %p74, %p75
    %p78 = scmp.ne.s32.totalorder %s63, %s77
    %p79 = scmp.eq.s32.totalorder %s18, 0
    %p80 = por %p78, %p79
    %s82 = sadd.s32 %s81, 1
    %p85 = scmp.eq.s32.totalorder %s12, 1
    %p86 = scmp.ne.s32.totalorder %s81, %s83
    %p87 = scmp.eq.s32.totalorder %s12, 0
    %p88 = por %p86, %p87
    %p89 = scmp.ne.s32.totalorder %s81, %s83
    %p90 = scmp.eq.s32.totalorder %s17, 1
    %p91 = por %p89, %p90
    %p92 = scmp.ne.s32.totalorder %s83, %s84
    %p93 = scmp.eq.s32.totalorder %s17, 0
    %p94 = por %p92, %p93
    %p95 = scmp.ne.s32.totalorder %s83, %s84
    %p96 = scmp.eq.s32.totalorder %s18, 1
    %p97 = por %p95, %p96
    %p99 = scmp.ne.s32.totalorder %s84, %s98
    %p100 = scmp.eq.s32.totalorder %s18, 0
    %p101 = por %p99, %p100
    %s102 = ssub.s32 %s19, %s31
    %s103 = ssub.s32 %s20, %s27
    %s104 = sor.u32 %s102, %s103
    %p105 = scmp.eq.s32.totalorder %s104, 0
    %s107 = sadd.s32 %s106, 1
    %s108 = scalar_select %p105, %s106, %s107
    %p111 = pneg %p105
    %p112 = scmp.eq.s32.totalorder %s12, 1
    %p113 = por %p111, %p112
    %p114 = scmp.ne.s32.totalorder %s106, %s109
    %p115 = scmp.eq.s32.totalorder %s12, 0
    %p116 = por %p114, %p115
    %p117 = scmp.ne.s32.totalorder %s106, %s109
    %p118 = scmp.eq.s32.totalorder %s17, 1
    %p119 = por %p117, %p118
    %p120 = scmp.ne.s32.totalorder %s109, %s110
    %p121 = scmp.eq.s32.totalorder %s17, 0
    %p122 = por %p120, %p121
    %p123 = scmp.ne.s32.totalorder %s109, %s110
    %p124 = scmp.eq.s32.totalorder %s18, 1
    %p125 = por %p123, %p124
    %p127 = scmp.ne.s32.totalorder %s110, %s126
    %p128 = scmp.eq.s32.totalorder %s18, 0
    %p129 = por %p127, %p128
    %s130 = ssub.s32 %s19, %s31
    %p131 = scmp.eq.s32.totalorder %s130, 0
    %s133 = sadd.s32 %s132, 1
    %s134 = scalar_select %p131, %s132, %s133
    %p137 = pneg %p131
    %p138 = scmp.eq.s32.totalorder %s12, 1
    %p139 = por %p137, %p138
    %p140 = scmp.ne.s32.totalorder %s132, %s135
    %p141 = scmp.eq.s32.totalorder %s12, 0
    %p142 = por %p140, %p141
    %p143 = scmp.ne.s32.totalorder %s132, %s135
    %p144 = scmp.eq.s32.totalorder %s17, 1
    %p145 = por %p143, %p144
    %p146 = scmp.ne.s32.totalorder %s135, %s136
    %p147 = scmp.eq.s32.totalorder %s17, 0
    %p148 = por %p146, %p147
    %p149 = scmp.ne.s32.totalorder %s135, %s136
    %p150 = scmp.eq.s32.totalorder %s18, 1
    %p151 = por %p149, %p150
    %p153 = scmp.ne.s32.totalorder %s136, %s152
    %p154 = scmp.eq.s32.totalorder %s18, 0
    %p155 = por %p153, %p154
    %s156 = ssub.s32 %s19, %s31
    %p157 = scmp.eq.s32.totalorder %s156, 0
    %s159 = sadd.s32 %s158, 1
    %s160 = scalar_select %p157, %s158, %s159
    %p163 = pneg %p157
    %p164 = scmp.eq.s32.totalorder %s12, 1
    %p165 = por %p163, %p164
    %p166 = scmp.ne.s32.totalorder %s158, %s161
    %p167 = scmp.eq.s32.totalorder %s12, 0
    %p168 = por %p166, %p167
    %p169 = scmp.ne.s32.totalorder %s158, %s161
    %p170 = scmp.eq.s32.totalorder %s17, 1
    %p171 = por %p169, %p170
    %p172 = scmp.ne.s32.totalorder %s161, %s162
    %p173 = scmp.eq.s32.totalorder %s17, 0
    %p174 = por %p172, %p173
    %p175 = scmp.ne.s32.totalorder %s161, %s162
    %p176 = scmp.eq.s32.totalorder %s18, 1
    %p177 = por %p175, %p176
    %p179 = scmp.ne.s32.totalorder %s162, %s178
    %p180 = scmp.eq.s32.totalorder %s18, 0
    %p181 = por %p179, %p180
    %p182 = scmp.le.s32.totalorder 1, %s12
    %p183 = scmp.lt.s32.totalorder %s12, 3
    %p184 = pnand %p182, %p183
    %p185 = pneg %p184
    // Predicated region
    $region9: #{a_call__.10} parent=5 // pred_check
      _
    $region10: #{a_call__.10} parent=5 // pred_check_branch
      %187 = sbr.rel (%p184) target = $region12
    $region11: #{a_call__.10} parent=5 // pred_region
      %s188 = ssub.s32 %s12, 1
      // Predicated region
      $region13: #{a_call__.10} parent=11 // pred_check
        %p189 = pneg %p73
      $region14: #{a_call__.10} parent=11 // pred_check_branch
        %191 = sbr.rel (%p189) target = $region16
      $region15: #{a_call__.10} parent=11 // pred_region
        _
      $region16: #{a_call__.10} parent=11 // pred_fallthru
        _
      // Predicated region
      $region17: #{a_call__.10} parent=11 // pred_check
        %p192 = pneg %p94
      $region18: #{a_call__.10} parent=11 // pred_check_branch
        %194 = sbr.rel (%p192) target = $region20
      $region19: #{a_call__.10} parent=11 // pred_region
        _
      $region20: #{a_call__.10} parent=11 // pred_fallthru
        _
    $region12: #{a_call__.10} parent=5 // pred_fallthru
      _
    %p195 = scmp.lt.s32.totalorder %s12, 2
    // Predicated region
    $region21: #{a_call__.10} parent=5 // pred_check
      %p196 = pneg %p195
    $region22: #{a_call__.10} parent=5 // pred_check_branch
      %198 = sbr.rel (%p196) target = $region24
    $region23: #{a_call__.10} parent=5 // pred_region
      // Predicated region
      $region25: #{a_call__.10} parent=23 // pred_check
        %p199 = pneg %p46
      $region26: #{a_call__.10} parent=23 // pred_check_branch
        %201 = sbr.rel (%p199) target = $region28
      $region27: #{a_call__.10} parent=23 // pred_region
        %p202 = scmp.lt.s32.totalorder %s19, 1
        %s203 = scalar_select %p202, %s19, 1
        %p204 = scmp.lt.s32.totalorder %s20, 0
        %s205 = scalar_select %p204, %s20, 0
        %s206 = smul.addr %s203, 256
        %s207 = sadd.s32 %s205, %s206
        %s208 = smul.addr %s207, 4
        %s209 = scalar_lea.vmem %s0, %s208
      $region28: #{a_call__.10} parent=23 // pred_fallthru
        _
    $region24: #{a_call__.10} parent=5 // pred_fallthru
      _
    %p210 = scmp.le.s32.totalorder 1, %s12
    %p211 = scmp.lt.s32.totalorder %s12, 3
    %p212 = pnand %p210, %p211
    %p213 = pneg %p212
    // Predicated region
    $region29: #{a_call__.10} parent=5 // pred_check
      _
    $region30: #{a_call__.10} parent=5 // pred_check_branch
      %215 = sbr.rel (%p212) target = $region32
    $region31: #{a_call__.10} parent=5 // pred_region
      %s216 = ssub.s32 %s12, 1
      %p217 = scmp.lt.s32.totalorder %s21, 1
      %s218 = scalar_select %p217, %s21, 1
      %p219 = scmp.lt.s32.totalorder %s22, 0
      %s220 = scalar_select %p219, %s22, 0
      %s221 = smul.addr %s218, 256
      %s222 = sadd.s32 %s220, %s221
      %s223 = smul.addr %s222, 4
      %s224 = scalar_lea.vmem %s0, %s223
      %p225 = pneg %p52
      %p226 = pneg %p49
      %p227 = pneg %p73
      %p228 = pneg %p70
      %p229 = pneg %p94
      %p230 = pneg %p91
      %p231 = pneg %p122
      %p232 = pneg %p119
      %p233 = scmp.lt.s32.totalorder %s21, 1
      %s234 = scalar_select %p233, %s21, 1
      %p235 = scmp.lt.s32.totalorder %s22, 0
      %s236 = scalar_select %p235, %s22, 0
      %s237 = smul.addr %s234, 8
      %s238 = sadd.s32 %s236, %s237
      %s239 = smul.addr %s238, 4
      %s240 = scalar_lea.vmem %s3, %s239
      %p241 = pneg %p148
      %p242 = pneg %p145
      %p243 = scmp.lt.s32.totalorder %s21, 1
      %s244 = scalar_select %p243, %s21, 1
      %s245 = smul.addr %s244, 8
      %s246 = smul.addr %s245, 8
      %s247 = scalar_lea.vmem %s4, %s246
      %p248 = pneg %p174
      %p249 = pneg %p171
      %p250 = scmp.lt.s32.totalorder %s21, 1
      %s251 = scalar_select %p250, %s21, 1
      %s252 = smul.addr %s251, 8
      %s253 = smul.addr %s252, 8
      %s254 = scalar_lea.vmem %s5, %s253
      %p255 = scmp.lt.s32.totalorder %s21, 1
      %s256 = scalar_select %p255, %s21, 1
      %p257 = scmp.lt.s32.totalorder %s22, 0
      %s258 = scalar_select %p257, %s22, 0
      %s259 = smul.addr %s256, 256
      %s260 = sadd.s32 %s258, %s259
      %s261 = smul.addr %s260, 4
      %s262 = scalar_lea.vmem %s0, %s261
      %p263 = scmp.lt.s32.totalorder %s21, 1
      %s264 = scalar_select %p263, %s21, 1
      %p265 = scmp.lt.s32.totalorder %s22, 0
      %s266 = scalar_select %p265, %s22, 0
      %s267 = smul.addr %s264, 8
      %s268 = sadd.s32 %s266, %s267
      %s269 = smul.addr %s268, 4
      %s270 = scalar_lea.vmem %s3, %s269
      %p271 = scmp.lt.s32.totalorder %s21, 1
      %s272 = scalar_select %p271, %s21, 1
      %s273 = smul.addr %s272, 8
      %s274 = smul.addr %s273, 8
      %s275 = scalar_lea.vmem %s4, %s274
      %p276 = scmp.lt.s32.totalorder %s21, 1
      %s277 = scalar_select %p276, %s21, 1
      %s278 = smul.addr %s277, 8
      %s279 = smul.addr %s278, 8
      %s280 = scalar_lea.vmem %s5, %s279
      %v282 = vld [vmem:[%s1] sm:$0xff]
      %v283 = vld [vmem:[%s1 + $0x8] sm:$0xff]
      %v284 = vld [vmem:[%s1 + $0x10] sm:$0xff]
      %v285 = vld [vmem:[%s1 + $0x18] sm:$0xff]
      %v286 = vld [vmem:[%s1 + $0x20] sm:$0xff]
      %v287 = vld [vmem:[%s1 + $0x28] sm:$0xff]
      %v288 = vld [vmem:[%s1 + $0x30] sm:$0xff]
      %v289 = vld [vmem:[%s1 + $0x38] sm:$0xff]
      %v290 = vld [vmem:[%s1 + $0x40] sm:$0xff]
      %v291 = vld [vmem:[%s1 + $0x48] sm:$0xff]
      %v292 = vld [vmem:[%s1 + $0x50] sm:$0xff]
      %v293 = vld [vmem:[%s1 + $0x58] sm:$0xff]
      %v294 = vld [vmem:[%s1 + $0x60] sm:$0xff]
      %v295 = vld [vmem:[%s1 + $0x68] sm:$0xff]
      %v296 = vld [vmem:[%s1 + $0x70] sm:$0xff]
      %v297 = vld [vmem:[%s1 + $0x78] sm:$0xff]
      %v298 = vld [vmem:[%s1 + $0x80] sm:$0xff]
      %v299 = vld [vmem:[%s1 + $0x88] sm:$0xff]
      %v300 = vld [vmem:[%s1 + $0x90] sm:$0xff]
      %v301 = vld [vmem:[%s1 + $0x98] sm:$0xff]
      %v302 = vld [vmem:[%s1 + $0xa0] sm:$0xff]
      %v303 = vld [vmem:[%s1 + $0xa8] sm:$0xff]
      %v304 = vld [vmem:[%s1 + $0xb0] sm:$0xff]
      %v305 = vld [vmem:[%s1 + $0xb8] sm:$0xff]
      %v306 = vld [vmem:[%s1 + $0xc0] sm:$0xff]
      %v307 = vld [vmem:[%s1 + $0xc8] sm:$0xff]
      %v308 = vld [vmem:[%s1 + $0xd0] sm:$0xff]
      %v309 = vld [vmem:[%s1 + $0xd8] sm:$0xff]
      %v310 = vld [vmem:[%s1 + $0xe0] sm:$0xff]
      %v311 = vld [vmem:[%s1 + $0xe8] sm:$0xff]
      %v312 = vld [vmem:[%s1 + $0xf0] sm:$0xff]
      %v313 = vld [vmem:[%s1 + $0xf8] sm:$0xff]
      %v314 = vld [vmem:[%s1 + $0x100] sm:$0xff]
      %v315 = vld [vmem:[%s1 + $0x108] sm:$0xff]
      %v316 = vld [vmem:[%s1 + $0x110] sm:$0xff]
      %v317 = vld [vmem:[%s1 + $0x118] sm:$0xff]
      %v318 = vld [vmem:[%s1 + $0x120] sm:$0xff]
      %v319 = vld [vmem:[%s1 + $0x128] sm:$0xff]
      %v320 = vld [vmem:[%s1 + $0x130] sm:$0xff]
      %v321 = vld [vmem:[%s1 + $0x138] sm:$0xff]
      %v322 = vld [vmem:[%s1 + $0x140] sm:$0xff]
      %v323 = vld [vmem:[%s1 + $0x148] sm:$0xff]
      %v324 = vld [vmem:[%s1 + $0x150] sm:$0xff]
      %v325 = vld [vmem:[%s1 + $0x158] sm:$0xff]
      %v326 = vld [vmem:[%s1 + $0x160] sm:$0xff]
      %v327 = vld [vmem:[%s1 + $0x168] sm:$0xff]
      %v328 = vld [vmem:[%s1 + $0x170] sm:$0xff]
      %v329 = vld [vmem:[%s1 + $0x178] sm:$0xff]
      %v330 = vld [vmem:[%s1 + $0x180] sm:$0xff]
      %v331 = vld [vmem:[%s1 + $0x188] sm:$0xff]
      %v332 = vld [vmem:[%s1 + $0x190] sm:$0xff]
      %v333 = vld [vmem:[%s1 + $0x198] sm:$0xff]
      %v334 = vld [vmem:[%s1 + $0x1a0] sm:$0xff]
      %v335 = vld [vmem:[%s1 + $0x1a8] sm:$0xff]
      %v336 = vld [vmem:[%s1 + $0x1b0] sm:$0xff]
      %v337 = vld [vmem:[%s1 + $0x1b8] sm:$0xff]
      %v338 = vld [vmem:[%s1 + $0x1c0] sm:$0xff]
      %v339 = vld [vmem:[%s1 + $0x1c8] sm:$0xff]
      %v340 = vld [vmem:[%s1 + $0x1d0] sm:$0xff]
      %v341 = vld [vmem:[%s1 + $0x1d8] sm:$0xff]
      %v342 = vld [vmem:[%s1 + $0x1e0] sm:$0xff]
      %v343 = vld [vmem:[%s1 + $0x1e8] sm:$0xff]
      %v344 = vld [vmem:[%s1 + $0x1f0] sm:$0xff]
      %v345 = vld [vmem:[%s1 + $0x1f8] sm:$0xff]
      %v346 = vld [vmem:[%s262] sm:$0xf]
      %v347 = vld [vmem:[%s262 + $0x4] sm:$0xf]
      %v348 = vld [vmem:[%s262 + $0x8] sm:$0xf]
      %v349 = vld [vmem:[%s262 + $0xc] sm:$0xf]
      %v350 = vld [vmem:[%s262 + $0x10] sm:$0xf]
      %v351 = vld [vmem:[%s262 + $0x14] sm:$0xf]
      %v352 = vld [vmem:[%s262 + $0x18] sm:$0xf]
      %v353 = vld [vmem:[%s262 + $0x1c] sm:$0xf]
      %v354 = vld [vmem:[%s262 + $0x20] sm:$0xf]
      %v355 = vld [vmem:[%s262 + $0x24] sm:$0xf]
      %v356 = vld [vmem:[%s262 + $0x28] sm:$0xf]
      %v357 = vld [vmem:[%s262 + $0x2c] sm:$0xf]
      %v358 = vld [vmem:[%s262 + $0x30] sm:$0xf]
      %v359 = vld [vmem:[%s262 + $0x34] sm:$0xf]
      %v360 = vld [vmem:[%s262 + $0x38] sm:$0xf]
      %v361 = vld [vmem:[%s262 + $0x3c] sm:$0xf]
      %v362 = vld [vmem:[%s262 + $0x40] sm:$0xf]
      %v363 = vld [vmem:[%s262 + $0x44] sm:$0xf]
      %v364 = vld [vmem:[%s262 + $0x48] sm:$0xf]
      %v365 = vld [vmem:[%s262 + $0x4c] sm:$0xf]
      %v366 = vld [vmem:[%s262 + $0x50] sm:$0xf]
      %v367 = vld [vmem:[%s262 + $0x54] sm:$0xf]
      %v368 = vld [vmem:[%s262 + $0x58] sm:$0xf]
      %v369 = vld [vmem:[%s262 + $0x5c] sm:$0xf]
      %v370 = vld [vmem:[%s262 + $0x60] sm:$0xf]
      %v371 = vld [vmem:[%s262 + $0x64] sm:$0xf]
      %v372 = vld [vmem:[%s262 + $0x68] sm:$0xf]
      %v373 = vld [vmem:[%s262 + $0x6c] sm:$0xf]
      %v374 = vld [vmem:[%s262 + $0x70] sm:$0xf]
      %v375 = vld [vmem:[%s262 + $0x74] sm:$0xf]
      %v376 = vld [vmem:[%s262 + $0x78] sm:$0xf]
      %v377 = vld [vmem:[%s262 + $0x7c] sm:$0xf]
      %v378 = vld [vmem:[%s262 + $0x80] sm:$0xf]
      %v379 = vld [vmem:[%s262 + $0x84] sm:$0xf]
      %v380 = vld [vmem:[%s262 + $0x88] sm:$0xf]
      %v381 = vld [vmem:[%s262 + $0x8c] sm:$0xf]
      %v382 = vld [vmem:[%s262 + $0x90] sm:$0xf]
      %v383 = vld [vmem:[%s262 + $0x94] sm:$0xf]
      %v384 = vld [vmem:[%s262 + $0x98] sm:$0xf]
      %v385 = vld [vmem:[%s262 + $0x9c] sm:$0xf]
      %v386 = vld [vmem:[%s262 + $0xa0] sm:$0xf]
      %v387 = vld [vmem:[%s262 + $0xa4] sm:$0xf]
      %v388 = vld [vmem:[%s262 + $0xa8] sm:$0xf]
      %v389 = vld [vmem:[%s262 + $0xac] sm:$0xf]
      %v390 = vld [vmem:[%s262 + $0xb0] sm:$0xf]
      %v391 = vld [vmem:[%s262 + $0xb4] sm:$0xf]
      %v392 = vld [vmem:[%s262 + $0xb8] sm:$0xf]
      %v393 = vld [vmem:[%s262 + $0xbc] sm:$0xf]
      %v394 = vld [vmem:[%s262 + $0xc0] sm:$0xf]
      %v395 = vld [vmem:[%s262 + $0xc4] sm:$0xf]
      %v396 = vld [vmem:[%s262 + $0xc8] sm:$0xf]
      %v397 = vld [vmem:[%s262 + $0xcc] sm:$0xf]
      %v398 = vld [vmem:[%s262 + $0xd0] sm:$0xf]
      %v399 = vld [vmem:[%s262 + $0xd4] sm:$0xf]
      %v400 = vld [vmem:[%s262 + $0xd8] sm:$0xf]
      %v401 = vld [vmem:[%s262 + $0xdc] sm:$0xf]
      %v402 = vld [vmem:[%s262 + $0xe0] sm:$0xf]
      %v403 = vld [vmem:[%s262 + $0xe4] sm:$0xf]
      %v404 = vld [vmem:[%s262 + $0xe8] sm:$0xf]
      %v405 = vld [vmem:[%s262 + $0xec] sm:$0xf]
      %v406 = vld [vmem:[%s262 + $0xf0] sm:$0xf]
      %v407 = vld [vmem:[%s262 + $0xf4] sm:$0xf]
      %v408 = vld [vmem:[%s262 + $0xf8] sm:$0xf]
      %v409 = vld [vmem:[%s262 + $0xfc] sm:$0xf]
      %v410 = vld [vmem:[%s262 + $0x100] sm:$0xf]
      %v411 = vld [vmem:[%s262 + $0x104] sm:$0xf]
      %v412 = vld [vmem:[%s262 + $0x108] sm:$0xf]
      %v413 = vld [vmem:[%s262 + $0x10c] sm:$0xf]
      %v414 = vld [vmem:[%s262 + $0x110] sm:$0xf]
      %v415 = vld [vmem:[%s262 + $0x114] sm:$0xf]
      %v416 = vld [vmem:[%s262 + $0x118] sm:$0xf]
      %v417 = vld [vmem:[%s262 + $0x11c] sm:$0xf]
      %v418 = vld [vmem:[%s262 + $0x120] sm:$0xf]
      %v419 = vld [vmem:[%s262 + $0x124] sm:$0xf]
      %v420 = vld [vmem:[%s262 + $0x128] sm:$0xf]
      %v421 = vld [vmem:[%s262 + $0x12c] sm:$0xf]
      %v422 = vld [vmem:[%s262 + $0x130] sm:$0xf]
      %v423 = vld [vmem:[%s262 + $0x134] sm:$0xf]
      %v424 = vld [vmem:[%s262 + $0x138] sm:$0xf]
      %v425 = vld [vmem:[%s262 + $0x13c] sm:$0xf]
      %v426 = vld [vmem:[%s262 + $0x140] sm:$0xf]
      %v427 = vld [vmem:[%s262 + $0x144] sm:$0xf]
      %v428 = vld [vmem:[%s262 + $0x148] sm:$0xf]
      %v429 = vld [vmem:[%s262 + $0x14c] sm:$0xf]
      %v430 = vld [vmem:[%s262 + $0x150] sm:$0xf]
      %v431 = vld [vmem:[%s262 + $0x154] sm:$0xf]
      %v432 = vld [vmem:[%s262 + $0x158] sm:$0xf]
      %v433 = vld [vmem:[%s262 + $0x15c] sm:$0xf]
      %v434 = vld [vmem:[%s262 + $0x160] sm:$0xf]
      %v435 = vld [vmem:[%s262 + $0x164] sm:$0xf]
      %v436 = vld [vmem:[%s262 + $0x168] sm:$0xf]
      %v437 = vld [vmem:[%s262 + $0x16c] sm:$0xf]
      %v438 = vld [vmem:[%s262 + $0x170] sm:$0xf]
      %v439 = vld [vmem:[%s262 + $0x174] sm:$0xf]
      %v440 = vld [vmem:[%s262 + $0x178] sm:$0xf]
      %v441 = vld [vmem:[%s262 + $0x17c] sm:$0xf]
      %v442 = vld [vmem:[%s262 + $0x180] sm:$0xf]
      %v443 = vld [vmem:[%s262 + $0x184] sm:$0xf]
      %v444 = vld [vmem:[%s262 + $0x188] sm:$0xf]
      %v445 = vld [vmem:[%s262 + $0x18c] sm:$0xf]
      %v446 = vld [vmem:[%s262 + $0x190] sm:$0xf]
      %v447 = vld [vmem:[%s262 + $0x194] sm:$0xf]
      %v448 = vld [vmem:[%s262 + $0x198] sm:$0xf]
      %v449 = vld [vmem:[%s262 + $0x19c] sm:$0xf]
      %v450 = vld [vmem:[%s262 + $0x1a0] sm:$0xf]
      %v451 = vld [vmem:[%s262 + $0x1a4] sm:$0xf]
      %v452 = vld [vmem:[%s262 + $0x1a8] sm:$0xf]
      %v453 = vld [vmem:[%s262 + $0x1ac] sm:$0xf]
      %v454 = vld [vmem:[%s262 + $0x1b0] sm:$0xf]
      %v455 = vld [vmem:[%s262 + $0x1b4] sm:$0xf]
      %v456 = vld [vmem:[%s262 + $0x1b8] sm:$0xf]
      %v457 = vld [vmem:[%s262 + $0x1bc] sm:$0xf]
      %v458 = vld [vmem:[%s262 + $0x1c0] sm:$0xf]
      %v459 = vld [vmem:[%s262 + $0x1c4] sm:$0xf]
      %v460 = vld [vmem:[%s262 + $0x1c8] sm:$0xf]
      %v461 = vld [vmem:[%s262 + $0x1cc] sm:$0xf]
      %v462 = vld [vmem:[%s262 + $0x1d0] sm:$0xf]
      %v463 = vld [vmem:[%s262 + $0x1d4] sm:$0xf]
      %v464 = vld [vmem:[%s262 + $0x1d8] sm:$0xf]
      %v465 = vld [vmem:[%s262 + $0x1dc] sm:$0xf]
      %v466 = vld [vmem:[%s262 + $0x1e0] sm:$0xf]
      %v467 = vld [vmem:[%s262 + $0x1e4] sm:$0xf]
      %v468 = vld [vmem:[%s262 + $0x1e8] sm:$0xf]
      %v469 = vld [vmem:[%s262 + $0x1ec] sm:$0xf]
      %v470 = vld [vmem:[%s262 + $0x1f0] sm:$0xf]
      %v471 = vld [vmem:[%s262 + $0x1f4] sm:$0xf]
      %v472 = vld [vmem:[%s262 + $0x1f8] sm:$0xf]
      %v473 = vld [vmem:[%s262 + $0x1fc] sm:$0xf]
      %v474 = vld [vmem:[%s262 + $0x200] sm:$0xf]
      %v475 = vld [vmem:[%s262 + $0x204] sm:$0xf]
      %v476 = vld [vmem:[%s262 + $0x208] sm:$0xf]
      %v477 = vld [vmem:[%s262 + $0x20c] sm:$0xf]
      %v478 = vld [vmem:[%s262 + $0x210] sm:$0xf]
      %v479 = vld [vmem:[%s262 + $0x214] sm:$0xf]
      %v480 = vld [vmem:[%s262 + $0x218] sm:$0xf]
      %v481 = vld [vmem:[%s262 + $0x21c] sm:$0xf]
      %v482 = vld [vmem:[%s262 + $0x220] sm:$0xf]
      %v483 = vld [vmem:[%s262 + $0x224] sm:$0xf]
      %v484 = vld [vmem:[%s262 + $0x228] sm:$0xf]
      %v485 = vld [vmem:[%s262 + $0x22c] sm:$0xf]
      %v486 = vld [vmem:[%s262 + $0x230] sm:$0xf]
      %v487 = vld [vmem:[%s262 + $0x234] sm:$0xf]
      %v488 = vld [vmem:[%s262 + $0x238] sm:$0xf]
      %v489 = vld [vmem:[%s262 + $0x23c] sm:$0xf]
      %v490 = vld [vmem:[%s262 + $0x240] sm:$0xf]
      %v491 = vld [vmem:[%s262 + $0x244] sm:$0xf]
      %v492 = vld [vmem:[%s262 + $0x248] sm:$0xf]
      %v493 = vld [vmem:[%s262 + $0x24c] sm:$0xf]
      %v494 = vld [vmem:[%s262 + $0x250] sm:$0xf]
      %v495 = vld [vmem:[%s262 + $0x254] sm:$0xf]
      %v496 = vld [vmem:[%s262 + $0x258] sm:$0xf]
      %v497 = vld [vmem:[%s262 + $0x25c] sm:$0xf]
      %v498 = vld [vmem:[%s262 + $0x260] sm:$0xf]
      %v499 = vld [vmem:[%s262 + $0x264] sm:$0xf]
      %v500 = vld [vmem:[%s262 + $0x268] sm:$0xf]
      %v501 = vld [vmem:[%s262 + $0x26c] sm:$0xf]
      %v502 = vld [vmem:[%s262 + $0x270] sm:$0xf]
      %v503 = vld [vmem:[%s262 + $0x274] sm:$0xf]
      %v504 = vld [vmem:[%s262 + $0x278] sm:$0xf]
      %v505 = vld [vmem:[%s262 + $0x27c] sm:$0xf]
      %v506 = vld [vmem:[%s262 + $0x280] sm:$0xf]
      %v507 = vld [vmem:[%s262 + $0x284] sm:$0xf]
      %v508 = vld [vmem:[%s262 + $0x288] sm:$0xf]
      %v509 = vld [vmem:[%s262 + $0x28c] sm:$0xf]
      %v510 = vld [vmem:[%s262 + $0x290] sm:$0xf]
      %v511 = vld [vmem:[%s262 + $0x294] sm:$0xf]
      %v512 = vld [vmem:[%s262 + $0x298] sm:$0xf]
      %v513 = vld [vmem:[%s262 + $0x29c] sm:$0xf]
      %v514 = vld [vmem:[%s262 + $0x2a0] sm:$0xf]
      %v515 = vld [vmem:[%s262 + $0x2a4] sm:$0xf]
      %v516 = vld [vmem:[%s262 + $0x2a8] sm:$0xf]
      %v517 = vld [vmem:[%s262 + $0x2ac] sm:$0xf]
      %v518 = vld [vmem:[%s262 + $0x2b0] sm:$0xf]
      %v519 = vld [vmem:[%s262 + $0x2b4] sm:$0xf]
      %v520 = vld [vmem:[%s262 + $0x2b8] sm:$0xf]
      %v521 = vld [vmem:[%s262 + $0x2bc] sm:$0xf]
      %v522 = vld [vmem:[%s262 + $0x2c0] sm:$0xf]
      %v523 = vld [vmem:[%s262 + $0x2c4] sm:$0xf]
      %v524 = vld [vmem:[%s262 + $0x2c8] sm:$0xf]
      %v525 = vld [vmem:[%s262 + $0x2cc] sm:$0xf]
      %v526 = vld [vmem:[%s262 + $0x2d0] sm:$0xf]
      %v527 = vld [vmem:[%s262 + $0x2d4] sm:$0xf]
      %v528 = vld [vmem:[%s262 + $0x2d8] sm:$0xf]
      %v529 = vld [vmem:[%s262 + $0x2dc] sm:$0xf]
      %v530 = vld [vmem:[%s262 + $0x2e0] sm:$0xf]
      %v531 = vld [vmem:[%s262 + $0x2e4] sm:$0xf]
      %v532 = vld [vmem:[%s262 + $0x2e8] sm:$0xf]
      %v533 = vld [vmem:[%s262 + $0x2ec] sm:$0xf]
      %v534 = vld [vmem:[%s262 + $0x2f0] sm:$0xf]
      %v535 = vld [vmem:[%s262 + $0x2f4] sm:$0xf]
      %v536 = vld [vmem:[%s262 + $0x2f8] sm:$0xf]
      %v537 = vld [vmem:[%s262 + $0x2fc] sm:$0xf]
      %v538 = vld [vmem:[%s262 + $0x300] sm:$0xf]
      %v539 = vld [vmem:[%s262 + $0x304] sm:$0xf]
      %v540 = vld [vmem:[%s262 + $0x308] sm:$0xf]
      %v541 = vld [vmem:[%s262 + $0x30c] sm:$0xf]
      %v542 = vld [vmem:[%s262 + $0x310] sm:$0xf]
      %v543 = vld [vmem:[%s262 + $0x314] sm:$0xf]
      %v544 = vld [vmem:[%s262 + $0x318] sm:$0xf]
      %v545 = vld [vmem:[%s262 + $0x31c] sm:$0xf]
      %v546 = vld [vmem:[%s262 + $0x320] sm:$0xf]
      %v547 = vld [vmem:[%s262 + $0x324] sm:$0xf]
      %v548 = vld [vmem:[%s262 + $0x328] sm:$0xf]
      %v549 = vld [vmem:[%s262 + $0x32c] sm:$0xf]
      %v550 = vld [vmem:[%s262 + $0x330] sm:$0xf]
      %v551 = vld [vmem:[%s262 + $0x334] sm:$0xf]
      %v552 = vld [vmem:[%s262 + $0x338] sm:$0xf]
      %v553 = vld [vmem:[%s262 + $0x33c] sm:$0xf]
      %v554 = vld [vmem:[%s262 + $0x340] sm:$0xf]
      %v555 = vld [vmem:[%s262 + $0x344] sm:$0xf]
      %v556 = vld [vmem:[%s262 + $0x348] sm:$0xf]
      %v557 = vld [vmem:[%s262 + $0x34c] sm:$0xf]
      %v558 = vld [vmem:[%s262 + $0x350] sm:$0xf]
      %v559 = vld [vmem:[%s262 + $0x354] sm:$0xf]
      %v560 = vld [vmem:[%s262 + $0x358] sm:$0xf]
      %v561 = vld [vmem:[%s262 + $0x35c] sm:$0xf]
      %v562 = vld [vmem:[%s262 + $0x360] sm:$0xf]
      %v563 = vld [vmem:[%s262 + $0x364] sm:$0xf]
      %v564 = vld [vmem:[%s262 + $0x368] sm:$0xf]
      %v565 = vld [vmem:[%s262 + $0x36c] sm:$0xf]
      %v566 = vld [vmem:[%s262 + $0x370] sm:$0xf]
      %v567 = vld [vmem:[%s262 + $0x374] sm:$0xf]
      %v568 = vld [vmem:[%s262 + $0x378] sm:$0xf]
      %v569 = vld [vmem:[%s262 + $0x37c] sm:$0xf]
      %v570 = vld [vmem:[%s262 + $0x380] sm:$0xf]
      %v571 = vld [vmem:[%s262 + $0x384] sm:$0xf]
      %v572 = vld [vmem:[%s262 + $0x388] sm:$0xf]
      %v573 = vld [vmem:[%s262 + $0x38c] sm:$0xf]
      %v574 = vld [vmem:[%s262 + $0x390] sm:$0xf]
      %v575 = vld [vmem:[%s262 + $0x394] sm:$0xf]
      %v576 = vld [vmem:[%s262 + $0x398] sm:$0xf]
      %v577 = vld [vmem:[%s262 + $0x39c] sm:$0xf]
      %v578 = vld [vmem:[%s262 + $0x3a0] sm:$0xf]
      %v579 = vld [vmem:[%s262 + $0x3a4] sm:$0xf]
      %v580 = vld [vmem:[%s262 + $0x3a8] sm:$0xf]
      %v581 = vld [vmem:[%s262 + $0x3ac] sm:$0xf]
      %v582 = vld [vmem:[%s262 + $0x3b0] sm:$0xf]
      %v583 = vld [vmem:[%s262 + $0x3b4] sm:$0xf]
      %v584 = vld [vmem:[%s262 + $0x3b8] sm:$0xf]
      %v585 = vld [vmem:[%s262 + $0x3bc] sm:$0xf]
      %v586 = vld [vmem:[%s262 + $0x3c0] sm:$0xf]
      %v587 = vld [vmem:[%s262 + $0x3c4] sm:$0xf]
      %v588 = vld [vmem:[%s262 + $0x3c8] sm:$0xf]
      %v589 = vld [vmem:[%s262 + $0x3cc] sm:$0xf]
      %v590 = vld [vmem:[%s262 + $0x3d0] sm:$0xf]
      %v591 = vld [vmem:[%s262 + $0x3d4] sm:$0xf]
      %v592 = vld [vmem:[%s262 + $0x3d8] sm:$0xf]
      %v593 = vld [vmem:[%s262 + $0x3dc] sm:$0xf]
      %v594 = vld [vmem:[%s262 + $0x3e0] sm:$0xf]
      %v595 = vld [vmem:[%s262 + $0x3e4] sm:$0xf]
      %v596 = vld [vmem:[%s262 + $0x3e8] sm:$0xf]
      %v597 = vld [vmem:[%s262 + $0x3ec] sm:$0xf]
      %v598 = vld [vmem:[%s262 + $0x3f0] sm:$0xf]
      %v599 = vld [vmem:[%s262 + $0x3f4] sm:$0xf]
      %v600 = vld [vmem:[%s262 + $0x3f8] sm:$0xf]
      %v601 = vld [vmem:[%s262 + $0x3fc] sm:$0xf]
      %v602 = vld [vmem:[%s2] sm:$0xff]
      %v603 = vld [vmem:[%s2 + $0x8] sm:$0xff]
      %v604 = vld [vmem:[%s2 + $0x10] sm:$0xff]
      %v605 = vld [vmem:[%s2 + $0x18] sm:$0xff]
      %v606 = vld [vmem:[%s2 + $0x20] sm:$0xff]
      %v607 = vld [vmem:[%s2 + $0x28] sm:$0xff]
      %v608 = vld [vmem:[%s2 + $0x30] sm:$0xff]
      %v609 = vld [vmem:[%s2 + $0x38] sm:$0xff]
      %611 = vset.pattern.permute.xlu0 0
      %612 = vperm.xlu0 %611, %v602
      %v613 = vpop.permute.xlu0 %612
      %616 = vset.pattern.permute.xlu0 0
      %617 = vperm.xlu0 %616, %v603
      %v618 = vpop.permute.xlu0 %617
      %621 = vset.pattern.permute.xlu0 0
      %622 = vperm.xlu0 %621, %v604
      %v623 = vpop.permute.xlu0 %622
      %626 = vset.pattern.permute.xlu0 0
      %627 = vperm.xlu0 %626, %v605
      %v628 = vpop.permute.xlu0 %627
      %631 = vset.pattern.permute.xlu0 0
      %632 = vperm.xlu0 %631, %v606
      %v633 = vpop.permute.xlu0 %632
      %636 = vset.pattern.permute.xlu0 0
      %637 = vperm.xlu0 %636, %v607
      %v638 = vpop.permute.xlu0 %637
      %641 = vset.pattern.permute.xlu0 0
      %642 = vperm.xlu0 %641, %v608
      %v643 = vpop.permute.xlu0 %642
      %646 = vset.pattern.permute.xlu0 0
      %647 = vperm.xlu0 %646, %v609
      %v648 = vpop.permute.xlu0 %647
      %v714 = vunpack.c.l.b16 %v282
      %v715 = vunpack.c.h.b16 %v282
      %v716 = vunpack.c.l.b16 %v283
      %v717 = vunpack.c.h.b16 %v283
      %v718 = vunpack.c.l.b16 %v284
      %v719 = vunpack.c.h.b16 %v284
      %v720 = vunpack.c.l.b16 %v285
      %v721 = vunpack.c.h.b16 %v285
      %v722 = vunpack.c.l.b16 %v286
      %v723 = vunpack.c.h.b16 %v286
      %v724 = vunpack.c.l.b16 %v287
      %v725 = vunpack.c.h.b16 %v287
      %v726 = vunpack.c.l.b16 %v288
      %v727 = vunpack.c.h.b16 %v288
      %v728 = vunpack.c.l.b16 %v289
      %v729 = vunpack.c.h.b16 %v289
      %v730 = vunpack.c.l.b16 %v290
      %v731 = vunpack.c.h.b16 %v290
      %v732 = vunpack.c.l.b16 %v291
      %v733 = vunpack.c.h.b16 %v291
      %v734 = vunpack.c.l.b16 %v292
      %v735 = vunpack.c.h.b16 %v292
      %v736 = vunpack.c.l.b16 %v293
      %v737 = vunpack.c.h.b16 %v293
      %v738 = vunpack.c.l.b16 %v294
      %v739 = vunpack.c.h.b16 %v294
      %v740 = vunpack.c.l.b16 %v295
      %v741 = vunpack.c.h.b16 %v295
      %v742 = vunpack.c.l.b16 %v296
      %v743 = vunpack.c.h.b16 %v296
      %v744 = vunpack.c.l.b16 %v297
      %v745 = vunpack.c.h.b16 %v297
      %v746 = vunpack.c.l.b16 %v298
      %v747 = vunpack.c.h.b16 %v298
      %v748 = vunpack.c.l.b16 %v299
      %v749 = vunpack.c.h.b16 %v299
      %v750 = vunpack.c.l.b16 %v300
      %v751 = vunpack.c.h.b16 %v300
      %v752 = vunpack.c.l.b16 %v301
      %v753 = vunpack.c.h.b16 %v301
      %v754 = vunpack.c.l.b16 %v302
      %v755 = vunpack.c.h.b16 %v302
      %v756 = vunpack.c.l.b16 %v303
      %v757 = vunpack.c.h.b16 %v303
      %v758 = vunpack.c.l.b16 %v304
      %v759 = vunpack.c.h.b16 %v304
      %v760 = vunpack.c.l.b16 %v305
      %v761 = vunpack.c.h.b16 %v305
      %v762 = vunpack.c.l.b16 %v306
      %v763 = vunpack.c.h.b16 %v306
      %v764 = vunpack.c.l.b16 %v307
      %v765 = vunpack.c.h.b16 %v307
      %v766 = vunpack.c.l.b16 %v308
      %v767 = vunpack.c.h.b16 %v308
      %v768 = vunpack.c.l.b16 %v309
      %v769 = vunpack.c.h.b16 %v309
      %v770 = vunpack.c.l.b16 %v310
      %v771 = vunpack.c.h.b16 %v310
      %v772 = vunpack.c.l.b16 %v311
      %v773 = vunpack.c.h.b16 %v311
      %v774 = vunpack.c.l.b16 %v312
      %v775 = vunpack.c.h.b16 %v312
      %v776 = vunpack.c.l.b16 %v313
      %v777 = vunpack.c.h.b16 %v313
      %v778 = vunpack.c.l.b16 %v314
      %v779 = vunpack.c.h.b16 %v314
      %v780 = vunpack.c.l.b16 %v315
      %v781 = vunpack.c.h.b16 %v315
      %v782 = vunpack.c.l.b16 %v316
      %v783 = vunpack.c.h.b16 %v316
      %v784 = vunpack.c.l.b16 %v317
      %v785 = vunpack.c.h.b16 %v317
      %v786 = vunpack.c.l.b16 %v318
      %v787 = vunpack.c.h.b16 %v318
      %v788 = vunpack.c.l.b16 %v319
      %v789 = vunpack.c.h.b16 %v319
      %v790 = vunpack.c.l.b16 %v320
      %v791 = vunpack.c.h.b16 %v320
      %v792 = vunpack.c.l.b16 %v321
      %v793 = vunpack.c.h.b16 %v321
      %v794 = vunpack.c.l.b16 %v322
      %v795 = vunpack.c.h.b16 %v322
      %v796 = vunpack.c.l.b16 %v323
      %v797 = vunpack.c.h.b16 %v323
      %v798 = vunpack.c.l.b16 %v324
      %v799 = vunpack.c.h.b16 %v324
      %v800 = vunpack.c.l.b16 %v325
      %v801 = vunpack.c.h.b16 %v325
      %v802 = vunpack.c.l.b16 %v326
      %v803 = vunpack.c.h.b16 %v326
      %v804 = vunpack.c.l.b16 %v327
      %v805 = vunpack.c.h.b16 %v327
      %v806 = vunpack.c.l.b16 %v328
      %v807 = vunpack.c.h.b16 %v328
      %v808 = vunpack.c.l.b16 %v329
      %v809 = vunpack.c.h.b16 %v329
      %v810 = vunpack.c.l.b16 %v330
      %v811 = vunpack.c.h.b16 %v330
      %v812 = vunpack.c.l.b16 %v331
      %v813 = vunpack.c.h.b16 %v331
      %v814 = vunpack.c.l.b16 %v332
      %v815 = vunpack.c.h.b16 %v332
      %v816 = vunpack.c.l.b16 %v333
      %v817 = vunpack.c.h.b16 %v333
      %v818 = vunpack.c.l.b16 %v334
      %v819 = vunpack.c.h.b16 %v334
      %v820 = vunpack.c.l.b16 %v335
      %v821 = vunpack.c.h.b16 %v335
      %v822 = vunpack.c.l.b16 %v336
      %v823 = vunpack.c.h.b16 %v336
      %v824 = vunpack.c.l.b16 %v337
      %v825 = vunpack.c.h.b16 %v337
      %v826 = vunpack.c.l.b16 %v338
      %v827 = vunpack.c.h.b16 %v338
      %v828 = vunpack.c.l.b16 %v339
      %v829 = vunpack.c.h.b16 %v339
      %v830 = vunpack.c.l.b16 %v340
      %v831 = vunpack.c.h.b16 %v340
      %v832 = vunpack.c.l.b16 %v341
      %v833 = vunpack.c.h.b16 %v341
      %v834 = vunpack.c.l.b16 %v342
      %v835 = vunpack.c.h.b16 %v342
      %v836 = vunpack.c.l.b16 %v343
      %v837 = vunpack.c.h.b16 %v343
      %v838 = vunpack.c.l.b16 %v344
      %v839 = vunpack.c.h.b16 %v344
      %v840 = vunpack.c.l.b16 %v345
      %v841 = vunpack.c.h.b16 %v345
      %v842 = vpack.c.b16 %v730, %v714
      %v843 = vpack.c.b16 %v731, %v715
      %v844 = vpack.c.b16 %v732, %v716
      %v845 = vpack.c.b16 %v733, %v717
      %v846 = vpack.c.b16 %v734, %v718
      %v847 = vpack.c.b16 %v735, %v719
      %v848 = vpack.c.b16 %v736, %v720
      %v849 = vpack.c.b16 %v737, %v721
      %v850 = vpack.c.b16 %v738, %v722
      %v851 = vpack.c.b16 %v739, %v723
      %v852 = vpack.c.b16 %v740, %v724
      %v853 = vpack.c.b16 %v741, %v725
      %v854 = vpack.c.b16 %v742, %v726
      %v855 = vpack.c.b16 %v743, %v727
      %v856 = vpack.c.b16 %v744, %v728
      %v857 = vpack.c.b16 %v745, %v729
      %v858 = vpack.c.b16 %v762, %v746
      %v859 = vpack.c.b16 %v763, %v747
      %v860 = vpack.c.b16 %v764, %v748
      %v861 = vpack.c.b16 %v765, %v749
      %v862 = vpack.c.b16 %v766, %v750
      %v863 = vpack.c.b16 %v767, %v751
      %v864 = vpack.c.b16 %v768, %v752
      %v865 = vpack.c.b16 %v769, %v753
      %v866 = vpack.c.b16 %v770, %v754
      %v867 = vpack.c.b16 %v771, %v755
      %v868 = vpack.c.b16 %v772, %v756
      %v869 = vpack.c.b16 %v773, %v757
      %v870 = vpack.c.b16 %v774, %v758
      %v871 = vpack.c.b16 %v775, %v759
      %v872 = vpack.c.b16 %v776, %v760
      %v873 = vpack.c.b16 %v777, %v761
      %v874 = vpack.c.b16 %v794, %v778
      %v875 = vpack.c.b16 %v795, %v779
      %v876 = vpack.c.b16 %v796, %v780
      %v877 = vpack.c.b16 %v797, %v781
      %v878 = vpack.c.b16 %v798, %v782
      %v879 = vpack.c.b16 %v799, %v783
      %v880 = vpack.c.b16 %v800, %v784
      %v881 = vpack.c.b16 %v801, %v785
      %v882 = vpack.c.b16 %v802, %v786
      %v883 = vpack.c.b16 %v803, %v787
      %v884 = vpack.c.b16 %v804, %v788
      %v885 = vpack.c.b16 %v805, %v789
      %v886 = vpack.c.b16 %v806, %v790
      %v887 = vpack.c.b16 %v807, %v791
      %v888 = vpack.c.b16 %v808, %v792
      %v889 = vpack.c.b16 %v809, %v793
      %v890 = vpack.c.b16 %v826, %v810
      %v891 = vpack.c.b16 %v827, %v811
      %v892 = vpack.c.b16 %v828, %v812
      %v893 = vpack.c.b16 %v829, %v813
      %v894 = vpack.c.b16 %v830, %v814
      %v895 = vpack.c.b16 %v831, %v815
      %v896 = vpack.c.b16 %v832, %v816
      %v897 = vpack.c.b16 %v833, %v817
      %v898 = vpack.c.b16 %v834, %v818
      %v899 = vpack.c.b16 %v835, %v819
      %v900 = vpack.c.b16 %v836, %v820
      %v901 = vpack.c.b16 %v837, %v821
      %v902 = vpack.c.b16 %v838, %v822
      %v903 = vpack.c.b16 %v839, %v823
      %v904 = vpack.c.b16 %v840, %v824
      %v905 = vpack.c.b16 %v841, %v825
      %v1226 = vunpack.c.l.b16 %v346
      %v1227 = vunpack.c.l.b16 %v347
      %v1228 = vunpack.c.l.b16 %v348
      %v1229 = vunpack.c.l.b16 %v349
      %v1230 = vunpack.c.l.b16 %v350
      %v1231 = vunpack.c.l.b16 %v351
      %v1232 = vunpack.c.l.b16 %v352
      %v1233 = vunpack.c.l.b16 %v353
      %v1234 = vunpack.c.l.b16 %v354
      %v1235 = vunpack.c.l.b16 %v355
      %v1236 = vunpack.c.l.b16 %v356
      %v1237 = vunpack.c.l.b16 %v357
      %v1238 = vunpack.c.l.b16 %v358
      %v1239 = vunpack.c.l.b16 %v359
      %v1240 = vunpack.c.l.b16 %v360
      %v1241 = vunpack.c.l.b16 %v361
      %v1242 = vunpack.c.l.b16 %v362
      %v1243 = vunpack.c.l.b16 %v363
      %v1244 = vunpack.c.l.b16 %v364
      %v1245 = vunpack.c.l.b16 %v365
      %v1246 = vunpack.c.l.b16 %v366
      %v1247 = vunpack.c.l.b16 %v367
      %v1248 = vunpack.c.l.b16 %v368
      %v1249 = vunpack.c.l.b16 %v369
      %v1250 = vunpack.c.l.b16 %v370
      %v1251 = vunpack.c.l.b16 %v371
      %v1252 = vunpack.c.l.b16 %v372
      %v1253 = vunpack.c.l.b16 %v373
      %v1254 = vunpack.c.l.b16 %v374
      %v1255 = vunpack.c.l.b16 %v375
      %v1256 = vunpack.c.l.b16 %v376
      %v1257 = vunpack.c.l.b16 %v377
      %v1258 = vunpack.c.l.b16 %v378
      %v1259 = vunpack.c.l.b16 %v379
      %v1260 = vunpack.c.l.b16 %v380
      %v1261 = vunpack.c.l.b16 %v381
      %v1262 = vunpack.c.l.b16 %v382
      %v1263 = vunpack.c.l.b16 %v383
      %v1264 = vunpack.c.l.b16 %v384
      %v1265 = vunpack.c.l.b16 %v385
      %v1266 = vunpack.c.l.b16 %v386
      %v1267 = vunpack.c.l.b16 %v387
      %v1268 = vunpack.c.l.b16 %v388
      %v1269 = vunpack.c.l.b16 %v389
      %v1270 = vunpack.c.l.b16 %v390
      %v1271 = vunpack.c.l.b16 %v391
      %v1272 = vunpack.c.l.b16 %v392
      %v1273 = vunpack.c.l.b16 %v393
      %v1274 = vunpack.c.l.b16 %v394
      %v1275 = vunpack.c.l.b16 %v395
      %v1276 = vunpack.c.l.b16 %v396
      %v1277 = vunpack.c.l.b16 %v397
      %v1278 = vunpack.c.l.b16 %v398
      %v1279 = vunpack.c.l.b16 %v399
      %v1280 = vunpack.c.l.b16 %v400
      %v1281 = vunpack.c.l.b16 %v401
      %v1282 = vunpack.c.l.b16 %v402
      %v1283 = vunpack.c.l.b16 %v403
      %v1284 = vunpack.c.l.b16 %v404
      %v1285 = vunpack.c.l.b16 %v405
      %v1286 = vunpack.c.l.b16 %v406
      %v1287 = vunpack.c.l.b16 %v407
      %v1288 = vunpack.c.l.b16 %v408
      %v1289 = vunpack.c.l.b16 %v409
      %v1290 = vunpack.c.l.b16 %v410
      %v1291 = vunpack.c.l.b16 %v411
      %v1292 = vunpack.c.l.b16 %v412
      %v1293 = vunpack.c.l.b16 %v413
      %v1294 = vunpack.c.l.b16 %v414
      %v1295 = vunpack.c.l.b16 %v415
      %v1296 = vunpack.c.l.b16 %v416
      %v1297 = vunpack.c.l.b16 %v417
      %v1298 = vunpack.c.l.b16 %v418
      %v1299 = vunpack.c.l.b16 %v419
      %v1300 = vunpack.c.l.b16 %v420
      %v1301 = vunpack.c.l.b16 %v421
      %v1302 = vunpack.c.l.b16 %v422
      %v1303 = vunpack.c.l.b16 %v423
      %v1304 = vunpack.c.l.b16 %v424
      %v1305 = vunpack.c.l.b16 %v425
      %v1306 = vunpack.c.l.b16 %v426
      %v1307 = vunpack.c.l.b16 %v427
      %v1308 = vunpack.c.l.b16 %v428
      %v1309 = vunpack.c.l.b16 %v429
      %v1310 = vunpack.c.l.b16 %v430
      %v1311 = vunpack.c.l.b16 %v431
      %v1312 = vunpack.c.l.b16 %v432
      %v1313 = vunpack.c.l.b16 %v433
      %v1314 = vunpack.c.l.b16 %v434
      %v1315 = vunpack.c.l.b16 %v435
      %v1316 = vunpack.c.l.b16 %v436
      %v1317 = vunpack.c.l.b16 %v437
      %v1318 = vunpack.c.l.b16 %v438
      %v1319 = vunpack.c.l.b16 %v439
      %v1320 = vunpack.c.l.b16 %v440
      %v1321 = vunpack.c.l.b16 %v441
      %v1322 = vunpack.c.l.b16 %v442
      %v1323 = vunpack.c.l.b16 %v443
      %v1324 = vunpack.c.l.b16 %v444
      %v1325 = vunpack.c.l.b16 %v445
      %v1326 = vunpack.c.l.b16 %v446
      %v1327 = vunpack.c.l.b16 %v447
      %v1328 = vunpack.c.l.b16 %v448
      %v1329 = vunpack.c.l.b16 %v449
      %v1330 = vunpack.c.l.b16 %v450
      %v1331 = vunpack.c.l.b16 %v451
      %v1332 = vunpack.c.l.b16 %v452
      %v1333 = vunpack.c.l.b16 %v453
      %v1334 = vunpack.c.l.b16 %v454
      %v1335 = vunpack.c.l.b16 %v455
      %v1336 = vunpack.c.l.b16 %v456
      %v1337 = vunpack.c.l.b16 %v457
      %v1338 = vunpack.c.l.b16 %v458
      %v1339 = vunpack.c.l.b16 %v459
      %v1340 = vunpack.c.l.b16 %v460
      %v1341 = vunpack.c.l.b16 %v461
      %v1342 = vunpack.c.l.b16 %v462
      %v1343 = vunpack.c.l.b16 %v463
      %v1344 = vunpack.c.l.b16 %v464
      %v1345 = vunpack.c.l.b16 %v465
      %v1346 = vunpack.c.l.b16 %v466
      %v1347 = vunpack.c.l.b16 %v467
      %v1348 = vunpack.c.l.b16 %v468
      %v1349 = vunpack.c.l.b16 %v469
      %v1350 = vunpack.c.l.b16 %v470
      %v1351 = vunpack.c.l.b16 %v471
      %v1352 = vunpack.c.l.b16 %v472
      %v1353 = vunpack.c.l.b16 %v473
      %v1354 = vunpack.c.l.b16 %v474
      %v1355 = vunpack.c.l.b16 %v475
      %v1356 = vunpack.c.l.b16 %v476
      %v1357 = vunpack.c.l.b16 %v477
      %v1358 = vunpack.c.l.b16 %v478
      %v1359 = vunpack.c.l.b16 %v479
      %v1360 = vunpack.c.l.b16 %v480
      %v1361 = vunpack.c.l.b16 %v481
      %v1362 = vunpack.c.l.b16 %v482
      %v1363 = vunpack.c.l.b16 %v483
      %v1364 = vunpack.c.l.b16 %v484
      %v1365 = vunpack.c.l.b16 %v485
      %v1366 = vunpack.c.l.b16 %v486
      %v1367 = vunpack.c.l.b16 %v487
      %v1368 = vunpack.c.l.b16 %v488
      %v1369 = vunpack.c.l.b16 %v489
      %v1370 = vunpack.c.l.b16 %v490
      %v1371 = vunpack.c.l.b16 %v491
      %v1372 = vunpack.c.l.b16 %v492
      %v1373 = vunpack.c.l.b16 %v493
      %v1374 = vunpack.c.l.b16 %v494
      %v1375 = vunpack.c.l.b16 %v495
      %v1376 = vunpack.c.l.b16 %v496
      %v1377 = vunpack.c.l.b16 %v497
      %v1378 = vunpack.c.l.b16 %v498
      %v1379 = vunpack.c.l.b16 %v499
      %v1380 = vunpack.c.l.b16 %v500
      %v1381 = vunpack.c.l.b16 %v501
      %v1382 = vunpack.c.l.b16 %v502
      %v1383 = vunpack.c.l.b16 %v503
      %v1384 = vunpack.c.l.b16 %v504
      %v1385 = vunpack.c.l.b16 %v505
      %v1386 = vunpack.c.l.b16 %v506
      %v1387 = vunpack.c.l.b16 %v507
      %v1388 = vunpack.c.l.b16 %v508
      %v1389 = vunpack.c.l.b16 %v509
      %v1390 = vunpack.c.l.b16 %v510
      %v1391 = vunpack.c.l.b16 %v511
      %v1392 = vunpack.c.l.b16 %v512
      %v1393 = vunpack.c.l.b16 %v513
      %v1394 = vunpack.c.l.b16 %v514
      %v1395 = vunpack.c.l.b16 %v515
      %v1396 = vunpack.c.l.b16 %v516
      %v1397 = vunpack.c.l.b16 %v517
      %v1398 = vunpack.c.l.b16 %v518
      %v1399 = vunpack.c.l.b16 %v519
      %v1400 = vunpack.c.l.b16 %v520
      %v1401 = vunpack.c.l.b16 %v521
      %v1402 = vunpack.c.l.b16 %v522
      %v1403 = vunpack.c.l.b16 %v523
      %v1404 = vunpack.c.l.b16 %v524
      %v1405 = vunpack.c.l.b16 %v525
      %v1406 = vunpack.c.l.b16 %v526
      %v1407 = vunpack.c.l.b16 %v527
      %v1408 = vunpack.c.l.b16 %v528
      %v1409 = vunpack.c.l.b16 %v529
      %v1410 = vunpack.c.l.b16 %v530
      %v1411 = vunpack.c.l.b16 %v531
      %v1412 = vunpack.c.l.b16 %v532
      %v1413 = vunpack.c.l.b16 %v533
      %v1414 = vunpack.c.l.b16 %v534
      %v1415 = vunpack.c.l.b16 %v535
      %v1416 = vunpack.c.l.b16 %v536
      %v1417 = vunpack.c.l.b16 %v537
      %v1418 = vunpack.c.l.b16 %v538
      %v1419 = vunpack.c.l.b16 %v539
      %v1420 = vunpack.c.l.b16 %v540
      %v1421 = vunpack.c.l.b16 %v541
      %v1422 = vunpack.c.l.b16 %v542
      %v1423 = vunpack.c.l.b16 %v543
      %v1424 = vunpack.c.l.b16 %v544
      %v1425 = vunpack.c.l.b16 %v545
      %v1426 = vunpack.c.l.b16 %v546
      %v1427 = vunpack.c.l.b16 %v547
      %v1428 = vunpack.c.l.b16 %v548
      %v1429 = vunpack.c.l.b16 %v549
      %v1430 = vunpack.c.l.b16 %v550
      %v1431 = vunpack.c.l.b16 %v551
      %v1432 = vunpack.c.l.b16 %v552
      %v1433 = vunpack.c.l.b16 %v553
      %v1434 = vunpack.c.l.b16 %v554
      %v1435 = vunpack.c.l.b16 %v555
      %v1436 = vunpack.c.l.b16 %v556
      %v1437 = vunpack.c.l.b16 %v557
      %v1438 = vunpack.c.l.b16 %v558
      %v1439 = vunpack.c.l.b16 %v559
      %v1440 = vunpack.c.l.b16 %v560
      %v1441 = vunpack.c.l.b16 %v561
      %v1442 = vunpack.c.l.b16 %v562
      %v1443 = vunpack.c.l.b16 %v563
      %v1444 = vunpack.c.l.b16 %v564
      %v1445 = vunpack.c.l.b16 %v565
      %v1446 = vunpack.c.l.b16 %v566
      %v1447 = vunpack.c.l.b16 %v567
      %v1448 = vunpack.c.l.b16 %v568
      %v1449 = vunpack.c.l.b16 %v569
      %v1450 = vunpack.c.l.b16 %v570
      %v1451 = vunpack.c.l.b16 %v571
      %v1452 = vunpack.c.l.b16 %v572
      %v1453 = vunpack.c.l.b16 %v573
      %v1454 = vunpack.c.l.b16 %v574
      %v1455 = vunpack.c.l.b16 %v575
      %v1456 = vunpack.c.l.b16 %v576
      %v1457 = vunpack.c.l.b16 %v577
      %v1458 = vunpack.c.l.b16 %v578
      %v1459 = vunpack.c.l.b16 %v579
      %v1460 = vunpack.c.l.b16 %v580
      %v1461 = vunpack.c.l.b16 %v581
      %v1462 = vunpack.c.l.b16 %v582
      %v1463 = vunpack.c.l.b16 %v583
      %v1464 = vunpack.c.l.b16 %v584
      %v1465 = vunpack.c.l.b16 %v585
      %v1466 = vunpack.c.l.b16 %v586
      %v1467 = vunpack.c.l.b16 %v587
      %v1468 = vunpack.c.l.b16 %v588
      %v1469 = vunpack.c.l.b16 %v589
      %v1470 = vunpack.c.l.b16 %v590
      %v1471 = vunpack.c.l.b16 %v591
      %v1472 = vunpack.c.l.b16 %v592
      %v1473 = vunpack.c.l.b16 %v593
      %v1474 = vunpack.c.l.b16 %v594
      %v1475 = vunpack.c.l.b16 %v595
      %v1476 = vunpack.c.l.b16 %v596
      %v1477 = vunpack.c.l.b16 %v597
      %v1478 = vunpack.c.l.b16 %v598
      %v1479 = vunpack.c.l.b16 %v599
      %v1480 = vunpack.c.l.b16 %v600
      %v1481 = vunpack.c.l.b16 %v601
      %v1482 = vpack.c.b16 %v1227, %v1226
      %v1483 = vpack.c.b16 %v1229, %v1228
      %v1484 = vpack.c.b16 %v1231, %v1230
      %v1485 = vpack.c.b16 %v1233, %v1232
      %v1486 = vpack.c.b16 %v1235, %v1234
      %v1487 = vpack.c.b16 %v1237, %v1236
      %v1488 = vpack.c.b16 %v1239, %v1238
      %v1489 = vpack.c.b16 %v1241, %v1240
      %v1490 = vpack.c.b16 %v1243, %v1242
      %v1491 = vpack.c.b16 %v1245, %v1244
      %v1492 = vpack.c.b16 %v1247, %v1246
      %v1493 = vpack.c.b16 %v1249, %v1248
      %v1494 = vpack.c.b16 %v1251, %v1250
      %v1495 = vpack.c.b16 %v1253, %v1252
      %v1496 = vpack.c.b16 %v1255, %v1254
      %v1497 = vpack.c.b16 %v1257, %v1256
      %v1498 = vpack.c.b16 %v1259, %v1258
      %v1499 = vpack.c.b16 %v1261, %v1260
      %v1500 = vpack.c.b16 %v1263, %v1262
      %v1501 = vpack.c.b16 %v1265, %v1264
      %v1502 = vpack.c.b16 %v1267, %v1266
      %v1503 = vpack.c.b16 %v1269, %v1268
      %v1504 = vpack.c.b16 %v1271, %v1270
      %v1505 = vpack.c.b16 %v1273, %v1272
      %v1506 = vpack.c.b16 %v1275, %v1274
      %v1507 = vpack.c.b16 %v1277, %v1276
      %v1508 = vpack.c.b16 %v1279, %v1278
      %v1509 = vpack.c.b16 %v1281, %v1280
      %v1510 = vpack.c.b16 %v1283, %v1282
      %v1511 = vpack.c.b16 %v1285, %v1284
      %v1512 = vpack.c.b16 %v1287, %v1286
      %v1513 = vpack.c.b16 %v1289, %v1288
      %v1514 = vpack.c.b16 %v1291, %v1290
      %v1515 = vpack.c.b16 %v1293, %v1292
      %v1516 = vpack.c.b16 %v1295, %v1294
      %v1517 = vpack.c.b16 %v1297, %v1296
      %v1518 = vpack.c.b16 %v1299, %v1298
      %v1519 = vpack.c.b16 %v1301, %v1300
      %v1520 = vpack.c.b16 %v1303, %v1302
      %v1521 = vpack.c.b16 %v1305, %v1304
      %v1522 = vpack.c.b16 %v1307, %v1306
      %v1523 = vpack.c.b16 %v1309, %v1308
      %v1524 = vpack.c.b16 %v1311, %v1310
      %v1525 = vpack.c.b16 %v1313, %v1312
      %v1526 = vpack.c.b16 %v1315, %v1314
      %v1527 = vpack.c.b16 %v1317, %v1316
      %v1528 = vpack.c.b16 %v1319, %v1318
      %v1529 = vpack.c.b16 %v1321, %v1320
      %v1530 = vpack.c.b16 %v1323, %v1322
      %v1531 = vpack.c.b16 %v1325, %v1324
      %v1532 = vpack.c.b16 %v1327, %v1326
      %v1533 = vpack.c.b16 %v1329, %v1328
      %v1534 = vpack.c.b16 %v1331, %v1330
      %v1535 = vpack.c.b16 %v1333, %v1332
      %v1536 = vpack.c.b16 %v1335, %v1334
      %v1537 = vpack.c.b16 %v1337, %v1336
      %v1538 = vpack.c.b16 %v1339, %v1338
      %v1539 = vpack.c.b16 %v1341, %v1340
      %v1540 = vpack.c.b16 %v1343, %v1342
      %v1541 = vpack.c.b16 %v1345, %v1344
      %v1542 = vpack.c.b16 %v1347, %v1346
      %v1543 = vpack.c.b16 %v1349, %v1348
      %v1544 = vpack.c.b16 %v1351, %v1350
      %v1545 = vpack.c.b16 %v1353, %v1352
      %v1546 = vpack.c.b16 %v1355, %v1354
      %v1547 = vpack.c.b16 %v1357, %v1356
      %v1548 = vpack.c.b16 %v1359, %v1358
      %v1549 = vpack.c.b16 %v1361, %v1360
      %v1550 = vpack.c.b16 %v1363, %v1362
      %v1551 = vpack.c.b16 %v1365, %v1364
      %v1552 = vpack.c.b16 %v1367, %v1366
      %v1553 = vpack.c.b16 %v1369, %v1368
      %v1554 = vpack.c.b16 %v1371, %v1370
      %v1555 = vpack.c.b16 %v1373, %v1372
      %v1556 = vpack.c.b16 %v1375, %v1374
      %v1557 = vpack.c.b16 %v1377, %v1376
      %v1558 = vpack.c.b16 %v1379, %v1378
      %v1559 = vpack.c.b16 %v1381, %v1380
      %v1560 = vpack.c.b16 %v1383, %v1382
      %v1561 = vpack.c.b16 %v1385, %v1384
      %v1562 = vpack.c.b16 %v1387, %v1386
      %v1563 = vpack.c.b16 %v1389, %v1388
      %v1564 = vpack.c.b16 %v1391, %v1390
      %v1565 = vpack.c.b16 %v1393, %v1392
      %v1566 = vpack.c.b16 %v1395, %v1394
      %v1567 = vpack.c.b16 %v1397, %v1396
      %v1568 = vpack.c.b16 %v1399, %v1398
      %v1569 = vpack.c.b16 %v1401, %v1400
      %v1570 = vpack.c.b16 %v1403, %v1402
      %v1571 = vpack.c.b16 %v1405, %v1404
      %v1572 = vpack.c.b16 %v1407, %v1406
      %v1573 = vpack.c.b16 %v1409, %v1408
      %v1574 = vpack.c.b16 %v1411, %v1410
      %v1575 = vpack.c.b16 %v1413, %v1412
      %v1576 = vpack.c.b16 %v1415, %v1414
      %v1577 = vpack.c.b16 %v1417, %v1416
      %v1578 = vpack.c.b16 %v1419, %v1418
      %v1579 = vpack.c.b16 %v1421, %v1420
      %v1580 = vpack.c.b16 %v1423, %v1422
      %v1581 = vpack.c.b16 %v1425, %v1424
      %v1582 = vpack.c.b16 %v1427, %v1426
      %v1583 = vpack.c.b16 %v1429, %v1428
      %v1584 = vpack.c.b16 %v1431, %v1430
      %v1585 = vpack.c.b16 %v1433, %v1432
      %v1586 = vpack.c.b16 %v1435, %v1434
      %v1587 = vpack.c.b16 %v1437, %v1436
      %v1588 = vpack.c.b16 %v1439, %v1438
      %v1589 = vpack.c.b16 %v1441, %v1440
      %v1590 = vpack.c.b16 %v1443, %v1442
      %v1591 = vpack.c.b16 %v1445, %v1444
      %v1592 = vpack.c.b16 %v1447, %v1446
      %v1593 = vpack.c.b16 %v1449, %v1448
      %v1594 = vpack.c.b16 %v1451, %v1450
      %v1595 = vpack.c.b16 %v1453, %v1452
      %v1596 = vpack.c.b16 %v1455, %v1454
      %v1597 = vpack.c.b16 %v1457, %v1456
      %v1598 = vpack.c.b16 %v1459, %v1458
      %v1599 = vpack.c.b16 %v1461, %v1460
      %v1600 = vpack.c.b16 %v1463, %v1462
      %v1601 = vpack.c.b16 %v1465, %v1464
      %v1602 = vpack.c.b16 %v1467, %v1466
      %v1603 = vpack.c.b16 %v1469, %v1468
      %v1604 = vpack.c.b16 %v1471, %v1470
      %v1605 = vpack.c.b16 %v1473, %v1472
      %v1606 = vpack.c.b16 %v1475, %v1474
      %v1607 = vpack.c.b16 %v1477, %v1476
      %v1608 = vpack.c.b16 %v1479, %v1478
      %v1609 = vpack.c.b16 %v1481, %v1480
      %1738 = vmatprep.subr.bf16.mxu0 0
      %1739 = vmatpush1.bf16.msra.mxu0 %v1482
      %1740 = vmatprep.subr.bf16.mxu0 0
      %1741 = vmatpush1.bf16.msra.mxu0 %v1483
      %1742 = vmatprep.subr.bf16.mxu0 0
      %1743 = vmatpush1.bf16.msra.mxu0 %v1484
      %1744 = vmatprep.subr.bf16.mxu0 0
      %1745 = vmatpush1.bf16.msra.mxu0 %v1485
      %1746 = vmatprep.subr.bf16.mxu0 0
      %1747 = vmatpush1.bf16.msra.mxu0 %v1486
      %1748 = vmatprep.subr.bf16.mxu0 0
      %1749 = vmatpush1.bf16.msra.mxu0 %v1487
      %1750 = vmatprep.subr.bf16.mxu0 0
      %1751 = vmatpush1.bf16.msra.mxu0 %v1488
      %1752 = vmatprep.subr.bf16.mxu0 0
      %1753 = vmatpush1.bf16.msra.mxu0 %v1489
      %1754 = vmatprep.subr.bf16.mxu0 0
      %1755 = vmatpush1.bf16.msra.mxu0 %v1490
      %1756 = vmatprep.subr.bf16.mxu0 0
      %1757 = vmatpush1.bf16.msra.mxu0 %v1491
      %1758 = vmatprep.subr.bf16.mxu0 0
      %1759 = vmatpush1.bf16.msra.mxu0 %v1492
      %1760 = vmatprep.subr.bf16.mxu0 0
      %1761 = vmatpush1.bf16.msra.mxu0 %v1493
      %1762 = vmatprep.subr.bf16.mxu0 0
      %1763 = vmatpush1.bf16.msra.mxu0 %v1494
      %1764 = vmatprep.subr.bf16.mxu0 0
      %1765 = vmatpush1.bf16.msra.mxu0 %v1495
      %1766 = vmatprep.subr.bf16.mxu0 0
      %1767 = vmatpush1.bf16.msra.mxu0 %v1496
      %1768 = vmatprep.subr.bf16.mxu0 0
      %1769 = vmatpush1.bf16.msra.mxu0 %v1497
      %1770 = vmatprep.mubr.bf16.mxu0 %v843
      %1771 = vmatmul.mubr.bf16.gmra.mrb[0].mxu0 %v842
      %v1772 = vpop.f32.mrb[0].mxu0
      %v1773 = vadd.f32 %v613, %v1772
      %v1774 = vpop.f32.mrb[0].mxu0
      %v1775 = vpop.f32.mrb[0].mxu0
      %v1776 = vadd.f32 %v618, %v1775
      %v1777 = vpop.f32.mrb[0].mxu0
      %1778 = vmatprep.mubr.bf16.mxu0 %v859
      %1779 = vmatmul.mubr.bf16.gmra.mrb[0].mxu0 %v858
      %v1780 = vpop.f32.mrb[0].mxu0
      %v1781 = vadd.f32 %v623, %v1780
      %v1782 = vpop.f32.mrb[0].mxu0
      %v1783 = vpop.f32.mrb[0].mxu0
      %v1784 = vadd.f32 %v628, %v1783
      %v1785 = vpop.f32.mrb[0].mxu0
      %1786 = vmatprep.mubr.bf16.mxu0 %v875
      %1787 = vmatmul.mubr.bf16.gmra.mrb[0].mxu0 %v874
      %v1788 = vpop.f32.mrb[0].mxu0
      %v1789 = vadd.f32 %v633, %v1788
      %v1790 = vpop.f32.mrb[0].mxu0
      %v1791 = vpop.f32.mrb[0].mxu0
      %v1792 = vadd.f32 %v638, %v1791
      %v1793 = vpop.f32.mrb[0].mxu0
      %1794 = vmatprep.mubr.bf16.mxu0 %v891
      %1795 = vmatmul.mubr.bf16.gmra.mrb[0].mxu0 %v890
      %v1796 = vpop.f32.mrb[0].mxu0
      %v1797 = vadd.f32 %v643, %v1796
      %v1798 = vpop.f32.mrb[0].mxu0
      %v1799 = vpop.f32.mrb[0].mxu0
      %v1800 = vadd.f32 %v648, %v1799
      %v1801 = vpop.f32.mrb[0].mxu0
      %1802 = vdwg.mxu0
      %1803 = vmatprep.subr.bf16.mxu0 0
      %1804 = vmatpush1.bf16.msra.mxu0 %v1498
      %1805 = vmatprep.subr.bf16.mxu0 0
      %1806 = vmatpush1.bf16.msra.mxu0 %v1499
      %1807 = vmatprep.subr.bf16.mxu0 0
      %1808 = vmatpush1.bf16.msra.mxu0 %v1500
      %1809 = vmatprep.subr.bf16.mxu0 0
      %1810 = vmatpush1.bf16.msra.mxu0 %v1501
      %1811 = vmatprep.subr.bf16.mxu0 0
      %1812 = vmatpush1.bf16.msra.mxu0 %v1502
      %1813 = vmatprep.subr.bf16.mxu0 0
      %1814 = vmatpush1.bf16.msra.mxu0 %v1503
      %1815 = vmatprep.subr.bf16.mxu0 0
      %1816 = vmatpush1.bf16.msra.mxu0 %v1504
      %1817 = vmatprep.subr.bf16.mxu0 0
      %1818 = vmatpush1.bf16.msra.mxu0 %v1505
      %1819 = vmatprep.subr.bf16.mxu0 0
      %1820 = vmatpush1.bf16.msra.mxu0 %v1506
      %1821 = vmatprep.subr.bf16.mxu0 0
      %1822 = vmatpush1.bf16.msra.mxu0 %v1507
      %1823 = vmatprep.subr.bf16.mxu0 0
      %1824 = vmatpush1.bf16.msra.mxu0 %v1508
      %1825 = vmatprep.subr.bf16.mxu0 0
      %1826 = vmatpush1.bf16.msra.mxu0 %v1509
      %1827 = vmatprep.subr.bf16.mxu0 0
      %1828 = vmatpush1.bf16.msra.mxu0 %v1510
      %1829 = vmatprep.subr.bf16.mxu0 0
      %1830 = vmatpush1.bf16.msra.mxu0 %v1511
      %1831 = vmatprep.subr.bf16.mxu0 0
      %1832 = vmatpush1.bf16.msra.mxu0 %v1512
      %1833 = vmatprep.subr.bf16.mxu0 0
      %1834 = vmatpush1.bf16.msra.mxu0 %v1513
      %1835 = vmatprep.mubr.bf16.mxu0 %v845
      %1836 = vmatmul.mubr.bf16.gmra.mrb[0].mxu0 %v844
      %v1837 = vpop.f32.mrb[0].mxu0
      %v1838 = vadd.f32 %v1773, %v1837
      %v1839 = vpop.f32.mrb[0].mxu0
      %v1840 = vpop.f32.mrb[0].mxu0
      %v1841 = vadd.f32 %v1776, %v1840
      %v1842 = vpop.f32.mrb[0].mxu0
      %1843 = vmatprep.mubr.bf16.mxu0 %v861
      %1844 = vmatmul.mubr.bf16.gmra.mrb[0].mxu0 %v860
      %v1845 = vpop.f32.mrb[0].mxu0
      %v1846 = vadd.f32 %v1781, %v1845
      %v1847 = vpop.f32.mrb[0].mxu0
      %v1848 = vpop.f32.mrb[0].mxu0
      %v1849 = vadd.f32 %v1784, %v1848
      %v1850 = vpop.f32.mrb[0].mxu0
      %1851 = vmatprep.mubr.bf16.mxu0 %v877
      %1852 = vmatmul.mubr.bf16.gmra.mrb[0].mxu0 %v876
      %v1853 = vpop.f32.mrb[0].mxu0
      %v1854 = vadd.f32 %v1789, %v1853
      %v1855 = vpop.f32.mrb[0].mxu0
      %v1856 = vpop.f32.mrb[0].mxu0
      %v1857 = vadd.f32 %v1792, %v1856
      %v1858 = vpop.f32.mrb[0].mxu0
      %1859 = vmatprep.mubr.bf16.mxu0 %v893
      %1860 = vmatmul.mubr.bf16.gmra.mrb[0].mxu0 %v892
      %v1861 = vpop.f32.mrb[0].mxu0
      %v1862 = vadd.f32 %v1797, %v1861
      %v1863 = vpop.f32.mrb[0].mxu0
      %v1864 = vpop.f32.mrb[0].mxu0
      %v1865 = vadd.f32 %v1800, %v1864
      %v1866 = vpop.f32.mrb[0].mxu0
      %1867 = vdwg.mxu0
      %1868 = vmatprep.subr.bf16.mxu0 0
      %1869 = vmatpush1.bf16.msra.mxu0 %v1514
      %1870 = vmatprep.subr.bf16.mxu0 0
      %1871 = vmatpush1.bf16.msra.mxu0 %v1515
      %1872 = vmatprep.subr.bf16.mxu0 0
      %1873 = vmatpush1.bf16.msra.mxu0 %v1516
      %1874 = vmatprep.subr.bf16.mxu0 0
      %1875 = vmatpush1.bf16.msra.mxu0 %v1517
      %1876 = vmatprep.subr.bf16.mxu0 0
      %1877 = vmatpush1.bf16.msra.mxu0 %v1518
      %1878 = vmatprep.subr.bf16.mxu0 0
      %1879 = vmatpush1.bf16.msra.mxu0 %v1519
      %1880 = vmatprep.subr.bf16.mxu0 0
      %1881 = vmatpush1.bf16.msra.mxu0 %v1520
      %1882 = vmatprep.subr.bf16.mxu0 0
      %1883 = vmatpush1.bf16.msra.mxu0 %v1521
      %1884 = vmatprep.subr.bf16.mxu0 0
      %1885 = vmatpush1.bf16.msra.mxu0 %v1522
      %1886 = vmatprep.subr.bf16.mxu0 0
      %1887 = vmatpush1.bf16.msra.mxu0 %v1523
      %1888 = vmatprep.subr.bf16.mxu0 0
      %1889 = vmatpush1.bf16.msra.mxu0 %v1524
      %1890 = vmatprep.subr.bf16.mxu0 0
      %1891 = vmatpush1.bf16.msra.mxu0 %v1525
      %1892 = vmatprep.subr.bf16.mxu0 0
      %1893 = vmatpush1.bf16.msra.mxu0 %v1526
      %1894 = vmatprep.subr.bf16.mxu0 0
      %1895 = vmatpush1.bf16.msra.mxu0 %v1527
      %1896 = vmatprep.subr.bf16.mxu0 0
      %1897 = vmatpush1.bf16.msra.mxu0 %v1528
      %1898 = vmatprep.subr.bf16.mxu0 0
      %1899 = vmatpush1.bf16.msra.mxu0 %v1529
      %1900 = vmatprep.mubr.bf16.mxu0 %v847
      %1901 = vmatmul.mubr.bf16.gmra.mrb[0].mxu0 %v846
      %v1902 = vpop.f32.mrb[0].mxu0
      %v1903 = vadd.f32 %v1838, %v1902
      %v1904 = vpop.f32.mrb[0].mxu0
      %v1905 = vpop.f32.mrb[0].mxu0
      %v1906 = vadd.f32 %v1841, %v1905
      %v1907 = vpop.f32.mrb[0].mxu0
      %1908 = vmatprep.mubr.bf16.mxu0 %v863
      %1909 = vmatmul.mubr.bf16.gmra.mrb[0].mxu0 %v862
      %v1910 = vpop.f32.mrb[0].mxu0
      %v1911 = vadd.f32 %v1846, %v1910
      %v1912 = vpop.f32.mrb[0].mxu0
      %v1913 = vpop.f32.mrb[0].mxu0
      %v1914 = vadd.f32 %v1849, %v1913
      %v1915 = vpop.f32.mrb[0].mxu0
      %1916 = vmatprep.mubr.bf16.mxu0 %v879
      %1917 = vmatmul.mubr.bf16.gmra.mrb[0].mxu0 %v878
      %v1918 = vpop.f32.mrb[0].mxu0
      %v1919 = vadd.f32 %v1854, %v1918
      %v1920 = vpop.f32.mrb[0].mxu0
      %v1921 = vpop.f32.mrb[0].mxu0
      %v1922 = vadd.f32 %v1857, %v1921
      %v1923 = vpop.f32.mrb[0].mxu0
      %1924 = vmatprep.mubr.bf16.mxu0 %v895
      %1925 = vmatmul.mubr.bf16.gmra.mrb[0].mxu0 %v894
      %v1926 = vpop.f32.mrb[0].mxu0
      %v1927 = vadd.f32 %v1862, %v1926
      %v1928 = vpop.f32.mrb[0].mxu0
      %v1929 = vpop.f32.mrb[0].mxu0
      %v1930 = vadd.f32 %v1865, %v1929
      %v1931 = vpop.f32.mrb[0].mxu0
      %1932 = vdwg.mxu0
      %1933 = vmatprep.subr.bf16.mxu0 0
      %1934 = vmatpush1.bf16.msra.mxu0 %v1530
      %1935 = vmatprep.subr.bf16.mxu0 0
      %1936 = vmatpush1.bf16.msra.mxu0 %v1531
      %1937 = vmatprep.subr.bf16.mxu0 0
      %1938 = vmatpush1.bf16.msra.mxu0 %v1532
      %1939 = vmatprep.subr.bf16.mxu0 0
      %1940 = vmatpush1.bf16.msra.mxu0 %v1533
      %1941 = vmatprep.subr.bf16.mxu0 0
      %1942 = vmatpush1.bf16.msra.mxu0 %v1534
      %1943 = vmatprep.subr.bf16.mxu0 0
      %1944 = vmatpush1.bf16.msra.mxu0 %v1535
      %1945 = vmatprep.subr.bf16.mxu0 0
      %1946 = vmatpush1.bf16.msra.mxu0 %v1536
      %1947 = vmatprep.subr.bf16.mxu0 0
      %1948 = vmatpush1.bf16.msra.mxu0 %v1537
      %1949 = vmatprep.subr.bf16.mxu0 0
      %1950 = vmatpush1.bf16.msra.mxu0 %v1538
      %1951 = vmatprep.subr.bf16.mxu0 0
      %1952 = vmatpush1.bf16.msra.mxu0 %v1539
      %1953 = vmatprep.subr.bf16.mxu0 0
      %1954 = vmatpush1.bf16.msra.mxu0 %v1540
      %1955 = vmatprep.subr.bf16.mxu0 0
      %1956 = vmatpush1.bf16.msra.mxu0 %v1541
      %1957 = vmatprep.subr.bf16.mxu0 0
      %1958 = vmatpush1.bf16.msra.mxu0 %v1542
      %1959 = vmatprep.subr.bf16.mxu0 0
      %1960 = vmatpush1.bf16.msra.mxu0 %v1543
      %1961 = vmatprep.subr.bf16.mxu0 0
      %1962 = vmatpush1.bf16.msra.mxu0 %v1544
      %1963 = vmatprep.subr.bf16.mxu0 0
      %1964 = vmatpush1.bf16.msra.mxu0 %v1545
      %1965 = vmatprep.mubr.bf16.mxu0 %v849
      %1966 = vmatmul.mubr.bf16.gmra.mrb[0].mxu0 %v848
      %v1967 = vpop.f32.mrb[0].mxu0
      %v1968 = vadd.f32 %v1903, %v1967
      %v1969 = vpop.f32.mrb[0].mxu0
      %v1970 = vpop.f32.mrb[0].mxu0
      %v1971 = vadd.f32 %v1906, %v1970
      %v1972 = vpop.f32.mrb[0].mxu0
      %1973 = vmatprep.mubr.bf16.mxu0 %v865
      %1974 = vmatmul.mubr.bf16.gmra.mrb[0].mxu0 %v864
      %v1975 = vpop.f32.mrb[0].mxu0
      %v1976 = vadd.f32 %v1911, %v1975
      %v1977 = vpop.f32.mrb[0].mxu0
      %v1978 = vpop.f32.mrb[0].mxu0
      %v1979 = vadd.f32 %v1914, %v1978
      %v1980 = vpop.f32.mrb[0].mxu0
      %1981 = vmatprep.mubr.bf16.mxu0 %v881
      %1982 = vmatmul.mubr.bf16.gmra.mrb[0].mxu0 %v880
      %v1983 = vpop.f32.mrb[0].mxu0
      %v1984 = vadd.f32 %v1919, %v1983
      %v1985 = vpop.f32.mrb[0].mxu0
      %v1986 = vpop.f32.mrb[0].mxu0
      %v1987 = vadd.f32 %v1922, %v1986
      %v1988 = vpop.f32.mrb[0].mxu0
      %1989 = vmatprep.mubr.bf16.mxu0 %v897
      %1990 = vmatmul.mubr.bf16.gmra.mrb[0].mxu0 %v896
      %v1991 = vpop.f32.mrb[0].mxu0
      %v1992 = vadd.f32 %v1927, %v1991
      %v1993 = vpop.f32.mrb[0].mxu0
      %v1994 = vpop.f32.mrb[0].mxu0
      %v1995 = vadd.f32 %v1930, %v1994
      %v1996 = vpop.f32.mrb[0].mxu0
      %1997 = vdwg.mxu0
      %1998 = vmatprep.subr.bf16.mxu0 0
      %1999 = vmatpush1.bf16.msra.mxu0 %v1546
      %2000 = vmatprep.subr.bf16.mxu0 0
      %2001 = vmatpush1.bf16.msra.mxu0 %v1547
      %2002 = vmatprep.subr.bf16.mxu0 0
      %2003 = vmatpush1.bf16.msra.mxu0 %v1548
      %2004 = vmatprep.subr.bf16.mxu0 0
      %2005 = vmatpush1.bf16.msra.mxu0 %v1549
      %2006 = vmatprep.subr.bf16.mxu0 0
      %2007 = vmatpush1.bf16.msra.mxu0 %v1550
      %2008 = vmatprep.subr.bf16.mxu0 0
      %2009 = vmatpush1.bf16.msra.mxu0 %v1551
      %2010 = vmatprep.subr.bf16.mxu0 0
      %2011 = vmatpush1.bf16.msra.mxu0 %v1552
      %2012 = vmatprep.subr.bf16.mxu0 0
      %2013 = vmatpush1.bf16.msra.mxu0 %v1553
      %2014 = vmatprep.subr.bf16.mxu0 0
      %2015 = vmatpush1.bf16.msra.mxu0 %v1554
      %2016 = vmatprep.subr.bf16.mxu0 0
      %2017 = vmatpush1.bf16.msra.mxu0 %v1555
      %2018 = vmatprep.subr.bf16.mxu0 0
      %2019 = vmatpush1.bf16.msra.mxu0 %v1556
      %2020 = vmatprep.subr.bf16.mxu0 0
      %2021 = vmatpush1.bf16.msra.mxu0 %v1557
      %2022 = vmatprep.subr.bf16.mxu0 0
      %2023 = vmatpush1.bf16.msra.mxu0 %v1558
      %2024 = vmatprep.subr.bf16.mxu0 0
      %2025 = vmatpush1.bf16.msra.mxu0 %v1559
      %2026 = vmatprep.subr.bf16.mxu0 0
      %2027 = vmatpush1.bf16.msra.mxu0 %v1560
      %2028 = vmatprep.subr.bf16.mxu0 0
      %2029 = vmatpush1.bf16.msra.mxu0 %v1561
      %2030 = vmatprep.mubr.bf16.mxu0 %v851
      %2031 = vmatmul.mubr.bf16.gmra.mrb[0].mxu0 %v850
      %v2032 = vpop.f32.mrb[0].mxu0
      %v2033 = vadd.f32 %v1968, %v2032
      %v2034 = vpop.f32.mrb[0].mxu0
      %v2035 = vpop.f32.mrb[0].mxu0
      %v2036 = vadd.f32 %v1971, %v2035
      %v2037 = vpop.f32.mrb[0].mxu0
      %2038 = vmatprep.mubr.bf16.mxu0 %v867
      %2039 = vmatmul.mubr.bf16.gmra.mrb[0].mxu0 %v866
      %v2040 = vpop.f32.mrb[0].mxu0
      %v2041 = vadd.f32 %v1976, %v2040
      %v2042 = vpop.f32.mrb[0].mxu0
      %v2043 = vpop.f32.mrb[0].mxu0
      %v2044 = vadd.f32 %v1979, %v2043
      %v2045 = vpop.f32.mrb[0].mxu0
      %2046 = vmatprep.mubr.bf16.mxu0 %v883
      %2047 = vmatmul.mubr.bf16.gmra.mrb[0].mxu0 %v882
      %v2048 = vpop.f32.mrb[0].mxu0
      %v2049 = vadd.f32 %v1984, %v2048
      %v2050 = vpop.f32.mrb[0].mxu0
      %v2051 = vpop.f32.mrb[0].mxu0
      %v2052 = vadd.f32 %v1987, %v2051
      %v2053 = vpop.f32.mrb[0].mxu0
      %2054 = vmatprep.mubr.bf16.mxu0 %v899
      %2055 = vmatmul.mubr.bf16.gmra.mrb[0].mxu0 %v898
      %v2056 = vpop.f32.mrb[0].mxu0
      %v2057 = vadd.f32 %v1992, %v2056
      %v2058 = vpop.f32.mrb[0].mxu0
      %v2059 = vpop.f32.mrb[0].mxu0
      %v2060 = vadd.f32 %v1995, %v2059
      %v2061 = vpop.f32.mrb[0].mxu0
      %2062 = vdwg.mxu0
      %2063 = vmatprep.subr.bf16.mxu0 0
      %2064 = vmatpush1.bf16.msra.mxu0 %v1562
      %2065 = vmatprep.subr.bf16.mxu0 0
      %2066 = vmatpush1.bf16.msra.mxu0 %v1563
      %2067 = vmatprep.subr.bf16.mxu0 0
      %2068 = vmatpush1.bf16.msra.mxu0 %v1564
      %2069 = vmatprep.subr.bf16.mxu0 0
      %2070 = vmatpush1.bf16.msra.mxu0 %v1565
      %2071 = vmatprep.subr.bf16.mxu0 0
      %2072 = vmatpush1.bf16.msra.mxu0 %v1566
      %2073 = vmatprep.subr.bf16.mxu0 0
      %2074 = vmatpush1.bf16.msra.mxu0 %v1567
      %2075 = vmatprep.subr.bf16.mxu0 0
      %2076 = vmatpush1.bf16.msra.mxu0 %v1568
      %2077 = vmatprep.subr.bf16.mxu0 0
      %2078 = vmatpush1.bf16.msra.mxu0 %v1569
      %2079 = vmatprep.subr.bf16.mxu0 0
      %2080 = vmatpush1.bf16.msra.mxu0 %v1570
      %2081 = vmatprep.subr.bf16.mxu0 0
      %2082 = vmatpush1.bf16.msra.mxu0 %v1571
      %2083 = vmatprep.subr.bf16.mxu0 0
      %2084 = vmatpush1.bf16.msra.mxu0 %v1572
      %2085 = vmatprep.subr.bf16.mxu0 0
      %2086 = vmatpush1.bf16.msra.mxu0 %v1573
      %2087 = vmatprep.subr.bf16.mxu0 0
      %2088 = vmatpush1.bf16.msra.mxu0 %v1574
      %2089 = vmatprep.subr.bf16.mxu0 0
      %2090 = vmatpush1.bf16.msra.mxu0 %v1575
      %2091 = vmatprep.subr.bf16.mxu0 0
      %2092 = vmatpush1.bf16.msra.mxu0 %v1576
      %2093 = vmatprep.subr.bf16.mxu0 0
      %2094 = vmatpush1.bf16.msra.mxu0 %v1577
      %2095 = vmatprep.mubr.bf16.mxu0 %v853
      %2096 = vmatmul.mubr.bf16.gmra.mrb[0].mxu0 %v852
      %v2097 = vpop.f32.mrb[0].mxu0
      %v2098 = vadd.f32 %v2033, %v2097
      %v2099 = vpop.f32.mrb[0].mxu0
      %v2100 = vpop.f32.mrb[0].mxu0
      %v2101 = vadd.f32 %v2036, %v2100
      %v2102 = vpop.f32.mrb[0].mxu0
      %2103 = vmatprep.mubr.bf16.mxu0 %v869
      %2104 = vmatmul.mubr.bf16.gmra.mrb[0].mxu0 %v868
      %v2105 = vpop.f32.mrb[0].mxu0
      %v2106 = vadd.f32 %v2041, %v2105
      %v2107 = vpop.f32.mrb[0].mxu0
      %v2108 = vpop.f32.mrb[0].mxu0
      %v2109 = vadd.f32 %v2044, %v2108
      %v2110 = vpop.f32.mrb[0].mxu0
      %2111 = vmatprep.mubr.bf16.mxu0 %v885
      %2112 = vmatmul.mubr.bf16.gmra.mrb[0].mxu0 %v884
      %v2113 = vpop.f32.mrb[0].mxu0
      %v2114 = vadd.f32 %v2049, %v2113
      %v2115 = vpop.f32.mrb[0].mxu0
      %v2116 = vpop.f32.mrb[0].mxu0
      %v2117 = vadd.f32 %v2052, %v2116
      %v2118 = vpop.f32.mrb[0].mxu0
      %2119 = vmatprep.mubr.bf16.mxu0 %v901
      %2120 = vmatmul.mubr.bf16.gmra.mrb[0].mxu0 %v900
      %v2121 = vpop.f32.mrb[0].mxu0
      %v2122 = vadd.f32 %v2057, %v2121
      %v2123 = vpop.f32.mrb[0].mxu0
      %v2124 = vpop.f32.mrb[0].mxu0
      %v2125 = vadd.f32 %v2060, %v2124
      %v2126 = vpop.f32.mrb[0].mxu0
      %2127 = vdwg.mxu0
      %2128 = vmatprep.subr.bf16.mxu0 0
      %2129 = vmatpush1.bf16.msra.mxu0 %v1578
      %2130 = vmatprep.subr.bf16.mxu0 0
      %2131 = vmatpush1.bf16.msra.mxu0 %v1579
      %2132 = vmatprep.subr.bf16.mxu0 0
      %2133 = vmatpush1.bf16.msra.mxu0 %v1580
      %2134 = vmatprep.subr.bf16.mxu0 0
      %2135 = vmatpush1.bf16.msra.mxu0 %v1581
      %2136 = vmatprep.subr.bf16.mxu0 0
      %2137 = vmatpush1.bf16.msra.mxu0 %v1582
      %2138 = vmatprep.subr.bf16.mxu0 0
      %2139 = vmatpush1.bf16.msra.mxu0 %v1583
      %2140 = vmatprep.subr.bf16.mxu0 0
      %2141 = vmatpush1.bf16.msra.mxu0 %v1584
      %2142 = vmatprep.subr.bf16.mxu0 0
      %2143 = vmatpush1.bf16.msra.mxu0 %v1585
      %2144 = vmatprep.subr.bf16.mxu0 0
      %2145 = vmatpush1.bf16.msra.mxu0 %v1586
      %2146 = vmatprep.subr.bf16.mxu0 0
      %2147 = vmatpush1.bf16.msra.mxu0 %v1587
      %2148 = vmatprep.subr.bf16.mxu0 0
      %2149 = vmatpush1.bf16.msra.mxu0 %v1588
      %2150 = vmatprep.subr.bf16.mxu0 0
      %2151 = vmatpush1.bf16.msra.mxu0 %v1589
      %2152 = vmatprep.subr.bf16.mxu0 0
      %2153 = vmatpush1.bf16.msra.mxu0 %v1590
      %2154 = vmatprep.subr.bf16.mxu0 0
      %2155 = vmatpush1.bf16.msra.mxu0 %v1591
      %2156 = vmatprep.subr.bf16.mxu0 0
      %2157 = vmatpush1.bf16.msra.mxu0 %v1592
      %2158 = vmatprep.subr.bf16.mxu0 0
      %2159 = vmatpush1.bf16.msra.mxu0 %v1593
      %2160 = vmatprep.mubr.bf16.mxu0 %v855
      %2161 = vmatmul.mubr.bf16.gmra.mrb[0].mxu0 %v854
      %v2162 = vpop.f32.mrb[0].mxu0
      %v2163 = vadd.f32 %v2098, %v2162
      %v2164 = vpop.f32.mrb[0].mxu0
      %v2165 = vpop.f32.mrb[0].mxu0
      %v2166 = vadd.f32 %v2101, %v2165
      %v2167 = vpop.f32.mrb[0].mxu0
      %2168 = vmatprep.mubr.bf16.mxu0 %v871
      %2169 = vmatmul.mubr.bf16.gmra.mrb[0].mxu0 %v870
      %v2170 = vpop.f32.mrb[0].mxu0
      %v2171 = vadd.f32 %v2106, %v2170
      %v2172 = vpop.f32.mrb[0].mxu0
      %v2173 = vpop.f32.mrb[0].mxu0
      %v2174 = vadd.f32 %v2109, %v2173
      %v2175 = vpop.f32.mrb[0].mxu0
      %2176 = vmatprep.mubr.bf16.mxu0 %v887
      %2177 = vmatmul.mubr.bf16.gmra.mrb[0].mxu0 %v886
      %v2178 = vpop.f32.mrb[0].mxu0
      %v2179 = vadd.f32 %v2114, %v2178
      %v2180 = vpop.f32.mrb[0].mxu0
      %v2181 = vpop.f32.mrb[0].mxu0
      %v2182 = vadd.f32 %v2117, %v2181
      %v2183 = vpop.f32.mrb[0].mxu0
      %2184 = vmatprep.mubr.bf16.mxu0 %v903
      %2185 = vmatmul.mubr.bf16.gmra.mrb[0].mxu0 %v902
      %v2186 = vpop.f32.mrb[0].mxu0
      %v2187 = vadd.f32 %v2122, %v2186
      %v2188 = vpop.f32.mrb[0].mxu0
      %v2189 = vpop.f32.mrb[0].mxu0
      %v2190 = vadd.f32 %v2125, %v2189
      %v2191 = vpop.f32.mrb[0].mxu0
      %2192 = vdwg.mxu0
      %2193 = vmatprep.subr.bf16.mxu0 0
      %2194 = vmatpush1.bf16.msra.mxu0 %v1594
      %2195 = vmatprep.subr.bf16.mxu0 0
      %2196 = vmatpush1.bf16.msra.mxu0 %v1595
      %2197 = vmatprep.subr.bf16.mxu0 0
      %2198 = vmatpush1.bf16.msra.mxu0 %v1596
      %2199 = vmatprep.subr.bf16.mxu0 0
      %2200 = vmatpush1.bf16.msra.mxu0 %v1597
      %2201 = vmatprep.subr.bf16.mxu0 0
      %2202 = vmatpush1.bf16.msra.mxu0 %v1598
      %2203 = vmatprep.subr.bf16.mxu0 0
      %2204 = vmatpush1.bf16.msra.mxu0 %v1599
      %2205 = vmatprep.subr.bf16.mxu0 0
      %2206 = vmatpush1.bf16.msra.mxu0 %v1600
      %2207 = vmatprep.subr.bf16.mxu0 0
      %2208 = vmatpush1.bf16.msra.mxu0 %v1601
      %2209 = vmatprep.subr.bf16.mxu0 0
      %2210 = vmatpush1.bf16.msra.mxu0 %v1602
      %2211 = vmatprep.subr.bf16.mxu0 0
      %2212 = vmatpush1.bf16.msra.mxu0 %v1603
      %2213 = vmatprep.subr.bf16.mxu0 0
      %2214 = vmatpush1.bf16.msra.mxu0 %v1604
      %2215 = vmatprep.subr.bf16.mxu0 0
      %2216 = vmatpush1.bf16.msra.mxu0 %v1605
      %2217 = vmatprep.subr.bf16.mxu0 0
      %2218 = vmatpush1.bf16.msra.mxu0 %v1606
      %2219 = vmatprep.subr.bf16.mxu0 0
      %2220 = vmatpush1.bf16.msra.mxu0 %v1607
      %2221 = vmatprep.subr.bf16.mxu0 0
      %2222 = vmatpush1.bf16.msra.mxu0 %v1608
      %2223 = vmatprep.subr.bf16.mxu0 0
      %2224 = vmatpush1.bf16.msra.mxu0 %v1609
      %2225 = vmatprep.mubr.bf16.mxu0 %v857
      %2226 = vmatmul.mubr.bf16.gmra.mrb[0].mxu0 %v856
      %v2227 = vpop.f32.mrb[0].mxu0
      %v2228 = vadd.f32 %v2163, %v2227
      %v2229 = vpop.f32.mrb[0].mxu0
      %v2230 = vpop.f32.mrb[0].mxu0
      %v2231 = vadd.f32 %v2166, %v2230
      %v2232 = vpop.f32.mrb[0].mxu0
      %2233 = vmatprep.mubr.bf16.mxu0 %v873
      %2234 = vmatmul.mubr.bf16.gmra.mrb[0].mxu0 %v872
      %v2235 = vpop.f32.mrb[0].mxu0
      %v2236 = vadd.f32 %v2171, %v2235
      %v2237 = vpop.f32.mrb[0].mxu0
      %v2238 = vpop.f32.mrb[0].mxu0
      %v2239 = vadd.f32 %v2174, %v2238
      %v2240 = vpop.f32.mrb[0].mxu0
      %2241 = vmatprep.mubr.bf16.mxu0 %v889
      %2242 = vmatmul.mubr.bf16.gmra.mrb[0].mxu0 %v888
      %v2243 = vpop.f32.mrb[0].mxu0
      %v2244 = vadd.f32 %v2179, %v2243
      %v2245 = vpop.f32.mrb[0].mxu0
      %v2246 = vpop.f32.mrb[0].mxu0
      %v2247 = vadd.f32 %v2182, %v2246
      %v2248 = vpop.f32.mrb[0].mxu0
      %2249 = vmatprep.mubr.bf16.mxu0 %v905
      %2250 = vmatmul.mubr.bf16.gmra.mrb[0].mxu0 %v904
      %v2251 = vpop.f32.mrb[0].mxu0
      %v2252 = vadd.f32 %v2187, %v2251
      %v2253 = vpop.f32.mrb[0].mxu0
      %v2254 = vpop.f32.mrb[0].mxu0
      %v2255 = vadd.f32 %v2190, %v2254
      %v2256 = vpop.f32.mrb[0].mxu0
      %2257 = vdwg.mxu0
      %p2258 = scmp.eq.s32.totalorder %s22, 0
      // Predicated region
      $region33: #{a_call__.10} parent=31 // pred_check
        %p2259 = pneg %p2258
      $region34: #{a_call__.10} parent=31 // pred_check_branch
        %2261 = sbr.rel (%p2259) target = $region36
      $region35: #{a_call__.10} parent=31 // pred_region
        %vm2262 = vcmask 7168
        %2263 = vst.msk [vmem:[%s275] sm:$0xff] %vm2262, 0.0
        %2264 = vst.msk [vmem:[%s275 + $0x8] sm:$0xff] %vm2262, 0.0
        %2265 = vst.msk [vmem:[%s275 + $0x10] sm:$0xff] %vm2262, 0.0
        %2266 = vst.msk [vmem:[%s275 + $0x18] sm:$0xff] %vm2262, 0.0
        %2267 = vst.msk [vmem:[%s275 + $0x20] sm:$0xff] %vm2262, 0.0
        %2268 = vst.msk [vmem:[%s275 + $0x28] sm:$0xff] %vm2262, 0.0
        %2269 = vst.msk [vmem:[%s275 + $0x30] sm:$0xff] %vm2262, 0.0
        %2270 = vst.msk [vmem:[%s275 + $0x38] sm:$0xff] %vm2262, 0.0
        %2271 = vst.msk [vmem:[%s280] sm:$0xff] %vm2262, 0.0
        %2272 = vst.msk [vmem:[%s280 + $0x8] sm:$0xff] %vm2262, 0.0
        %2273 = vst.msk [vmem:[%s280 + $0x10] sm:$0xff] %vm2262, 0.0
        %2274 = vst.msk [vmem:[%s280 + $0x18] sm:$0xff] %vm2262, 0.0
        %2275 = vst.msk [vmem:[%s280 + $0x20] sm:$0xff] %vm2262, 0.0
        %2276 = vst.msk [vmem:[%s280 + $0x28] sm:$0xff] %vm2262, 0.0
        %2277 = vst.msk [vmem:[%s280 + $0x30] sm:$0xff] %vm2262, 0.0
        %2278 = vst.msk [vmem:[%s280 + $0x38] sm:$0xff] %vm2262, 0.0
      $region36: #{a_call__.10} parent=31 // pred_fallthru
        _
      %v2279 = vld [vmem:[%s275] sm:$0xff]
      %v2280 = vld [vmem:[%s275 + $0x8] sm:$0xff]
      %v2281 = vld [vmem:[%s275 + $0x10] sm:$0xff]
      %v2282 = vld [vmem:[%s275 + $0x18] sm:$0xff]
      %v2283 = vld [vmem:[%s275 + $0x20] sm:$0xff]
      %v2284 = vld [vmem:[%s275 + $0x28] sm:$0xff]
      %v2285 = vld [vmem:[%s275 + $0x30] sm:$0xff]
      %v2286 = vld [vmem:[%s275 + $0x38] sm:$0xff]
      %2287 = vadd.xlane.f32.xlu0 %v2228
      %v2288 = vpop.xlane.xlu0 %2287
      %2289 = vadd.xlane.f32.xlu0 %v2231
      %v2290 = vpop.xlane.xlu0 %2289
      %2291 = vadd.xlane.f32.xlu0 %v2236
      %v2292 = vpop.xlane.xlu0 %2291
      %2293 = vadd.xlane.f32.xlu0 %v2239
      %v2294 = vpop.xlane.xlu0 %2293
      %2295 = vadd.xlane.f32.xlu0 %v2244
      %v2296 = vpop.xlane.xlu0 %2295
      %2297 = vadd.xlane.f32.xlu0 %v2247
      %v2298 = vpop.xlane.xlu0 %2297
      %2299 = vadd.xlane.f32.xlu0 %v2252
      %v2300 = vpop.xlane.xlu0 %2299
      %2301 = vadd.xlane.f32.xlu0 %v2255
      %v2302 = vpop.xlane.xlu0 %2301
      %v2303 = vadd.f32 %v2279, %v2288
      %v2304 = vadd.f32 %v2280, %v2290
      %v2305 = vadd.f32 %v2281, %v2292
      %v2306 = vadd.f32 %v2282, %v2294
      %v2307 = vadd.f32 %v2283, %v2296
      %v2308 = vadd.f32 %v2284, %v2298
      %v2309 = vadd.f32 %v2285, %v2300
      %v2310 = vadd.f32 %v2286, %v2302
      %vm2311 = vcmask 7168
      %2312 = vst.msk [vmem:[%s275] sm:$0xff] %vm2311, %v2303
      %2313 = vst.msk [vmem:[%s275 + $0x8] sm:$0xff] %vm2311, %v2304
      %2314 = vst.msk [vmem:[%s275 + $0x10] sm:$0xff] %vm2311, %v2305
      %2315 = vst.msk [vmem:[%s275 + $0x18] sm:$0xff] %vm2311, %v2306
      %2316 = vst.msk [vmem:[%s275 + $0x20] sm:$0xff] %vm2311, %v2307
      %2317 = vst.msk [vmem:[%s275 + $0x28] sm:$0xff] %vm2311, %v2308
      %2318 = vst.msk [vmem:[%s275 + $0x30] sm:$0xff] %vm2311, %v2309
      %2319 = vst.msk [vmem:[%s275 + $0x38] sm:$0xff] %vm2311, %v2310
      %v2320 = vld [vmem:[%s280] sm:$0xff]
      %v2321 = vld [vmem:[%s280 + $0x8] sm:$0xff]
      %v2322 = vld [vmem:[%s280 + $0x10] sm:$0xff]
      %v2323 = vld [vmem:[%s280 + $0x18] sm:$0xff]
      %v2324 = vld [vmem:[%s280 + $0x20] sm:$0xff]
      %v2325 = vld [vmem:[%s280 + $0x28] sm:$0xff]
      %v2326 = vld [vmem:[%s280 + $0x30] sm:$0xff]
      %v2327 = vld [vmem:[%s280 + $0x38] sm:$0xff]
      %v2328 = vmul.f32 %v2228, %v2228
      %v2329 = vmul.f32 %v2231, %v2231
      %v2330 = vmul.f32 %v2236, %v2236
      %v2331 = vmul.f32 %v2239, %v2239
      %v2332 = vmul.f32 %v2244, %v2244
      %v2333 = vmul.f32 %v2247, %v2247
      %v2334 = vmul.f32 %v2252, %v2252
      %v2335 = vmul.f32 %v2255, %v2255
      %2336 = vadd.xlane.f32.xlu0 %v2328
      %v2337 = vpop.xlane.xlu0 %2336
      %2338 = vadd.xlane.f32.xlu0 %v2329
      %v2339 = vpop.xlane.xlu0 %2338
      %2340 = vadd.xlane.f32.xlu0 %v2330
      %v2341 = vpop.xlane.xlu0 %2340
      %2342 = vadd.xlane.f32.xlu0 %v2331
      %v2343 = vpop.xlane.xlu0 %2342
      %2344 = vadd.xlane.f32.xlu0 %v2332
      %v2345 = vpop.xlane.xlu0 %2344
      %2346 = vadd.xlane.f32.xlu0 %v2333
      %v2347 = vpop.xlane.xlu0 %2346
      %2348 = vadd.xlane.f32.xlu0 %v2334
      %v2349 = vpop.xlane.xlu0 %2348
      %2350 = vadd.xlane.f32.xlu0 %v2335
      %v2351 = vpop.xlane.xlu0 %2350
      %v2352 = vadd.f32 %v2320, %v2337
      %v2353 = vadd.f32 %v2321, %v2339
      %v2354 = vadd.f32 %v2322, %v2341
      %v2355 = vadd.f32 %v2323, %v2343
      %v2356 = vadd.f32 %v2324, %v2345
      %v2357 = vadd.f32 %v2325, %v2347
      %v2358 = vadd.f32 %v2326, %v2349
      %v2359 = vadd.f32 %v2327, %v2351
      %2360 = vst.msk [vmem:[%s280] sm:$0xff] %vm2311, %v2352
      %2361 = vst.msk [vmem:[%s280 + $0x8] sm:$0xff] %vm2311, %v2353
      %2362 = vst.msk [vmem:[%s280 + $0x10] sm:$0xff] %vm2311, %v2354
      %2363 = vst.msk [vmem:[%s280 + $0x18] sm:$0xff] %vm2311, %v2355
      %2364 = vst.msk [vmem:[%s280 + $0x20] sm:$0xff] %vm2311, %v2356
      %2365 = vst.msk [vmem:[%s280 + $0x28] sm:$0xff] %vm2311, %v2357
      %2366 = vst.msk [vmem:[%s280 + $0x30] sm:$0xff] %vm2311, %v2358
      %2367 = vst.msk [vmem:[%s280 + $0x38] sm:$0xff] %vm2311, %v2359
      %v2368 = vpack.c.bf16 %v2231, %v2228
      %v2369 = vpack.c.bf16 %v2239, %v2236
      %v2370 = vpack.c.bf16 %v2247, %v2244
      %v2371 = vpack.c.bf16 %v2255, %v2252
      %v2376 = vunpack.c.l.b16 %v2368
      %v2377 = vunpack.c.h.b16 %v2368
      %v2378 = vunpack.c.l.b16 %v2369
      %v2379 = vunpack.c.h.b16 %v2369
      %v2380 = vunpack.c.l.b16 %v2370
      %v2381 = vunpack.c.h.b16 %v2370
      %v2382 = vunpack.c.l.b16 %v2371
      %v2383 = vunpack.c.h.b16 %v2371
      %v2384 = vpack.c.b16 %v2376, %v2376
      %v2385 = vpack.c.b16 %v2377, %v2377
      %v2386 = vpack.c.b16 %v2378, %v2378
      %v2387 = vpack.c.b16 %v2379, %v2379
      %v2388 = vpack.c.b16 %v2380, %v2380
      %v2389 = vpack.c.b16 %v2381, %v2381
      %v2390 = vpack.c.b16 %v2382, %v2382
      %v2391 = vpack.c.b16 %v2383, %v2383
      %2400 = vst [vmem:[%s270] sm:$0xf] %v2384
      %2401 = vst [vmem:[%s270 + $0x4] sm:$0xf] %v2385
      %2402 = vst [vmem:[%s270 + $0x8] sm:$0xf] %v2386
      %2403 = vst [vmem:[%s270 + $0xc] sm:$0xf] %v2387
      %2404 = vst [vmem:[%s270 + $0x10] sm:$0xf] %v2388
      %2405 = vst [vmem:[%s270 + $0x14] sm:$0xf] %v2389
      %2406 = vst [vmem:[%s270 + $0x18] sm:$0xf] %v2390
      %2407 = vst [vmem:[%s270 + $0x1c] sm:$0xf] %v2391
      %p2408 = scmp.lt.s32.totalorder %s21, 1
      %s2409 = scalar_select %p2408, %s21, 1
      %p2410 = scmp.lt.s32.totalorder %s22, 0
      %s2411 = scalar_select %p2410, %s22, 0
      %s2412 = smul.addr %s2409, 8
      %s2413 = sadd.s32 %s2411, %s2412
      %s2414 = smul.addr %s2413, 4
      %s2415 = scalar_lea.vmem %s3, %s2414
      %p2416 = scmp.lt.s32.totalorder %s21, 1
      %s2417 = scalar_select %p2416, %s21, 1
      %s2418 = smul.addr %s2417, 8
      %s2419 = smul.addr %s2418, 8
      %s2420 = scalar_lea.vmem %s4, %s2419
      %p2421 = scmp.lt.s32.totalorder %s21, 1
      %s2422 = scalar_select %p2421, %s21, 1
      %s2423 = smul.addr %s2422, 8
      %s2424 = smul.addr %s2423, 8
      %s2425 = scalar_lea.vmem %s5, %s2424
      // Predicated region
      $region37: #{a_call__.10} parent=31 // pred_check
        %p2426 = pneg %p119
      $region38: #{a_call__.10} parent=31 // pred_check_branch
        %2428 = sbr.rel (%p2426) target = $region40
      $region39: #{a_call__.10} parent=31 // pred_region
        _
      $region40: #{a_call__.10} parent=31 // pred_fallthru
        _
      // Predicated region
      $region41: #{a_call__.10} parent=31 // pred_check
        %p2429 = pneg %p145
      $region42: #{a_call__.10} parent=31 // pred_check_branch
        %2431 = sbr.rel (%p2429) target = $region44
      $region43: #{a_call__.10} parent=31 // pred_region
        _
      $region44: #{a_call__.10} parent=31 // pred_fallthru
        _
      // Predicated region
      $region45: #{a_call__.10} parent=31 // pred_check
        %p2432 = pneg %p171
      $region46: #{a_call__.10} parent=31 // pred_check_branch
        %2434 = sbr.rel (%p2432) target = $region48
      $region47: #{a_call__.10} parent=31 // pred_region
        _
      $region48: #{a_call__.10} parent=31 // pred_fallthru
        _
    $region32: #{a_call__.10} parent=5 // pred_fallthru
      _
    %p2435 = scmp.le.s32.totalorder 2, %s12
    // Predicated region
    $region49: #{a_call__.10} parent=5 // pred_check
      %p2436 = pneg %p2435
    $region50: #{a_call__.10} parent=5 // pred_check_branch
      %2438 = sbr.rel (%p2436) target = $region52
    $region51: #{a_call__.10} parent=5 // pred_region
      %s2439 = ssub.s32 %s12, 2
      // Predicated region
      $region53: #{a_call__.10} parent=51 // pred_check
        %p2440 = pneg %p125
      $region54: #{a_call__.10} parent=51 // pred_check_branch
        %2442 = sbr.rel (%p2440) target = $region56
      $region55: #{a_call__.10} parent=51 // pred_region
        %p2443 = scmp.lt.s32.totalorder %s23, 1
        %s2444 = scalar_select %p2443, %s23, 1
        %p2445 = scmp.lt.s32.totalorder %s24, 0
        %s2446 = scalar_select %p2445, %s24, 0
        %s2447 = smul.addr %s2444, 8
        %s2448 = sadd.s32 %s2446, %s2447
        %s2449 = smul.addr %s2448, 4
        %s2450 = scalar_lea.vmem %s3, %s2449
      $region56: #{a_call__.10} parent=51 // pred_fallthru
        _
      // Predicated region
      $region57: #{a_call__.10} parent=51 // pred_check
        %p2451 = pneg %p151
      $region58: #{a_call__.10} parent=51 // pred_check_branch
        %2453 = sbr.rel (%p2451) target = $region60
      $region59: #{a_call__.10} parent=51 // pred_region
        %p2454 = scmp.lt.s32.totalorder %s23, 1
        %s2455 = scalar_select %p2454, %s23, 1
        %s2456 = smul.addr %s2455, 8
        %s2457 = smul.addr %s2456, 8
        %s2458 = scalar_lea.vmem %s4, %s2457
      $region60: #{a_call__.10} parent=51 // pred_fallthru
        _
      // Predicated region
      $region61: #{a_call__.10} parent=51 // pred_check
        %p2459 = pneg %p177
      $region62: #{a_call__.10} parent=51 // pred_check_branch
        %2461 = sbr.rel (%p2459) target = $region64
      $region63: #{a_call__.10} parent=51 // pred_region
        %p2462 = scmp.lt.s32.totalorder %s23, 1
        %s2463 = scalar_select %p2462, %s23, 1
        %s2464 = smul.addr %s2463, 8
        %s2465 = smul.addr %s2464, 8
        %s2466 = scalar_lea.vmem %s5, %s2465
      $region64: #{a_call__.10} parent=51 // pred_fallthru
        _
    $region52: #{a_call__.10} parent=5 // pred_fallthru
      _
  $region6: #{a_call__.10} parent=0 // loop_footer
    %s16 = sadd.s32 1, %s12
  $region7: #{a_call__.10} parent=0 // loop_footer_branch
    %11 = sbr.rel target = $region3
  $region8: #{a_call__.10} parent=0 // loop_exit
    _

// kernel: a_call__.12
$region0: #{a_call__.12}
  #allocation0 [shape = 'u32[]', space=smem, size = 0x4, offset = 0x4, fixed_abs, tag = 'smem constant byte address 0x4 - core index']
  #allocation1 [shape = 'u32[144,128]{1,0:T(1,128)}', space=vmem, size = 0x12000, scoped, tag = 'internal scratch']
  %s0 = inlined_call_operand.vmem [shape: bf16[2,4096,128], index: 0, kind: input, shape index: {}]
  %s1 = inlined_call_operand.vmem [shape: bf16[128,4096], index: 1, kind: input, shape index: {}]
  %s2 = inlined_call_operand.vmem [shape: f32[128,1], index: 2, kind: input, shape index: {}]
  %s3 = inlined_call_operand.vmem [shape: bf16[2,128,128], index: 3, kind: output, shape index: {0}]
  %s4 = inlined_call_operand.vmem [shape: f32[2,128,1], index: 4, kind: output, shape index: {1}]
  %s5 = inlined_call_operand.vmem [shape: f32[2,128,1], index: 5, kind: output, shape index: {2}]
  %6 = xla_tuple %s3, %s4, %s5
  %s7 = sld [smem:[#allocation0]]
  $region65: #{a_call__.12} parent=0
    _
  %s9 = ssub.s32 1, %s7
  %s10 = scalar_select 0, %s9, %s7
  loop: start=0, step=1, limit=4
  $region2: #{a_call__.12} parent=0 // loop_pre_header
    _
  $region3: #{a_call__.12} parent=0 // loop_header
    %s12 = sphi 0, %s16
    %p13 = scmp.ge.s32.totalorder %s12, 4
    %s19 = sphi 0, %s31
    %s20 = sphi 0, %s27
    %s21 = sphi 0, %s19
    %s22 = sphi 0, %s20
    %s23 = sphi 0, %s21
    %s24 = sphi 0, %s22
    %s36 = sphi 0, %s38
    %s39 = sphi 0, %s36
    %s40 = sphi 0, %s39
    %s56 = sphi 0, %s40
    %s60 = sphi 0, %s60
    %s62 = sphi 0, %s60
    %s63 = sphi 0, %s62
    %s77 = sphi 0, %s63
    %s81 = sphi 0, %s81
    %s83 = sphi 0, %s81
    %s84 = sphi 0, %s83
    %s98 = sphi 0, %s84
    %s106 = sphi 0, %s108
    %s109 = sphi 0, %s106
    %s110 = sphi 0, %s109
    %s126 = sphi 0, %s110
    %s132 = sphi 0, %s134
    %s135 = sphi 0, %s132
    %s136 = sphi 0, %s135
    %s152 = sphi 0, %s136
    %s158 = sphi 0, %s160
    %s161 = sphi 0, %s158
    %s162 = sphi 0, %s161
    %s178 = sphi 0, %s162
  $region4: #{a_call__.12} parent=0 // loop_header_branch
    %15 = sbr.rel (%p13) target = $region8
  $region5: #{a_call__.12} parent=0 // loop_body
    %s17 = ssub.s32 %s12, 1
    %s18 = ssub.s32 %s12, 2
    %s25 = sadd.s32 1, %s20
    %p26 = scmp.ge.s32.totalorder %s25, 1
    %s27 = scalar_select %p26, 0, %s25
    %s28 = sadd.s32 1, %s19
    %s29 = scalar_select %p26, %s28, %s19
    %p30 = scmp.ge.s32.totalorder %s29, 2
    %s31 = scalar_select %p30, 0, %s29
    %s32 = ssub.s32 %s19, %s31
    %s33 = ssub.s32 %s20, %s27
    %s34 = sor.u32 %s32, %s33
    %p35 = scmp.eq.s32.totalorder %s34, 0
    %s37 = sadd.s32 %s36, 1
    %s38 = scalar_select %p35, %s36, %s37
    %p41 = pneg %p35
    %p42 = scmp.eq.s32.totalorder %s12, 1
    %p43 = por %p41, %p42
    %p44 = scmp.ne.s32.totalorder %s36, %s39
    %p45 = scmp.eq.s32.totalorder %s12, 0
    %p46 = por %p44, %p45
    %p47 = scmp.ne.s32.totalorder %s36, %s39
    %p48 = scmp.eq.s32.totalorder %s17, 1
    %p49 = por %p47, %p48
    %p50 = scmp.ne.s32.totalorder %s39, %s40
    %p51 = scmp.eq.s32.totalorder %s17, 0
    %p52 = por %p50, %p51
    %p53 = scmp.ne.s32.totalorder %s39, %s40
    %p54 = scmp.eq.s32.totalorder %s18, 1
    %p55 = por %p53, %p54
    %p57 = scmp.ne.s32.totalorder %s40, %s56
    %p58 = scmp.eq.s32.totalorder %s18, 0
    %p59 = por %p57, %p58
    %s61 = sadd.s32 %s60, 1
    %p64 = scmp.eq.s32.totalorder %s12, 1
    %p65 = scmp.ne.s32.totalorder %s60, %s62
    %p66 = scmp.eq.s32.totalorder %s12, 0
    %p67 = por %p65, %p66
    %p68 = scmp.ne.s32.totalorder %s60, %s62
    %p69 = scmp.eq.s32.totalorder %s17, 1
    %p70 = por %p68, %p69
    %p71 = scmp.ne.s32.totalorder %s62, %s63
    %p72 = scmp.eq.s32.totalorder %s17, 0
    %p73 = por %p71, %p72
    %p74 = scmp.ne.s32.totalorder %s62, %s63
    %p75 = scmp.eq.s32.totalorder %s18, 1
    %p76 = por %p74, %p75
    %p78 = scmp.ne.s32.totalorder %s63, %s77
    %p79 = scmp.eq.s32.totalorder %s18, 0
    %p80 = por %p78, %p79
    %s82 = sadd.s32 %s81, 1
    %p85 = scmp.eq.s32.totalorder %s12, 1
    %p86 = scmp.ne.s32.totalorder %s81, %s83
    %p87 = scmp.eq.s32.totalorder %s12, 0
    %p88 = por %p86, %p87
    %p89 = scmp.ne.s32.totalorder %s81, %s83
    %p90 = scmp.eq.s32.totalorder %s17, 1
    %p91 = por %p89, %p90
    %p92 = scmp.ne.s32.totalorder %s83, %s84
    %p93 = scmp.eq.s32.totalorder %s17, 0
    %p94 = por %p92, %p93
    %p95 = scmp.ne.s32.totalorder %s83, %s84
    %p96 = scmp.eq.s32.totalorder %s18, 1
    %p97 = por %p95, %p96
    %p99 = scmp.ne.s32.totalorder %s84, %s98
    %p100 = scmp.eq.s32.totalorder %s18, 0
    %p101 = por %p99, %p100
    %s102 = ssub.s32 %s19, %s31
    %s103 = ssub.s32 %s20, %s27
    %s104 = sor.u32 %s102, %s103
    %p105 = scmp.eq.s32.totalorder %s104, 0
    %s107 = sadd.s32 %s106, 1
    %s108 = scalar_select %p105, %s106, %s107
    %p111 = pneg %p105
    %p112 = scmp.eq.s32.totalorder %s12, 1
    %p113 = por %p111, %p112
    %p114 = scmp.ne.s32.totalorder %s106, %s109
    %p115 = scmp.eq.s32.totalorder %s12, 0
    %p116 = por %p114, %p115
    %p117 = scmp.ne.s32.totalorder %s106, %s109
    %p118 = scmp.eq.s32.totalorder %s17, 1
    %p119 = por %p117, %p118
    %p120 = scmp.ne.s32.totalorder %s109, %s110
    %p121 = scmp.eq.s32.totalorder %s17, 0
    %p122 = por %p120, %p121
    %p123 = scmp.ne.s32.totalorder %s109, %s110
    %p124 = scmp.eq.s32.totalorder %s18, 1
    %p125 = por %p123, %p124
    %p127 = scmp.ne.s32.totalorder %s110, %s126
    %p128 = scmp.eq.s32.totalorder %s18, 0
    %p129 = por %p127, %p128
    %s130 = ssub.s32 %s19, %s31
    %p131 = scmp.eq.s32.totalorder %s130, 0
    %s133 = sadd.s32 %s132, 1
    %s134 = scalar_select %p131, %s132, %s133
    %p137 = pneg %p131
    %p138 = scmp.eq.s32.totalorder %s12, 1
    %p139 = por %p137, %p138
    %p140 = scmp.ne.s32.totalorder %s132, %s135
    %p141 = scmp.eq.s32.totalorder %s12, 0
    %p142 = por %p140, %p141
    %p143 = scmp.ne.s32.totalorder %s132, %s135
    %p144 = scmp.eq.s32.totalorder %s17, 1
    %p145 = por %p143, %p144
    %p146 = scmp.ne.s32.totalorder %s135, %s136
    %p147 = scmp.eq.s32.totalorder %s17, 0
    %p148 = por %p146, %p147
    %p149 = scmp.ne.s32.totalorder %s135, %s136
    %p150 = scmp.eq.s32.totalorder %s18, 1
    %p151 = por %p149, %p150
    %p153 = scmp.ne.s32.totalorder %s136, %s152
    %p154 = scmp.eq.s32.totalorder %s18, 0
    %p155 = por %p153, %p154
    %s156 = ssub.s32 %s19, %s31
    %p157 = scmp.eq.s32.totalorder %s156, 0
    %s159 = sadd.s32 %s158, 1
    %s160 = scalar_select %p157, %s158, %s159
    %p163 = pneg %p157
    %p164 = scmp.eq.s32.totalorder %s12, 1
    %p165 = por %p163, %p164
    %p166 = scmp.ne.s32.totalorder %s158, %s161
    %p167 = scmp.eq.s32.totalorder %s12, 0
    %p168 = por %p166, %p167
    %p169 = scmp.ne.s32.totalorder %s158, %s161
    %p170 = scmp.eq.s32.totalorder %s17, 1
    %p171 = por %p169, %p170
    %p172 = scmp.ne.s32.totalorder %s161, %s162
    %p173 = scmp.eq.s32.totalorder %s17, 0
    %p174 = por %p172, %p173
    %p175 = scmp.ne.s32.totalorder %s161, %s162
    %p176 = scmp.eq.s32.totalorder %s18, 1
    %p177 = por %p175, %p176
    %p179 = scmp.ne.s32.totalorder %s162, %s178
    %p180 = scmp.eq.s32.totalorder %s18, 0
    %p181 = por %p179, %p180
    %p182 = scmp.le.s32.totalorder 1, %s12
    %p183 = scmp.lt.s32.totalorder %s12, 3
    %p184 = pnand %p182, %p183
    %p185 = pneg %p184
    // Predicated region
    $region9: #{a_call__.12} parent=5 // pred_check
      _
    $region10: #{a_call__.12} parent=5 // pred_check_branch
      %187 = sbr.rel (%p184) target = $region12
    $region11: #{a_call__.12} parent=5 // pred_region
      %s188 = ssub.s32 %s12, 1
      // Predicated region
      $region13: #{a_call__.12} parent=11 // pred_check
        %p189 = pneg %p73
      $region14: #{a_call__.12} parent=11 // pred_check_branch
        %191 = sbr.rel (%p189) target = $region16
      $region15: #{a_call__.12} parent=11 // pred_region
        _
      $region16: #{a_call__.12} parent=11 // pred_fallthru
        _
      // Predicated region
      $region17: #{a_call__.12} parent=11 // pred_check
        %p192 = pneg %p94
      $region18: #{a_call__.12} parent=11 // pred_check_branch
        %194 = sbr.rel (%p192) target = $region20
      $region19: #{a_call__.12} parent=11 // pred_region
        _
      $region20: #{a_call__.12} parent=11 // pred_fallthru
        _
    $region12: #{a_call__.12} parent=5 // pred_fallthru
      _
    %p195 = scmp.lt.s32.totalorder %s12, 2
    // Predicated region
    $region21: #{a_call__.12} parent=5 // pred_check
      %p196 = pneg %p195
    $region22: #{a_call__.12} parent=5 // pred_check_branch
      %198 = sbr.rel (%p196) target = $region24
    $region23: #{a_call__.12} parent=5 // pred_region
      // Predicated region
      $region25: #{a_call__.12} parent=23 // pred_check
        %p199 = pneg %p46
      $region26: #{a_call__.12} parent=23 // pred_check_branch
        %201 = sbr.rel (%p199) target = $region28
      $region27: #{a_call__.12} parent=23 // pred_region
        %p202 = scmp.lt.s32.totalorder %s19, 1
        %s203 = scalar_select %p202, %s19, 1
        %p204 = scmp.lt.s32.totalorder %s20, 0
        %s205 = scalar_select %p204, %s20, 0
        %s206 = smul.addr %s203, 512
        %s207 = sadd.s32 %s205, %s206
        %s208 = smul.addr %s207, 4
        %s209 = scalar_lea.vmem %s0, %s208
      $region28: #{a_call__.12} parent=23 // pred_fallthru
        _
    $region24: #{a_call__.12} parent=5 // pred_fallthru
      _
    %p210 = scmp.le.s32.totalorder 1, %s12
    %p211 = scmp.lt.s32.totalorder %s12, 3
    %p212 = pnand %p210, %p211
    %p213 = pneg %p212
    // Predicated region
    $region29: #{a_call__.12} parent=5 // pred_check
      _
    $region30: #{a_call__.12} parent=5 // pred_check_branch
      %215 = sbr.rel (%p212) target = $region32
    $region31: #{a_call__.12} parent=5 // pred_region
      %s216 = ssub.s32 %s12, 1
      %p217 = scmp.lt.s32.totalorder %s21, 1
      %s218 = scalar_select %p217, %s21, 1
      %p219 = scmp.lt.s32.totalorder %s22, 0
      %s220 = scalar_select %p219, %s22, 0
      %s221 = smul.addr %s218, 512
      %s222 = sadd.s32 %s220, %s221
      %s223 = smul.addr %s222, 4
      %s224 = scalar_lea.vmem %s0, %s223
      %p225 = pneg %p52
      %p226 = pneg %p49
      %p227 = pneg %p73
      %p228 = pneg %p70
      %p229 = pneg %p94
      %p230 = pneg %p91
      %p231 = pneg %p122
      %p232 = pneg %p119
      %p233 = scmp.lt.s32.totalorder %s21, 1
      %s234 = scalar_select %p233, %s21, 1
      %p235 = scmp.lt.s32.totalorder %s22, 0
      %s236 = scalar_select %p235, %s22, 0
      %s237 = smul.addr %s234, 16
      %s238 = sadd.s32 %s236, %s237
      %s239 = smul.addr %s238, 4
      %s240 = scalar_lea.vmem %s3, %s239
      %p241 = pneg %p148
      %p242 = pneg %p145
      %p243 = scmp.lt.s32.totalorder %s21, 1
      %s244 = scalar_select %p243, %s21, 1
      %s245 = smul.addr %s244, 16
      %s246 = smul.addr %s245, 8
      %s247 = scalar_lea.vmem %s4, %s246
      %p248 = pneg %p174
      %p249 = pneg %p171
      %p250 = scmp.lt.s32.totalorder %s21, 1
      %s251 = scalar_select %p250, %s21, 1
      %s252 = smul.addr %s251, 16
      %s253 = smul.addr %s252, 8
      %s254 = scalar_lea.vmem %s5, %s253
      %p255 = scmp.lt.s32.totalorder %s21, 1
      %s256 = scalar_select %p255, %s21, 1
      %p257 = scmp.lt.s32.totalorder %s22, 0
      %s258 = scalar_select %p257, %s22, 0
      %s259 = smul.addr %s256, 512
      %s260 = sadd.s32 %s258, %s259
      %s261 = smul.addr %s260, 4
      %s262 = scalar_lea.vmem %s0, %s261
      %p263 = scmp.lt.s32.totalorder %s21, 1
      %s264 = scalar_select %p263, %s21, 1
      %p265 = scmp.lt.s32.totalorder %s22, 0
      %s266 = scalar_select %p265, %s22, 0
      %s267 = smul.addr %s264, 16
      %s268 = sadd.s32 %s266, %s267
      %s269 = smul.addr %s268, 4
      %s270 = scalar_lea.vmem %s3, %s269
      %p271 = scmp.lt.s32.totalorder %s21, 1
      %s272 = scalar_select %p271, %s21, 1
      %s273 = smul.addr %s272, 16
      %s274 = smul.addr %s273, 8
      %s275 = scalar_lea.vmem %s4, %s274
      %p276 = scmp.lt.s32.totalorder %s21, 1
      %s277 = scalar_select %p276, %s21, 1
      %s278 = smul.addr %s277, 16
      %s279 = smul.addr %s278, 8
      %s280 = scalar_lea.vmem %s5, %s279
      %v282 = vld [vmem:[%s1] sm:$0xff]
      %v283 = vld [vmem:[%s1 + $0x8] sm:$0xff]
      %v284 = vld [vmem:[%s1 + $0x10] sm:$0xff]
      %v285 = vld [vmem:[%s1 + $0x18] sm:$0xff]
      %v286 = vld [vmem:[%s1 + $0x20] sm:$0xff]
      %v287 = vld [vmem:[%s1 + $0x28] sm:$0xff]
      %v288 = vld [vmem:[%s1 + $0x30] sm:$0xff]
      %v289 = vld [vmem:[%s1 + $0x38] sm:$0xff]
      %v290 = vld [vmem:[%s1 + $0x40] sm:$0xff]
      %v291 = vld [vmem:[%s1 + $0x48] sm:$0xff]
      %v292 = vld [vmem:[%s1 + $0x50] sm:$0xff]
      %v293 = vld [vmem:[%s1 + $0x58] sm:$0xff]
      %v294 = vld [vmem:[%s1 + $0x60] sm:$0xff]
      %v295 = vld [vmem:[%s1 + $0x68] sm:$0xff]
      %v296 = vld [vmem:[%s1 + $0x70] sm:$0xff]
      %v297 = vld [vmem:[%s1 + $0x78] sm:$0xff]
      %v298 = vld [vmem:[%s1 + $0x80] sm:$0xff]
      %v299 = vld [vmem:[%s1 + $0x88] sm:$0xff]
      %v300 = vld [vmem:[%s1 + $0x90] sm:$0xff]
      %v301 = vld [vmem:[%s1 + $0x98] sm:$0xff]
      %v302 = vld [vmem:[%s1 + $0xa0] sm:$0xff]
      %v303 = vld [vmem:[%s1 + $0xa8] sm:$0xff]
      %v304 = vld [vmem:[%s1 + $0xb0] sm:$0xff]
      %v305 = vld [vmem:[%s1 + $0xb8] sm:$0xff]
      %v306 = vld [vmem:[%s1 + $0xc0] sm:$0xff]
      %v307 = vld [vmem:[%s1 + $0xc8] sm:$0xff]
      %v308 = vld [vmem:[%s1 + $0xd0] sm:$0xff]
      %v309 = vld [vmem:[%s1 + $0xd8] sm:$0xff]
      %v310 = vld [vmem:[%s1 + $0xe0] sm:$0xff]
      %v311 = vld [vmem:[%s1 + $0xe8] sm:$0xff]
      %v312 = vld [vmem:[%s1 + $0xf0] sm:$0xff]
      %v313 = vld [vmem:[%s1 + $0xf8] sm:$0xff]
      %v314 = vld [vmem:[%s1 + $0x100] sm:$0xff]
      %v315 = vld [vmem:[%s1 + $0x108] sm:$0xff]
      %v316 = vld [vmem:[%s1 + $0x110] sm:$0xff]
      %v317 = vld [vmem:[%s1 + $0x118] sm:$0xff]
      %v318 = vld [vmem:[%s1 + $0x120] sm:$0xff]
      %v319 = vld [vmem:[%s1 + $0x128] sm:$0xff]
      %v320 = vld [vmem:[%s1 + $0x130] sm:$0xff]
      %v321 = vld [vmem:[%s1 + $0x138] sm:$0xff]
      %v322 = vld [vmem:[%s1 + $0x140] sm:$0xff]
      %v323 = vld [vmem:[%s1 + $0x148] sm:$0xff]
      %v324 = vld [vmem:[%s1 + $0x150] sm:$0xff]
      %v325 = vld [vmem:[%s1 + $0x158] sm:$0xff]
      %v326 = vld [vmem:[%s1 + $0x160] sm:$0xff]
      %v327 = vld [vmem:[%s1 + $0x168] sm:$0xff]
      %v328 = vld [vmem:[%s1 + $0x170] sm:$0xff]
      %v329 = vld [vmem:[%s1 + $0x178] sm:$0xff]
      %v330 = vld [vmem:[%s1 + $0x180] sm:$0xff]
      %v331 = vld [vmem:[%s1 + $0x188] sm:$0xff]
      %v332 = vld [vmem:[%s1 + $0x190] sm:$0xff]
      %v333 = vld [vmem:[%s1 + $0x198] sm:$0xff]
      %v334 = vld [vmem:[%s1 + $0x1a0] sm:$0xff]
      %v335 = vld [vmem:[%s1 + $0x1a8] sm:$0xff]
      %v336 = vld [vmem:[%s1 + $0x1b0] sm:$0xff]
      %v337 = vld [vmem:[%s1 + $0x1b8] sm:$0xff]
      %v338 = vld [vmem:[%s1 + $0x1c0] sm:$0xff]
      %v339 = vld [vmem:[%s1 + $0x1c8] sm:$0xff]
      %v340 = vld [vmem:[%s1 + $0x1d0] sm:$0xff]
      %v341 = vld [vmem:[%s1 + $0x1d8] sm:$0xff]
      %v342 = vld [vmem:[%s1 + $0x1e0] sm:$0xff]
      %v343 = vld [vmem:[%s1 + $0x1e8] sm:$0xff]
      %v344 = vld [vmem:[%s1 + $0x1f0] sm:$0xff]
      %v345 = vld [vmem:[%s1 + $0x1f8] sm:$0xff]
      %v346 = vld [vmem:[%s1 + $0x200] sm:$0xff]
      %v347 = vld [vmem:[%s1 + $0x208] sm:$0xff]
      %v348 = vld [vmem:[%s1 + $0x210] sm:$0xff]
      %v349 = vld [vmem:[%s1 + $0x218] sm:$0xff]
      %v350 = vld [vmem:[%s1 + $0x220] sm:$0xff]
      %v351 = vld [vmem:[%s1 + $0x228] sm:$0xff]
      %v352 = vld [vmem:[%s1 + $0x230] sm:$0xff]
      %v353 = vld [vmem:[%s1 + $0x238] sm:$0xff]
      %v354 = vld [vmem:[%s1 + $0x240] sm:$0xff]
      %v355 = vld [vmem:[%s1 + $0x248] sm:$0xff]
      %v356 = vld [vmem:[%s1 + $0x250] sm:$0xff]
      %v357 = vld [vmem:[%s1 + $0x258] sm:$0xff]
      %v358 = vld [vmem:[%s1 + $0x260] sm:$0xff]
      %v359 = vld [vmem:[%s1 + $0x268] sm:$0xff]
      %v360 = vld [vmem:[%s1 + $0x270] sm:$0xff]
      %v361 = vld [vmem:[%s1 + $0x278] sm:$0xff]
      %v362 = vld [vmem:[%s1 + $0x280] sm:$0xff]
      %v363 = vld [vmem:[%s1 + $0x288] sm:$0xff]
      %v364 = vld [vmem:[%s1 + $0x290] sm:$0xff]
      %v365 = vld [vmem:[%s1 + $0x298] sm:$0xff]
      %v366 = vld [vmem:[%s1 + $0x2a0] sm:$0xff]
      %v367 = vld [vmem:[%s1 + $0x2a8] sm:$0xff]
      %v368 = vld [vmem:[%s1 + $0x2b0] sm:$0xff]
      %v369 = vld [vmem:[%s1 + $0x2b8] sm:$0xff]
      %v370 = vld [vmem:[%s1 + $0x2c0] sm:$0xff]
      %v371 = vld [vmem:[%s1 + $0x2c8] sm:$0xff]
      %v372 = vld [vmem:[%s1 + $0x2d0] sm:$0xff]
      %v373 = vld [vmem:[%s1 + $0x2d8] sm:$0xff]
      %v374 = vld [vmem:[%s1 + $0x2e0] sm:$0xff]
      %v375 = vld [vmem:[%s1 + $0x2e8] sm:$0xff]
      %v376 = vld [vmem:[%s1 + $0x2f0] sm:$0xff]
      %v377 = vld [vmem:[%s1 + $0x2f8] sm:$0xff]
      %v378 = vld [vmem:[%s1 + $0x300] sm:$0xff]
      %v379 = vld [vmem:[%s1 + $0x308] sm:$0xff]
      %v380 = vld [vmem:[%s1 + $0x310] sm:$0xff]
      %v381 = vld [vmem:[%s1 + $0x318] sm:$0xff]
      %v382 = vld [vmem:[%s1 + $0x320] sm:$0xff]
      %v383 = vld [vmem:[%s1 + $0x328] sm:$0xff]
      %v384 = vld [vmem:[%s1 + $0x330] sm:$0xff]
      %v385 = vld [vmem:[%s1 + $0x338] sm:$0xff]
      %v386 = vld [vmem:[%s1 + $0x340] sm:$0xff]
      %v387 = vld [vmem:[%s1 + $0x348] sm:$0xff]
      %v388 = vld [vmem:[%s1 + $0x350] sm:$0xff]
      %v389 = vld [vmem:[%s1 + $0x358] sm:$0xff]
      %v390 = vld [vmem:[%s1 + $0x360] sm:$0xff]
      %v391 = vld [vmem:[%s1 + $0x368] sm:$0xff]
      %v392 = vld [vmem:[%s1 + $0x370] sm:$0xff]
      %v393 = vld [vmem:[%s1 + $0x378] sm:$0xff]
      %v394 = vld [vmem:[%s1 + $0x380] sm:$0xff]
      %v395 = vld [vmem:[%s1 + $0x388] sm:$0xff]
      %v396 = vld [vmem:[%s1 + $0x390] sm:$0xff]
      %v397 = vld [vmem:[%s1 + $0x398] sm:$0xff]
      %v398 = vld [vmem:[%s1 + $0x3a0] sm:$0xff]
      %v399 = vld [vmem:[%s1 + $0x3a8] sm:$0xff]
      %v400 = vld [vmem:[%s1 + $0x3b0] sm:$0xff]
      %v401 = vld [vmem:[%s1 + $0x3b8] sm:$0xff]
      %v402 = vld [vmem:[%s1 + $0x3c0] sm:$0xff]
      %v403 = vld [vmem:[%s1 + $0x3c8] sm:$0xff]
      %v404 = vld [vmem:[%s1 + $0x3d0] sm:$0xff]
      %v405 = vld [vmem:[%s1 + $0x3d8] sm:$0xff]
      %v406 = vld [vmem:[%s1 + $0x3e0] sm:$0xff]
      %v407 = vld [vmem:[%s1 + $0x3e8] sm:$0xff]
      %v408 = vld [vmem:[%s1 + $0x3f0] sm:$0xff]
      %v409 = vld [vmem:[%s1 + $0x3f8] sm:$0xff]
      %v410 = vld [vmem:[%s1 + $0x400] sm:$0xff]
      %v411 = vld [vmem:[%s1 + $0x408] sm:$0xff]
      %v412 = vld [vmem:[%s1 + $0x410] sm:$0xff]
      %v413 = vld [vmem:[%s1 + $0x418] sm:$0xff]
      %v414 = vld [vmem:[%s1 + $0x420] sm:$0xff]
      %v415 = vld [vmem:[%s1 + $0x428] sm:$0xff]
      %v416 = vld [vmem:[%s1 + $0x430] sm:$0xff]
      %v417 = vld [vmem:[%s1 + $0x438] sm:$0xff]
      %v418 = vld [vmem:[%s1 + $0x440] sm:$0xff]
      %v419 = vld [vmem:[%s1 + $0x448] sm:$0xff]
      %v420 = vld [vmem:[%s1 + $0x450] sm:$0xff]
      %v421 = vld [vmem:[%s1 + $0x458] sm:$0xff]
      %v422 = vld [vmem:[%s1 + $0x460] sm:$0xff]
      %v423 = vld [vmem:[%s1 + $0x468] sm:$0xff]
      %v424 = vld [vmem:[%s1 + $0x470] sm:$0xff]
      %v425 = vld [vmem:[%s1 + $0x478] sm:$0xff]
      %v426 = vld [vmem:[%s1 + $0x480] sm:$0xff]
      %v427 = vld [vmem:[%s1 + $0x488] sm:$0xff]
      %v428 = vld [vmem:[%s1 + $0x490] sm:$0xff]
      %v429 = vld [vmem:[%s1 + $0x498] sm:$0xff]
      %v430 = vld [vmem:[%s1 + $0x4a0] sm:$0xff]
      %v431 = vld [vmem:[%s1 + $0x4a8] sm:$0xff]
      %v432 = vld [vmem:[%s1 + $0x4b0] sm:$0xff]
      %v433 = vld [vmem:[%s1 + $0x4b8] sm:$0xff]
      %v434 = vld [vmem:[%s1 + $0x4c0] sm:$0xff]
      %v435 = vld [vmem:[%s1 + $0x4c8] sm:$0xff]
      %v436 = vld [vmem:[%s1 + $0x4d0] sm:$0xff]
      %v437 = vld [vmem:[%s1 + $0x4d8] sm:$0xff]
      %v438 = vld [vmem:[%s1 + $0x4e0] sm:$0xff]
      %v439 = vld [vmem:[%s1 + $0x4e8] sm:$0xff]
      %v440 = vld [vmem:[%s1 + $0x4f0] sm:$0xff]
      %v441 = vld [vmem:[%s1 + $0x4f8] sm:$0xff]
      %v442 = vld [vmem:[%s1 + $0x500] sm:$0xff]
      %v443 = vld [vmem:[%s1 + $0x508] sm:$0xff]
      %v444 = vld [vmem:[%s1 + $0x510] sm:$0xff]
      %v445 = vld [vmem:[%s1 + $0x518] sm:$0xff]
      %v446 = vld [vmem:[%s1 + $0x520] sm:$0xff]
      %v447 = vld [vmem:[%s1 + $0x528] sm:$0xff]
      %v448 = vld [vmem:[%s1 + $0x530] sm:$0xff]
      %v449 = vld [vmem:[%s1 + $0x538] sm:$0xff]
      %v450 = vld [vmem:[%s1 + $0x540] sm:$0xff]
      %v451 = vld [vmem:[%s1 + $0x548] sm:$0xff]
      %v452 = vld [vmem:[%s1 + $0x550] sm:$0xff]
      %v453 = vld [vmem:[%s1 + $0x558] sm:$0xff]
      %v454 = vld [vmem:[%s1 + $0x560] sm:$0xff]
      %v455 = vld [vmem:[%s1 + $0x568] sm:$0xff]
      %v456 = vld [vmem:[%s1 + $0x570] sm:$0xff]
      %v457 = vld [vmem:[%s1 + $0x578] sm:$0xff]
      %v458 = vld [vmem:[%s1 + $0x580] sm:$0xff]
      %v459 = vld [vmem:[%s1 + $0x588] sm:$0xff]
      %v460 = vld [vmem:[%s1 + $0x590] sm:$0xff]
      %v461 = vld [vmem:[%s1 + $0x598] sm:$0xff]
      %v462 = vld [vmem:[%s1 + $0x5a0] sm:$0xff]
      %v463 = vld [vmem:[%s1 + $0x5a8] sm:$0xff]
      %v464 = vld [vmem:[%s1 + $0x5b0] sm:$0xff]
      %v465 = vld [vmem:[%s1 + $0x5b8] sm:$0xff]
      %v466 = vld [vmem:[%s1 + $0x5c0] sm:$0xff]
      %v467 = vld [vmem:[%s1 + $0x5c8] sm:$0xff]
      %v468 = vld [vmem:[%s1 + $0x5d0] sm:$0xff]
      %v469 = vld [vmem:[%s1 + $0x5d8] sm:$0xff]
      %v470 = vld [vmem:[%s1 + $0x5e0] sm:$0xff]
      %v471 = vld [vmem:[%s1 + $0x5e8] sm:$0xff]
      %v472 = vld [vmem:[%s1 + $0x5f0] sm:$0xff]
      %v473 = vld [vmem:[%s1 + $0x5f8] sm:$0xff]
      %v474 = vld [vmem:[%s1 + $0x600] sm:$0xff]
      %v475 = vld [vmem:[%s1 + $0x608] sm:$0xff]
      %v476 = vld [vmem:[%s1 + $0x610] sm:$0xff]
      %v477 = vld [vmem:[%s1 + $0x618] sm:$0xff]
      %v478 = vld [vmem:[%s1 + $0x620] sm:$0xff]
      %v479 = vld [vmem:[%s1 + $0x628] sm:$0xff]
      %v480 = vld [vmem:[%s1 + $0x630] sm:$0xff]
      %v481 = vld [vmem:[%s1 + $0x638] sm:$0xff]
      %v482 = vld [vmem:[%s1 + $0x640] sm:$0xff]
      %v483 = vld [vmem:[%s1 + $0x648] sm:$0xff]
      %v484 = vld [vmem:[%s1 + $0x650] sm:$0xff]
      %v485 = vld [vmem:[%s1 + $0x658] sm:$0xff]
      %v486 = vld [vmem:[%s1 + $0x660] sm:$0xff]
      %v487 = vld [vmem:[%s1 + $0x668] sm:$0xff]
      %v488 = vld [vmem:[%s1 + $0x670] sm:$0xff]
      %v489 = vld [vmem:[%s1 + $0x678] sm:$0xff]
      %v490 = vld [vmem:[%s1 + $0x680] sm:$0xff]
      %v491 = vld [vmem:[%s1 + $0x688] sm:$0xff]
      %v492 = vld [vmem:[%s1 + $0x690] sm:$0xff]
      %v493 = vld [vmem:[%s1 + $0x698] sm:$0xff]
      %v494 = vld [vmem:[%s1 + $0x6a0] sm:$0xff]
      %v495 = vld [vmem:[%s1 + $0x6a8] sm:$0xff]
      %v496 = vld [vmem:[%s1 + $0x6b0] sm:$0xff]
      %v497 = vld [vmem:[%s1 + $0x6b8] sm:$0xff]
      %v498 = vld [vmem:[%s1 + $0x6c0] sm:$0xff]
      %v499 = vld [vmem:[%s1 + $0x6c8] sm:$0xff]
      %v500 = vld [vmem:[%s1 + $0x6d0] sm:$0xff]
      %v501 = vld [vmem:[%s1 + $0x6d8] sm:$0xff]
      %v502 = vld [vmem:[%s1 + $0x6e0] sm:$0xff]
      %v503 = vld [vmem:[%s1 + $0x6e8] sm:$0xff]
      %v504 = vld [vmem:[%s1 + $0x6f0] sm:$0xff]
      %v505 = vld [vmem:[%s1 + $0x6f8] sm:$0xff]
      %v506 = vld [vmem:[%s1 + $0x700] sm:$0xff]
      %v507 = vld [vmem:[%s1 + $0x708] sm:$0xff]
      %v508 = vld [vmem:[%s1 + $0x710] sm:$0xff]
      %v509 = vld [vmem:[%s1 + $0x718] sm:$0xff]
      %v510 = vld [vmem:[%s1 + $0x720] sm:$0xff]
      %v511 = vld [vmem:[%s1 + $0x728] sm:$0xff]
      %v512 = vld [vmem:[%s1 + $0x730] sm:$0xff]
      %v513 = vld [vmem:[%s1 + $0x738] sm:$0xff]
      %v514 = vld [vmem:[%s1 + $0x740] sm:$0xff]
      %v515 = vld [vmem:[%s1 + $0x748] sm:$0xff]
      %v516 = vld [vmem:[%s1 + $0x750] sm:$0xff]
      %v517 = vld [vmem:[%s1 + $0x758] sm:$0xff]
      %v518 = vld [vmem:[%s1 + $0x760] sm:$0xff]
      %v519 = vld [vmem:[%s1 + $0x768] sm:$0xff]
      %v520 = vld [vmem:[%s1 + $0x770] sm:$0xff]
      %v521 = vld [vmem:[%s1 + $0x778] sm:$0xff]
      %v522 = vld [vmem:[%s1 + $0x780] sm:$0xff]
      %v523 = vld [vmem:[%s1 + $0x788] sm:$0xff]
      %v524 = vld [vmem:[%s1 + $0x790] sm:$0xff]
      %v525 = vld [vmem:[%s1 + $0x798] sm:$0xff]
      %v526 = vld [vmem:[%s1 + $0x7a0] sm:$0xff]
      %v527 = vld [vmem:[%s1 + $0x7a8] sm:$0xff]
      %v528 = vld [vmem:[%s1 + $0x7b0] sm:$0xff]
      %v529 = vld [vmem:[%s1 + $0x7b8] sm:$0xff]
      %v530 = vld [vmem:[%s1 + $0x7c0] sm:$0xff]
      %v531 = vld [vmem:[%s1 + $0x7c8] sm:$0xff]
      %v532 = vld [vmem:[%s1 + $0x7d0] sm:$0xff]
      %v533 = vld [vmem:[%s1 + $0x7d8] sm:$0xff]
      %v534 = vld [vmem:[%s1 + $0x7e0] sm:$0xff]
      %v535 = vld [vmem:[%s1 + $0x7e8] sm:$0xff]
      %v536 = vld [vmem:[%s1 + $0x7f0] sm:$0xff]
      %v537 = vld [vmem:[%s1 + $0x7f8] sm:$0xff]
      %v538 = vld [vmem:[%s262] sm:$0xf]
      %v539 = vld [vmem:[%s262 + $0x4] sm:$0xf]
      %v540 = vld [vmem:[%s262 + $0x8] sm:$0xf]
      %v541 = vld [vmem:[%s262 + $0xc] sm:$0xf]
      %v542 = vld [vmem:[%s262 + $0x10] sm:$0xf]
      %v543 = vld [vmem:[%s262 + $0x14] sm:$0xf]
      %v544 = vld [vmem:[%s262 + $0x18] sm:$0xf]
      %v545 = vld [vmem:[%s262 + $0x1c] sm:$0xf]
      %v546 = vld [vmem:[%s262 + $0x20] sm:$0xf]
      %v547 = vld [vmem:[%s262 + $0x24] sm:$0xf]
      %v548 = vld [vmem:[%s262 + $0x28] sm:$0xf]
      %v549 = vld [vmem:[%s262 + $0x2c] sm:$0xf]
      %v550 = vld [vmem:[%s262 + $0x30] sm:$0xf]
      %v551 = vld [vmem:[%s262 + $0x34] sm:$0xf]
      %v552 = vld [vmem:[%s262 + $0x38] sm:$0xf]
      %v553 = vld [vmem:[%s262 + $0x3c] sm:$0xf]
      %v554 = vld [vmem:[%s262 + $0x40] sm:$0xf]
      %v555 = vld [vmem:[%s262 + $0x44] sm:$0xf]
      %v556 = vld [vmem:[%s262 + $0x48] sm:$0xf]
      %v557 = vld [vmem:[%s262 + $0x4c] sm:$0xf]
      %v558 = vld [vmem:[%s262 + $0x50] sm:$0xf]
      %v559 = vld [vmem:[%s262 + $0x54] sm:$0xf]
      %v560 = vld [vmem:[%s262 + $0x58] sm:$0xf]
      %v561 = vld [vmem:[%s262 + $0x5c] sm:$0xf]
      %v562 = vld [vmem:[%s262 + $0x60] sm:$0xf]
      %v563 = vld [vmem:[%s262 + $0x64] sm:$0xf]
      %v564 = vld [vmem:[%s262 + $0x68] sm:$0xf]
      %v565 = vld [vmem:[%s262 + $0x6c] sm:$0xf]
      %v566 = vld [vmem:[%s262 + $0x70] sm:$0xf]
      %v567 = vld [vmem:[%s262 + $0x74] sm:$0xf]
      %v568 = vld [vmem:[%s262 + $0x78] sm:$0xf]
      %v569 = vld [vmem:[%s262 + $0x7c] sm:$0xf]
      %v570 = vld [vmem:[%s262 + $0x80] sm:$0xf]
      %v571 = vld [vmem:[%s262 + $0x84] sm:$0xf]
      %v572 = vld [vmem:[%s262 + $0x88] sm:$0xf]
      %v573 = vld [vmem:[%s262 + $0x8c] sm:$0xf]
      %v574 = vld [vmem:[%s262 + $0x90] sm:$0xf]
      %v575 = vld [vmem:[%s262 + $0x94] sm:$0xf]
      %v576 = vld [vmem:[%s262 + $0x98] sm:$0xf]
      %v577 = vld [vmem:[%s262 + $0x9c] sm:$0xf]
      %v578 = vld [vmem:[%s262 + $0xa0] sm:$0xf]
      %v579 = vld [vmem:[%s262 + $0xa4] sm:$0xf]
      %v580 = vld [vmem:[%s262 + $0xa8] sm:$0xf]
      %v581 = vld [vmem:[%s262 + $0xac] sm:$0xf]
      %v582 = vld [vmem:[%s262 + $0xb0] sm:$0xf]
      %v583 = vld [vmem:[%s262 + $0xb4] sm:$0xf]
      %v584 = vld [vmem:[%s262 + $0xb8] sm:$0xf]
      %v585 = vld [vmem:[%s262 + $0xbc] sm:$0xf]
      %v586 = vld [vmem:[%s262 + $0xc0] sm:$0xf]
      %v587 = vld [vmem:[%s262 + $0xc4] sm:$0xf]
      %v588 = vld [vmem:[%s262 + $0xc8] sm:$0xf]
      %v589 = vld [vmem:[%s262 + $0xcc] sm:$0xf]
      %v590 = vld [vmem:[%s262 + $0xd0] sm:$0xf]
      %v591 = vld [vmem:[%s262 + $0xd4] sm:$0xf]
      %v592 = vld [vmem:[%s262 + $0xd8] sm:$0xf]
      %v593 = vld [vmem:[%s262 + $0xdc] sm:$0xf]
      %v594 = vld [vmem:[%s262 + $0xe0] sm:$0xf]
      %v595 = vld [vmem:[%s262 + $0xe4] sm:$0xf]
      %v596 = vld [vmem:[%s262 + $0xe8] sm:$0xf]
      %v597 = vld [vmem:[%s262 + $0xec] sm:$0xf]
      %v598 = vld [vmem:[%s262 + $0xf0] sm:$0xf]
      %v599 = vld [vmem:[%s262 + $0xf4] sm:$0xf]
      %v600 = vld [vmem:[%s262 + $0xf8] sm:$0xf]
      %v601 = vld [vmem:[%s262 + $0xfc] sm:$0xf]
      %v602 = vld [vmem:[%s262 + $0x100] sm:$0xf]
      %v603 = vld [vmem:[%s262 + $0x104] sm:$0xf]
      %v604 = vld [vmem:[%s262 + $0x108] sm:$0xf]
      %v605 = vld [vmem:[%s262 + $0x10c] sm:$0xf]
      %v606 = vld [vmem:[%s262 + $0x110] sm:$0xf]
      %v607 = vld [vmem:[%s262 + $0x114] sm:$0xf]
      %v608 = vld [vmem:[%s262 + $0x118] sm:$0xf]
      %v609 = vld [vmem:[%s262 + $0x11c] sm:$0xf]
      %v610 = vld [vmem:[%s262 + $0x120] sm:$0xf]
      %v611 = vld [vmem:[%s262 + $0x124] sm:$0xf]
      %v612 = vld [vmem:[%s262 + $0x128] sm:$0xf]
      %v613 = vld [vmem:[%s262 + $0x12c] sm:$0xf]
      %v614 = vld [vmem:[%s262 + $0x130] sm:$0xf]
      %v615 = vld [vmem:[%s262 + $0x134] sm:$0xf]
      %v616 = vld [vmem:[%s262 + $0x138] sm:$0xf]
      %v617 = vld [vmem:[%s262 + $0x13c] sm:$0xf]
      %v618 = vld [vmem:[%s262 + $0x140] sm:$0xf]
      %v619 = vld [vmem:[%s262 + $0x144] sm:$0xf]
      %v620 = vld [vmem:[%s262 + $0x148] sm:$0xf]
      %v621 = vld [vmem:[%s262 + $0x14c] sm:$0xf]
      %v622 = vld [vmem:[%s262 + $0x150] sm:$0xf]
      %v623 = vld [vmem:[%s262 + $0x154] sm:$0xf]
      %v624 = vld [vmem:[%s262 + $0x158] sm:$0xf]
      %v625 = vld [vmem:[%s262 + $0x15c] sm:$0xf]
      %v626 = vld [vmem:[%s262 + $0x160] sm:$0xf]
      %v627 = vld [vmem:[%s262 + $0x164] sm:$0xf]
      %v628 = vld [vmem:[%s262 + $0x168] sm:$0xf]
      %v629 = vld [vmem:[%s262 + $0x16c] sm:$0xf]
      %v630 = vld [vmem:[%s262 + $0x170] sm:$0xf]
      %v631 = vld [vmem:[%s262 + $0x174] sm:$0xf]
      %v632 = vld [vmem:[%s262 + $0x178] sm:$0xf]
      %v633 = vld [vmem:[%s262 + $0x17c] sm:$0xf]
      %v634 = vld [vmem:[%s262 + $0x180] sm:$0xf]
      %v635 = vld [vmem:[%s262 + $0x184] sm:$0xf]
      %v636 = vld [vmem:[%s262 + $0x188] sm:$0xf]
      %v637 = vld [vmem:[%s262 + $0x18c] sm:$0xf]
      %v638 = vld [vmem:[%s262 + $0x190] sm:$0xf]
      %v639 = vld [vmem:[%s262 + $0x194] sm:$0xf]
      %v640 = vld [vmem:[%s262 + $0x198] sm:$0xf]
      %v641 = vld [vmem:[%s262 + $0x19c] sm:$0xf]
      %v642 = vld [vmem:[%s262 + $0x1a0] sm:$0xf]
      %v643 = vld [vmem:[%s262 + $0x1a4] sm:$0xf]
      %v644 = vld [vmem:[%s262 + $0x1a8] sm:$0xf]
      %v645 = vld [vmem:[%s262 + $0x1ac] sm:$0xf]
      %v646 = vld [vmem:[%s262 + $0x1b0] sm:$0xf]
      %v647 = vld [vmem:[%s262 + $0x1b4] sm:$0xf]
      %v648 = vld [vmem:[%s262 + $0x1b8] sm:$0xf]
      %v649 = vld [vmem:[%s262 + $0x1bc] sm:$0xf]
      %v650 = vld [vmem:[%s262 + $0x1c0] sm:$0xf]
      %v651 = vld [vmem:[%s262 + $0x1c4] sm:$0xf]
      %v652 = vld [vmem:[%s262 + $0x1c8] sm:$0xf]
      %v653 = vld [vmem:[%s262 + $0x1cc] sm:$0xf]
      %v654 = vld [vmem:[%s262 + $0x1d0] sm:$0xf]
      %v655 = vld [vmem:[%s262 + $0x1d4] sm:$0xf]
      %v656 = vld [vmem:[%s262 + $0x1d8] sm:$0xf]
      %v657 = vld [vmem:[%s262 + $0x1dc] sm:$0xf]
      %v658 = vld [vmem:[%s262 + $0x1e0] sm:$0xf]
      %v659 = vld [vmem:[%s262 + $0x1e4] sm:$0xf]
      %v660 = vld [vmem:[%s262 + $0x1e8] sm:$0xf]
      %v661 = vld [vmem:[%s262 + $0x1ec] sm:$0xf]
      %v662 = vld [vmem:[%s262 + $0x1f0] sm:$0xf]
      %v663 = vld [vmem:[%s262 + $0x1f4] sm:$0xf]
      %v664 = vld [vmem:[%s262 + $0x1f8] sm:$0xf]
      %v665 = vld [vmem:[%s262 + $0x1fc] sm:$0xf]
      %v666 = vld [vmem:[%s262 + $0x200] sm:$0xf]
      %v667 = vld [vmem:[%s262 + $0x204] sm:$0xf]
      %v668 = vld [vmem:[%s262 + $0x208] sm:$0xf]
      %v669 = vld [vmem:[%s262 + $0x20c] sm:$0xf]
      %v670 = vld [vmem:[%s262 + $0x210] sm:$0xf]
      %v671 = vld [vmem:[%s262 + $0x214] sm:$0xf]
      %v672 = vld [vmem:[%s262 + $0x218] sm:$0xf]
      %v673 = vld [vmem:[%s262 + $0x21c] sm:$0xf]
      %v674 = vld [vmem:[%s262 + $0x220] sm:$0xf]
      %v675 = vld [vmem:[%s262 + $0x224] sm:$0xf]
      %v676 = vld [vmem:[%s262 + $0x228] sm:$0xf]
      %v677 = vld [vmem:[%s262 + $0x22c] sm:$0xf]
      %v678 = vld [vmem:[%s262 + $0x230] sm:$0xf]
      %v679 = vld [vmem:[%s262 + $0x234] sm:$0xf]
      %v680 = vld [vmem:[%s262 + $0x238] sm:$0xf]
      %v681 = vld [vmem:[%s262 + $0x23c] sm:$0xf]
      %v682 = vld [vmem:[%s262 + $0x240] sm:$0xf]
      %v683 = vld [vmem:[%s262 + $0x244] sm:$0xf]
      %v684 = vld [vmem:[%s262 + $0x248] sm:$0xf]
      %v685 = vld [vmem:[%s262 + $0x24c] sm:$0xf]
      %v686 = vld [vmem:[%s262 + $0x250] sm:$0xf]
      %v687 = vld [vmem:[%s262 + $0x254] sm:$0xf]
      %v688 = vld [vmem:[%s262 + $0x258] sm:$0xf]
      %v689 = vld [vmem:[%s262 + $0x25c] sm:$0xf]
      %v690 = vld [vmem:[%s262 + $0x260] sm:$0xf]
      %v691 = vld [vmem:[%s262 + $0x264] sm:$0xf]
      %v692 = vld [vmem:[%s262 + $0x268] sm:$0xf]
      %v693 = vld [vmem:[%s262 + $0x26c] sm:$0xf]
      %v694 = vld [vmem:[%s262 + $0x270] sm:$0xf]
      %v695 = vld [vmem:[%s262 + $0x274] sm:$0xf]
      %v696 = vld [vmem:[%s262 + $0x278] sm:$0xf]
      %v697 = vld [vmem:[%s262 + $0x27c] sm:$0xf]
      %v698 = vld [vmem:[%s262 + $0x280] sm:$0xf]
      %v699 = vld [vmem:[%s262 + $0x284] sm:$0xf]
      %v700 = vld [vmem:[%s262 + $0x288] sm:$0xf]
      %v701 = vld [vmem:[%s262 + $0x28c] sm:$0xf]
      %v702 = vld [vmem:[%s262 + $0x290] sm:$0xf]
      %v703 = vld [vmem:[%s262 + $0x294] sm:$0xf]
      %v704 = vld [vmem:[%s262 + $0x298] sm:$0xf]
      %v705 = vld [vmem:[%s262 + $0x29c] sm:$0xf]
      %v706 = vld [vmem:[%s262 + $0x2a0] sm:$0xf]
      %v707 = vld [vmem:[%s262 + $0x2a4] sm:$0xf]
      %v708 = vld [vmem:[%s262 + $0x2a8] sm:$0xf]
      %v709 = vld [vmem:[%s262 + $0x2ac] sm:$0xf]
      %v710 = vld [vmem:[%s262 + $0x2b0] sm:$0xf]
      %v711 = vld [vmem:[%s262 + $0x2b4] sm:$0xf]
      %v712 = vld [vmem:[%s262 + $0x2b8] sm:$0xf]
      %v713 = vld [vmem:[%s262 + $0x2bc] sm:$0xf]
      %v714 = vld [vmem:[%s262 + $0x2c0] sm:$0xf]
      %v715 = vld [vmem:[%s262 + $0x2c4] sm:$0xf]
      %v716 = vld [vmem:[%s262 + $0x2c8] sm:$0xf]
      %v717 = vld [vmem:[%s262 + $0x2cc] sm:$0xf]
      %v718 = vld [vmem:[%s262 + $0x2d0] sm:$0xf]
      %v719 = vld [vmem:[%s262 + $0x2d4] sm:$0xf]
      %v720 = vld [vmem:[%s262 + $0x2d8] sm:$0xf]
      %v721 = vld [vmem:[%s262 + $0x2dc] sm:$0xf]
      %v722 = vld [vmem:[%s262 + $0x2e0] sm:$0xf]
      %v723 = vld [vmem:[%s262 + $0x2e4] sm:$0xf]
      %v724 = vld [vmem:[%s262 + $0x2e8] sm:$0xf]
      %v725 = vld [vmem:[%s262 + $0x2ec] sm:$0xf]
      %v726 = vld [vmem:[%s262 + $0x2f0] sm:$0xf]
      %v727 = vld [vmem:[%s262 + $0x2f4] sm:$0xf]
      %v728 = vld [vmem:[%s262 + $0x2f8] sm:$0xf]
      %v729 = vld [vmem:[%s262 + $0x2fc] sm:$0xf]
      %v730 = vld [vmem:[%s262 + $0x300] sm:$0xf]
      %v731 = vld [vmem:[%s262 + $0x304] sm:$0xf]
      %v732 = vld [vmem:[%s262 + $0x308] sm:$0xf]
      %v733 = vld [vmem:[%s262 + $0x30c] sm:$0xf]
      %v734 = vld [vmem:[%s262 + $0x310] sm:$0xf]
      %v735 = vld [vmem:[%s262 + $0x314] sm:$0xf]
      %v736 = vld [vmem:[%s262 + $0x318] sm:$0xf]
      %v737 = vld [vmem:[%s262 + $0x31c] sm:$0xf]
      %v738 = vld [vmem:[%s262 + $0x320] sm:$0xf]
      %v739 = vld [vmem:[%s262 + $0x324] sm:$0xf]
      %v740 = vld [vmem:[%s262 + $0x328] sm:$0xf]
      %v741 = vld [vmem:[%s262 + $0x32c] sm:$0xf]
      %v742 = vld [vmem:[%s262 + $0x330] sm:$0xf]
      %v743 = vld [vmem:[%s262 + $0x334] sm:$0xf]
      %v744 = vld [vmem:[%s262 + $0x338] sm:$0xf]
      %v745 = vld [vmem:[%s262 + $0x33c] sm:$0xf]
      %v746 = vld [vmem:[%s262 + $0x340] sm:$0xf]
      %v747 = vld [vmem:[%s262 + $0x344] sm:$0xf]
      %v748 = vld [vmem:[%s262 + $0x348] sm:$0xf]
      %v749 = vld [vmem:[%s262 + $0x34c] sm:$0xf]
      %v750 = vld [vmem:[%s262 + $0x350] sm:$0xf]
      %v751 = vld [vmem:[%s262 + $0x354] sm:$0xf]
      %v752 = vld [vmem:[%s262 + $0x358] sm:$0xf]
      %v753 = vld [vmem:[%s262 + $0x35c] sm:$0xf]
      %v754 = vld [vmem:[%s262 + $0x360] sm:$0xf]
      %v755 = vld [vmem:[%s262 + $0x364] sm:$0xf]
      %v756 = vld [vmem:[%s262 + $0x368] sm:$0xf]
      %v757 = vld [vmem:[%s262 + $0x36c] sm:$0xf]
      %v758 = vld [vmem:[%s262 + $0x370] sm:$0xf]
      %v759 = vld [vmem:[%s262 + $0x374] sm:$0xf]
      %v760 = vld [vmem:[%s262 + $0x378] sm:$0xf]
      %v761 = vld [vmem:[%s262 + $0x37c] sm:$0xf]
      %v762 = vld [vmem:[%s262 + $0x380] sm:$0xf]
      %v763 = vld [vmem:[%s262 + $0x384] sm:$0xf]
      %v764 = vld [vmem:[%s262 + $0x388] sm:$0xf]
      %v765 = vld [vmem:[%s262 + $0x38c] sm:$0xf]
      %v766 = vld [vmem:[%s262 + $0x390] sm:$0xf]
      %v767 = vld [vmem:[%s262 + $0x394] sm:$0xf]
      %v768 = vld [vmem:[%s262 + $0x398] sm:$0xf]
      %v769 = vld [vmem:[%s262 + $0x39c] sm:$0xf]
      %v770 = vld [vmem:[%s262 + $0x3a0] sm:$0xf]
      %v771 = vld [vmem:[%s262 + $0x3a4] sm:$0xf]
      %v772 = vld [vmem:[%s262 + $0x3a8] sm:$0xf]
      %v773 = vld [vmem:[%s262 + $0x3ac] sm:$0xf]
      %v774 = vld [vmem:[%s262 + $0x3b0] sm:$0xf]
      %v775 = vld [vmem:[%s262 + $0x3b4] sm:$0xf]
      %v776 = vld [vmem:[%s262 + $0x3b8] sm:$0xf]
      %v777 = vld [vmem:[%s262 + $0x3bc] sm:$0xf]
      %v778 = vld [vmem:[%s262 + $0x3c0] sm:$0xf]
      %v779 = vld [vmem:[%s262 + $0x3c4] sm:$0xf]
      %v780 = vld [vmem:[%s262 + $0x3c8] sm:$0xf]
      %v781 = vld [vmem:[%s262 + $0x3cc] sm:$0xf]
      %v782 = vld [vmem:[%s262 + $0x3d0] sm:$0xf]
      %v783 = vld [vmem:[%s262 + $0x3d4] sm:$0xf]
      %v784 = vld [vmem:[%s262 + $0x3d8] sm:$0xf]
      %v785 = vld [vmem:[%s262 + $0x3dc] sm:$0xf]
      %v786 = vld [vmem:[%s262 + $0x3e0] sm:$0xf]
      %v787 = vld [vmem:[%s262 + $0x3e4] sm:$0xf]
      %v788 = vld [vmem:[%s262 + $0x3e8] sm:$0xf]
      %v789 = vld [vmem:[%s262 + $0x3ec] sm:$0xf]
      %v790 = vld [vmem:[%s262 + $0x3f0] sm:$0xf]
      %v791 = vld [vmem:[%s262 + $0x3f4] sm:$0xf]
      %v792 = vld [vmem:[%s262 + $0x3f8] sm:$0xf]
      %v793 = vld [vmem:[%s262 + $0x3fc] sm:$0xf]
      %v794 = vld [vmem:[%s262 + $0x400] sm:$0xf]
      %v795 = vld [vmem:[%s262 + $0x404] sm:$0xf]
      %v796 = vld [vmem:[%s262 + $0x408] sm:$0xf]
      %v797 = vld [vmem:[%s262 + $0x40c] sm:$0xf]
      %v798 = vld [vmem:[%s262 + $0x410] sm:$0xf]
      %v799 = vld [vmem:[%s262 + $0x414] sm:$0xf]
      %v800 = vld [vmem:[%s262 + $0x418] sm:$0xf]
      %v801 = vld [vmem:[%s262 + $0x41c] sm:$0xf]
      %v802 = vld [vmem:[%s262 + $0x420] sm:$0xf]
      %v803 = vld [vmem:[%s262 + $0x424] sm:$0xf]
      %v804 = vld [vmem:[%s262 + $0x428] sm:$0xf]
      %v805 = vld [vmem:[%s262 + $0x42c] sm:$0xf]
      %v806 = vld [vmem:[%s262 + $0x430] sm:$0xf]
      %v807 = vld [vmem:[%s262 + $0x434] sm:$0xf]
      %v808 = vld [vmem:[%s262 + $0x438] sm:$0xf]
      %v809 = vld [vmem:[%s262 + $0x43c] sm:$0xf]
      %v810 = vld [vmem:[%s262 + $0x440] sm:$0xf]
      %v811 = vld [vmem:[%s262 + $0x444] sm:$0xf]
      %v812 = vld [vmem:[%s262 + $0x448] sm:$0xf]
      %v813 = vld [vmem:[%s262 + $0x44c] sm:$0xf]
      %v814 = vld [vmem:[%s262 + $0x450] sm:$0xf]
      %v815 = vld [vmem:[%s262 + $0x454] sm:$0xf]
      %v816 = vld [vmem:[%s262 + $0x458] sm:$0xf]
      %v817 = vld [vmem:[%s262 + $0x45c] sm:$0xf]
      %v818 = vld [vmem:[%s262 + $0x460] sm:$0xf]
      %v819 = vld [vmem:[%s262 + $0x464] sm:$0xf]
      %v820 = vld [vmem:[%s262 + $0x468] sm:$0xf]
      %v821 = vld [vmem:[%s262 + $0x46c] sm:$0xf]
      %v822 = vld [vmem:[%s262 + $0x470] sm:$0xf]
      %v823 = vld [vmem:[%s262 + $0x474] sm:$0xf]
      %v824 = vld [vmem:[%s262 + $0x478] sm:$0xf]
      %v825 = vld [vmem:[%s262 + $0x47c] sm:$0xf]
      %v826 = vld [vmem:[%s262 + $0x480] sm:$0xf]
      %v827 = vld [vmem:[%s262 + $0x484] sm:$0xf]
      %v828 = vld [vmem:[%s262 + $0x488] sm:$0xf]
      %v829 = vld [vmem:[%s262 + $0x48c] sm:$0xf]
      %v830 = vld [vmem:[%s262 + $0x490] sm:$0xf]
      %v831 = vld [vmem:[%s262 + $0x494] sm:$0xf]
      %v832 = vld [vmem:[%s262 + $0x498] sm:$0xf]
      %v833 = vld [vmem:[%s262 + $0x49c] sm:$0xf]
      %v834 = vld [vmem:[%s262 + $0x4a0] sm:$0xf]
      %v835 = vld [vmem:[%s262 + $0x4a4] sm:$0xf]
      %v836 = vld [vmem:[%s262 + $0x4a8] sm:$0xf]
      %v837 = vld [vmem:[%s262 + $0x4ac] sm:$0xf]
      %v838 = vld [vmem:[%s262 + $0x4b0] sm:$0xf]
      %v839 = vld [vmem:[%s262 + $0x4b4] sm:$0xf]
      %v840 = vld [vmem:[%s262 + $0x4b8] sm:$0xf]
      %v841 = vld [vmem:[%s262 + $0x4bc] sm:$0xf]
      %v842 = vld [vmem:[%s262 + $0x4c0] sm:$0xf]
      %v843 = vld [vmem:[%s262 + $0x4c4] sm:$0xf]
      %v844 = vld [vmem:[%s262 + $0x4c8] sm:$0xf]
      %v845 = vld [vmem:[%s262 + $0x4cc] sm:$0xf]
      %v846 = vld [vmem:[%s262 + $0x4d0] sm:$0xf]
      %v847 = vld [vmem:[%s262 + $0x4d4] sm:$0xf]
      %v848 = vld [vmem:[%s262 + $0x4d8] sm:$0xf]
      %v849 = vld [vmem:[%s262 + $0x4dc] sm:$0xf]
      %v850 = vld [vmem:[%s262 + $0x4e0] sm:$0xf]
      %v851 = vld [vmem:[%s262 + $0x4e4] sm:$0xf]
      %v852 = vld [vmem:[%s262 + $0x4e8] sm:$0xf]
      %v853 = vld [vmem:[%s262 + $0x4ec] sm:$0xf]
      %v854 = vld [vmem:[%s262 + $0x4f0] sm:$0xf]
      %v855 = vld [vmem:[%s262 + $0x4f4] sm:$0xf]
      %v856 = vld [vmem:[%s262 + $0x4f8] sm:$0xf]
      %v857 = vld [vmem:[%s262 + $0x4fc] sm:$0xf]
      %v858 = vld [vmem:[%s262 + $0x500] sm:$0xf]
      %v859 = vld [vmem:[%s262 + $0x504] sm:$0xf]
      %v860 = vld [vmem:[%s262 + $0x508] sm:$0xf]
      %v861 = vld [vmem:[%s262 + $0x50c] sm:$0xf]
      %v862 = vld [vmem:[%s262 + $0x510] sm:$0xf]
      %v863 = vld [vmem:[%s262 + $0x514] sm:$0xf]
      %v864 = vld [vmem:[%s262 + $0x518] sm:$0xf]
      %v865 = vld [vmem:[%s262 + $0x51c] sm:$0xf]
      %v866 = vld [vmem:[%s262 + $0x520] sm:$0xf]
      %v867 = vld [vmem:[%s262 + $0x524] sm:$0xf]
      %v868 = vld [vmem:[%s262 + $0x528] sm:$0xf]
      %v869 = vld [vmem:[%s262 + $0x52c] sm:$0xf]
      %v870 = vld [vmem:[%s262 + $0x530] sm:$0xf]
      %v871 = vld [vmem:[%s262 + $0x534] sm:$0xf]
      %v872 = vld [vmem:[%s262 + $0x538] sm:$0xf]
      %v873 = vld [vmem:[%s262 + $0x53c] sm:$0xf]
      %v874 = vld [vmem:[%s262 + $0x540] sm:$0xf]
      %v875 = vld [vmem:[%s262 + $0x544] sm:$0xf]
      %v876 = vld [vmem:[%s262 + $0x548] sm:$0xf]
      %v877 = vld [vmem:[%s262 + $0x54c] sm:$0xf]
      %v878 = vld [vmem:[%s262 + $0x550] sm:$0xf]
      %v879 = vld [vmem:[%s262 + $0x554] sm:$0xf]
      %v880 = vld [vmem:[%s262 + $0x558] sm:$0xf]
      %v881 = vld [vmem:[%s262 + $0x55c] sm:$0xf]
      %v882 = vld [vmem:[%s262 + $0x560] sm:$0xf]
      %v883 = vld [vmem:[%s262 + $0x564] sm:$0xf]
      %v884 = vld [vmem:[%s262 + $0x568] sm:$0xf]
      %v885 = vld [vmem:[%s262 + $0x56c] sm:$0xf]
      %v886 = vld [vmem:[%s262 + $0x570] sm:$0xf]
      %v887 = vld [vmem:[%s262 + $0x574] sm:$0xf]
      %v888 = vld [vmem:[%s262 + $0x578] sm:$0xf]
      %v889 = vld [vmem:[%s262 + $0x57c] sm:$0xf]
      %v890 = vld [vmem:[%s262 + $0x580] sm:$0xf]
      %v891 = vld [vmem:[%s262 + $0x584] sm:$0xf]
      %v892 = vld [vmem:[%s262 + $0x588] sm:$0xf]
      %v893 = vld [vmem:[%s262 + $0x58c] sm:$0xf]
      %v894 = vld [vmem:[%s262 + $0x590] sm:$0xf]
      %v895 = vld [vmem:[%s262 + $0x594] sm:$0xf]
      %v896 = vld [vmem:[%s262 + $0x598] sm:$0xf]
      %v897 = vld [vmem:[%s262 + $0x59c] sm:$0xf]
      %v898 = vld [vmem:[%s262 + $0x5a0] sm:$0xf]
      %v899 = vld [vmem:[%s262 + $0x5a4] sm:$0xf]
      %v900 = vld [vmem:[%s262 + $0x5a8] sm:$0xf]
      %v901 = vld [vmem:[%s262 + $0x5ac] sm:$0xf]
      %v902 = vld [vmem:[%s262 + $0x5b0] sm:$0xf]
      %v903 = vld [vmem:[%s262 + $0x5b4] sm:$0xf]
      %v904 = vld [vmem:[%s262 + $0x5b8] sm:$0xf]
      %v905 = vld [vmem:[%s262 + $0x5bc] sm:$0xf]
      %v906 = vld [vmem:[%s262 + $0x5c0] sm:$0xf]
      %v907 = vld [vmem:[%s262 + $0x5c4] sm:$0xf]
      %v908 = vld [vmem:[%s262 + $0x5c8] sm:$0xf]
      %v909 = vld [vmem:[%s262 + $0x5cc] sm:$0xf]
      %v910 = vld [vmem:[%s262 + $0x5d0] sm:$0xf]
      %v911 = vld [vmem:[%s262 + $0x5d4] sm:$0xf]
      %v912 = vld [vmem:[%s262 + $0x5d8] sm:$0xf]
      %v913 = vld [vmem:[%s262 + $0x5dc] sm:$0xf]
      %v914 = vld [vmem:[%s262 + $0x5e0] sm:$0xf]
      %v915 = vld [vmem:[%s262 + $0x5e4] sm:$0xf]
      %v916 = vld [vmem:[%s262 + $0x5e8] sm:$0xf]
      %v917 = vld [vmem:[%s262 + $0x5ec] sm:$0xf]
      %v918 = vld [vmem:[%s262 + $0x5f0] sm:$0xf]
      %v919 = vld [vmem:[%s262 + $0x5f4] sm:$0xf]
      %v920 = vld [vmem:[%s262 + $0x5f8] sm:$0xf]
      %v921 = vld [vmem:[%s262 + $0x5fc] sm:$0xf]
      %v922 = vld [vmem:[%s262 + $0x600] sm:$0xf]
      %v923 = vld [vmem:[%s262 + $0x604] sm:$0xf]
      %v924 = vld [vmem:[%s262 + $0x608] sm:$0xf]
      %v925 = vld [vmem:[%s262 + $0x60c] sm:$0xf]
      %v926 = vld [vmem:[%s262 + $0x610] sm:$0xf]
      %v927 = vld [vmem:[%s262 + $0x614] sm:$0xf]
      %v928 = vld [vmem:[%s262 + $0x618] sm:$0xf]
      %v929 = vld [vmem:[%s262 + $0x61c] sm:$0xf]
      %v930 = vld [vmem:[%s262 + $0x620] sm:$0xf]
      %v931 = vld [vmem:[%s262 + $0x624] sm:$0xf]
      %v932 = vld [vmem:[%s262 + $0x628] sm:$0xf]
      %v933 = vld [vmem:[%s262 + $0x62c] sm:$0xf]
      %v934 = vld [vmem:[%s262 + $0x630] sm:$0xf]
      %v935 = vld [vmem:[%s262 + $0x634] sm:$0xf]
      %v936 = vld [vmem:[%s262 + $0x638] sm:$0xf]
      %v937 = vld [vmem:[%s262 + $0x63c] sm:$0xf]
      %v938 = vld [vmem:[%s262 + $0x640] sm:$0xf]
      %v939 = vld [vmem:[%s262 + $0x644] sm:$0xf]
      %v940 = vld [vmem:[%s262 + $0x648] sm:$0xf]
      %v941 = vld [vmem:[%s262 + $0x64c] sm:$0xf]
      %v942 = vld [vmem:[%s262 + $0x650] sm:$0xf]
      %v943 = vld [vmem:[%s262 + $0x654] sm:$0xf]
      %v944 = vld [vmem:[%s262 + $0x658] sm:$0xf]
      %v945 = vld [vmem:[%s262 + $0x65c] sm:$0xf]
      %v946 = vld [vmem:[%s262 + $0x660] sm:$0xf]
      %v947 = vld [vmem:[%s262 + $0x664] sm:$0xf]
      %v948 = vld [vmem:[%s262 + $0x668] sm:$0xf]
      %v949 = vld [vmem:[%s262 + $0x66c] sm:$0xf]
      %v950 = vld [vmem:[%s262 + $0x670] sm:$0xf]
      %v951 = vld [vmem:[%s262 + $0x674] sm:$0xf]
      %v952 = vld [vmem:[%s262 + $0x678] sm:$0xf]
      %v953 = vld [vmem:[%s262 + $0x67c] sm:$0xf]
      %v954 = vld [vmem:[%s262 + $0x680] sm:$0xf]
      %v955 = vld [vmem:[%s262 + $0x684] sm:$0xf]
      %v956 = vld [vmem:[%s262 + $0x688] sm:$0xf]
      %v957 = vld [vmem:[%s262 + $0x68c] sm:$0xf]
      %v958 = vld [vmem:[%s262 + $0x690] sm:$0xf]
      %v959 = vld [vmem:[%s262 + $0x694] sm:$0xf]
      %v960 = vld [vmem:[%s262 + $0x698] sm:$0xf]
      %v961 = vld [vmem:[%s262 + $0x69c] sm:$0xf]
      %v962 = vld [vmem:[%s262 + $0x6a0] sm:$0xf]
      %v963 = vld [vmem:[%s262 + $0x6a4] sm:$0xf]
      %v964 = vld [vmem:[%s262 + $0x6a8] sm:$0xf]
      %v965 = vld [vmem:[%s262 + $0x6ac] sm:$0xf]
      %v966 = vld [vmem:[%s262 + $0x6b0] sm:$0xf]
      %v967 = vld [vmem:[%s262 + $0x6b4] sm:$0xf]
      %v968 = vld [vmem:[%s262 + $0x6b8] sm:$0xf]
      %v969 = vld [vmem:[%s262 + $0x6bc] sm:$0xf]
      %v970 = vld [vmem:[%s262 + $0x6c0] sm:$0xf]
      %v971 = vld [vmem:[%s262 + $0x6c4] sm:$0xf]
      %v972 = vld [vmem:[%s262 + $0x6c8] sm:$0xf]
      %v973 = vld [vmem:[%s262 + $0x6cc] sm:$0xf]
      %v974 = vld [vmem:[%s262 + $0x6d0] sm:$0xf]
      %v975 = vld [vmem:[%s262 + $0x6d4] sm:$0xf]
      %v976 = vld [vmem:[%s262 + $0x6d8] sm:$0xf]
      %v977 = vld [vmem:[%s262 + $0x6dc] sm:$0xf]
      %v978 = vld [vmem:[%s262 + $0x6e0] sm:$0xf]
      %v979 = vld [vmem:[%s262 + $0x6e4] sm:$0xf]
      %v980 = vld [vmem:[%s262 + $0x6e8] sm:$0xf]
      %v981 = vld [vmem:[%s262 + $0x6ec] sm:$0xf]
      %v982 = vld [vmem:[%s262 + $0x6f0] sm:$0xf]
      %v983 = vld [vmem:[%s262 + $0x6f4] sm:$0xf]
      %v984 = vld [vmem:[%s262 + $0x6f8] sm:$0xf]
      %v985 = vld [vmem:[%s262 + $0x6fc] sm:$0xf]
      %v986 = vld [vmem:[%s262 + $0x700] sm:$0xf]
      %v987 = vld [vmem:[%s262 + $0x704] sm:$0xf]
      %v988 = vld [vmem:[%s262 + $0x708] sm:$0xf]
      %v989 = vld [vmem:[%s262 + $0x70c] sm:$0xf]
      %v990 = vld [vmem:[%s262 + $0x710] sm:$0xf]
      %v991 = vld [vmem:[%s262 + $0x714] sm:$0xf]
      %v992 = vld [vmem:[%s262 + $0x718] sm:$0xf]
      %v993 = vld [vmem:[%s262 + $0x71c] sm:$0xf]
      %v994 = vld [vmem:[%s262 + $0x720] sm:$0xf]
      %v995 = vld [vmem:[%s262 + $0x724] sm:$0xf]
      %v996 = vld [vmem:[%s262 + $0x728] sm:$0xf]
      %v997 = vld [vmem:[%s262 + $0x72c] sm:$0xf]
      %v998 = vld [vmem:[%s262 + $0x730] sm:$0xf]
      %v999 = vld [vmem:[%s262 + $0x734] sm:$0xf]
      %v1000 = vld [vmem:[%s262 + $0x738] sm:$0xf]
      %v1001 = vld [vmem:[%s262 + $0x73c] sm:$0xf]
      %v1002 = vld [vmem:[%s262 + $0x740] sm:$0xf]
      %v1003 = vld [vmem:[%s262 + $0x744] sm:$0xf]
      %v1004 = vld [vmem:[%s262 + $0x748] sm:$0xf]
      %v1005 = vld [vmem:[%s262 + $0x74c] sm:$0xf]
      %v1006 = vld [vmem:[%s262 + $0x750] sm:$0xf]
      %v1007 = vld [vmem:[%s262 + $0x754] sm:$0xf]
      %v1008 = vld [vmem:[%s262 + $0x758] sm:$0xf]
      %v1009 = vld [vmem:[%s262 + $0x75c] sm:$0xf]
      %v1010 = vld [vmem:[%s262 + $0x760] sm:$0xf]
      %v1011 = vld [vmem:[%s262 + $0x764] sm:$0xf]
      %v1012 = vld [vmem:[%s262 + $0x768] sm:$0xf]
      %v1013 = vld [vmem:[%s262 + $0x76c] sm:$0xf]
      %v1014 = vld [vmem:[%s262 + $0x770] sm:$0xf]
      %v1015 = vld [vmem:[%s262 + $0x774] sm:$0xf]
      %v1016 = vld [vmem:[%s262 + $0x778] sm:$0xf]
      %v1017 = vld [vmem:[%s262 + $0x77c] sm:$0xf]
      %v1018 = vld [vmem:[%s262 + $0x780] sm:$0xf]
      %v1019 = vld [vmem:[%s262 + $0x784] sm:$0xf]
      %v1020 = vld [vmem:[%s262 + $0x788] sm:$0xf]
      %v1021 = vld [vmem:[%s262 + $0x78c] sm:$0xf]
      %v1022 = vld [vmem:[%s262 + $0x790] sm:$0xf]
      %v1023 = vld [vmem:[%s262 + $0x794] sm:$0xf]
      %v1024 = vld [vmem:[%s262 + $0x798] sm:$0xf]
      %v1025 = vld [vmem:[%s262 + $0x79c] sm:$0xf]
      %v1026 = vld [vmem:[%s262 + $0x7a0] sm:$0xf]
      %v1027 = vld [vmem:[%s262 + $0x7a4] sm:$0xf]
      %v1028 = vld [vmem:[%s262 + $0x7a8] sm:$0xf]
      %v1029 = vld [vmem:[%s262 + $0x7ac] sm:$0xf]
      %v1030 = vld [vmem:[%s262 + $0x7b0] sm:$0xf]
      %v1031 = vld [vmem:[%s262 + $0x7b4] sm:$0xf]
      %v1032 = vld [vmem:[%s262 + $0x7b8] sm:$0xf]
      %v1033 = vld [vmem:[%s262 + $0x7bc] sm:$0xf]
      %v1034 = vld [vmem:[%s262 + $0x7c0] sm:$0xf]
      %v1035 = vld [vmem:[%s262 + $0x7c4] sm:$0xf]
      %v1036 = vld [vmem:[%s262 + $0x7c8] sm:$0xf]
      %v1037 = vld [vmem:[%s262 + $0x7cc] sm:$0xf]
      %v1038 = vld [vmem:[%s262 + $0x7d0] sm:$0xf]
      %v1039 = vld [vmem:[%s262 + $0x7d4] sm:$0xf]
      %v1040 = vld [vmem:[%s262 + $0x7d8] sm:$0xf]
      %v1041 = vld [vmem:[%s262 + $0x7dc] sm:$0xf]
      %v1042 = vld [vmem:[%s262 + $0x7e0] sm:$0xf]
      %v1043 = vld [vmem:[%s262 + $0x7e4] sm:$0xf]
      %v1044 = vld [vmem:[%s262 + $0x7e8] sm:$0xf]
      %v1045 = vld [vmem:[%s262 + $0x7ec] sm:$0xf]
      %v1046 = vld [vmem:[%s262 + $0x7f0] sm:$0xf]
      %v1047 = vld [vmem:[%s262 + $0x7f4] sm:$0xf]
      %v1048 = vld [vmem:[%s262 + $0x7f8] sm:$0xf]
      %v1049 = vld [vmem:[%s262 + $0x7fc] sm:$0xf]
      %v1050 = vld [vmem:[%s2] sm:$0xff]
      %v1051 = vld [vmem:[%s2 + $0x8] sm:$0xff]
      %v1052 = vld [vmem:[%s2 + $0x10] sm:$0xff]
      %v1053 = vld [vmem:[%s2 + $0x18] sm:$0xff]
      %v1054 = vld [vmem:[%s2 + $0x20] sm:$0xff]
      %v1055 = vld [vmem:[%s2 + $0x28] sm:$0xff]
      %v1056 = vld [vmem:[%s2 + $0x30] sm:$0xff]
      %v1057 = vld [vmem:[%s2 + $0x38] sm:$0xff]
      %v1058 = vld [vmem:[%s2 + $0x40] sm:$0xff]
      %v1059 = vld [vmem:[%s2 + $0x48] sm:$0xff]
      %v1060 = vld [vmem:[%s2 + $0x50] sm:$0xff]
      %v1061 = vld [vmem:[%s2 + $0x58] sm:$0xff]
      %v1062 = vld [vmem:[%s2 + $0x60] sm:$0xff]
      %v1063 = vld [vmem:[%s2 + $0x68] sm:$0xff]
      %v1064 = vld [vmem:[%s2 + $0x70] sm:$0xff]
      %v1065 = vld [vmem:[%s2 + $0x78] sm:$0xff]
      %1067 = vset.pattern.permute.xlu0 0
      %1068 = vperm.xlu0 %1067, %v1050
      %v1069 = vpop.permute.xlu0 %1068
      %1072 = vset.pattern.permute.xlu0 0
      %1073 = vperm.xlu0 %1072, %v1051
      %v1074 = vpop.permute.xlu0 %1073
      %1077 = vset.pattern.permute.xlu0 0
      %1078 = vperm.xlu0 %1077, %v1052
      %v1079 = vpop.permute.xlu0 %1078
      %1082 = vset.pattern.permute.xlu0 0
      %1083 = vperm.xlu0 %1082, %v1053
      %v1084 = vpop.permute.xlu0 %1083
      %1087 = vset.pattern.permute.xlu0 0
      %1088 = vperm.xlu0 %1087, %v1054
      %v1089 = vpop.permute.xlu0 %1088
      %1092 = vset.pattern.permute.xlu0 0
      %1093 = vperm.xlu0 %1092, %v1055
      %v1094 = vpop.permute.xlu0 %1093
      %1097 = vset.pattern.permute.xlu0 0
      %1098 = vperm.xlu0 %1097, %v1056
      %v1099 = vpop.permute.xlu0 %1098
      %1102 = vset.pattern.permute.xlu0 0
      %1103 = vperm.xlu0 %1102, %v1057
      %v1104 = vpop.permute.xlu0 %1103
      %1107 = vset.pattern.permute.xlu0 0
      %1108 = vperm.xlu0 %1107, %v1058
      %v1109 = vpop.permute.xlu0 %1108
      %1112 = vset.pattern.permute.xlu0 0
      %1113 = vperm.xlu0 %1112, %v1059
      %v1114 = vpop.permute.xlu0 %1113
      %1117 = vset.pattern.permute.xlu0 0
      %1118 = vperm.xlu0 %1117, %v1060
      %v1119 = vpop.permute.xlu0 %1118
      %1122 = vset.pattern.permute.xlu0 0
      %1123 = vperm.xlu0 %1122, %v1061
      %v1124 = vpop.permute.xlu0 %1123
      %1127 = vset.pattern.permute.xlu0 0
      %1128 = vperm.xlu0 %1127, %v1062
      %v1129 = vpop.permute.xlu0 %1128
      %1132 = vset.pattern.permute.xlu0 0
      %1133 = vperm.xlu0 %1132, %v1063
      %v1134 = vpop.permute.xlu0 %1133
      %1137 = vset.pattern.permute.xlu0 0
      %1138 = vperm.xlu0 %1137, %v1064
      %v1139 = vpop.permute.xlu0 %1138
      %1142 = vset.pattern.permute.xlu0 0
      %1143 = vperm.xlu0 %1142, %v1065
      %v1144 = vpop.permute.xlu0 %1143
      %v1402 = vunpack.c.l.b16 %v282
      %v1403 = vunpack.c.h.b16 %v282
      %v1404 = vunpack.c.l.b16 %v283
      %v1405 = vunpack.c.h.b16 %v283
      %v1406 = vunpack.c.l.b16 %v284
      %v1407 = vunpack.c.h.b16 %v284
      %v1408 = vunpack.c.l.b16 %v285
      %v1409 = vunpack.c.h.b16 %v285
      %v1410 = vunpack.c.l.b16 %v286
      %v1411 = vunpack.c.h.b16 %v286
      %v1412 = vunpack.c.l.b16 %v287
      %v1413 = vunpack.c.h.b16 %v287
      %v1414 = vunpack.c.l.b16 %v288
      %v1415 = vunpack.c.h.b16 %v288
      %v1416 = vunpack.c.l.b16 %v289
      %v1417 = vunpack.c.h.b16 %v289
      %v1418 = vunpack.c.l.b16 %v290
      %v1419 = vunpack.c.h.b16 %v290
      %v1420 = vunpack.c.l.b16 %v291
      %v1421 = vunpack.c.h.b16 %v291
      %v1422 = vunpack.c.l.b16 %v292
      %v1423 = vunpack.c.h.b16 %v292
      %v1424 = vunpack.c.l.b16 %v293
      %v1425 = vunpack.c.h.b16 %v293
      %v1426 = vunpack.c.l.b16 %v294
      %v1427 = vunpack.c.h.b16 %v294
      %v1428 = vunpack.c.l.b16 %v295
      %v1429 = vunpack.c.h.b16 %v295
      %v1430 = vunpack.c.l.b16 %v296
      %v1431 = vunpack.c.h.b16 %v296
      %v1432 = vunpack.c.l.b16 %v297
      %v1433 = vunpack.c.h.b16 %v297
      %v1434 = vunpack.c.l.b16 %v298
      %v1435 = vunpack.c.h.b16 %v298
      %v1436 = vunpack.c.l.b16 %v299
      %v1437 = vunpack.c.h.b16 %v299
      %v1438 = vunpack.c.l.b16 %v300
      %v1439 = vunpack.c.h.b16 %v300
      %v1440 = vunpack.c.l.b16 %v301
      %v1441 = vunpack.c.h.b16 %v301
      %v1442 = vunpack.c.l.b16 %v302
      %v1443 = vunpack.c.h.b16 %v302
      %v1444 = vunpack.c.l.b16 %v303
      %v1445 = vunpack.c.h.b16 %v303
      %v1446 = vunpack.c.l.b16 %v304
      %v1447 = vunpack.c.h.b16 %v304
      %v1448 = vunpack.c.l.b16 %v305
      %v1449 = vunpack.c.h.b16 %v305
      %v1450 = vunpack.c.l.b16 %v306
      %v1451 = vunpack.c.h.b16 %v306
      %v1452 = vunpack.c.l.b16 %v307
      %v1453 = vunpack.c.h.b16 %v307
      %v1454 = vunpack.c.l.b16 %v308
      %v1455 = vunpack.c.h.b16 %v308
      %v1456 = vunpack.c.l.b16 %v309
      %v1457 = vunpack.c.h.b16 %v309
      %v1458 = vunpack.c.l.b16 %v310
      %v1459 = vunpack.c.h.b16 %v310
      %v1460 = vunpack.c.l.b16 %v311
      %v1461 = vunpack.c.h.b16 %v311
      %v1462 = vunpack.c.l.b16 %v312
      %v1463 = vunpack.c.h.b16 %v312
      %v1464 = vunpack.c.l.b16 %v313
      %v1465 = vunpack.c.h.b16 %v313
      %v1466 = vunpack.c.l.b16 %v314
      %v1467 = vunpack.c.h.b16 %v314
      %v1468 = vunpack.c.l.b16 %v315
      %v1469 = vunpack.c.h.b16 %v315
      %v1470 = vunpack.c.l.b16 %v316
      %v1471 = vunpack.c.h.b16 %v316
      %v1472 = vunpack.c.l.b16 %v317
      %v1473 = vunpack.c.h.b16 %v317
      %v1474 = vunpack.c.l.b16 %v318
      %v1475 = vunpack.c.h.b16 %v318
      %v1476 = vunpack.c.l.b16 %v319
      %v1477 = vunpack.c.h.b16 %v319
      %v1478 = vunpack.c.l.b16 %v320
      %v1479 = vunpack.c.h.b16 %v320
      %v1480 = vunpack.c.l.b16 %v321
      %v1481 = vunpack.c.h.b16 %v321
      %v1482 = vunpack.c.l.b16 %v322
      %v1483 = vunpack.c.h.b16 %v322
      %v1484 = vunpack.c.l.b16 %v323
      %v1485 = vunpack.c.h.b16 %v323
      %v1486 = vunpack.c.l.b16 %v324
      %v1487 = vunpack.c.h.b16 %v324
      %v1488 = vunpack.c.l.b16 %v325
      %v1489 = vunpack.c.h.b16 %v325
      %v1490 = vunpack.c.l.b16 %v326
      %v1491 = vunpack.c.h.b16 %v326
      %v1492 = vunpack.c.l.b16 %v327
      %v1493 = vunpack.c.h.b16 %v327
      %v1494 = vunpack.c.l.b16 %v328
      %v1495 = vunpack.c.h.b16 %v328
      %v1496 = vunpack.c.l.b16 %v329
      %v1497 = vunpack.c.h.b16 %v329
      %v1498 = vunpack.c.l.b16 %v330
      %v1499 = vunpack.c.h.b16 %v330
      %v1500 = vunpack.c.l.b16 %v331
      %v1501 = vunpack.c.h.b16 %v331
      %v1502 = vunpack.c.l.b16 %v332
      %v1503 = vunpack.c.h.b16 %v332
      %v1504 = vunpack.c.l.b16 %v333
      %v1505 = vunpack.c.h.b16 %v333
      %v1506 = vunpack.c.l.b16 %v334
      %v1507 = vunpack.c.h.b16 %v334
      %v1508 = vunpack.c.l.b16 %v335
      %v1509 = vunpack.c.h.b16 %v335
      %v1510 = vunpack.c.l.b16 %v336
      %v1511 = vunpack.c.h.b16 %v336
      %v1512 = vunpack.c.l.b16 %v337
      %v1513 = vunpack.c.h.b16 %v337
      %v1514 = vunpack.c.l.b16 %v338
      %v1515 = vunpack.c.h.b16 %v338
      %v1516 = vunpack.c.l.b16 %v339
      %v1517 = vunpack.c.h.b16 %v339
      %v1518 = vunpack.c.l.b16 %v340
      %v1519 = vunpack.c.h.b16 %v340
      %v1520 = vunpack.c.l.b16 %v341
      %v1521 = vunpack.c.h.b16 %v341
      %v1522 = vunpack.c.l.b16 %v342
      %v1523 = vunpack.c.h.b16 %v342
      %v1524 = vunpack.c.l.b16 %v343
      %v1525 = vunpack.c.h.b16 %v343
      %v1526 = vunpack.c.l.b16 %v344
      %v1527 = vunpack.c.h.b16 %v344
      %v1528 = vunpack.c.l.b16 %v345
      %v1529 = vunpack.c.h.b16 %v345
      %v1530 = vunpack.c.l.b16 %v346
      %v1531 = vunpack.c.h.b16 %v346
      %v1532 = vunpack.c.l.b16 %v347
      %v1533 = vunpack.c.h.b16 %v347
      %v1534 = vunpack.c.l.b16 %v348
      %v1535 = vunpack.c.h.b16 %v348
      %v1536 = vunpack.c.l.b16 %v349
      %v1537 = vunpack.c.h.b16 %v349
      %v1538 = vunpack.c.l.b16 %v350
      %v1539 = vunpack.c.h.b16 %v350
      %v1540 = vunpack.c.l.b16 %v351
      %v1541 = vunpack.c.h.b16 %v351
      %v1542 = vunpack.c.l.b16 %v352
      %v1543 = vunpack.c.h.b16 %v352
      %v1544 = vunpack.c.l.b16 %v353
      %v1545 = vunpack.c.h.b16 %v353
      %v1546 = vunpack.c.l.b16 %v354
      %v1547 = vunpack.c.h.b16 %v354
      %v1548 = vunpack.c.l.b16 %v355
      %v1549 = vunpack.c.h.b16 %v355
      %v1550 = vunpack.c.l.b16 %v356
      %v1551 = vunpack.c.h.b16 %v356
      %v1552 = vunpack.c.l.b16 %v357
      %v1553 = vunpack.c.h.b16 %v357
      %v1554 = vunpack.c.l.b16 %v358
      %v1555 = vunpack.c.h.b16 %v358
      %v1556 = vunpack.c.l.b16 %v359
      %v1557 = vunpack.c.h.b16 %v359
      %v1558 = vunpack.c.l.b16 %v360
      %v1559 = vunpack.c.h.b16 %v360
      %v1560 = vunpack.c.l.b16 %v361
      %v1561 = vunpack.c.h.b16 %v361
      %v1562 = vunpack.c.l.b16 %v362
      %v1563 = vunpack.c.h.b16 %v362
      %v1564 = vunpack.c.l.b16 %v363
      %v1565 = vunpack.c.h.b16 %v363
      %v1566 = vunpack.c.l.b16 %v364
      %v1567 = vunpack.c.h.b16 %v364
      %v1568 = vunpack.c.l.b16 %v365
      %v1569 = vunpack.c.h.b16 %v365
      %v1570 = vunpack.c.l.b16 %v366
      %v1571 = vunpack.c.h.b16 %v366
      %v1572 = vunpack.c.l.b16 %v367
      %v1573 = vunpack.c.h.b16 %v367
      %v1574 = vunpack.c.l.b16 %v368
      %v1575 = vunpack.c.h.b16 %v368
      %v1576 = vunpack.c.l.b16 %v369
      %v1577 = vunpack.c.h.b16 %v369
      %v1578 = vunpack.c.l.b16 %v370
      %v1579 = vunpack.c.h.b16 %v370
      %v1580 = vunpack.c.l.b16 %v371
      %v1581 = vunpack.c.h.b16 %v371
      %v1582 = vunpack.c.l.b16 %v372
      %v1583 = vunpack.c.h.b16 %v372
      %v1584 = vunpack.c.l.b16 %v373
      %v1585 = vunpack.c.h.b16 %v373
      %v1586 = vunpack.c.l.b16 %v374
      %v1587 = vunpack.c.h.b16 %v374
      %v1588 = vunpack.c.l.b16 %v375
      %v1589 = vunpack.c.h.b16 %v375
      %v1590 = vunpack.c.l.b16 %v376
      %v1591 = vunpack.c.h.b16 %v376
      %v1592 = vunpack.c.l.b16 %v377
      %v1593 = vunpack.c.h.b16 %v377
      %v1594 = vunpack.c.l.b16 %v378
      %v1595 = vunpack.c.h.b16 %v378
      %v1596 = vunpack.c.l.b16 %v379
      %v1597 = vunpack.c.h.b16 %v379
      %v1598 = vunpack.c.l.b16 %v380
      %v1599 = vunpack.c.h.b16 %v380
      %v1600 = vunpack.c.l.b16 %v381
      %v1601 = vunpack.c.h.b16 %v381
      %v1602 = vunpack.c.l.b16 %v382
      %v1603 = vunpack.c.h.b16 %v382
      %v1604 = vunpack.c.l.b16 %v383
      %v1605 = vunpack.c.h.b16 %v383
      %v1606 = vunpack.c.l.b16 %v384
      %v1607 = vunpack.c.h.b16 %v384
      %v1608 = vunpack.c.l.b16 %v385
      %v1609 = vunpack.c.h.b16 %v385
      %v1610 = vunpack.c.l.b16 %v386
      %v1611 = vunpack.c.h.b16 %v386
      %v1612 = vunpack.c.l.b16 %v387
      %v1613 = vunpack.c.h.b16 %v387
      %v1614 = vunpack.c.l.b16 %v388
      %v1615 = vunpack.c.h.b16 %v388
      %v1616 = vunpack.c.l.b16 %v389
      %v1617 = vunpack.c.h.b16 %v389
      %v1618 = vunpack.c.l.b16 %v390
      %v1619 = vunpack.c.h.b16 %v390
      %v1620 = vunpack.c.l.b16 %v391
      %v1621 = vunpack.c.h.b16 %v391
      %v1622 = vunpack.c.l.b16 %v392
      %v1623 = vunpack.c.h.b16 %v392
      %v1624 = vunpack.c.l.b16 %v393
      %v1625 = vunpack.c.h.b16 %v393
      %v1626 = vunpack.c.l.b16 %v394
      %v1627 = vunpack.c.h.b16 %v394
      %v1628 = vunpack.c.l.b16 %v395
      %v1629 = vunpack.c.h.b16 %v395
      %v1630 = vunpack.c.l.b16 %v396
      %v1631 = vunpack.c.h.b16 %v396
      %v1632 = vunpack.c.l.b16 %v397
      %v1633 = vunpack.c.h.b16 %v397
      %v1634 = vunpack.c.l.b16 %v398
      %v1635 = vunpack.c.h.b16 %v398
      %v1636 = vunpack.c.l.b16 %v399
      %v1637 = vunpack.c.h.b16 %v399
      %v1638 = vunpack.c.l.b16 %v400
      %v1639 = vunpack.c.h.b16 %v400
      %v1640 = vunpack.c.l.b16 %v401
      %v1641 = vunpack.c.h.b16 %v401
      %v1642 = vunpack.c.l.b16 %v402
      %v1643 = vunpack.c.h.b16 %v402
      %v1644 = vunpack.c.l.b16 %v403
      %v1645 = vunpack.c.h.b16 %v403
      %v1646 = vunpack.c.l.b16 %v404
      %v1647 = vunpack.c.h.b16 %v404
      %v1648 = vunpack.c.l.b16 %v405
      %v1649 = vunpack.c.h.b16 %v405
      %v1650 = vunpack.c.l.b16 %v406
      %v1651 = vunpack.c.h.b16 %v406
      %v1652 = vunpack.c.l.b16 %v407
      %v1653 = vunpack.c.h.b16 %v407
      %v1654 = vunpack.c.l.b16 %v408
      %v1655 = vunpack.c.h.b16 %v408
      %v1656 = vunpack.c.l.b16 %v409
      %v1657 = vunpack.c.h.b16 %v409
      %v1658 = vunpack.c.l.b16 %v410
      %v1659 = vunpack.c.h.b16 %v410
      %v1660 = vunpack.c.l.b16 %v411
      %v1661 = vunpack.c.h.b16 %v411
      %v1662 = vunpack.c.l.b16 %v412
      %v1663 = vunpack.c.h.b16 %v412
      %v1664 = vunpack.c.l.b16 %v413
      %v1665 = vunpack.c.h.b16 %v413
      %v1666 = vunpack.c.l.b16 %v414
      %v1667 = vunpack.c.h.b16 %v414
      %v1668 = vunpack.c.l.b16 %v415
      %v1669 = vunpack.c.h.b16 %v415
      %v1670 = vunpack.c.l.b16 %v416
      %v1671 = vunpack.c.h.b16 %v416
      %v1672 = vunpack.c.l.b16 %v417
      %v1673 = vunpack.c.h.b16 %v417
      %v1674 = vunpack.c.l.b16 %v418
      %v1675 = vunpack.c.h.b16 %v418
      %v1676 = vunpack.c.l.b16 %v419
      %v1677 = vunpack.c.h.b16 %v419
      %v1678 = vunpack.c.l.b16 %v420
      %v1679 = vunpack.c.h.b16 %v420
      %v1680 = vunpack.c.l.b16 %v421
      %v1681 = vunpack.c.h.b16 %v421
      %v1682 = vunpack.c.l.b16 %v422
      %v1683 = vunpack.c.h.b16 %v422
      %v1684 = vunpack.c.l.b16 %v423
      %v1685 = vunpack.c.h.b16 %v423
      %v1686 = vunpack.c.l.b16 %v424
      %v1687 = vunpack.c.h.b16 %v424
      %v1688 = vunpack.c.l.b16 %v425
      %v1689 = vunpack.c.h.b16 %v425
      %v1690 = vunpack.c.l.b16 %v426
      %v1691 = vunpack.c.h.b16 %v426
      %v1692 = vunpack.c.l.b16 %v427
      %v1693 = vunpack.c.h.b16 %v427
      %v1694 = vunpack.c.l.b16 %v428
      %v1695 = vunpack.c.h.b16 %v428
      %v1696 = vunpack.c.l.b16 %v429
      %v1697 = vunpack.c.h.b16 %v429
      %v1698 = vunpack.c.l.b16 %v430
      %v1699 = vunpack.c.h.b16 %v430
      %v1700 = vunpack.c.l.b16 %v431
      %v1701 = vunpack.c.h.b16 %v431
      %v1702 = vunpack.c.l.b16 %v432
      %v1703 = vunpack.c.h.b16 %v432
      %v1704 = vunpack.c.l.b16 %v433
      %v1705 = vunpack.c.h.b16 %v433
      %v1706 = vunpack.c.l.b16 %v434
      %v1707 = vunpack.c.h.b16 %v434
      %v1708 = vunpack.c.l.b16 %v435
      %v1709 = vunpack.c.h.b16 %v435
      %v1710 = vunpack.c.l.b16 %v436
      %v1711 = vunpack.c.h.b16 %v436
      %v1712 = vunpack.c.l.b16 %v437
      %v1713 = vunpack.c.h.b16 %v437
      %v1714 = vunpack.c.l.b16 %v438
      %v1715 = vunpack.c.h.b16 %v438
      %v1716 = vunpack.c.l.b16 %v439
      %v1717 = vunpack.c.h.b16 %v439
      %v1718 = vunpack.c.l.b16 %v440
      %v1719 = vunpack.c.h.b16 %v440
      %v1720 = vunpack.c.l.b16 %v441
      %v1721 = vunpack.c.h.b16 %v441
      %v1722 = vunpack.c.l.b16 %v442
      %v1723 = vunpack.c.h.b16 %v442
      %v1724 = vunpack.c.l.b16 %v443
      %v1725 = vunpack.c.h.b16 %v443
      %v1726 = vunpack.c.l.b16 %v444
      %v1727 = vunpack.c.h.b16 %v444
      %v1728 = vunpack.c.l.b16 %v445
      %v1729 = vunpack.c.h.b16 %v445
      %v1730 = vunpack.c.l.b16 %v446
      %v1731 = vunpack.c.h.b16 %v446
      %v1732 = vunpack.c.l.b16 %v447
      %v1733 = vunpack.c.h.b16 %v447
      %v1734 = vunpack.c.l.b16 %v448
      %v1735 = vunpack.c.h.b16 %v448
      %v1736 = vunpack.c.l.b16 %v449
      %v1737 = vunpack.c.h.b16 %v449
      %v1738 = vunpack.c.l.b16 %v450
      %v1739 = vunpack.c.h.b16 %v450
      %v1740 = vunpack.c.l.b16 %v451
      %v1741 = vunpack.c.h.b16 %v451
      %v1742 = vunpack.c.l.b16 %v452
      %v1743 = vunpack.c.h.b16 %v452
      %v1744 = vunpack.c.l.b16 %v453
      %v1745 = vunpack.c.h.b16 %v453
      %v1746 = vunpack.c.l.b16 %v454
      %v1747 = vunpack.c.h.b16 %v454
      %v1748 = vunpack.c.l.b16 %v455
      %v1749 = vunpack.c.h.b16 %v455
      %v1750 = vunpack.c.l.b16 %v456
      %v1751 = vunpack.c.h.b16 %v456
      %v1752 = vunpack.c.l.b16 %v457
      %v1753 = vunpack.c.h.b16 %v457
      %v1754 = vunpack.c.l.b16 %v458
      %v1755 = vunpack.c.h.b16 %v458
      %v1756 = vunpack.c.l.b16 %v459
      %v1757 = vunpack.c.h.b16 %v459
      %v1758 = vunpack.c.l.b16 %v460
      %v1759 = vunpack.c.h.b16 %v460
      %v1760 = vunpack.c.l.b16 %v461
      %v1761 = vunpack.c.h.b16 %v461
      %v1762 = vunpack.c.l.b16 %v462
      %v1763 = vunpack.c.h.b16 %v462
      %v1764 = vunpack.c.l.b16 %v463
      %v1765 = vunpack.c.h.b16 %v463
      %v1766 = vunpack.c.l.b16 %v464
      %v1767 = vunpack.c.h.b16 %v464
      %v1768 = vunpack.c.l.b16 %v465
      %v1769 = vunpack.c.h.b16 %v465
      %v1770 = vunpack.c.l.b16 %v466
      %v1771 = vunpack.c.h.b16 %v466
      %v1772 = vunpack.c.l.b16 %v467
      %v1773 = vunpack.c.h.b16 %v467
      %v1774 = vunpack.c.l.b16 %v468
      %v1775 = vunpack.c.h.b16 %v468
      %v1776 = vunpack.c.l.b16 %v469
      %v1777 = vunpack.c.h.b16 %v469
      %v1778 = vunpack.c.l.b16 %v470
      %v1779 = vunpack.c.h.b16 %v470
      %v1780 = vunpack.c.l.b16 %v471
      %v1781 = vunpack.c.h.b16 %v471
      %v1782 = vunpack.c.l.b16 %v472
      %v1783 = vunpack.c.h.b16 %v472
      %v1784 = vunpack.c.l.b16 %v473
      %v1785 = vunpack.c.h.b16 %v473
      %v1786 = vunpack.c.l.b16 %v474
      %v1787 = vunpack.c.h.b16 %v474
      %v1788 = vunpack.c.l.b16 %v475
      %v1789 = vunpack.c.h.b16 %v475
      %v1790 = vunpack.c.l.b16 %v476
      %v1791 = vunpack.c.h.b16 %v476
      %v1792 = vunpack.c.l.b16 %v477
      %v1793 = vunpack.c.h.b16 %v477
      %v1794 = vunpack.c.l.b16 %v478
      %v1795 = vunpack.c.h.b16 %v478
      %v1796 = vunpack.c.l.b16 %v479
      %v1797 = vunpack.c.h.b16 %v479
      %v1798 = vunpack.c.l.b16 %v480
      %v1799 = vunpack.c.h.b16 %v480
      %v1800 = vunpack.c.l.b16 %v481
      %v1801 = vunpack.c.h.b16 %v481
      %v1802 = vunpack.c.l.b16 %v482
      %v1803 = vunpack.c.h.b16 %v482
      %v1804 = vunpack.c.l.b16 %v483
      %v1805 = vunpack.c.h.b16 %v483
      %v1806 = vunpack.c.l.b16 %v484
      %v1807 = vunpack.c.h.b16 %v484
      %v1808 = vunpack.c.l.b16 %v485
      %v1809 = vunpack.c.h.b16 %v485
      %v1810 = vunpack.c.l.b16 %v486
      %v1811 = vunpack.c.h.b16 %v486
      %v1812 = vunpack.c.l.b16 %v487
      %v1813 = vunpack.c.h.b16 %v487
      %v1814 = vunpack.c.l.b16 %v488
      %v1815 = vunpack.c.h.b16 %v488
      %v1816 = vunpack.c.l.b16 %v489
      %v1817 = vunpack.c.h.b16 %v489
      %v1818 = vunpack.c.l.b16 %v490
      %v1819 = vunpack.c.h.b16 %v490
      %v1820 = vunpack.c.l.b16 %v491
      %v1821 = vunpack.c.h.b16 %v491
      %v1822 = vunpack.c.l.b16 %v492
      %v1823 = vunpack.c.h.b16 %v492
      %v1824 = vunpack.c.l.b16 %v493
      %v1825 = vunpack.c.h.b16 %v493
      %v1826 = vunpack.c.l.b16 %v494
      %v1827 = vunpack.c.h.b16 %v494
      %v1828 = vunpack.c.l.b16 %v495
      %v1829 = vunpack.c.h.b16 %v495
      %v1830 = vunpack.c.l.b16 %v496
      %v1831 = vunpack.c.h.b16 %v496
      %v1832 = vunpack.c.l.b16 %v497
      %v1833 = vunpack.c.h.b16 %v497
      %v1834 = vunpack.c.l.b16 %v498
      %v1835 = vunpack.c.h.b16 %v498
      %v1836 = vunpack.c.l.b16 %v499
      %v1837 = vunpack.c.h.b16 %v499
      %v1838 = vunpack.c.l.b16 %v500
      %v1839 = vunpack.c.h.b16 %v500
      %v1840 = vunpack.c.l.b16 %v501
      %v1841 = vunpack.c.h.b16 %v501
      %v1842 = vunpack.c.l.b16 %v502
      %v1843 = vunpack.c.h.b16 %v502
      %v1844 = vunpack.c.l.b16 %v503
      %v1845 = vunpack.c.h.b16 %v503
      %v1846 = vunpack.c.l.b16 %v504
      %v1847 = vunpack.c.h.b16 %v504
      %v1848 = vunpack.c.l.b16 %v505
      %v1849 = vunpack.c.h.b16 %v505
      %v1850 = vunpack.c.l.b16 %v506
      %v1851 = vunpack.c.h.b16 %v506
      %v1852 = vunpack.c.l.b16 %v507
      %v1853 = vunpack.c.h.b16 %v507
      %v1854 = vunpack.c.l.b16 %v508
      %v1855 = vunpack.c.h.b16 %v508
      %v1856 = vunpack.c.l.b16 %v509
      %v1857 = vunpack.c.h.b16 %v509
      %v1858 = vunpack.c.l.b16 %v510
      %v1859 = vunpack.c.h.b16 %v510
      %v1860 = vunpack.c.l.b16 %v511
      %v1861 = vunpack.c.h.b16 %v511
      %v1862 = vunpack.c.l.b16 %v512
      %v1863 = vunpack.c.h.b16 %v512
      %v1864 = vunpack.c.l.b16 %v513
      %v1865 = vunpack.c.h.b16 %v513
      %v1866 = vunpack.c.l.b16 %v514
      %v1867 = vunpack.c.h.b16 %v514
      %v1868 = vunpack.c.l.b16 %v515
      %v1869 = vunpack.c.h.b16 %v515
      %v1870 = vunpack.c.l.b16 %v516
      %v1871 = vunpack.c.h.b16 %v516
      %v1872 = vunpack.c.l.b16 %v517
      %v1873 = vunpack.c.h.b16 %v517
      %v1874 = vunpack.c.l.b16 %v518
      %v1875 = vunpack.c.h.b16 %v518
      %v1876 = vunpack.c.l.b16 %v519
      %v1877 = vunpack.c.h.b16 %v519
      %v1878 = vunpack.c.l.b16 %v520
      %v1879 = vunpack.c.h.b16 %v520
      %v1880 = vunpack.c.l.b16 %v521
      %v1881 = vunpack.c.h.b16 %v521
      %v1882 = vunpack.c.l.b16 %v522
      %v1883 = vunpack.c.h.b16 %v522
      %v1884 = vunpack.c.l.b16 %v523
      %v1885 = vunpack.c.h.b16 %v523
      %v1886 = vunpack.c.l.b16 %v524
      %v1887 = vunpack.c.h.b16 %v524
      %v1888 = vunpack.c.l.b16 %v525
      %v1889 = vunpack.c.h.b16 %v525
      %v1890 = vunpack.c.l.b16 %v526
      %v1891 = vunpack.c.h.b16 %v526
      %v1892 = vunpack.c.l.b16 %v527
      %v1893 = vunpack.c.h.b16 %v527
      %v1894 = vunpack.c.l.b16 %v528
      %v1895 = vunpack.c.h.b16 %v528
      %v1896 = vunpack.c.l.b16 %v529
      %v1897 = vunpack.c.h.b16 %v529
      %v1898 = vunpack.c.l.b16 %v530
      %v1899 = vunpack.c.h.b16 %v530
      %v1900 = vunpack.c.l.b16 %v531
      %v1901 = vunpack.c.h.b16 %v531
      %v1902 = vunpack.c.l.b16 %v532
      %v1903 = vunpack.c.h.b16 %v532
      %v1904 = vunpack.c.l.b16 %v533
      %v1905 = vunpack.c.h.b16 %v533
      %v1906 = vunpack.c.l.b16 %v534
      %v1907 = vunpack.c.h.b16 %v534
      %v1908 = vunpack.c.l.b16 %v535
      %v1909 = vunpack.c.h.b16 %v535
      %v1910 = vunpack.c.l.b16 %v536
      %v1911 = vunpack.c.h.b16 %v536
      %v1912 = vunpack.c.l.b16 %v537
      %v1913 = vunpack.c.h.b16 %v537
      %v1914 = vpack.c.b16 %v1434, %v1402
      %v1915 = vpack.c.b16 %v1435, %v1403
      %v1916 = vpack.c.b16 %v1436, %v1404
      %v1917 = vpack.c.b16 %v1437, %v1405
      %v1918 = vpack.c.b16 %v1438, %v1406
      %v1919 = vpack.c.b16 %v1439, %v1407
      %v1920 = vpack.c.b16 %v1440, %v1408
      %v1921 = vpack.c.b16 %v1441, %v1409
      %v1922 = vpack.c.b16 %v1442, %v1410
      %v1923 = vpack.c.b16 %v1443, %v1411
      %v1924 = vpack.c.b16 %v1444, %v1412
      %v1925 = vpack.c.b16 %v1445, %v1413
      %v1926 = vpack.c.b16 %v1446, %v1414
      %v1927 = vpack.c.b16 %v1447, %v1415
      %v1928 = vpack.c.b16 %v1448, %v1416
      %v1929 = vpack.c.b16 %v1449, %v1417
      %v1930 = vpack.c.b16 %v1450, %v1418
      %v1931 = vpack.c.b16 %v1451, %v1419
      %v1932 = vpack.c.b16 %v1452, %v1420
      %v1933 = vpack.c.b16 %v1453, %v1421
      %v1934 = vpack.c.b16 %v1454, %v1422
      %v1935 = vpack.c.b16 %v1455, %v1423
      %v1936 = vpack.c.b16 %v1456, %v1424
      %v1937 = vpack.c.b16 %v1457, %v1425
      %v1938 = vpack.c.b16 %v1458, %v1426
      %v1939 = vpack.c.b16 %v1459, %v1427
      %v1940 = vpack.c.b16 %v1460, %v1428
      %v1941 = vpack.c.b16 %v1461, %v1429
      %v1942 = vpack.c.b16 %v1462, %v1430
      %v1943 = vpack.c.b16 %v1463, %v1431
      %v1944 = vpack.c.b16 %v1464, %v1432
      %v1945 = vpack.c.b16 %v1465, %v1433
      %v1946 = vpack.c.b16 %v1498, %v1466
      %v1947 = vpack.c.b16 %v1499, %v1467
      %v1948 = vpack.c.b16 %v1500, %v1468
      %v1949 = vpack.c.b16 %v1501, %v1469
      %v1950 = vpack.c.b16 %v1502, %v1470
      %v1951 = vpack.c.b16 %v1503, %v1471
      %v1952 = vpack.c.b16 %v1504, %v1472
      %v1953 = vpack.c.b16 %v1505, %v1473
      %v1954 = vpack.c.b16 %v1506, %v1474
      %v1955 = vpack.c.b16 %v1507, %v1475
      %v1956 = vpack.c.b16 %v1508, %v1476
      %v1957 = vpack.c.b16 %v1509, %v1477
      %v1958 = vpack.c.b16 %v1510, %v1478
      %v1959 = vpack.c.b16 %v1511, %v1479
      %v1960 = vpack.c.b16 %v1512, %v1480
      %v1961 = vpack.c.b16 %v1513, %v1481
      %v1962 = vpack.c.b16 %v1514, %v1482
      %v1963 = vpack.c.b16 %v1515, %v1483
      %v1964 = vpack.c.b16 %v1516, %v1484
      %v1965 = vpack.c.b16 %v1517, %v1485
      %v1966 = vpack.c.b16 %v1518, %v1486
      %v1967 = vpack.c.b16 %v1519, %v1487
      %v1968 = vpack.c.b16 %v1520, %v1488
      %v1969 = vpack.c.b16 %v1521, %v1489
      %v1970 = vpack.c.b16 %v1522, %v1490
      %v1971 = vpack.c.b16 %v1523, %v1491
      %v1972 = vpack.c.b16 %v1524, %v1492
      %v1973 = vpack.c.b16 %v1525, %v1493
      %v1974 = vpack.c.b16 %v1526, %v1494
      %v1975 = vpack.c.b16 %v1527, %v1495
      %v1976 = vpack.c.b16 %v1528, %v1496
      %v1977 = vpack.c.b16 %v1529, %v1497
      %v1978 = vpack.c.b16 %v1562, %v1530
      %v1979 = vpack.c.b16 %v1563, %v1531
      %v1980 = vpack.c.b16 %v1564, %v1532
      %v1981 = vpack.c.b16 %v1565, %v1533
      %v1982 = vpack.c.b16 %v1566, %v1534
      %v1983 = vpack.c.b16 %v1567, %v1535
      %v1984 = vpack.c.b16 %v1568, %v1536
      %v1985 = vpack.c.b16 %v1569, %v1537
      %v1986 = vpack.c.b16 %v1570, %v1538
      %v1987 = vpack.c.b16 %v1571, %v1539
      %v1988 = vpack.c.b16 %v1572, %v1540
      %v1989 = vpack.c.b16 %v1573, %v1541
      %v1990 = vpack.c.b16 %v1574, %v1542
      %v1991 = vpack.c.b16 %v1575, %v1543
      %v1992 = vpack.c.b16 %v1576, %v1544
      %v1993 = vpack.c.b16 %v1577, %v1545
      %v1994 = vpack.c.b16 %v1578, %v1546
      %v1995 = vpack.c.b16 %v1579, %v1547
      %v1996 = vpack.c.b16 %v1580, %v1548
      %v1997 = vpack.c.b16 %v1581, %v1549
      %v1998 = vpack.c.b16 %v1582, %v1550
      %v1999 = vpack.c.b16 %v1583, %v1551
      %v2000 = vpack.c.b16 %v1584, %v1552
      %v2001 = vpack.c.b16 %v1585, %v1553
      %v2002 = vpack.c.b16 %v1586, %v1554
      %v2003 = vpack.c.b16 %v1587, %v1555
      %v2004 = vpack.c.b16 %v1588, %v1556
      %v2005 = vpack.c.b16 %v1589, %v1557
      %v2006 = vpack.c.b16 %v1590, %v1558
      %v2007 = vpack.c.b16 %v1591, %v1559
      %v2008 = vpack.c.b16 %v1592, %v1560
      %v2009 = vpack.c.b16 %v1593, %v1561
      %v2010 = vpack.c.b16 %v1626, %v1594
      %v2011 = vpack.c.b16 %v1627, %v1595
      %v2012 = vpack.c.b16 %v1628, %v1596
      %v2013 = vpack.c.b16 %v1629, %v1597
      %v2014 = vpack.c.b16 %v1630, %v1598
      %v2015 = vpack.c.b16 %v1631, %v1599
      %v2016 = vpack.c.b16 %v1632, %v1600
      %v2017 = vpack.c.b16 %v1633, %v1601
      %v2018 = vpack.c.b16 %v1634, %v1602
      %v2019 = vpack.c.b16 %v1635, %v1603
      %v2020 = vpack.c.b16 %v1636, %v1604
      %v2021 = vpack.c.b16 %v1637, %v1605
      %v2022 = vpack.c.b16 %v1638, %v1606
      %v2023 = vpack.c.b16 %v1639, %v1607
      %v2024 = vpack.c.b16 %v1640, %v1608
      %v2025 = vpack.c.b16 %v1641, %v1609
      %v2026 = vpack.c.b16 %v1642, %v1610
      %v2027 = vpack.c.b16 %v1643, %v1611
      %v2028 = vpack.c.b16 %v1644, %v1612
      %v2029 = vpack.c.b16 %v1645, %v1613
      %v2030 = vpack.c.b16 %v1646, %v1614
      %v2031 = vpack.c.b16 %v1647, %v1615
      %v2032 = vpack.c.b16 %v1648, %v1616
      %v2033 = vpack.c.b16 %v1649, %v1617
      %v2034 = vpack.c.b16 %v1650, %v1618
      %v2035 = vpack.c.b16 %v1651, %v1619
      %v2036 = vpack.c.b16 %v1652, %v1620
      %v2037 = vpack.c.b16 %v1653, %v1621
      %v2038 = vpack.c.b16 %v1654, %v1622
      %v2039 = vpack.c.b16 %v1655, %v1623
      %v2040 = vpack.c.b16 %v1656, %v1624
      %v2041 = vpack.c.b16 %v1657, %v1625
      %v2042 = vpack.c.b16 %v1690, %v1658
      %v2043 = vpack.c.b16 %v1691, %v1659
      %v2044 = vpack.c.b16 %v1692, %v1660
      %v2045 = vpack.c.b16 %v1693, %v1661
      %v2046 = vpack.c.b16 %v1694, %v1662
      %v2047 = vpack.c.b16 %v1695, %v1663
      %v2048 = vpack.c.b16 %v1696, %v1664
      %v2049 = vpack.c.b16 %v1697, %v1665
      %v2050 = vpack.c.b16 %v1698, %v1666
      %v2051 = vpack.c.b16 %v1699, %v1667
      %v2052 = vpack.c.b16 %v1700, %v1668
      %v2053 = vpack.c.b16 %v1701, %v1669
      %v2054 = vpack.c.b16 %v1702, %v1670
      %v2055 = vpack.c.b16 %v1703, %v1671
      %v2056 = vpack.c.b16 %v1704, %v1672
      %v2057 = vpack.c.b16 %v1705, %v1673
      %v2058 = vpack.c.b16 %v1706, %v1674
      %v2059 = vpack.c.b16 %v1707, %v1675
      %v2060 = vpack.c.b16 %v1708, %v1676
      %v2061 = vpack.c.b16 %v1709, %v1677
      %v2062 = vpack.c.b16 %v1710, %v1678
      %v2063 = vpack.c.b16 %v1711, %v1679
      %v2064 = vpack.c.b16 %v1712, %v1680
      %v2065 = vpack.c.b16 %v1713, %v1681
      %v2066 = vpack.c.b16 %v1714, %v1682
      %v2067 = vpack.c.b16 %v1715, %v1683
      %v2068 = vpack.c.b16 %v1716, %v1684
      %v2069 = vpack.c.b16 %v1717, %v1685
      %v2070 = vpack.c.b16 %v1718, %v1686
      %v2071 = vpack.c.b16 %v1719, %v1687
      %v2072 = vpack.c.b16 %v1720, %v1688
      %v2073 = vpack.c.b16 %v1721, %v1689
      %v2074 = vpack.c.b16 %v1754, %v1722
      %v2075 = vpack.c.b16 %v1755, %v1723
      %v2076 = vpack.c.b16 %v1756, %v1724
      %v2077 = vpack.c.b16 %v1757, %v1725
      %v2078 = vpack.c.b16 %v1758, %v1726
      %v2079 = vpack.c.b16 %v1759, %v1727
      %v2080 = vpack.c.b16 %v1760, %v1728
      %v2081 = vpack.c.b16 %v1761, %v1729
      %v2082 = vpack.c.b16 %v1762, %v1730
      %v2083 = vpack.c.b16 %v1763, %v1731
      %v2084 = vpack.c.b16 %v1764, %v1732
      %v2085 = vpack.c.b16 %v1765, %v1733
      %v2086 = vpack.c.b16 %v1766, %v1734
      %v2087 = vpack.c.b16 %v1767, %v1735
      %v2088 = vpack.c.b16 %v1768, %v1736
      %v2089 = vpack.c.b16 %v1769, %v1737
      %v2090 = vpack.c.b16 %v1770, %v1738
      %v2091 = vpack.c.b16 %v1771, %v1739
      %v2092 = vpack.c.b16 %v1772, %v1740
      %v2093 = vpack.c.b16 %v1773, %v1741
      %v2094 = vpack.c.b16 %v1774, %v1742
      %v2095 = vpack.c.b16 %v1775, %v1743
      %v2096 = vpack.c.b16 %v1776, %v1744
      %v2097 = vpack.c.b16 %v1777, %v1745
      %v2098 = vpack.c.b16 %v1778, %v1746
      %v2099 = vpack.c.b16 %v1779, %v1747
      %v2100 = vpack.c.b16 %v1780, %v1748
      %v2101 = vpack.c.b16 %v1781, %v1749
      %v2102 = vpack.c.b16 %v1782, %v1750
      %v2103 = vpack.c.b16 %v1783, %v1751
      %v2104 = vpack.c.b16 %v1784, %v1752
      %v2105 = vpack.c.b16 %v1785, %v1753
      %v2106 = vpack.c.b16 %v1818, %v1786
      %v2107 = vpack.c.b16 %v1819, %v1787
      %v2108 = vpack.c.b16 %v1820, %v1788
      %v2109 = vpack.c.b16 %v1821, %v1789
      %v2110 = vpack.c.b16 %v1822, %v1790
      %v2111 = vpack.c.b16 %v1823, %v1791
      %v2112 = vpack.c.b16 %v1824, %v1792
      %v2113 = vpack.c.b16 %v1825, %v1793
      %v2114 = vpack.c.b16 %v1826, %v1794
      %v2115 = vpack.c.b16 %v1827, %v1795
      %v2116 = vpack.c.b16 %v1828, %v1796
      %v2117 = vpack.c.b16 %v1829, %v1797
      %v2118 = vpack.c.b16 %v1830, %v1798
      %v2119 = vpack.c.b16 %v1831, %v1799
      %v2120 = vpack.c.b16 %v1832, %v1800
      %v2121 = vpack.c.b16 %v1833, %v1801
      %v2122 = vpack.c.b16 %v1834, %v1802
      %v2123 = vpack.c.b16 %v1835, %v1803
      %v2124 = vpack.c.b16 %v1836, %v1804
      %v2125 = vpack.c.b16 %v1837, %v1805
      %v2126 = vpack.c.b16 %v1838, %v1806
      %v2127 = vpack.c.b16 %v1839, %v1807
      %v2128 = vpack.c.b16 %v1840, %v1808
      %v2129 = vpack.c.b16 %v1841, %v1809
      %v2130 = vpack.c.b16 %v1842, %v1810
      %v2131 = vpack.c.b16 %v1843, %v1811
      %v2132 = vpack.c.b16 %v1844, %v1812
      %v2133 = vpack.c.b16 %v1845, %v1813
      %v2134 = vpack.c.b16 %v1846, %v1814
      %v2135 = vpack.c.b16 %v1847, %v1815
      %v2136 = vpack.c.b16 %v1848, %v1816
      %v2137 = vpack.c.b16 %v1849, %v1817
      %v2138 = vpack.c.b16 %v1882, %v1850
      %v2139 = vpack.c.b16 %v1883, %v1851
      %v2140 = vpack.c.b16 %v1884, %v1852
      %v2141 = vpack.c.b16 %v1885, %v1853
      %v2142 = vpack.c.b16 %v1886, %v1854
      %v2143 = vpack.c.b16 %v1887, %v1855
      %v2144 = vpack.c.b16 %v1888, %v1856
      %v2145 = vpack.c.b16 %v1889, %v1857
      %v2146 = vpack.c.b16 %v1890, %v1858
      %v2147 = vpack.c.b16 %v1891, %v1859
      %v2148 = vpack.c.b16 %v1892, %v1860
      %v2149 = vpack.c.b16 %v1893, %v1861
      %v2150 = vpack.c.b16 %v1894, %v1862
      %v2151 = vpack.c.b16 %v1895, %v1863
      %v2152 = vpack.c.b16 %v1896, %v1864
      %v2153 = vpack.c.b16 %v1897, %v1865
      %v2154 = vpack.c.b16 %v1898, %v1866
      %v2155 = vpack.c.b16 %v1899, %v1867
      %v2156 = vpack.c.b16 %v1900, %v1868
      %v2157 = vpack.c.b16 %v1901, %v1869
      %v2158 = vpack.c.b16 %v1902, %v1870
      %v2159 = vpack.c.b16 %v1903, %v1871
      %v2160 = vpack.c.b16 %v1904, %v1872
      %v2161 = vpack.c.b16 %v1905, %v1873
      %v2162 = vpack.c.b16 %v1906, %v1874
      %v2163 = vpack.c.b16 %v1907, %v1875
      %v2164 = vpack.c.b16 %v1908, %v1876
      %v2165 = vpack.c.b16 %v1909, %v1877
      %v2166 = vpack.c.b16 %v1910, %v1878
      %v2167 = vpack.c.b16 %v1911, %v1879
      %v2168 = vpack.c.b16 %v1912, %v1880
      %v2169 = vpack.c.b16 %v1913, %v1881
      %v2938 = vunpack.c.l.b16 %v538
      %v2939 = vunpack.c.l.b16 %v539
      %v2940 = vunpack.c.l.b16 %v540
      %v2941 = vunpack.c.l.b16 %v541
      %v2942 = vunpack.c.l.b16 %v542
      %v2943 = vunpack.c.l.b16 %v543
      %v2944 = vunpack.c.l.b16 %v544
      %v2945 = vunpack.c.l.b16 %v545
      %v2946 = vunpack.c.l.b16 %v546
      %v2947 = vunpack.c.l.b16 %v547
      %v2948 = vunpack.c.l.b16 %v548
      %v2949 = vunpack.c.l.b16 %v549
      %v2950 = vunpack.c.l.b16 %v550
      %v2951 = vunpack.c.l.b16 %v551
      %v2952 = vunpack.c.l.b16 %v552
      %v2953 = vunpack.c.l.b16 %v553
      %v2954 = vunpack.c.l.b16 %v554
      %v2955 = vunpack.c.l.b16 %v555
      %v2956 = vunpack.c.l.b16 %v556
      %v2957 = vunpack.c.l.b16 %v557
      %v2958 = vunpack.c.l.b16 %v558
      %v2959 = vunpack.c.l.b16 %v559
      %v2960 = vunpack.c.l.b16 %v560
      %v2961 = vunpack.c.l.b16 %v561
      %v2962 = vunpack.c.l.b16 %v562
      %v2963 = vunpack.c.l.b16 %v563
      %v2964 = vunpack.c.l.b16 %v564
      %v2965 = vunpack.c.l.b16 %v565
      %v2966 = vunpack.c.l.b16 %v566
      %v2967 = vunpack.c.l.b16 %v567
      %v2968 = vunpack.c.l.b16 %v568
      %v2969 = vunpack.c.l.b16 %v569
      %v2970 = vunpack.c.l.b16 %v570
      %v2971 = vunpack.c.l.b16 %v571
      %v2972 = vunpack.c.l.b16 %v572
      %v2973 = vunpack.c.l.b16 %v573
      %v2974 = vunpack.c.l.b16 %v574
      %v2975 = vunpack.c.l.b16 %v575
      %v2976 = vunpack.c.l.b16 %v576
      %v2977 = vunpack.c.l.b16 %v577
      %v2978 = vunpack.c.l.b16 %v578
      %v2979 = vunpack.c.l.b16 %v579
      %v2980 = vunpack.c.l.b16 %v580
      %v2981 = vunpack.c.l.b16 %v581
      %v2982 = vunpack.c.l.b16 %v582
      %v2983 = vunpack.c.l.b16 %v583
      %v2984 = vunpack.c.l.b16 %v584
      %v2985 = vunpack.c.l.b16 %v585
      %v2986 = vunpack.c.l.b16 %v586
      %v2987 = vunpack.c.l.b16 %v587
      %v2988 = vunpack.c.l.b16 %v588
      %v2989 = vunpack.c.l.b16 %v589
      %v2990 = vunpack.c.l.b16 %v590
      %v2991 = vunpack.c.l.b16 %v591
      %v2992 = vunpack.c.l.b16 %v592
      %v2993 = vunpack.c.l.b16 %v593
      %v2994 = vunpack.c.l.b16 %v594
      %v2995 = vunpack.c.l.b16 %v595
      %v2996 = vunpack.c.l.b16 %v596
      %v2997 = vunpack.c.l.b16 %v597
      %v2998 = vunpack.c.l.b16 %v598
      %v2999 = vunpack.c.l.b16 %v599
      %v3000 = vunpack.c.l.b16 %v600
      %v3001 = vunpack.c.l.b16 %v601
      %v3002 = vunpack.c.l.b16 %v602
      %v3003 = vunpack.c.l.b16 %v603
      %v3004 = vunpack.c.l.b16 %v604
      %v3005 = vunpack.c.l.b16 %v605
      %v3006 = vunpack.c.l.b16 %v606
      %v3007 = vunpack.c.l.b16 %v607
      %v3008 = vunpack.c.l.b16 %v608
      %v3009 = vunpack.c.l.b16 %v609
      %v3010 = vunpack.c.l.b16 %v610
      %v3011 = vunpack.c.l.b16 %v611
      %v3012 = vunpack.c.l.b16 %v612
      %v3013 = vunpack.c.l.b16 %v613
      %v3014 = vunpack.c.l.b16 %v614
      %v3015 = vunpack.c.l.b16 %v615
      %v3016 = vunpack.c.l.b16 %v616
      %v3017 = vunpack.c.l.b16 %v617
      %v3018 = vunpack.c.l.b16 %v618
      %v3019 = vunpack.c.l.b16 %v619
      %v3020 = vunpack.c.l.b16 %v620
      %v3021 = vunpack.c.l.b16 %v621
      %v3022 = vunpack.c.l.b16 %v622
      %v3023 = vunpack.c.l.b16 %v623
      %v3024 = vunpack.c.l.b16 %v624
      %v3025 = vunpack.c.l.b16 %v625
      %v3026 = vunpack.c.l.b16 %v626
      %v3027 = vunpack.c.l.b16 %v627
      %v3028 = vunpack.c.l.b16 %v628
      %v3029 = vunpack.c.l.b16 %v629
      %v3030 = vunpack.c.l.b16 %v630
      %v3031 = vunpack.c.l.b16 %v631
      %v3032 = vunpack.c.l.b16 %v632
      %v3033 = vunpack.c.l.b16 %v633
      %v3034 = vunpack.c.l.b16 %v634
      %v3035 = vunpack.c.l.b16 %v635
      %v3036 = vunpack.c.l.b16 %v636
      %v3037 = vunpack.c.l.b16 %v637
      %v3038 = vunpack.c.l.b16 %v638
      %v3039 = vunpack.c.l.b16 %v639
      %v3040 = vunpack.c.l.b16 %v640
      %v3041 = vunpack.c.l.b16 %v641
      %v3042 = vunpack.c.l.b16 %v642
      %v3043 = vunpack.c.l.b16 %v643
      %v3044 = vunpack.c.l.b16 %v644
      %v3045 = vunpack.c.l.b16 %v645
      %v3046 = vunpack.c.l.b16 %v646
      %v3047 = vunpack.c.l.b16 %v647
      %v3048 = vunpack.c.l.b16 %v648
      %v3049 = vunpack.c.l.b16 %v649
      %v3050 = vunpack.c.l.b16 %v650
      %v3051 = vunpack.c.l.b16 %v651
      %v3052 = vunpack.c.l.b16 %v652
      %v3053 = vunpack.c.l.b16 %v653
      %v3054 = vunpack.c.l.b16 %v654
      %v3055 = vunpack.c.l.b16 %v655
      %v3056 = vunpack.c.l.b16 %v656
      %v3057 = vunpack.c.l.b16 %v657
      %v3058 = vunpack.c.l.b16 %v658
      %v3059 = vunpack.c.l.b16 %v659
      %v3060 = vunpack.c.l.b16 %v660
      %v3061 = vunpack.c.l.b16 %v661
      %v3062 = vunpack.c.l.b16 %v662
      %v3063 = vunpack.c.l.b16 %v663
      %v3064 = vunpack.c.l.b16 %v664
      %v3065 = vunpack.c.l.b16 %v665
      %v3066 = vunpack.c.l.b16 %v666
      %v3067 = vunpack.c.l.b16 %v667
      %v3068 = vunpack.c.l.b16 %v668
      %v3069 = vunpack.c.l.b16 %v669
      %v3070 = vunpack.c.l.b16 %v670
      %v3071 = vunpack.c.l.b16 %v671
      %v3072 = vunpack.c.l.b16 %v672
      %v3073 = vunpack.c.l.b16 %v673
      %v3074 = vunpack.c.l.b16 %v674
      %v3075 = vunpack.c.l.b16 %v675
      %v3076 = vunpack.c.l.b16 %v676
      %v3077 = vunpack.c.l.b16 %v677
      %v3078 = vunpack.c.l.b16 %v678
      %v3079 = vunpack.c.l.b16 %v679
      %v3080 = vunpack.c.l.b16 %v680
      %v3081 = vunpack.c.l.b16 %v681
      %v3082 = vunpack.c.l.b16 %v682
      %v3083 = vunpack.c.l.b16 %v683
      %v3084 = vunpack.c.l.b16 %v684
      %v3085 = vunpack.c.l.b16 %v685
      %v3086 = vunpack.c.l.b16 %v686
      %v3087 = vunpack.c.l.b16 %v687
      %v3088 = vunpack.c.l.b16 %v688
      %v3089 = vunpack.c.l.b16 %v689
      %v3090 = vunpack.c.l.b16 %v690
      %v3091 = vunpack.c.l.b16 %v691
      %v3092 = vunpack.c.l.b16 %v692
      %v3093 = vunpack.c.l.b16 %v693
      %v3094 = vunpack.c.l.b16 %v694
      %v3095 = vunpack.c.l.b16 %v695
      %v3096 = vunpack.c.l.b16 %v696
      %v3097 = vunpack.c.l.b16 %v697
      %v3098 = vunpack.c.l.b16 %v698
      %v3099 = vunpack.c.l.b16 %v699
      %v3100 = vunpack.c.l.b16 %v700
      %v3101 = vunpack.c.l.b16 %v701
      %v3102 = vunpack.c.l.b16 %v702
      %v3103 = vunpack.c.l.b16 %v703
      %v3104 = vunpack.c.l.b16 %v704
      %v3105 = vunpack.c.l.b16 %v705
      %v3106 = vunpack.c.l.b16 %v706
      %v3107 = vunpack.c.l.b16 %v707
      %v3108 = vunpack.c.l.b16 %v708
      %v3109 = vunpack.c.l.b16 %v709
      %v3110 = vunpack.c.l.b16 %v710
      %v3111 = vunpack.c.l.b16 %v711
      %v3112 = vunpack.c.l.b16 %v712
      %v3113 = vunpack.c.l.b16 %v713
      %v3114 = vunpack.c.l.b16 %v714
      %v3115 = vunpack.c.l.b16 %v715
      %v3116 = vunpack.c.l.b16 %v716
      %v3117 = vunpack.c.l.b16 %v717
      %v3118 = vunpack.c.l.b16 %v718
      %v3119 = vunpack.c.l.b16 %v719
      %v3120 = vunpack.c.l.b16 %v720
      %v3121 = vunpack.c.l.b16 %v721
      %v3122 = vunpack.c.l.b16 %v722
      %v3123 = vunpack.c.l.b16 %v723
      %v3124 = vunpack.c.l.b16 %v724
      %v3125 = vunpack.c.l.b16 %v725
      %v3126 = vunpack.c.l.b16 %v726
      %v3127 = vunpack.c.l.b16 %v727
      %v3128 = vunpack.c.l.b16 %v728
      %v3129 = vunpack.c.l.b16 %v729
      %v3130 = vunpack.c.l.b16 %v730
      %v3131 = vunpack.c.l.b16 %v731
      %v3132 = vunpack.c.l.b16 %v732
      %v3133 = vunpack.c.l.b16 %v733
      %v3134 = vunpack.c.l.b16 %v734
      %v3135 = vunpack.c.l.b16 %v735
      %v3136 = vunpack.c.l.b16 %v736
      %v3137 = vunpack.c.l.b16 %v737
      %v3138 = vunpack.c.l.b16 %v738
      %v3139 = vunpack.c.l.b16 %v739
      %v3140 = vunpack.c.l.b16 %v740
      %v3141 = vunpack.c.l.b16 %v741
      %v3142 = vunpack.c.l.b16 %v742
      %v3143 = vunpack.c.l.b16 %v743
      %v3144 = vunpack.c.l.b16 %v744
      %v3145 = vunpack.c.l.b16 %v745
      %v3146 = vunpack.c.l.b16 %v746
      %v3147 = vunpack.c.l.b16 %v747
      %v3148 = vunpack.c.l.b16 %v748
      %v3149 = vunpack.c.l.b16 %v749
      %v3150 = vunpack.c.l.b16 %v750
      %v3151 = vunpack.c.l.b16 %v751
      %v3152 = vunpack.c.l.b16 %v752
      %v3153 = vunpack.c.l.b16 %v753
      %v3154 = vunpack.c.l.b16 %v754
      %v3155 = vunpack.c.l.b16 %v755
      %v3156 = vunpack.c.l.b16 %v756
      %v3157 = vunpack.c.l.b16 %v757
      %v3158 = vunpack.c.l.b16 %v758
      %v3159 = vunpack.c.l.b16 %v759
      %v3160 = vunpack.c.l.b16 %v760
      %v3161 = vunpack.c.l.b16 %v761
      %v3162 = vunpack.c.l.b16 %v762
      %v3163 = vunpack.c.l.b16 %v763
      %v3164 = vunpack.c.l.b16 %v764
      %v3165 = vunpack.c.l.b16 %v765
      %v3166 = vunpack.c.l.b16 %v766
      %v3167 = vunpack.c.l.b16 %v767
      %v3168 = vunpack.c.l.b16 %v768
      %v3169 = vunpack.c.l.b16 %v769
      %v3170 = vunpack.c.l.b16 %v770
      %v3171 = vunpack.c.l.b16 %v771
      %v3172 = vunpack.c.l.b16 %v772
      %v3173 = vunpack.c.l.b16 %v773
      %v3174 = vunpack.c.l.b16 %v774
      %v3175 = vunpack.c.l.b16 %v775
      %v3176 = vunpack.c.l.b16 %v776
      %v3177 = vunpack.c.l.b16 %v777
      %v3178 = vunpack.c.l.b16 %v778
      %v3179 = vunpack.c.l.b16 %v779
      %v3180 = vunpack.c.l.b16 %v780
      %v3181 = vunpack.c.l.b16 %v781
      %v3182 = vunpack.c.l.b16 %v782
      %v3183 = vunpack.c.l.b16 %v783
      %v3184 = vunpack.c.l.b16 %v784
      %v3185 = vunpack.c.l.b16 %v785
      %v3186 = vunpack.c.l.b16 %v786
      %v3187 = vunpack.c.l.b16 %v787
      %v3188 = vunpack.c.l.b16 %v788
      %v3189 = vunpack.c.l.b16 %v789
      %v3190 = vunpack.c.l.b16 %v790
      %v3191 = vunpack.c.l.b16 %v791
      %v3192 = vunpack.c.l.b16 %v792
      %v3193 = vunpack.c.l.b16 %v793
      %v3194 = vunpack.c.l.b16 %v794
      %v3195 = vunpack.c.l.b16 %v795
      %v3196 = vunpack.c.l.b16 %v796
      %v3197 = vunpack.c.l.b16 %v797
      %v3198 = vunpack.c.l.b16 %v798
      %v3199 = vunpack.c.l.b16 %v799
      %v3200 = vunpack.c.l.b16 %v800
      %v3201 = vunpack.c.l.b16 %v801
      %v3202 = vunpack.c.l.b16 %v802
      %v3203 = vunpack.c.l.b16 %v803
      %v3204 = vunpack.c.l.b16 %v804
      %v3205 = vunpack.c.l.b16 %v805
      %v3206 = vunpack.c.l.b16 %v806
      %v3207 = vunpack.c.l.b16 %v807
      %v3208 = vunpack.c.l.b16 %v808
      %v3209 = vunpack.c.l.b16 %v809
      %v3210 = vunpack.c.l.b16 %v810
      %v3211 = vunpack.c.l.b16 %v811
      %v3212 = vunpack.c.l.b16 %v812
      %v3213 = vunpack.c.l.b16 %v813
      %v3214 = vunpack.c.l.b16 %v814
      %v3215 = vunpack.c.l.b16 %v815
      %v3216 = vunpack.c.l.b16 %v816
      %v3217 = vunpack.c.l.b16 %v817
      %v3218 = vunpack.c.l.b16 %v818
      %v3219 = vunpack.c.l.b16 %v819
      %v3220 = vunpack.c.l.b16 %v820
      %v3221 = vunpack.c.l.b16 %v821
      %v3222 = vunpack.c.l.b16 %v822
      %v3223 = vunpack.c.l.b16 %v823
      %v3224 = vunpack.c.l.b16 %v824
      %v3225 = vunpack.c.l.b16 %v825
      %v3226 = vunpack.c.l.b16 %v826
      %v3227 = vunpack.c.l.b16 %v827
      %v3228 = vunpack.c.l.b16 %v828
      %v3229 = vunpack.c.l.b16 %v829
      %v3230 = vunpack.c.l.b16 %v830
      %v3231 = vunpack.c.l.b16 %v831
      %v3232 = vunpack.c.l.b16 %v832
      %v3233 = vunpack.c.l.b16 %v833
      %v3234 = vunpack.c.l.b16 %v834
      %v3235 = vunpack.c.l.b16 %v835
      %v3236 = vunpack.c.l.b16 %v836
      %v3237 = vunpack.c.l.b16 %v837
      %v3238 = vunpack.c.l.b16 %v838
      %v3239 = vunpack.c.l.b16 %v839
      %v3240 = vunpack.c.l.b16 %v840
      %v3241 = vunpack.c.l.b16 %v841
      %v3242 = vunpack.c.l.b16 %v842
      %v3243 = vunpack.c.l.b16 %v843
      %v3244 = vunpack.c.l.b16 %v844
      %v3245 = vunpack.c.l.b16 %v845
      %v3246 = vunpack.c.l.b16 %v846
      %v3247 = vunpack.c.l.b16 %v847
      %v3248 = vunpack.c.l.b16 %v848
      %v3249 = vunpack.c.l.b16 %v849
      %v3250 = vunpack.c.l.b16 %v850
      %v3251 = vunpack.c.l.b16 %v851
      %v3252 = vunpack.c.l.b16 %v852
      %v3253 = vunpack.c.l.b16 %v853
      %v3254 = vunpack.c.l.b16 %v854
      %v3255 = vunpack.c.l.b16 %v855
      %v3256 = vunpack.c.l.b16 %v856
      %v3257 = vunpack.c.l.b16 %v857
      %v3258 = vunpack.c.l.b16 %v858
      %v3259 = vunpack.c.l.b16 %v859
      %v3260 = vunpack.c.l.b16 %v860
      %v3261 = vunpack.c.l.b16 %v861
      %v3262 = vunpack.c.l.b16 %v862
      %v3263 = vunpack.c.l.b16 %v863
      %v3264 = vunpack.c.l.b16 %v864
      %v3265 = vunpack.c.l.b16 %v865
      %v3266 = vunpack.c.l.b16 %v866
      %v3267 = vunpack.c.l.b16 %v867
      %v3268 = vunpack.c.l.b16 %v868
      %v3269 = vunpack.c.l.b16 %v869
      %v3270 = vunpack.c.l.b16 %v870
      %v3271 = vunpack.c.l.b16 %v871
      %v3272 = vunpack.c.l.b16 %v872
      %v3273 = vunpack.c.l.b16 %v873
      %v3274 = vunpack.c.l.b16 %v874
      %v3275 = vunpack.c.l.b16 %v875
      %v3276 = vunpack.c.l.b16 %v876
      %v3277 = vunpack.c.l.b16 %v877
      %v3278 = vunpack.c.l.b16 %v878
      %v3279 = vunpack.c.l.b16 %v879
      %v3280 = vunpack.c.l.b16 %v880
      %v3281 = vunpack.c.l.b16 %v881
      %v3282 = vunpack.c.l.b16 %v882
      %v3283 = vunpack.c.l.b16 %v883
      %v3284 = vunpack.c.l.b16 %v884
      %v3285 = vunpack.c.l.b16 %v885
      %v3286 = vunpack.c.l.b16 %v886
      %v3287 = vunpack.c.l.b16 %v887
      %v3288 = vunpack.c.l.b16 %v888
      %v3289 = vunpack.c.l.b16 %v889
      %v3290 = vunpack.c.l.b16 %v890
      %v3291 = vunpack.c.l.b16 %v891
      %v3292 = vunpack.c.l.b16 %v892
      %v3293 = vunpack.c.l.b16 %v893
      %v3294 = vunpack.c.l.b16 %v894
      %v3295 = vunpack.c.l.b16 %v895
      %v3296 = vunpack.c.l.b16 %v896
      %v3297 = vunpack.c.l.b16 %v897
      %v3298 = vunpack.c.l.b16 %v898
      %v3299 = vunpack.c.l.b16 %v899
      %v3300 = vunpack.c.l.b16 %v900
      %v3301 = vunpack.c.l.b16 %v901
      %v3302 = vunpack.c.l.b16 %v902
      %v3303 = vunpack.c.l.b16 %v903
      %v3304 = vunpack.c.l.b16 %v904
      %v3305 = vunpack.c.l.b16 %v905
      %v3306 = vunpack.c.l.b16 %v906
      %v3307 = vunpack.c.l.b16 %v907
      %v3308 = vunpack.c.l.b16 %v908
      %v3309 = vunpack.c.l.b16 %v909
      %v3310 = vunpack.c.l.b16 %v910
      %v3311 = vunpack.c.l.b16 %v911
      %v3312 = vunpack.c.l.b16 %v912
      %v3313 = vunpack.c.l.b16 %v913
      %v3314 = vunpack.c.l.b16 %v914
      %v3315 = vunpack.c.l.b16 %v915
      %v3316 = vunpack.c.l.b16 %v916
      %v3317 = vunpack.c.l.b16 %v917
      %v3318 = vunpack.c.l.b16 %v918
      %v3319 = vunpack.c.l.b16 %v919
      %v3320 = vunpack.c.l.b16 %v920
      %v3321 = vunpack.c.l.b16 %v921
      %v3322 = vunpack.c.l.b16 %v922
      %v3323 = vunpack.c.l.b16 %v923
      %v3324 = vunpack.c.l.b16 %v924
      %v3325 = vunpack.c.l.b16 %v925
      %v3326 = vunpack.c.l.b16 %v926
      %v3327 = vunpack.c.l.b16 %v927
      %v3328 = vunpack.c.l.b16 %v928
      %v3329 = vunpack.c.l.b16 %v929
      %v3330 = vunpack.c.l.b16 %v930
      %v3331 = vunpack.c.l.b16 %v931
      %v3332 = vunpack.c.l.b16 %v932
      %v3333 = vunpack.c.l.b16 %v933
      %v3334 = vunpack.c.l.b16 %v934
      %v3335 = vunpack.c.l.b16 %v935
      %v3336 = vunpack.c.l.b16 %v936
      %v3337 = vunpack.c.l.b16 %v937
      %v3338 = vunpack.c.l.b16 %v938
      %v3339 = vunpack.c.l.b16 %v939
      %v3340 = vunpack.c.l.b16 %v940
      %v3341 = vunpack.c.l.b16 %v941
      %v3342 = vunpack.c.l.b16 %v942
      %v3343 = vunpack.c.l.b16 %v943
      %v3344 = vunpack.c.l.b16 %v944
      %v3345 = vunpack.c.l.b16 %v945
      %v3346 = vunpack.c.l.b16 %v946
      %v3347 = vunpack.c.l.b16 %v947
      %v3348 = vunpack.c.l.b16 %v948
      %v3349 = vunpack.c.l.b16 %v949
      %v3350 = vunpack.c.l.b16 %v950
      %v3351 = vunpack.c.l.b16 %v951
      %v3352 = vunpack.c.l.b16 %v952
      %v3353 = vunpack.c.l.b16 %v953
      %v3354 = vunpack.c.l.b16 %v954
      %v3355 = vunpack.c.l.b16 %v955
      %v3356 = vunpack.c.l.b16 %v956
      %v3357 = vunpack.c.l.b16 %v957
      %v3358 = vunpack.c.l.b16 %v958
      %v3359 = vunpack.c.l.b16 %v959
      %v3360 = vunpack.c.l.b16 %v960
      %v3361 = vunpack.c.l.b16 %v961
      %v3362 = vunpack.c.l.b16 %v962
      %v3363 = vunpack.c.l.b16 %v963
      %v3364 = vunpack.c.l.b16 %v964
      %v3365 = vunpack.c.l.b16 %v965
      %v3366 = vunpack.c.l.b16 %v966
      %v3367 = vunpack.c.l.b16 %v967
      %v3368 = vunpack.c.l.b16 %v968
      %v3369 = vunpack.c.l.b16 %v969
      %v3370 = vunpack.c.l.b16 %v970
      %v3371 = vunpack.c.l.b16 %v971
      %v3372 = vunpack.c.l.b16 %v972
      %v3373 = vunpack.c.l.b16 %v973
      %v3374 = vunpack.c.l.b16 %v974
      %v3375 = vunpack.c.l.b16 %v975
      %v3376 = vunpack.c.l.b16 %v976
      %v3377 = vunpack.c.l.b16 %v977
      %v3378 = vunpack.c.l.b16 %v978
      %v3379 = vunpack.c.l.b16 %v979
      %v3380 = vunpack.c.l.b16 %v980
      %v3381 = vunpack.c.l.b16 %v981
      %v3382 = vunpack.c.l.b16 %v982
      %v3383 = vunpack.c.l.b16 %v983
      %v3384 = vunpack.c.l.b16 %v984
      %v3385 = vunpack.c.l.b16 %v985
      %v3386 = vunpack.c.l.b16 %v986
      %v3387 = vunpack.c.l.b16 %v987
      %v3388 = vunpack.c.l.b16 %v988
      %v3389 = vunpack.c.l.b16 %v989
      %v3390 = vunpack.c.l.b16 %v990
      %v3391 = vunpack.c.l.b16 %v991
      %v3392 = vunpack.c.l.b16 %v992
      %v3393 = vunpack.c.l.b16 %v993
      %v3394 = vunpack.c.l.b16 %v994
      %v3395 = vunpack.c.l.b16 %v995
      %v3396 = vunpack.c.l.b16 %v996
      %v3397 = vunpack.c.l.b16 %v997
      %v3398 = vunpack.c.l.b16 %v998
      %v3399 = vunpack.c.l.b16 %v999
      %v3400 = vunpack.c.l.b16 %v1000
      %v3401 = vunpack.c.l.b16 %v1001
      %v3402 = vunpack.c.l.b16 %v1002
      %v3403 = vunpack.c.l.b16 %v1003
      %v3404 = vunpack.c.l.b16 %v1004
      %v3405 = vunpack.c.l.b16 %v1005
      %v3406 = vunpack.c.l.b16 %v1006
      %v3407 = vunpack.c.l.b16 %v1007
      %v3408 = vunpack.c.l.b16 %v1008
      %v3409 = vunpack.c.l.b16 %v1009
      %v3410 = vunpack.c.l.b16 %v1010
      %v3411 = vunpack.c.l.b16 %v1011
      %v3412 = vunpack.c.l.b16 %v1012
      %v3413 = vunpack.c.l.b16 %v1013
      %v3414 = vunpack.c.l.b16 %v1014
      %v3415 = vunpack.c.l.b16 %v1015
      %v3416 = vunpack.c.l.b16 %v1016
      %v3417 = vunpack.c.l.b16 %v1017
      %v3418 = vunpack.c.l.b16 %v1018
      %v3419 = vunpack.c.l.b16 %v1019
      %v3420 = vunpack.c.l.b16 %v1020
      %v3421 = vunpack.c.l.b16 %v1021
      %v3422 = vunpack.c.l.b16 %v1022
      %v3423 = vunpack.c.l.b16 %v1023
      %v3424 = vunpack.c.l.b16 %v1024
      %v3425 = vunpack.c.l.b16 %v1025
      %v3426 = vunpack.c.l.b16 %v1026
      %v3427 = vunpack.c.l.b16 %v1027
      %v3428 = vunpack.c.l.b16 %v1028
      %v3429 = vunpack.c.l.b16 %v1029
      %v3430 = vunpack.c.l.b16 %v1030
      %v3431 = vunpack.c.l.b16 %v1031
      %v3432 = vunpack.c.l.b16 %v1032
      %v3433 = vunpack.c.l.b16 %v1033
      %v3434 = vunpack.c.l.b16 %v1034
      %v3435 = vunpack.c.l.b16 %v1035
      %v3436 = vunpack.c.l.b16 %v1036
      %v3437 = vunpack.c.l.b16 %v1037
      %v3438 = vunpack.c.l.b16 %v1038
      %v3439 = vunpack.c.l.b16 %v1039
      %v3440 = vunpack.c.l.b16 %v1040
      %v3441 = vunpack.c.l.b16 %v1041
      %v3442 = vunpack.c.l.b16 %v1042
      %v3443 = vunpack.c.l.b16 %v1043
      %v3444 = vunpack.c.l.b16 %v1044
      %v3445 = vunpack.c.l.b16 %v1045
      %v3446 = vunpack.c.l.b16 %v1046
      %v3447 = vunpack.c.l.b16 %v1047
      %v3448 = vunpack.c.l.b16 %v1048
      %v3449 = vunpack.c.l.b16 %v1049
      %v3450 = vpack.c.b16 %v2939, %v2938
      %v3451 = vpack.c.b16 %v2941, %v2940
      %v3452 = vpack.c.b16 %v2943, %v2942
      %v3453 = vpack.c.b16 %v2945, %v2944
      %v3454 = vpack.c.b16 %v2947, %v2946
      %v3455 = vpack.c.b16 %v2949, %v2948
      %v3456 = vpack.c.b16 %v2951, %v2950
      %v3457 = vpack.c.b16 %v2953, %v2952
      %v3458 = vpack.c.b16 %v2955, %v2954
      %v3459 = vpack.c.b16 %v2957, %v2956
      %v3460 = vpack.c.b16 %v2959, %v2958
      %v3461 = vpack.c.b16 %v2961, %v2960
      %v3462 = vpack.c.b16 %v2963, %v2962
      %v3463 = vpack.c.b16 %v2965, %v2964
      %v3464 = vpack.c.b16 %v2967, %v2966
      %v3465 = vpack.c.b16 %v2969, %v2968
      %v3466 = vpack.c.b16 %v2971, %v2970
      %v3467 = vpack.c.b16 %v2973, %v2972
      %v3468 = vpack.c.b16 %v2975, %v2974
      %v3469 = vpack.c.b16 %v2977, %v2976
      %v3470 = vpack.c.b16 %v2979, %v2978
      %v3471 = vpack.c.b16 %v2981, %v2980
      %v3472 = vpack.c.b16 %v2983, %v2982
      %v3473 = vpack.c.b16 %v2985, %v2984
      %v3474 = vpack.c.b16 %v2987, %v2986
      %v3475 = vpack.c.b16 %v2989, %v2988
      %v3476 = vpack.c.b16 %v2991, %v2990
      %v3477 = vpack.c.b16 %v2993, %v2992
      %v3478 = vpack.c.b16 %v2995, %v2994
      %v3479 = vpack.c.b16 %v2997, %v2996
      %v3480 = vpack.c.b16 %v2999, %v2998
      %v3481 = vpack.c.b16 %v3001, %v3000
      %v3482 = vpack.c.b16 %v3003, %v3002
      %v3483 = vpack.c.b16 %v3005, %v3004
      %v3484 = vpack.c.b16 %v3007, %v3006
      %v3485 = vpack.c.b16 %v3009, %v3008
      %v3486 = vpack.c.b16 %v3011, %v3010
      %v3487 = vpack.c.b16 %v3013, %v3012
      %v3488 = vpack.c.b16 %v3015, %v3014
      %v3489 = vpack.c.b16 %v3017, %v3016
      %v3490 = vpack.c.b16 %v3019, %v3018
      %v3491 = vpack.c.b16 %v3021, %v3020
      %v3492 = vpack.c.b16 %v3023, %v3022
      %v3493 = vpack.c.b16 %v3025, %v3024
      %v3494 = vpack.c.b16 %v3027, %v3026
      %v3495 = vpack.c.b16 %v3029, %v3028
      %v3496 = vpack.c.b16 %v3031, %v3030
      %v3497 = vpack.c.b16 %v3033, %v3032
      %v3498 = vpack.c.b16 %v3035, %v3034
      %v3499 = vpack.c.b16 %v3037, %v3036
      %v3500 = vpack.c.b16 %v3039, %v3038
      %v3501 = vpack.c.b16 %v3041, %v3040
      %v3502 = vpack.c.b16 %v3043, %v3042
      %v3503 = vpack.c.b16 %v3045, %v3044
      %v3504 = vpack.c.b16 %v3047, %v3046
      %v3505 = vpack.c.b16 %v3049, %v3048
      %v3506 = vpack.c.b16 %v3051, %v3050
      %v3507 = vpack.c.b16 %v3053, %v3052
      %v3508 = vpack.c.b16 %v3055, %v3054
      %v3509 = vpack.c.b16 %v3057, %v3056
      %v3510 = vpack.c.b16 %v3059, %v3058
      %v3511 = vpack.c.b16 %v3061, %v3060
      %v3512 = vpack.c.b16 %v3063, %v3062
      %v3513 = vpack.c.b16 %v3065, %v3064
      %v3514 = vpack.c.b16 %v3067, %v3066
      %v3515 = vpack.c.b16 %v3069, %v3068
      %v3516 = vpack.c.b16 %v3071, %v3070
      %v3517 = vpack.c.b16 %v3073, %v3072
      %v3518 = vpack.c.b16 %v3075, %v3074
      %v3519 = vpack.c.b16 %v3077, %v3076
      %v3520 = vpack.c.b16 %v3079, %v3078
      %v3521 = vpack.c.b16 %v3081, %v3080
      %v3522 = vpack.c.b16 %v3083, %v3082
      %v3523 = vpack.c.b16 %v3085, %v3084
      %v3524 = vpack.c.b16 %v3087, %v3086
      %v3525 = vpack.c.b16 %v3089, %v3088
      %v3526 = vpack.c.b16 %v3091, %v3090
      %v3527 = vpack.c.b16 %v3093, %v3092
      %v3528 = vpack.c.b16 %v3095, %v3094
      %v3529 = vpack.c.b16 %v3097, %v3096
      %v3530 = vpack.c.b16 %v3099, %v3098
      %v3531 = vpack.c.b16 %v3101, %v3100
      %v3532 = vpack.c.b16 %v3103, %v3102
      %v3533 = vpack.c.b16 %v3105, %v3104
      %v3534 = vpack.c.b16 %v3107, %v3106
      %v3535 = vpack.c.b16 %v3109, %v3108
      %v3536 = vpack.c.b16 %v3111, %v3110
      %v3537 = vpack.c.b16 %v3113, %v3112
      %v3538 = vpack.c.b16 %v3115, %v3114
      %v3539 = vpack.c.b16 %v3117, %v3116
      %v3540 = vpack.c.b16 %v3119, %v3118
      %v3541 = vpack.c.b16 %v3121, %v3120
      %v3542 = vpack.c.b16 %v3123, %v3122
      %v3543 = vpack.c.b16 %v3125, %v3124
      %v3544 = vpack.c.b16 %v3127, %v3126
      %v3545 = vpack.c.b16 %v3129, %v3128
      %v3546 = vpack.c.b16 %v3131, %v3130
      %v3547 = vpack.c.b16 %v3133, %v3132
      %v3548 = vpack.c.b16 %v3135, %v3134
      %v3549 = vpack.c.b16 %v3137, %v3136
      %v3550 = vpack.c.b16 %v3139, %v3138
      %v3551 = vpack.c.b16 %v3141, %v3140
      %v3552 = vpack.c.b16 %v3143, %v3142
      %v3553 = vpack.c.b16 %v3145, %v3144
      %v3554 = vpack.c.b16 %v3147, %v3146
      %v3555 = vpack.c.b16 %v3149, %v3148
      %v3556 = vpack.c.b16 %v3151, %v3150
      %v3557 = vpack.c.b16 %v3153, %v3152
      %v3558 = vpack.c.b16 %v3155, %v3154
      %v3559 = vpack.c.b16 %v3157, %v3156
      %v3560 = vpack.c.b16 %v3159, %v3158
      %v3561 = vpack.c.b16 %v3161, %v3160
      %v3562 = vpack.c.b16 %v3163, %v3162
      %v3563 = vpack.c.b16 %v3165, %v3164
      %v3564 = vpack.c.b16 %v3167, %v3166
      %v3565 = vpack.c.b16 %v3169, %v3168
      %v3566 = vpack.c.b16 %v3171, %v3170
      %v3567 = vpack.c.b16 %v3173, %v3172
      %v3568 = vpack.c.b16 %v3175, %v3174
      %v3569 = vpack.c.b16 %v3177, %v3176
      %v3570 = vpack.c.b16 %v3179, %v3178
      %v3571 = vpack.c.b16 %v3181, %v3180
      %v3572 = vpack.c.b16 %v3183, %v3182
      %v3573 = vpack.c.b16 %v3185, %v3184
      %v3574 = vpack.c.b16 %v3187, %v3186
      %v3575 = vpack.c.b16 %v3189, %v3188
      %v3576 = vpack.c.b16 %v3191, %v3190
      %v3577 = vpack.c.b16 %v3193, %v3192
      %v3578 = vpack.c.b16 %v3195, %v3194
      %v3579 = vpack.c.b16 %v3197, %v3196
      %v3580 = vpack.c.b16 %v3199, %v3198
      %v3581 = vpack.c.b16 %v3201, %v3200
      %v3582 = vpack.c.b16 %v3203, %v3202
      %v3583 = vpack.c.b16 %v3205, %v3204
      %v3584 = vpack.c.b16 %v3207, %v3206
      %v3585 = vpack.c.b16 %v3209, %v3208
      %v3586 = vpack.c.b16 %v3211, %v3210
      %v3587 = vpack.c.b16 %v3213, %v3212
      %v3588 = vpack.c.b16 %v3215, %v3214
      %v3589 = vpack.c.b16 %v3217, %v3216
      %v3590 = vpack.c.b16 %v3219, %v3218
      %v3591 = vpack.c.b16 %v3221, %v3220
      %v3592 = vpack.c.b16 %v3223, %v3222
      %v3593 = vpack.c.b16 %v3225, %v3224
      %v3594 = vpack.c.b16 %v3227, %v3226
      %v3595 = vpack.c.b16 %v3229, %v3228
      %v3596 = vpack.c.b16 %v3231, %v3230
      %v3597 = vpack.c.b16 %v3233, %v3232
      %v3598 = vpack.c.b16 %v3235, %v3234
      %v3599 = vpack.c.b16 %v3237, %v3236
      %v3600 = vpack.c.b16 %v3239, %v3238
      %v3601 = vpack.c.b16 %v3241, %v3240
      %v3602 = vpack.c.b16 %v3243, %v3242
      %v3603 = vpack.c.b16 %v3245, %v3244
      %v3604 = vpack.c.b16 %v3247, %v3246
      %v3605 = vpack.c.b16 %v3249, %v3248
      %v3606 = vpack.c.b16 %v3251, %v3250
      %v3607 = vpack.c.b16 %v3253, %v3252
      %v3608 = vpack.c.b16 %v3255, %v3254
      %v3609 = vpack.c.b16 %v3257, %v3256
      %v3610 = vpack.c.b16 %v3259, %v3258
      %v3611 = vpack.c.b16 %v3261, %v3260
      %v3612 = vpack.c.b16 %v3263, %v3262
      %v3613 = vpack.c.b16 %v3265, %v3264
      %v3614 = vpack.c.b16 %v3267, %v3266
      %v3615 = vpack.c.b16 %v3269, %v3268
      %v3616 = vpack.c.b16 %v3271, %v3270
      %v3617 = vpack.c.b16 %v3273, %v3272
      %v3618 = vpack.c.b16 %v3275, %v3274
      %v3619 = vpack.c.b16 %v3277, %v3276
      %v3620 = vpack.c.b16 %v3279, %v3278
      %v3621 = vpack.c.b16 %v3281, %v3280
      %v3622 = vpack.c.b16 %v3283, %v3282
      %v3623 = vpack.c.b16 %v3285, %v3284
      %v3624 = vpack.c.b16 %v3287, %v3286
      %v3625 = vpack.c.b16 %v3289, %v3288
      %v3626 = vpack.c.b16 %v3291, %v3290
      %v3627 = vpack.c.b16 %v3293, %v3292
      %v3628 = vpack.c.b16 %v3295, %v3294
      %v3629 = vpack.c.b16 %v3297, %v3296
      %v3630 = vpack.c.b16 %v3299, %v3298
      %v3631 = vpack.c.b16 %v3301, %v3300
      %v3632 = vpack.c.b16 %v3303, %v3302
      %v3633 = vpack.c.b16 %v3305, %v3304
      %v3634 = vpack.c.b16 %v3307, %v3306
      %v3635 = vpack.c.b16 %v3309, %v3308
      %v3636 = vpack.c.b16 %v3311, %v3310
      %v3637 = vpack.c.b16 %v3313, %v3312
      %v3638 = vpack.c.b16 %v3315, %v3314
      %v3639 = vpack.c.b16 %v3317, %v3316
      %v3640 = vpack.c.b16 %v3319, %v3318
      %v3641 = vpack.c.b16 %v3321, %v3320
      %v3642 = vpack.c.b16 %v3323, %v3322
      %v3643 = vpack.c.b16 %v3325, %v3324
      %v3644 = vpack.c.b16 %v3327, %v3326
      %v3645 = vpack.c.b16 %v3329, %v3328
      %v3646 = vpack.c.b16 %v3331, %v3330
      %v3647 = vpack.c.b16 %v3333, %v3332
      %v3648 = vpack.c.b16 %v3335, %v3334
      %v3649 = vpack.c.b16 %v3337, %v3336
      %v3650 = vpack.c.b16 %v3339, %v3338
      %v3651 = vpack.c.b16 %v3341, %v3340
      %v3652 = vpack.c.b16 %v3343, %v3342
      %v3653 = vpack.c.b16 %v3345, %v3344
      %v3654 = vpack.c.b16 %v3347, %v3346
      %v3655 = vpack.c.b16 %v3349, %v3348
      %v3656 = vpack.c.b16 %v3351, %v3350
      %v3657 = vpack.c.b16 %v3353, %v3352
      %v3658 = vpack.c.b16 %v3355, %v3354
      %v3659 = vpack.c.b16 %v3357, %v3356
      %v3660 = vpack.c.b16 %v3359, %v3358
      %v3661 = vpack.c.b16 %v3361, %v3360
      %v3662 = vpack.c.b16 %v3363, %v3362
      %v3663 = vpack.c.b16 %v3365, %v3364
      %v3664 = vpack.c.b16 %v3367, %v3366
      %v3665 = vpack.c.b16 %v3369, %v3368
      %v3666 = vpack.c.b16 %v3371, %v3370
      %v3667 = vpack.c.b16 %v3373, %v3372
      %v3668 = vpack.c.b16 %v3375, %v3374
      %v3669 = vpack.c.b16 %v3377, %v3376
      %v3670 = vpack.c.b16 %v3379, %v3378
      %v3671 = vpack.c.b16 %v3381, %v3380
      %v3672 = vpack.c.b16 %v3383, %v3382
      %v3673 = vpack.c.b16 %v3385, %v3384
      %v3674 = vpack.c.b16 %v3387, %v3386
      %v3675 = vpack.c.b16 %v3389, %v3388
      %v3676 = vpack.c.b16 %v3391, %v3390
      %v3677 = vpack.c.b16 %v3393, %v3392
      %v3678 = vpack.c.b16 %v3395, %v3394
      %v3679 = vpack.c.b16 %v3397, %v3396
      %v3680 = vpack.c.b16 %v3399, %v3398
      %v3681 = vpack.c.b16 %v3401, %v3400
      %v3682 = vpack.c.b16 %v3403, %v3402
      %v3683 = vpack.c.b16 %v3405, %v3404
      %v3684 = vpack.c.b16 %v3407, %v3406
      %v3685 = vpack.c.b16 %v3409, %v3408
      %v3686 = vpack.c.b16 %v3411, %v3410
      %v3687 = vpack.c.b16 %v3413, %v3412
      %v3688 = vpack.c.b16 %v3415, %v3414
      %v3689 = vpack.c.b16 %v3417, %v3416
      %v3690 = vpack.c.b16 %v3419, %v3418
      %v3691 = vpack.c.b16 %v3421, %v3420
      %v3692 = vpack.c.b16 %v3423, %v3422
      %v3693 = vpack.c.b16 %v3425, %v3424
      %v3694 = vpack.c.b16 %v3427, %v3426
      %v3695 = vpack.c.b16 %v3429, %v3428
      %v3696 = vpack.c.b16 %v3431, %v3430
      %v3697 = vpack.c.b16 %v3433, %v3432
      %v3698 = vpack.c.b16 %v3435, %v3434
      %v3699 = vpack.c.b16 %v3437, %v3436
      %v3700 = vpack.c.b16 %v3439, %v3438
      %v3701 = vpack.c.b16 %v3441, %v3440
      %v3702 = vpack.c.b16 %v3443, %v3442
      %v3703 = vpack.c.b16 %v3445, %v3444
      %v3704 = vpack.c.b16 %v3447, %v3446
      %v3705 = vpack.c.b16 %v3449, %v3448
      %3962 = vmatprep.subr.bf16.mxu0 0
      %3963 = vmatpush1.bf16.msra.mxu0 %v3450
      %3964 = vmatprep.subr.bf16.mxu0 0
      %3965 = vmatpush1.bf16.msra.mxu0 %v3451
      %3966 = vmatprep.subr.bf16.mxu0 0
      %3967 = vmatpush1.bf16.msra.mxu0 %v3452
      %3968 = vmatprep.subr.bf16.mxu0 0
      %3969 = vmatpush1.bf16.msra.mxu0 %v3453
      %3970 = vmatprep.subr.bf16.mxu0 0
      %3971 = vmatpush1.bf16.msra.mxu0 %v3454
      %3972 = vmatprep.subr.bf16.mxu0 0
      %3973 = vmatpush1.bf16.msra.mxu0 %v3455
      %3974 = vmatprep.subr.bf16.mxu0 0
      %3975 = vmatpush1.bf16.msra.mxu0 %v3456
      %3976 = vmatprep.subr.bf16.mxu0 0
      %3977 = vmatpush1.bf16.msra.mxu0 %v3457
      %3978 = vmatprep.subr.bf16.mxu0 0
      %3979 = vmatpush1.bf16.msra.mxu0 %v3458
      %3980 = vmatprep.subr.bf16.mxu0 0
      %3981 = vmatpush1.bf16.msra.mxu0 %v3459
      %3982 = vmatprep.subr.bf16.mxu0 0
      %3983 = vmatpush1.bf16.msra.mxu0 %v3460
      %3984 = vmatprep.subr.bf16.mxu0 0
      %3985 = vmatpush1.bf16.msra.mxu0 %v3461
      %3986 = vmatprep.subr.bf16.mxu0 0
      %3987 = vmatpush1.bf16.msra.mxu0 %v3462
      %3988 = vmatprep.subr.bf16.mxu0 0
      %3989 = vmatpush1.bf16.msra.mxu0 %v3463
      %3990 = vmatprep.subr.bf16.mxu0 0
      %3991 = vmatpush1.bf16.msra.mxu0 %v3464
      %3992 = vmatprep.subr.bf16.mxu0 0
      %3993 = vmatpush1.bf16.msra.mxu0 %v3465
      %3994 = vmatprep.mubr.bf16.mxu0 %v1915
      %3995 = vmatmul.mubr.bf16.gmra.mrb[0].mxu0 %v1914
      %v3996 = vpop.f32.mrb[0].mxu0
      %v3997 = vadd.f32 %v1069, %v3996
      %v3998 = vpop.f32.mrb[0].mxu0
      %v3999 = vpop.f32.mrb[0].mxu0
      %v4000 = vadd.f32 %v1074, %v3999
      %v4001 = vpop.f32.mrb[0].mxu0
      %4002 = vmatprep.mubr.bf16.mxu0 %v1947
      %4003 = vmatmul.mubr.bf16.gmra.mrb[0].mxu0 %v1946
      %v4004 = vpop.f32.mrb[0].mxu0
      %v4005 = vadd.f32 %v1079, %v4004
      %v4006 = vpop.f32.mrb[0].mxu0
      %v4007 = vpop.f32.mrb[0].mxu0
      %v4008 = vadd.f32 %v1084, %v4007
      %v4009 = vpop.f32.mrb[0].mxu0
      %4010 = vmatprep.mubr.bf16.mxu0 %v1979
      %4011 = vmatmul.mubr.bf16.gmra.mrb[0].mxu0 %v1978
      %v4012 = vpop.f32.mrb[0].mxu0
      %v4013 = vadd.f32 %v1089, %v4012
      %v4014 = vpop.f32.mrb[0].mxu0
      %v4015 = vpop.f32.mrb[0].mxu0
      %v4016 = vadd.f32 %v1094, %v4015
      %v4017 = vpop.f32.mrb[0].mxu0
      %4018 = vmatprep.mubr.bf16.mxu0 %v2011
      %4019 = vmatmul.mubr.bf16.gmra.mrb[0].mxu0 %v2010
      %v4020 = vpop.f32.mrb[0].mxu0
      %v4021 = vadd.f32 %v1099, %v4020
      %v4022 = vpop.f32.mrb[0].mxu0
      %v4023 = vpop.f32.mrb[0].mxu0
      %v4024 = vadd.f32 %v1104, %v4023
      %v4025 = vpop.f32.mrb[0].mxu0
      %4026 = vmatprep.mubr.bf16.mxu0 %v2043
      %4027 = vmatmul.mubr.bf16.gmra.mrb[0].mxu0 %v2042
      %v4028 = vpop.f32.mrb[0].mxu0
      %v4029 = vadd.f32 %v1109, %v4028
      %v4030 = vpop.f32.mrb[0].mxu0
      %v4031 = vpop.f32.mrb[0].mxu0
      %v4032 = vadd.f32 %v1114, %v4031
      %v4033 = vpop.f32.mrb[0].mxu0
      %4034 = vmatprep.mubr.bf16.mxu0 %v2075
      %4035 = vmatmul.mubr.bf16.gmra.mrb[0].mxu0 %v2074
      %v4036 = vpop.f32.mrb[0].mxu0
      %v4037 = vadd.f32 %v1119, %v4036
      %v4038 = vpop.f32.mrb[0].mxu0
      %v4039 = vpop.f32.mrb[0].mxu0
      %v4040 = vadd.f32 %v1124, %v4039
      %v4041 = vpop.f32.mrb[0].mxu0
      %4042 = vmatprep.mubr.bf16.mxu0 %v2107
      %4043 = vmatmul.mubr.bf16.gmra.mrb[0].mxu0 %v2106
      %v4044 = vpop.f32.mrb[0].mxu0
      %v4045 = vadd.f32 %v1129, %v4044
      %v4046 = vpop.f32.mrb[0].mxu0
      %v4047 = vpop.f32.mrb[0].mxu0
      %v4048 = vadd.f32 %v1134, %v4047
      %v4049 = vpop.f32.mrb[0].mxu0
      %4050 = vmatprep.mubr.bf16.mxu0 %v2139
      %4051 = vmatmul.mubr.bf16.gmra.mrb[0].mxu0 %v2138
      %v4052 = vpop.f32.mrb[0].mxu0
      %v4053 = vadd.f32 %v1139, %v4052
      %v4054 = vpop.f32.mrb[0].mxu0
      %v4055 = vpop.f32.mrb[0].mxu0
      %v4056 = vadd.f32 %v1144, %v4055
      %v4057 = vpop.f32.mrb[0].mxu0
      %4058 = vdwg.mxu0
      %4059 = vmatprep.subr.bf16.mxu0 0
      %4060 = vmatpush1.bf16.msra.mxu0 %v3466
      %4061 = vmatprep.subr.bf16.mxu0 0
      %4062 = vmatpush1.bf16.msra.mxu0 %v3467
      %4063 = vmatprep.subr.bf16.mxu0 0
      %4064 = vmatpush1.bf16.msra.mxu0 %v3468
      %4065 = vmatprep.subr.bf16.mxu0 0
      %4066 = vmatpush1.bf16.msra.mxu0 %v3469
      %4067 = vmatprep.subr.bf16.mxu0 0
      %4068 = vmatpush1.bf16.msra.mxu0 %v3470
      %4069 = vmatprep.subr.bf16.mxu0 0
      %4070 = vmatpush1.bf16.msra.mxu0 %v3471
      %4071 = vmatprep.subr.bf16.mxu0 0
      %4072 = vmatpush1.bf16.msra.mxu0 %v3472
      %4073 = vmatprep.subr.bf16.mxu0 0
      %4074 = vmatpush1.bf16.msra.mxu0 %v3473
      %4075 = vmatprep.subr.bf16.mxu0 0
      %4076 = vmatpush1.bf16.msra.mxu0 %v3474
      %4077 = vmatprep.subr.bf16.mxu0 0
      %4078 = vmatpush1.bf16.msra.mxu0 %v3475
      %4079 = vmatprep.subr.bf16.mxu0 0
      %4080 = vmatpush1.bf16.msra.mxu0 %v3476
      %4081 = vmatprep.subr.bf16.mxu0 0
      %4082 = vmatpush1.bf16.msra.mxu0 %v3477
      %4083 = vmatprep.subr.bf16.mxu0 0
      %4084 = vmatpush1.bf16.msra.mxu0 %v3478
      %4085 = vmatprep.subr.bf16.mxu0 0
      %4086 = vmatpush1.bf16.msra.mxu0 %v3479
      %4087 = vmatprep.subr.bf16.mxu0 0
      %4088 = vmatpush1.bf16.msra.mxu0 %v3480
      %4089 = vmatprep.subr.bf16.mxu0 0
      %4090 = vmatpush1.bf16.msra.mxu0 %v3481
      %4091 = vmatprep.mubr.bf16.mxu0 %v1917
      %4092 = vmatmul.mubr.bf16.gmra.mrb[0].mxu0 %v1916
      %v4093 = vpop.f32.mrb[0].mxu0
      %v4094 = vadd.f32 %v3997, %v4093
      %v4095 = vpop.f32.mrb[0].mxu0
      %v4096 = vpop.f32.mrb[0].mxu0
      %v4097 = vadd.f32 %v4000, %v4096
      %v4098 = vpop.f32.mrb[0].mxu0
      %4099 = vmatprep.mubr.bf16.mxu0 %v1949
      %4100 = vmatmul.mubr.bf16.gmra.mrb[0].mxu0 %v1948
      %v4101 = vpop.f32.mrb[0].mxu0
      %v4102 = vadd.f32 %v4005, %v4101
      %v4103 = vpop.f32.mrb[0].mxu0
      %v4104 = vpop.f32.mrb[0].mxu0
      %v4105 = vadd.f32 %v4008, %v4104
      %v4106 = vpop.f32.mrb[0].mxu0
      %4107 = vmatprep.mubr.bf16.mxu0 %v1981
      %4108 = vmatmul.mubr.bf16.gmra.mrb[0].mxu0 %v1980
      %v4109 = vpop.f32.mrb[0].mxu0
      %v4110 = vadd.f32 %v4013, %v4109
      %v4111 = vpop.f32.mrb[0].mxu0
      %v4112 = vpop.f32.mrb[0].mxu0
      %v4113 = vadd.f32 %v4016, %v4112
      %v4114 = vpop.f32.mrb[0].mxu0
      %4115 = vmatprep.mubr.bf16.mxu0 %v2013
      %4116 = vmatmul.mubr.bf16.gmra.mrb[0].mxu0 %v2012
      %v4117 = vpop.f32.mrb[0].mxu0
      %v4118 = vadd.f32 %v4021, %v4117
      %v4119 = vpop.f32.mrb[0].mxu0
      %v4120 = vpop.f32.mrb[0].mxu0
      %v4121 = vadd.f32 %v4024, %v4120
      %v4122 = vpop.f32.mrb[0].mxu0
      %4123 = vmatprep.mubr.bf16.mxu0 %v2045
      %4124 = vmatmul.mubr.bf16.gmra.mrb[0].mxu0 %v2044
      %v4125 = vpop.f32.mrb[0].mxu0
      %v4126 = vadd.f32 %v4029, %v4125
      %v4127 = vpop.f32.mrb[0].mxu0
      %v4128 = vpop.f32.mrb[0].mxu0
      %v4129 = vadd.f32 %v4032, %v4128
      %v4130 = vpop.f32.mrb[0].mxu0
      %4131 = vmatprep.mubr.bf16.mxu0 %v2077
      %4132 = vmatmul.mubr.bf16.gmra.mrb[0].mxu0 %v2076
      %v4133 = vpop.f32.mrb[0].mxu0
      %v4134 = vadd.f32 %v4037, %v4133
      %v4135 = vpop.f32.mrb[0].mxu0
      %v4136 = vpop.f32.mrb[0].mxu0
      %v4137 = vadd.f32 %v4040, %v4136
      %v4138 = vpop.f32.mrb[0].mxu0
      %4139 = vmatprep.mubr.bf16.mxu0 %v2109
      %4140 = vmatmul.mubr.bf16.gmra.mrb[0].mxu0 %v2108
      %v4141 = vpop.f32.mrb[0].mxu0
      %v4142 = vadd.f32 %v4045, %v4141
      %v4143 = vpop.f32.mrb[0].mxu0
      %v4144 = vpop.f32.mrb[0].mxu0
      %v4145 = vadd.f32 %v4048, %v4144
      %v4146 = vpop.f32.mrb[0].mxu0
      %4147 = vmatprep.mubr.bf16.mxu0 %v2141
      %4148 = vmatmul.mubr.bf16.gmra.mrb[0].mxu0 %v2140
      %v4149 = vpop.f32.mrb[0].mxu0
      %v4150 = vadd.f32 %v4053, %v4149
      %v4151 = vpop.f32.mrb[0].mxu0
      %v4152 = vpop.f32.mrb[0].mxu0
      %v4153 = vadd.f32 %v4056, %v4152
      %v4154 = vpop.f32.mrb[0].mxu0
      %4155 = vdwg.mxu0
      %4156 = vmatprep.subr.bf16.mxu0 0
      %4157 = vmatpush1.bf16.msra.mxu0 %v3482
      %4158 = vmatprep.subr.bf16.mxu0 0
      %4159 = vmatpush1.bf16.msra.mxu0 %v3483
      %4160 = vmatprep.subr.bf16.mxu0 0
      %4161 = vmatpush1.bf16.msra.mxu0 %v3484
      %4162 = vmatprep.subr.bf16.mxu0 0
      %4163 = vmatpush1.bf16.msra.mxu0 %v3485
      %4164 = vmatprep.subr.bf16.mxu0 0
      %4165 = vmatpush1.bf16.msra.mxu0 %v3486
      %4166 = vmatprep.subr.bf16.mxu0 0
      %4167 = vmatpush1.bf16.msra.mxu0 %v3487
      %4168 = vmatprep.subr.bf16.mxu0 0
      %4169 = vmatpush1.bf16.msra.mxu0 %v3488
      %4170 = vmatprep.subr.bf16.mxu0 0
      %4171 = vmatpush1.bf16.msra.mxu0 %v3489
      %4172 = vmatprep.subr.bf16.mxu0 0
      %4173 = vmatpush1.bf16.msra.mxu0 %v3490
      %4174 = vmatprep.subr.bf16.mxu0 0
      %4175 = vmatpush1.bf16.msra.mxu0 %v3491
      %4176 = vmatprep.subr.bf16.mxu0 0
      %4177 = vmatpush1.bf16.msra.mxu0 %v3492
      %4178 = vmatprep.subr.bf16.mxu0 0
      %4179 = vmatpush1.bf16.msra.mxu0 %v3493
      %4180 = vmatprep.subr.bf16.mxu0 0
      %4181 = vmatpush1.bf16.msra.mxu0 %v3494
      %4182 = vmatprep.subr.bf16.mxu0 0
      %4183 = vmatpush1.bf16.msra.mxu0 %v3495
      %4184 = vmatprep.subr.bf16.mxu0 0
      %4185 = vmatpush1.bf16.msra.mxu0 %v3496
      %4186 = vmatprep.subr.bf16.mxu0 0
      %4187 = vmatpush1.bf16.msra.mxu0 %v3497
      %4188 = vmatprep.mubr.bf16.mxu0 %v1919
      %4189 = vmatmul.mubr.bf16.gmra.mrb[0].mxu0 %v1918
      %v4190 = vpop.f32.mrb[0].mxu0
      %v4191 = vadd.f32 %v4094, %v4190
      %v4192 = vpop.f32.mrb[0].mxu0
      %v4193 = vpop.f32.mrb[0].mxu0
      %v4194 = vadd.f32 %v4097, %v4193
      %v4195 = vpop.f32.mrb[0].mxu0
      %4196 = vmatprep.mubr.bf16.mxu0 %v1951
      %4197 = vmatmul.mubr.bf16.gmra.mrb[0].mxu0 %v1950
      %v4198 = vpop.f32.mrb[0].mxu0
      %v4199 = vadd.f32 %v4102, %v4198
      %v4200 = vpop.f32.mrb[0].mxu0
      %v4201 = vpop.f32.mrb[0].mxu0
      %v4202 = vadd.f32 %v4105, %v4201
      %v4203 = vpop.f32.mrb[0].mxu0
      %4204 = vmatprep.mubr.bf16.mxu0 %v1983
      %4205 = vmatmul.mubr.bf16.gmra.mrb[0].mxu0 %v1982
      %v4206 = vpop.f32.mrb[0].mxu0
      %v4207 = vadd.f32 %v4110, %v4206
      %v4208 = vpop.f32.mrb[0].mxu0
      %v4209 = vpop.f32.mrb[0].mxu0
      %v4210 = vadd.f32 %v4113, %v4209
      %v4211 = vpop.f32.mrb[0].mxu0
      %4212 = vmatprep.mubr.bf16.mxu0 %v2015
      %4213 = vmatmul.mubr.bf16.gmra.mrb[0].mxu0 %v2014
      %v4214 = vpop.f32.mrb[0].mxu0
      %v4215 = vadd.f32 %v4118, %v4214
      %v4216 = vpop.f32.mrb[0].mxu0
      %v4217 = vpop.f32.mrb[0].mxu0
      %v4218 = vadd.f32 %v4121, %v4217
      %v4219 = vpop.f32.mrb[0].mxu0
      %4220 = vmatprep.mubr.bf16.mxu0 %v2047
      %4221 = vmatmul.mubr.bf16.gmra.mrb[0].mxu0 %v2046
      %v4222 = vpop.f32.mrb[0].mxu0
      %v4223 = vadd.f32 %v4126, %v4222
      %v4224 = vpop.f32.mrb[0].mxu0
      %v4225 = vpop.f32.mrb[0].mxu0
      %v4226 = vadd.f32 %v4129, %v4225
      %v4227 = vpop.f32.mrb[0].mxu0
      %4228 = vmatprep.mubr.bf16.mxu0 %v2079
      %4229 = vmatmul.mubr.bf16.gmra.mrb[0].mxu0 %v2078
      %v4230 = vpop.f32.mrb[0].mxu0
      %v4231 = vadd.f32 %v4134, %v4230
      %v4232 = vpop.f32.mrb[0].mxu0
      %v4233 = vpop.f32.mrb[0].mxu0
      %v4234 = vadd.f32 %v4137, %v4233
      %v4235 = vpop.f32.mrb[0].mxu0
      %4236 = vmatprep.mubr.bf16.mxu0 %v2111
      %4237 = vmatmul.mubr.bf16.gmra.mrb[0].mxu0 %v2110
      %v4238 = vpop.f32.mrb[0].mxu0
      %v4239 = vadd.f32 %v4142, %v4238
      %v4240 = vpop.f32.mrb[0].mxu0
      %v4241 = vpop.f32.mrb[0].mxu0
      %v4242 = vadd.f32 %v4145, %v4241
      %v4243 = vpop.f32.mrb[0].mxu0
      %4244 = vmatprep.mubr.bf16.mxu0 %v2143
      %4245 = vmatmul.mubr.bf16.gmra.mrb[0].mxu0 %v2142
      %v4246 = vpop.f32.mrb[0].mxu0
      %v4247 = vadd.f32 %v4150, %v4246
      %v4248 = vpop.f32.mrb[0].mxu0
      %v4249 = vpop.f32.mrb[0].mxu0
      %v4250 = vadd.f32 %v4153, %v4249
      %v4251 = vpop.f32.mrb[0].mxu0
      %4252 = vdwg.mxu0
      %4253 = vmatprep.subr.bf16.mxu0 0
      %4254 = vmatpush1.bf16.msra.mxu0 %v3498
      %4255 = vmatprep.subr.bf16.mxu0 0
      %4256 = vmatpush1.bf16.msra.mxu0 %v3499
      %4257 = vmatprep.subr.bf16.mxu0 0
      %4258 = vmatpush1.bf16.msra.mxu0 %v3500
      %4259 = vmatprep.subr.bf16.mxu0 0
      %4260 = vmatpush1.bf16.msra.mxu0 %v3501
      %4261 = vmatprep.subr.bf16.mxu0 0
      %4262 = vmatpush1.bf16.msra.mxu0 %v3502
      %4263 = vmatprep.subr.bf16.mxu0 0
      %4264 = vmatpush1.bf16.msra.mxu0 %v3503
      %4265 = vmatprep.subr.bf16.mxu0 0
      %4266 = vmatpush1.bf16.msra.mxu0 %v3504
      %4267 = vmatprep.subr.bf16.mxu0 0
      %4268 = vmatpush1.bf16.msra.mxu0 %v3505
      %4269 = vmatprep.subr.bf16.mxu0 0
      %4270 = vmatpush1.bf16.msra.mxu0 %v3506
      %4271 = vmatprep.subr.bf16.mxu0 0
      %4272 = vmatpush1.bf16.msra.mxu0 %v3507
      %4273 = vmatprep.subr.bf16.mxu0 0
      %4274 = vmatpush1.bf16.msra.mxu0 %v3508
      %4275 = vmatprep.subr.bf16.mxu0 0
      %4276 = vmatpush1.bf16.msra.mxu0 %v3509
      %4277 = vmatprep.subr.bf16.mxu0 0
      %4278 = vmatpush1.bf16.msra.mxu0 %v3510
      %4279 = vmatprep.subr.bf16.mxu0 0
      %4280 = vmatpush1.bf16.msra.mxu0 %v3511
      %4281 = vmatprep.subr.bf16.mxu0 0
      %4282 = vmatpush1.bf16.msra.mxu0 %v3512
      %4283 = vmatprep.subr.bf16.mxu0 0
      %4284 = vmatpush1.bf16.msra.mxu0 %v3513
      %4285 = vmatprep.mubr.bf16.mxu0 %v1921
      %4286 = vmatmul.mubr.bf16.gmra.mrb[0].mxu0 %v1920
      %v4287 = vpop.f32.mrb[0].mxu0
      %v4288 = vadd.f32 %v4191, %v4287
      %v4289 = vpop.f32.mrb[0].mxu0
      %v4290 = vpop.f32.mrb[0].mxu0
      %v4291 = vadd.f32 %v4194, %v4290
      %v4292 = vpop.f32.mrb[0].mxu0
      %4293 = vmatprep.mubr.bf16.mxu0 %v1953
      %4294 = vmatmul.mubr.bf16.gmra.mrb[0].mxu0 %v1952
      %v4295 = vpop.f32.mrb[0].mxu0
      %v4296 = vadd.f32 %v4199, %v4295
      %v4297 = vpop.f32.mrb[0].mxu0
      %v4298 = vpop.f32.mrb[0].mxu0
      %v4299 = vadd.f32 %v4202, %v4298
      %v4300 = vpop.f32.mrb[0].mxu0
      %4301 = vmatprep.mubr.bf16.mxu0 %v1985
      %4302 = vmatmul.mubr.bf16.gmra.mrb[0].mxu0 %v1984
      %v4303 = vpop.f32.mrb[0].mxu0
      %v4304 = vadd.f32 %v4207, %v4303
      %v4305 = vpop.f32.mrb[0].mxu0
      %v4306 = vpop.f32.mrb[0].mxu0
      %v4307 = vadd.f32 %v4210, %v4306
      %v4308 = vpop.f32.mrb[0].mxu0
      %4309 = vmatprep.mubr.bf16.mxu0 %v2017
      %4310 = vmatmul.mubr.bf16.gmra.mrb[0].mxu0 %v2016
      %v4311 = vpop.f32.mrb[0].mxu0
      %v4312 = vadd.f32 %v4215, %v4311
      %v4313 = vpop.f32.mrb[0].mxu0
      %v4314 = vpop.f32.mrb[0].mxu0
      %v4315 = vadd.f32 %v4218, %v4314
      %v4316 = vpop.f32.mrb[0].mxu0
      %4317 = vmatprep.mubr.bf16.mxu0 %v2049
      %4318 = vmatmul.mubr.bf16.gmra.mrb[0].mxu0 %v2048
      %v4319 = vpop.f32.mrb[0].mxu0
      %v4320 = vadd.f32 %v4223, %v4319
      %v4321 = vpop.f32.mrb[0].mxu0
      %v4322 = vpop.f32.mrb[0].mxu0
      %v4323 = vadd.f32 %v4226, %v4322
      %v4324 = vpop.f32.mrb[0].mxu0
      %4325 = vmatprep.mubr.bf16.mxu0 %v2081
      %4326 = vmatmul.mubr.bf16.gmra.mrb[0].mxu0 %v2080
      %v4327 = vpop.f32.mrb[0].mxu0
      %v4328 = vadd.f32 %v4231, %v4327
      %v4329 = vpop.f32.mrb[0].mxu0
      %v4330 = vpop.f32.mrb[0].mxu0
      %v4331 = vadd.f32 %v4234, %v4330
      %v4332 = vpop.f32.mrb[0].mxu0
      %4333 = vmatprep.mubr.bf16.mxu0 %v2113
      %4334 = vmatmul.mubr.bf16.gmra.mrb[0].mxu0 %v2112
      %v4335 = vpop.f32.mrb[0].mxu0
      %v4336 = vadd.f32 %v4239, %v4335
      %v4337 = vpop.f32.mrb[0].mxu0
      %v4338 = vpop.f32.mrb[0].mxu0
      %v4339 = vadd.f32 %v4242, %v4338
      %v4340 = vpop.f32.mrb[0].mxu0
      %4341 = vmatprep.mubr.bf16.mxu0 %v2145
      %4342 = vmatmul.mubr.bf16.gmra.mrb[0].mxu0 %v2144
      %v4343 = vpop.f32.mrb[0].mxu0
      %v4344 = vadd.f32 %v4247, %v4343
      %v4345 = vpop.f32.mrb[0].mxu0
      %v4346 = vpop.f32.mrb[0].mxu0
      %v4347 = vadd.f32 %v4250, %v4346
      %v4348 = vpop.f32.mrb[0].mxu0
      %4349 = vdwg.mxu0
      %4350 = vmatprep.subr.bf16.mxu0 0
      %4351 = vmatpush1.bf16.msra.mxu0 %v3514
      %4352 = vmatprep.subr.bf16.mxu0 0
      %4353 = vmatpush1.bf16.msra.mxu0 %v3515
      %4354 = vmatprep.subr.bf16.mxu0 0
      %4355 = vmatpush1.bf16.msra.mxu0 %v3516
      %4356 = vmatprep.subr.bf16.mxu0 0
      %4357 = vmatpush1.bf16.msra.mxu0 %v3517
      %4358 = vmatprep.subr.bf16.mxu0 0
      %4359 = vmatpush1.bf16.msra.mxu0 %v3518
      %4360 = vmatprep.subr.bf16.mxu0 0
      %4361 = vmatpush1.bf16.msra.mxu0 %v3519
      %4362 = vmatprep.subr.bf16.mxu0 0
      %4363 = vmatpush1.bf16.msra.mxu0 %v3520
      %4364 = vmatprep.subr.bf16.mxu0 0
      %4365 = vmatpush1.bf16.msra.mxu0 %v3521
      %4366 = vmatprep.subr.bf16.mxu0 0
      %4367 = vmatpush1.bf16.msra.mxu0 %v3522
      %4368 = vmatprep.subr.bf16.mxu0 0
      %4369 = vmatpush1.bf16.msra.mxu0 %v3523
      %4370 = vmatprep.subr.bf16.mxu0 0
      %4371 = vmatpush1.bf16.msra.mxu0 %v3524
      %4372 = vmatprep.subr.bf16.mxu0 0
      %4373 = vmatpush1.bf16.msra.mxu0 %v3525
      %4374 = vmatprep.subr.bf16.mxu0 0
      %4375 = vmatpush1.bf16.msra.mxu0 %v3526
      %4376 = vmatprep.subr.bf16.mxu0 0
      %4377 = vmatpush1.bf16.msra.mxu0 %v3527
      %4378 = vmatprep.subr.bf16.mxu0 0
      %4379 = vmatpush1.bf16.msra.mxu0 %v3528
      %4380 = vmatprep.subr.bf16.mxu0 0
      %4381 = vmatpush1.bf16.msra.mxu0 %v3529
      %4382 = vmatprep.mubr.bf16.mxu0 %v1923
      %4383 = vmatmul.mubr.bf16.gmra.mrb[0].mxu0 %v1922
      %v4384 = vpop.f32.mrb[0].mxu0
      %v4385 = vadd.f32 %v4288, %v4384
      %v4386 = vpop.f32.mrb[0].mxu0
      %v4387 = vpop.f32.mrb[0].mxu0
      %v4388 = vadd.f32 %v4291, %v4387
      %v4389 = vpop.f32.mrb[0].mxu0
      %4390 = vmatprep.mubr.bf16.mxu0 %v1955
      %4391 = vmatmul.mubr.bf16.gmra.mrb[0].mxu0 %v1954
      %v4392 = vpop.f32.mrb[0].mxu0
      %v4393 = vadd.f32 %v4296, %v4392
      %v4394 = vpop.f32.mrb[0].mxu0
      %v4395 = vpop.f32.mrb[0].mxu0
      %v4396 = vadd.f32 %v4299, %v4395
      %v4397 = vpop.f32.mrb[0].mxu0
      %4398 = vmatprep.mubr.bf16.mxu0 %v1987
      %4399 = vmatmul.mubr.bf16.gmra.mrb[0].mxu0 %v1986
      %v4400 = vpop.f32.mrb[0].mxu0
      %v4401 = vadd.f32 %v4304, %v4400
      %v4402 = vpop.f32.mrb[0].mxu0
      %v4403 = vpop.f32.mrb[0].mxu0
      %v4404 = vadd.f32 %v4307, %v4403
      %v4405 = vpop.f32.mrb[0].mxu0
      %4406 = vmatprep.mubr.bf16.mxu0 %v2019
      %4407 = vmatmul.mubr.bf16.gmra.mrb[0].mxu0 %v2018
      %v4408 = vpop.f32.mrb[0].mxu0
      %v4409 = vadd.f32 %v4312, %v4408
      %v4410 = vpop.f32.mrb[0].mxu0
      %v4411 = vpop.f32.mrb[0].mxu0
      %v4412 = vadd.f32 %v4315, %v4411
      %v4413 = vpop.f32.mrb[0].mxu0
      %4414 = vmatprep.mubr.bf16.mxu0 %v2051
      %4415 = vmatmul.mubr.bf16.gmra.mrb[0].mxu0 %v2050
      %v4416 = vpop.f32.mrb[0].mxu0
      %v4417 = vadd.f32 %v4320, %v4416
      %v4418 = vpop.f32.mrb[0].mxu0
      %v4419 = vpop.f32.mrb[0].mxu0
      %v4420 = vadd.f32 %v4323, %v4419
      %v4421 = vpop.f32.mrb[0].mxu0
      %4422 = vmatprep.mubr.bf16.mxu0 %v2083
      %4423 = vmatmul.mubr.bf16.gmra.mrb[0].mxu0 %v2082
      %v4424 = vpop.f32.mrb[0].mxu0
      %v4425 = vadd.f32 %v4328, %v4424
      %v4426 = vpop.f32.mrb[0].mxu0
      %v4427 = vpop.f32.mrb[0].mxu0
      %v4428 = vadd.f32 %v4331, %v4427
      %v4429 = vpop.f32.mrb[0].mxu0
      %4430 = vmatprep.mubr.bf16.mxu0 %v2115
      %4431 = vmatmul.mubr.bf16.gmra.mrb[0].mxu0 %v2114
      %v4432 = vpop.f32.mrb[0].mxu0
      %v4433 = vadd.f32 %v4336, %v4432
      %v4434 = vpop.f32.mrb[0].mxu0
      %v4435 = vpop.f32.mrb[0].mxu0
      %v4436 = vadd.f32 %v4339, %v4435
      %v4437 = vpop.f32.mrb[0].mxu0
      %4438 = vmatprep.mubr.bf16.mxu0 %v2147
      %4439 = vmatmul.mubr.bf16.gmra.mrb[0].mxu0 %v2146
      %v4440 = vpop.f32.mrb[0].mxu0
      %v4441 = vadd.f32 %v4344, %v4440
      %v4442 = vpop.f32.mrb[0].mxu0
      %v4443 = vpop.f32.mrb[0].mxu0
      %v4444 = vadd.f32 %v4347, %v4443
      %v4445 = vpop.f32.mrb[0].mxu0
      %4446 = vdwg.mxu0
      %4447 = vmatprep.subr.bf16.mxu0 0
      %4448 = vmatpush1.bf16.msra.mxu0 %v3530
      %4449 = vmatprep.subr.bf16.mxu0 0
      %4450 = vmatpush1.bf16.msra.mxu0 %v3531
      %4451 = vmatprep.subr.bf16.mxu0 0
      %4452 = vmatpush1.bf16.msra.mxu0 %v3532
      %4453 = vmatprep.subr.bf16.mxu0 0
      %4454 = vmatpush1.bf16.msra.mxu0 %v3533
      %4455 = vmatprep.subr.bf16.mxu0 0
      %4456 = vmatpush1.bf16.msra.mxu0 %v3534
      %4457 = vmatprep.subr.bf16.mxu0 0
      %4458 = vmatpush1.bf16.msra.mxu0 %v3535
      %4459 = vmatprep.subr.bf16.mxu0 0
      %4460 = vmatpush1.bf16.msra.mxu0 %v3536
      %4461 = vmatprep.subr.bf16.mxu0 0
      %4462 = vmatpush1.bf16.msra.mxu0 %v3537
      %4463 = vmatprep.subr.bf16.mxu0 0
      %4464 = vmatpush1.bf16.msra.mxu0 %v3538
      %4465 = vmatprep.subr.bf16.mxu0 0
      %4466 = vmatpush1.bf16.msra.mxu0 %v3539
      %4467 = vmatprep.subr.bf16.mxu0 0
      %4468 = vmatpush1.bf16.msra.mxu0 %v3540
      %4469 = vmatprep.subr.bf16.mxu0 0
      %4470 = vmatpush1.bf16.msra.mxu0 %v3541
      %4471 = vmatprep.subr.bf16.mxu0 0
      %4472 = vmatpush1.bf16.msra.mxu0 %v3542
      %4473 = vmatprep.subr.bf16.mxu0 0
      %4474 = vmatpush1.bf16.msra.mxu0 %v3543
      %4475 = vmatprep.subr.bf16.mxu0 0
      %4476 = vmatpush1.bf16.msra.mxu0 %v3544
      %4477 = vmatprep.subr.bf16.mxu0 0
      %4478 = vmatpush1.bf16.msra.mxu0 %v3545
      %4479 = vmatprep.mubr.bf16.mxu0 %v1925
      %4480 = vmatmul.mubr.bf16.gmra.mrb[0].mxu0 %v1924
      %v4481 = vpop.f32.mrb[0].mxu0
      %v4482 = vadd.f32 %v4385, %v4481
      %v4483 = vpop.f32.mrb[0].mxu0
      %v4484 = vpop.f32.mrb[0].mxu0
      %v4485 = vadd.f32 %v4388, %v4484
      %v4486 = vpop.f32.mrb[0].mxu0
      %4487 = vmatprep.mubr.bf16.mxu0 %v1957
      %4488 = vmatmul.mubr.bf16.gmra.mrb[0].mxu0 %v1956
      %v4489 = vpop.f32.mrb[0].mxu0
      %v4490 = vadd.f32 %v4393, %v4489
      %v4491 = vpop.f32.mrb[0].mxu0
      %v4492 = vpop.f32.mrb[0].mxu0
      %v4493 = vadd.f32 %v4396, %v4492
      %v4494 = vpop.f32.mrb[0].mxu0
      %4495 = vmatprep.mubr.bf16.mxu0 %v1989
      %4496 = vmatmul.mubr.bf16.gmra.mrb[0].mxu0 %v1988
      %v4497 = vpop.f32.mrb[0].mxu0
      %v4498 = vadd.f32 %v4401, %v4497
      %v4499 = vpop.f32.mrb[0].mxu0
      %v4500 = vpop.f32.mrb[0].mxu0
      %v4501 = vadd.f32 %v4404, %v4500
      %v4502 = vpop.f32.mrb[0].mxu0
      %4503 = vmatprep.mubr.bf16.mxu0 %v2021
      %4504 = vmatmul.mubr.bf16.gmra.mrb[0].mxu0 %v2020
      %v4505 = vpop.f32.mrb[0].mxu0
      %v4506 = vadd.f32 %v4409, %v4505
      %v4507 = vpop.f32.mrb[0].mxu0
      %v4508 = vpop.f32.mrb[0].mxu0
      %v4509 = vadd.f32 %v4412, %v4508
      %v4510 = vpop.f32.mrb[0].mxu0
      %4511 = vmatprep.mubr.bf16.mxu0 %v2053
      %4512 = vmatmul.mubr.bf16.gmra.mrb[0].mxu0 %v2052
      %v4513 = vpop.f32.mrb[0].mxu0
      %v4514 = vadd.f32 %v4417, %v4513
      %v4515 = vpop.f32.mrb[0].mxu0
      %v4516 = vpop.f32.mrb[0].mxu0
      %v4517 = vadd.f32 %v4420, %v4516
      %v4518 = vpop.f32.mrb[0].mxu0
      %4519 = vmatprep.mubr.bf16.mxu0 %v2085
      %4520 = vmatmul.mubr.bf16.gmra.mrb[0].mxu0 %v2084
      %v4521 = vpop.f32.mrb[0].mxu0
      %v4522 = vadd.f32 %v4425, %v4521
      %v4523 = vpop.f32.mrb[0].mxu0
      %v4524 = vpop.f32.mrb[0].mxu0
      %v4525 = vadd.f32 %v4428, %v4524
      %v4526 = vpop.f32.mrb[0].mxu0
      %4527 = vmatprep.mubr.bf16.mxu0 %v2117
      %4528 = vmatmul.mubr.bf16.gmra.mrb[0].mxu0 %v2116
      %v4529 = vpop.f32.mrb[0].mxu0
      %v4530 = vadd.f32 %v4433, %v4529
      %v4531 = vpop.f32.mrb[0].mxu0
      %v4532 = vpop.f32.mrb[0].mxu0
      %v4533 = vadd.f32 %v4436, %v4532
      %v4534 = vpop.f32.mrb[0].mxu0
      %4535 = vmatprep.mubr.bf16.mxu0 %v2149
      %4536 = vmatmul.mubr.bf16.gmra.mrb[0].mxu0 %v2148
      %v4537 = vpop.f32.mrb[0].mxu0
      %v4538 = vadd.f32 %v4441, %v4537
      %v4539 = vpop.f32.mrb[0].mxu0
      %v4540 = vpop.f32.mrb[0].mxu0
      %v4541 = vadd.f32 %v4444, %v4540
      %v4542 = vpop.f32.mrb[0].mxu0
      %4543 = vdwg.mxu0
      %4544 = vmatprep.subr.bf16.mxu0 0
      %4545 = vmatpush1.bf16.msra.mxu0 %v3546
      %4546 = vmatprep.subr.bf16.mxu0 0
      %4547 = vmatpush1.bf16.msra.mxu0 %v3547
      %4548 = vmatprep.subr.bf16.mxu0 0
      %4549 = vmatpush1.bf16.msra.mxu0 %v3548
      %4550 = vmatprep.subr.bf16.mxu0 0
      %4551 = vmatpush1.bf16.msra.mxu0 %v3549
      %4552 = vmatprep.subr.bf16.mxu0 0
      %4553 = vmatpush1.bf16.msra.mxu0 %v3550
      %4554 = vmatprep.subr.bf16.mxu0 0
      %4555 = vmatpush1.bf16.msra.mxu0 %v3551
      %4556 = vmatprep.subr.bf16.mxu0 0
      %4557 = vmatpush1.bf16.msra.mxu0 %v3552
      %4558 = vmatprep.subr.bf16.mxu0 0
      %4559 = vmatpush1.bf16.msra.mxu0 %v3553
      %4560 = vmatprep.subr.bf16.mxu0 0
      %4561 = vmatpush1.bf16.msra.mxu0 %v3554
      %4562 = vmatprep.subr.bf16.mxu0 0
      %4563 = vmatpush1.bf16.msra.mxu0 %v3555
      %4564 = vmatprep.subr.bf16.mxu0 0
      %4565 = vmatpush1.bf16.msra.mxu0 %v3556
      %4566 = vmatprep.subr.bf16.mxu0 0
      %4567 = vmatpush1.bf16.msra.mxu0 %v3557
      %4568 = vmatprep.subr.bf16.mxu0 0
      %4569 = vmatpush1.bf16.msra.mxu0 %v3558
      %4570 = vmatprep.subr.bf16.mxu0 0
      %4571 = vmatpush1.bf16.msra.mxu0 %v3559
      %4572 = vmatprep.subr.bf16.mxu0 0
      %4573 = vmatpush1.bf16.msra.mxu0 %v3560
      %4574 = vmatprep.subr.bf16.mxu0 0
      %4575 = vmatpush1.bf16.msra.mxu0 %v3561
      %4576 = vmatprep.mubr.bf16.mxu0 %v1927
      %4577 = vmatmul.mubr.bf16.gmra.mrb[0].mxu0 %v1926
      %v4578 = vpop.f32.mrb[0].mxu0
      %v4579 = vadd.f32 %v4482, %v4578
      %v4580 = vpop.f32.mrb[0].mxu0
      %v4581 = vpop.f32.mrb[0].mxu0
      %v4582 = vadd.f32 %v4485, %v4581
      %v4583 = vpop.f32.mrb[0].mxu0
      %4584 = vmatprep.mubr.bf16.mxu0 %v1959
      %4585 = vmatmul.mubr.bf16.gmra.mrb[0].mxu0 %v1958
      %v4586 = vpop.f32.mrb[0].mxu0
      %v4587 = vadd.f32 %v4490, %v4586
      %v4588 = vpop.f32.mrb[0].mxu0
      %v4589 = vpop.f32.mrb[0].mxu0
      %v4590 = vadd.f32 %v4493, %v4589
      %v4591 = vpop.f32.mrb[0].mxu0
      %4592 = vmatprep.mubr.bf16.mxu0 %v1991
      %4593 = vmatmul.mubr.bf16.gmra.mrb[0].mxu0 %v1990
      %v4594 = vpop.f32.mrb[0].mxu0
      %v4595 = vadd.f32 %v4498, %v4594
      %v4596 = vpop.f32.mrb[0].mxu0
      %v4597 = vpop.f32.mrb[0].mxu0
      %v4598 = vadd.f32 %v4501, %v4597
      %v4599 = vpop.f32.mrb[0].mxu0
      %4600 = vmatprep.mubr.bf16.mxu0 %v2023
      %4601 = vmatmul.mubr.bf16.gmra.mrb[0].mxu0 %v2022
      %v4602 = vpop.f32.mrb[0].mxu0
      %v4603 = vadd.f32 %v4506, %v4602
      %v4604 = vpop.f32.mrb[0].mxu0
      %v4605 = vpop.f32.mrb[0].mxu0
      %v4606 = vadd.f32 %v4509, %v4605
      %v4607 = vpop.f32.mrb[0].mxu0
      %4608 = vmatprep.mubr.bf16.mxu0 %v2055
      %4609 = vmatmul.mubr.bf16.gmra.mrb[0].mxu0 %v2054
      %v4610 = vpop.f32.mrb[0].mxu0
      %v4611 = vadd.f32 %v4514, %v4610
      %v4612 = vpop.f32.mrb[0].mxu0
      %v4613 = vpop.f32.mrb[0].mxu0
      %v4614 = vadd.f32 %v4517, %v4613
      %v4615 = vpop.f32.mrb[0].mxu0
      %4616 = vmatprep.mubr.bf16.mxu0 %v2087
      %4617 = vmatmul.mubr.bf16.gmra.mrb[0].mxu0 %v2086
      %v4618 = vpop.f32.mrb[0].mxu0
      %v4619 = vadd.f32 %v4522, %v4618
      %v4620 = vpop.f32.mrb[0].mxu0
      %v4621 = vpop.f32.mrb[0].mxu0
      %v4622 = vadd.f32 %v4525, %v4621
      %v4623 = vpop.f32.mrb[0].mxu0
      %4624 = vmatprep.mubr.bf16.mxu0 %v2119
      %4625 = vmatmul.mubr.bf16.gmra.mrb[0].mxu0 %v2118
      %v4626 = vpop.f32.mrb[0].mxu0
      %v4627 = vadd.f32 %v4530, %v4626
      %v4628 = vpop.f32.mrb[0].mxu0
      %v4629 = vpop.f32.mrb[0].mxu0
      %v4630 = vadd.f32 %v4533, %v4629
      %v4631 = vpop.f32.mrb[0].mxu0
      %4632 = vmatprep.mubr.bf16.mxu0 %v2151
      %4633 = vmatmul.mubr.bf16.gmra.mrb[0].mxu0 %v2150
      %v4634 = vpop.f32.mrb[0].mxu0
      %v4635 = vadd.f32 %v4538, %v4634
      %v4636 = vpop.f32.mrb[0].mxu0
      %v4637 = vpop.f32.mrb[0].mxu0
      %v4638 = vadd.f32 %v4541, %v4637
      %v4639 = vpop.f32.mrb[0].mxu0
      %4640 = vdwg.mxu0
      %4641 = vmatprep.subr.bf16.mxu0 0
      %4642 = vmatpush1.bf16.msra.mxu0 %v3562
      %4643 = vmatprep.subr.bf16.mxu0 0
      %4644 = vmatpush1.bf16.msra.mxu0 %v3563
      %4645 = vmatprep.subr.bf16.mxu0 0
      %4646 = vmatpush1.bf16.msra.mxu0 %v3564
      %4647 = vmatprep.subr.bf16.mxu0 0
      %4648 = vmatpush1.bf16.msra.mxu0 %v3565
      %4649 = vmatprep.subr.bf16.mxu0 0
      %4650 = vmatpush1.bf16.msra.mxu0 %v3566
      %4651 = vmatprep.subr.bf16.mxu0 0
      %4652 = vmatpush1.bf16.msra.mxu0 %v3567
      %4653 = vmatprep.subr.bf16.mxu0 0
      %4654 = vmatpush1.bf16.msra.mxu0 %v3568
      %4655 = vmatprep.subr.bf16.mxu0 0
      %4656 = vmatpush1.bf16.msra.mxu0 %v3569
      %4657 = vmatprep.subr.bf16.mxu0 0
      %4658 = vmatpush1.bf16.msra.mxu0 %v3570
      %4659 = vmatprep.subr.bf16.mxu0 0
      %4660 = vmatpush1.bf16.msra.mxu0 %v3571
      %4661 = vmatprep.subr.bf16.mxu0 0
      %4662 = vmatpush1.bf16.msra.mxu0 %v3572
      %4663 = vmatprep.subr.bf16.mxu0 0
      %4664 = vmatpush1.bf16.msra.mxu0 %v3573
      %4665 = vmatprep.subr.bf16.mxu0 0
      %4666 = vmatpush1.bf16.msra.mxu0 %v3574
      %4667 = vmatprep.subr.bf16.mxu0 0
      %4668 = vmatpush1.bf16.msra.mxu0 %v3575
      %4669 = vmatprep.subr.bf16.mxu0 0
      %4670 = vmatpush1.bf16.msra.mxu0 %v3576
      %4671 = vmatprep.subr.bf16.mxu0 0
      %4672 = vmatpush1.bf16.msra.mxu0 %v3577
      %4673 = vmatprep.mubr.bf16.mxu0 %v1929
      %4674 = vmatmul.mubr.bf16.gmra.mrb[0].mxu0 %v1928
      %v4675 = vpop.f32.mrb[0].mxu0
      %v4676 = vadd.f32 %v4579, %v4675
      %v4677 = vpop.f32.mrb[0].mxu0
      %v4678 = vpop.f32.mrb[0].mxu0
      %v4679 = vadd.f32 %v4582, %v4678
      %v4680 = vpop.f32.mrb[0].mxu0
      %4681 = vmatprep.mubr.bf16.mxu0 %v1961
      %4682 = vmatmul.mubr.bf16.gmra.mrb[0].mxu0 %v1960
      %v4683 = vpop.f32.mrb[0].mxu0
      %v4684 = vadd.f32 %v4587, %v4683
      %v4685 = vpop.f32.mrb[0].mxu0
      %v4686 = vpop.f32.mrb[0].mxu0
      %v4687 = vadd.f32 %v4590, %v4686
      %v4688 = vpop.f32.mrb[0].mxu0
      %4689 = vmatprep.mubr.bf16.mxu0 %v1993
      %4690 = vmatmul.mubr.bf16.gmra.mrb[0].mxu0 %v1992
      %v4691 = vpop.f32.mrb[0].mxu0
      %v4692 = vadd.f32 %v4595, %v4691
      %v4693 = vpop.f32.mrb[0].mxu0
      %v4694 = vpop.f32.mrb[0].mxu0
      %v4695 = vadd.f32 %v4598, %v4694
      %v4696 = vpop.f32.mrb[0].mxu0
      %4697 = vmatprep.mubr.bf16.mxu0 %v2025
      %4698 = vmatmul.mubr.bf16.gmra.mrb[0].mxu0 %v2024
      %v4699 = vpop.f32.mrb[0].mxu0
      %v4700 = vadd.f32 %v4603, %v4699
      %v4701 = vpop.f32.mrb[0].mxu0
      %v4702 = vpop.f32.mrb[0].mxu0
      %v4703 = vadd.f32 %v4606, %v4702
      %v4704 = vpop.f32.mrb[0].mxu0
      %4705 = vmatprep.mubr.bf16.mxu0 %v2057
      %4706 = vmatmul.mubr.bf16.gmra.mrb[0].mxu0 %v2056
      %v4707 = vpop.f32.mrb[0].mxu0
      %v4708 = vadd.f32 %v4611, %v4707
      %v4709 = vpop.f32.mrb[0].mxu0
      %v4710 = vpop.f32.mrb[0].mxu0
      %v4711 = vadd.f32 %v4614, %v4710
      %v4712 = vpop.f32.mrb[0].mxu0
      %4713 = vmatprep.mubr.bf16.mxu0 %v2089
      %4714 = vmatmul.mubr.bf16.gmra.mrb[0].mxu0 %v2088
      %v4715 = vpop.f32.mrb[0].mxu0
      %v4716 = vadd.f32 %v4619, %v4715
      %v4717 = vpop.f32.mrb[0].mxu0
      %v4718 = vpop.f32.mrb[0].mxu0
      %v4719 = vadd.f32 %v4622, %v4718
      %v4720 = vpop.f32.mrb[0].mxu0
      %4721 = vmatprep.mubr.bf16.mxu0 %v2121
      %4722 = vmatmul.mubr.bf16.gmra.mrb[0].mxu0 %v2120
      %v4723 = vpop.f32.mrb[0].mxu0
      %v4724 = vadd.f32 %v4627, %v4723
      %v4725 = vpop.f32.mrb[0].mxu0
      %v4726 = vpop.f32.mrb[0].mxu0
      %v4727 = vadd.f32 %v4630, %v4726
      %v4728 = vpop.f32.mrb[0].mxu0
      %4729 = vmatprep.mubr.bf16.mxu0 %v2153
      %4730 = vmatmul.mubr.bf16.gmra.mrb[0].mxu0 %v2152
      %v4731 = vpop.f32.mrb[0].mxu0
      %v4732 = vadd.f32 %v4635, %v4731
      %v4733 = vpop.f32.mrb[0].mxu0
      %v4734 = vpop.f32.mrb[0].mxu0
      %v4735 = vadd.f32 %v4638, %v4734
      %v4736 = vpop.f32.mrb[0].mxu0
      %4737 = vdwg.mxu0
      %4738 = vmatprep.subr.bf16.mxu0 0
      %4739 = vmatpush1.bf16.msra.mxu0 %v3578
      %4740 = vmatprep.subr.bf16.mxu0 0
      %4741 = vmatpush1.bf16.msra.mxu0 %v3579
      %4742 = vmatprep.subr.bf16.mxu0 0
      %4743 = vmatpush1.bf16.msra.mxu0 %v3580
      %4744 = vmatprep.subr.bf16.mxu0 0
      %4745 = vmatpush1.bf16.msra.mxu0 %v3581
      %4746 = vmatprep.subr.bf16.mxu0 0
      %4747 = vmatpush1.bf16.msra.mxu0 %v3582
      %4748 = vmatprep.subr.bf16.mxu0 0
      %4749 = vmatpush1.bf16.msra.mxu0 %v3583
      %4750 = vmatprep.subr.bf16.mxu0 0
      %4751 = vmatpush1.bf16.msra.mxu0 %v3584
      %4752 = vmatprep.subr.bf16.mxu0 0
      %4753 = vmatpush1.bf16.msra.mxu0 %v3585
      %4754 = vmatprep.subr.bf16.mxu0 0
      %4755 = vmatpush1.bf16.msra.mxu0 %v3586
      %4756 = vmatprep.subr.bf16.mxu0 0
      %4757 = vmatpush1.bf16.msra.mxu0 %v3587
      %4758 = vmatprep.subr.bf16.mxu0 0
      %4759 = vmatpush1.bf16.msra.mxu0 %v3588
      %4760 = vmatprep.subr.bf16.mxu0 0
      %4761 = vmatpush1.bf16.msra.mxu0 %v3589
      %4762 = vmatprep.subr.bf16.mxu0 0
      %4763 = vmatpush1.bf16.msra.mxu0 %v3590
      %4764 = vmatprep.subr.bf16.mxu0 0
      %4765 = vmatpush1.bf16.msra.mxu0 %v3591
      %4766 = vmatprep.subr.bf16.mxu0 0
      %4767 = vmatpush1.bf16.msra.mxu0 %v3592
      %4768 = vmatprep.subr.bf16.mxu0 0
      %4769 = vmatpush1.bf16.msra.mxu0 %v3593
      %4770 = vmatprep.mubr.bf16.mxu0 %v1931
      %4771 = vmatmul.mubr.bf16.gmra.mrb[0].mxu0 %v1930
      %v4772 = vpop.f32.mrb[0].mxu0
      %v4773 = vadd.f32 %v4676, %v4772
      %v4774 = vpop.f32.mrb[0].mxu0
      %v4775 = vpop.f32.mrb[0].mxu0
      %v4776 = vadd.f32 %v4679, %v4775
      %v4777 = vpop.f32.mrb[0].mxu0
      %4778 = vmatprep.mubr.bf16.mxu0 %v1963
      %4779 = vmatmul.mubr.bf16.gmra.mrb[0].mxu0 %v1962
      %v4780 = vpop.f32.mrb[0].mxu0
      %v4781 = vadd.f32 %v4684, %v4780
      %v4782 = vpop.f32.mrb[0].mxu0
      %v4783 = vpop.f32.mrb[0].mxu0
      %v4784 = vadd.f32 %v4687, %v4783
      %v4785 = vpop.f32.mrb[0].mxu0
      %4786 = vmatprep.mubr.bf16.mxu0 %v1995
      %4787 = vmatmul.mubr.bf16.gmra.mrb[0].mxu0 %v1994
      %v4788 = vpop.f32.mrb[0].mxu0
      %v4789 = vadd.f32 %v4692, %v4788
      %v4790 = vpop.f32.mrb[0].mxu0
      %v4791 = vpop.f32.mrb[0].mxu0
      %v4792 = vadd.f32 %v4695, %v4791
      %v4793 = vpop.f32.mrb[0].mxu0
      %4794 = vmatprep.mubr.bf16.mxu0 %v2027
      %4795 = vmatmul.mubr.bf16.gmra.mrb[0].mxu0 %v2026
      %v4796 = vpop.f32.mrb[0].mxu0
      %v4797 = vadd.f32 %v4700, %v4796
      %v4798 = vpop.f32.mrb[0].mxu0
      %v4799 = vpop.f32.mrb[0].mxu0
      %v4800 = vadd.f32 %v4703, %v4799
      %v4801 = vpop.f32.mrb[0].mxu0
      %4802 = vmatprep.mubr.bf16.mxu0 %v2059
      %4803 = vmatmul.mubr.bf16.gmra.mrb[0].mxu0 %v2058
      %v4804 = vpop.f32.mrb[0].mxu0
      %v4805 = vadd.f32 %v4708, %v4804
      %v4806 = vpop.f32.mrb[0].mxu0
      %v4807 = vpop.f32.mrb[0].mxu0
      %v4808 = vadd.f32 %v4711, %v4807
      %v4809 = vpop.f32.mrb[0].mxu0
      %4810 = vmatprep.mubr.bf16.mxu0 %v2091
      %4811 = vmatmul.mubr.bf16.gmra.mrb[0].mxu0 %v2090
      %v4812 = vpop.f32.mrb[0].mxu0
      %v4813 = vadd.f32 %v4716, %v4812
      %v4814 = vpop.f32.mrb[0].mxu0
      %v4815 = vpop.f32.mrb[0].mxu0
      %v4816 = vadd.f32 %v4719, %v4815
      %v4817 = vpop.f32.mrb[0].mxu0
      %4818 = vmatprep.mubr.bf16.mxu0 %v2123
      %4819 = vmatmul.mubr.bf16.gmra.mrb[0].mxu0 %v2122
      %v4820 = vpop.f32.mrb[0].mxu0
      %v4821 = vadd.f32 %v4724, %v4820
      %v4822 = vpop.f32.mrb[0].mxu0
      %v4823 = vpop.f32.mrb[0].mxu0
      %v4824 = vadd.f32 %v4727, %v4823
      %v4825 = vpop.f32.mrb[0].mxu0
      %4826 = vmatprep.mubr.bf16.mxu0 %v2155
      %4827 = vmatmul.mubr.bf16.gmra.mrb[0].mxu0 %v2154
      %v4828 = vpop.f32.mrb[0].mxu0
      %v4829 = vadd.f32 %v4732, %v4828
      %v4830 = vpop.f32.mrb[0].mxu0
      %v4831 = vpop.f32.mrb[0].mxu0
      %v4832 = vadd.f32 %v4735, %v4831
      %v4833 = vpop.f32.mrb[0].mxu0
      %4834 = vdwg.mxu0
      %4835 = vmatprep.subr.bf16.mxu0 0
      %4836 = vmatpush1.bf16.msra.mxu0 %v3594
      %4837 = vmatprep.subr.bf16.mxu0 0
      %4838 = vmatpush1.bf16.msra.mxu0 %v3595
      %4839 = vmatprep.subr.bf16.mxu0 0
      %4840 = vmatpush1.bf16.msra.mxu0 %v3596
      %4841 = vmatprep.subr.bf16.mxu0 0
      %4842 = vmatpush1.bf16.msra.mxu0 %v3597
      %4843 = vmatprep.subr.bf16.mxu0 0
      %4844 = vmatpush1.bf16.msra.mxu0 %v3598
      %4845 = vmatprep.subr.bf16.mxu0 0
      %4846 = vmatpush1.bf16.msra.mxu0 %v3599
      %4847 = vmatprep.subr.bf16.mxu0 0
      %4848 = vmatpush1.bf16.msra.mxu0 %v3600
      %4849 = vmatprep.subr.bf16.mxu0 0
      %4850 = vmatpush1.bf16.msra.mxu0 %v3601
      %4851 = vmatprep.subr.bf16.mxu0 0
      %4852 = vmatpush1.bf16.msra.mxu0 %v3602
      %4853 = vmatprep.subr.bf16.mxu0 0
      %4854 = vmatpush1.bf16.msra.mxu0 %v3603
      %4855 = vmatprep.subr.bf16.mxu0 0
      %4856 = vmatpush1.bf16.msra.mxu0 %v3604
      %4857 = vmatprep.subr.bf16.mxu0 0
      %4858 = vmatpush1.bf16.msra.mxu0 %v3605
      %4859 = vmatprep.subr.bf16.mxu0 0
      %4860 = vmatpush1.bf16.msra.mxu0 %v3606
      %4861 = vmatprep.subr.bf16.mxu0 0
      %4862 = vmatpush1.bf16.msra.mxu0 %v3607
      %4863 = vmatprep.subr.bf16.mxu0 0
      %4864 = vmatpush1.bf16.msra.mxu0 %v3608
      %4865 = vmatprep.subr.bf16.mxu0 0
      %4866 = vmatpush1.bf16.msra.mxu0 %v3609
      %4867 = vmatprep.mubr.bf16.mxu0 %v1933
      %4868 = vmatmul.mubr.bf16.gmra.mrb[0].mxu0 %v1932
      %v4869 = vpop.f32.mrb[0].mxu0
      %v4870 = vadd.f32 %v4773, %v4869
      %v4871 = vpop.f32.mrb[0].mxu0
      %v4872 = vpop.f32.mrb[0].mxu0
      %v4873 = vadd.f32 %v4776, %v4872
      %v4874 = vpop.f32.mrb[0].mxu0
      %4875 = vmatprep.mubr.bf16.mxu0 %v1965
      %4876 = vmatmul.mubr.bf16.gmra.mrb[0].mxu0 %v1964
      %v4877 = vpop.f32.mrb[0].mxu0
      %v4878 = vadd.f32 %v4781, %v4877
      %v4879 = vpop.f32.mrb[0].mxu0
      %v4880 = vpop.f32.mrb[0].mxu0
      %v4881 = vadd.f32 %v4784, %v4880
      %v4882 = vpop.f32.mrb[0].mxu0
      %4883 = vmatprep.mubr.bf16.mxu0 %v1997
      %4884 = vmatmul.mubr.bf16.gmra.mrb[0].mxu0 %v1996
      %v4885 = vpop.f32.mrb[0].mxu0
      %v4886 = vadd.f32 %v4789, %v4885
      %v4887 = vpop.f32.mrb[0].mxu0
      %v4888 = vpop.f32.mrb[0].mxu0
      %v4889 = vadd.f32 %v4792, %v4888
      %v4890 = vpop.f32.mrb[0].mxu0
      %4891 = vmatprep.mubr.bf16.mxu0 %v2029
      %4892 = vmatmul.mubr.bf16.gmra.mrb[0].mxu0 %v2028
      %v4893 = vpop.f32.mrb[0].mxu0
      %v4894 = vadd.f32 %v4797, %v4893
      %v4895 = vpop.f32.mrb[0].mxu0
      %v4896 = vpop.f32.mrb[0].mxu0
      %v4897 = vadd.f32 %v4800, %v4896
      %v4898 = vpop.f32.mrb[0].mxu0
      %4899 = vmatprep.mubr.bf16.mxu0 %v2061
      %4900 = vmatmul.mubr.bf16.gmra.mrb[0].mxu0 %v2060
      %v4901 = vpop.f32.mrb[0].mxu0
      %v4902 = vadd.f32 %v4805, %v4901
      %v4903 = vpop.f32.mrb[0].mxu0
      %v4904 = vpop.f32.mrb[0].mxu0
      %v4905 = vadd.f32 %v4808, %v4904
      %v4906 = vpop.f32.mrb[0].mxu0
      %4907 = vmatprep.mubr.bf16.mxu0 %v2093
      %4908 = vmatmul.mubr.bf16.gmra.mrb[0].mxu0 %v2092
      %v4909 = vpop.f32.mrb[0].mxu0
      %v4910 = vadd.f32 %v4813, %v4909
      %v4911 = vpop.f32.mrb[0].mxu0
      %v4912 = vpop.f32.mrb[0].mxu0
      %v4913 = vadd.f32 %v4816, %v4912
      %v4914 = vpop.f32.mrb[0].mxu0
      %4915 = vmatprep.mubr.bf16.mxu0 %v2125
      %4916 = vmatmul.mubr.bf16.gmra.mrb[0].mxu0 %v2124
      %v4917 = vpop.f32.mrb[0].mxu0
      %v4918 = vadd.f32 %v4821, %v4917
      %v4919 = vpop.f32.mrb[0].mxu0
      %v4920 = vpop.f32.mrb[0].mxu0
      %v4921 = vadd.f32 %v4824, %v4920
      %v4922 = vpop.f32.mrb[0].mxu0
      %4923 = vmatprep.mubr.bf16.mxu0 %v2157
      %4924 = vmatmul.mubr.bf16.gmra.mrb[0].mxu0 %v2156
      %v4925 = vpop.f32.mrb[0].mxu0
      %v4926 = vadd.f32 %v4829, %v4925
      %v4927 = vpop.f32.mrb[0].mxu0
      %v4928 = vpop.f32.mrb[0].mxu0
      %v4929 = vadd.f32 %v4832, %v4928
      %v4930 = vpop.f32.mrb[0].mxu0
      %4931 = vdwg.mxu0
      %4932 = vmatprep.subr.bf16.mxu0 0
      %4933 = vmatpush1.bf16.msra.mxu0 %v3610
      %4934 = vmatprep.subr.bf16.mxu0 0
      %4935 = vmatpush1.bf16.msra.mxu0 %v3611
      %4936 = vmatprep.subr.bf16.mxu0 0
      %4937 = vmatpush1.bf16.msra.mxu0 %v3612
      %4938 = vmatprep.subr.bf16.mxu0 0
      %4939 = vmatpush1.bf16.msra.mxu0 %v3613
      %4940 = vmatprep.subr.bf16.mxu0 0
      %4941 = vmatpush1.bf16.msra.mxu0 %v3614
      %4942 = vmatprep.subr.bf16.mxu0 0
      %4943 = vmatpush1.bf16.msra.mxu0 %v3615
      %4944 = vmatprep.subr.bf16.mxu0 0
      %4945 = vmatpush1.bf16.msra.mxu0 %v3616
      %4946 = vmatprep.subr.bf16.mxu0 0
      %4947 = vmatpush1.bf16.msra.mxu0 %v3617
      %4948 = vmatprep.subr.bf16.mxu0 0
      %4949 = vmatpush1.bf16.msra.mxu0 %v3618
      %4950 = vmatprep.subr.bf16.mxu0 0
      %4951 = vmatpush1.bf16.msra.mxu0 %v3619
      %4952 = vmatprep.subr.bf16.mxu0 0
      %4953 = vmatpush1.bf16.msra.mxu0 %v3620
      %4954 = vmatprep.subr.bf16.mxu0 0
      %4955 = vmatpush1.bf16.msra.mxu0 %v3621
      %4956 = vmatprep.subr.bf16.mxu0 0
      %4957 = vmatpush1.bf16.msra.mxu0 %v3622
      %4958 = vmatprep.subr.bf16.mxu0 0
      %4959 = vmatpush1.bf16.msra.mxu0 %v3623
      %4960 = vmatprep.subr.bf16.mxu0 0
      %4961 = vmatpush1.bf16.msra.mxu0 %v3624
      %4962 = vmatprep.subr.bf16.mxu0 0
      %4963 = vmatpush1.bf16.msra.mxu0 %v3625
      %4964 = vmatprep.mubr.bf16.mxu0 %v1935
      %4965 = vmatmul.mubr.bf16.gmra.mrb[0].mxu0 %v1934
      %v4966 = vpop.f32.mrb[0].mxu0
      %v4967 = vadd.f32 %v4870, %v4966
      %v4968 = vpop.f32.mrb[0].mxu0
      %v4969 = vpop.f32.mrb[0].mxu0
      %v4970 = vadd.f32 %v4873, %v4969
      %v4971 = vpop.f32.mrb[0].mxu0
      %4972 = vmatprep.mubr.bf16.mxu0 %v1967
      %4973 = vmatmul.mubr.bf16.gmra.mrb[0].mxu0 %v1966
      %v4974 = vpop.f32.mrb[0].mxu0
      %v4975 = vadd.f32 %v4878, %v4974
      %v4976 = vpop.f32.mrb[0].mxu0
      %v4977 = vpop.f32.mrb[0].mxu0
      %v4978 = vadd.f32 %v4881, %v4977
      %v4979 = vpop.f32.mrb[0].mxu0
      %4980 = vmatprep.mubr.bf16.mxu0 %v1999
      %4981 = vmatmul.mubr.bf16.gmra.mrb[0].mxu0 %v1998
      %v4982 = vpop.f32.mrb[0].mxu0
      %v4983 = vadd.f32 %v4886, %v4982
      %v4984 = vpop.f32.mrb[0].mxu0
      %v4985 = vpop.f32.mrb[0].mxu0
      %v4986 = vadd.f32 %v4889, %v4985
      %v4987 = vpop.f32.mrb[0].mxu0
      %4988 = vmatprep.mubr.bf16.mxu0 %v2031
      %4989 = vmatmul.mubr.bf16.gmra.mrb[0].mxu0 %v2030
      %v4990 = vpop.f32.mrb[0].mxu0
      %v4991 = vadd.f32 %v4894, %v4990
      %v4992 = vpop.f32.mrb[0].mxu0
      %v4993 = vpop.f32.mrb[0].mxu0
      %v4994 = vadd.f32 %v4897, %v4993
      %v4995 = vpop.f32.mrb[0].mxu0
      %4996 = vmatprep.mubr.bf16.mxu0 %v2063
      %4997 = vmatmul.mubr.bf16.gmra.mrb[0].mxu0 %v2062
      %v4998 = vpop.f32.mrb[0].mxu0
      %v4999 = vadd.f32 %v4902, %v4998
      %v5000 = vpop.f32.mrb[0].mxu0
      %v5001 = vpop.f32.mrb[0].mxu0
      %v5002 = vadd.f32 %v4905, %v5001
      %v5003 = vpop.f32.mrb[0].mxu0
      %5004 = vmatprep.mubr.bf16.mxu0 %v2095
      %5005 = vmatmul.mubr.bf16.gmra.mrb[0].mxu0 %v2094
      %v5006 = vpop.f32.mrb[0].mxu0
      %v5007 = vadd.f32 %v4910, %v5006
      %v5008 = vpop.f32.mrb[0].mxu0
      %v5009 = vpop.f32.mrb[0].mxu0
      %v5010 = vadd.f32 %v4913, %v5009
      %v5011 = vpop.f32.mrb[0].mxu0
      %5012 = vmatprep.mubr.bf16.mxu0 %v2127
      %5013 = vmatmul.mubr.bf16.gmra.mrb[0].mxu0 %v2126
      %v5014 = vpop.f32.mrb[0].mxu0
      %v5015 = vadd.f32 %v4918, %v5014
      %v5016 = vpop.f32.mrb[0].mxu0
      %v5017 = vpop.f32.mrb[0].mxu0
      %v5018 = vadd.f32 %v4921, %v5017
      %v5019 = vpop.f32.mrb[0].mxu0
      %5020 = vmatprep.mubr.bf16.mxu0 %v2159
      %5021 = vmatmul.mubr.bf16.gmra.mrb[0].mxu0 %v2158
      %v5022 = vpop.f32.mrb[0].mxu0
      %v5023 = vadd.f32 %v4926, %v5022
      %v5024 = vpop.f32.mrb[0].mxu0
      %v5025 = vpop.f32.mrb[0].mxu0
      %v5026 = vadd.f32 %v4929, %v5025
      %v5027 = vpop.f32.mrb[0].mxu0
      %5028 = vdwg.mxu0
      %5029 = vmatprep.subr.bf16.mxu0 0
      %5030 = vmatpush1.bf16.msra.mxu0 %v3626
      %5031 = vmatprep.subr.bf16.mxu0 0
      %5032 = vmatpush1.bf16.msra.mxu0 %v3627
      %5033 = vmatprep.subr.bf16.mxu0 0
      %5034 = vmatpush1.bf16.msra.mxu0 %v3628
      %5035 = vmatprep.subr.bf16.mxu0 0
      %5036 = vmatpush1.bf16.msra.mxu0 %v3629
      %5037 = vmatprep.subr.bf16.mxu0 0
      %5038 = vmatpush1.bf16.msra.mxu0 %v3630
      %5039 = vmatprep.subr.bf16.mxu0 0
      %5040 = vmatpush1.bf16.msra.mxu0 %v3631
      %5041 = vmatprep.subr.bf16.mxu0 0
      %5042 = vmatpush1.bf16.msra.mxu0 %v3632
      %5043 = vmatprep.subr.bf16.mxu0 0
      %5044 = vmatpush1.bf16.msra.mxu0 %v3633
      %5045 = vmatprep.subr.bf16.mxu0 0
      %5046 = vmatpush1.bf16.msra.mxu0 %v3634
      %5047 = vmatprep.subr.bf16.mxu0 0
      %5048 = vmatpush1.bf16.msra.mxu0 %v3635
      %5049 = vmatprep.subr.bf16.mxu0 0
      %5050 = vmatpush1.bf16.msra.mxu0 %v3636
      %5051 = vmatprep.subr.bf16.mxu0 0
      %5052 = vmatpush1.bf16.msra.mxu0 %v3637
      %5053 = vmatprep.subr.bf16.mxu0 0
      %5054 = vmatpush1.bf16.msra.mxu0 %v3638
      %5055 = vmatprep.subr.bf16.mxu0 0
      %5056 = vmatpush1.bf16.msra.mxu0 %v3639
      %5057 = vmatprep.subr.bf16.mxu0 0
      %5058 = vmatpush1.bf16.msra.mxu0 %v3640
      %5059 = vmatprep.subr.bf16.mxu0 0
      %5060 = vmatpush1.bf16.msra.mxu0 %v3641
      %5061 = vmatprep.mubr.bf16.mxu0 %v1937
      %5062 = vmatmul.mubr.bf16.gmra.mrb[0].mxu0 %v1936
      %v5063 = vpop.f32.mrb[0].mxu0
      %v5064 = vadd.f32 %v4967, %v5063
      %v5065 = vpop.f32.mrb[0].mxu0
      %v5066 = vpop.f32.mrb[0].mxu0
      %v5067 = vadd.f32 %v4970, %v5066
      %v5068 = vpop.f32.mrb[0].mxu0
      %5069 = vmatprep.mubr.bf16.mxu0 %v1969
      %5070 = vmatmul.mubr.bf16.gmra.mrb[0].mxu0 %v1968
      %v5071 = vpop.f32.mrb[0].mxu0
      %v5072 = vadd.f32 %v4975, %v5071
      %v5073 = vpop.f32.mrb[0].mxu0
      %v5074 = vpop.f32.mrb[0].mxu0
      %v5075 = vadd.f32 %v4978, %v5074
      %v5076 = vpop.f32.mrb[0].mxu0
      %5077 = vmatprep.mubr.bf16.mxu0 %v2001
      %5078 = vmatmul.mubr.bf16.gmra.mrb[0].mxu0 %v2000
      %v5079 = vpop.f32.mrb[0].mxu0
      %v5080 = vadd.f32 %v4983, %v5079
      %v5081 = vpop.f32.mrb[0].mxu0
      %v5082 = vpop.f32.mrb[0].mxu0
      %v5083 = vadd.f32 %v4986, %v5082
      %v5084 = vpop.f32.mrb[0].mxu0
      %5085 = vmatprep.mubr.bf16.mxu0 %v2033
      %5086 = vmatmul.mubr.bf16.gmra.mrb[0].mxu0 %v2032
      %v5087 = vpop.f32.mrb[0].mxu0
      %v5088 = vadd.f32 %v4991, %v5087
      %v5089 = vpop.f32.mrb[0].mxu0
      %v5090 = vpop.f32.mrb[0].mxu0
      %v5091 = vadd.f32 %v4994, %v5090
      %v5092 = vpop.f32.mrb[0].mxu0
      %5093 = vmatprep.mubr.bf16.mxu0 %v2065
      %5094 = vmatmul.mubr.bf16.gmra.mrb[0].mxu0 %v2064
      %v5095 = vpop.f32.mrb[0].mxu0
      %v5096 = vadd.f32 %v4999, %v5095
      %v5097 = vpop.f32.mrb[0].mxu0
      %v5098 = vpop.f32.mrb[0].mxu0
      %v5099 = vadd.f32 %v5002, %v5098
      %v5100 = vpop.f32.mrb[0].mxu0
      %5101 = vmatprep.mubr.bf16.mxu0 %v2097
      %5102 = vmatmul.mubr.bf16.gmra.mrb[0].mxu0 %v2096
      %v5103 = vpop.f32.mrb[0].mxu0
      %v5104 = vadd.f32 %v5007, %v5103
      %v5105 = vpop.f32.mrb[0].mxu0
      %v5106 = vpop.f32.mrb[0].mxu0
      %v5107 = vadd.f32 %v5010, %v5106
      %v5108 = vpop.f32.mrb[0].mxu0
      %5109 = vmatprep.mubr.bf16.mxu0 %v2129
      %5110 = vmatmul.mubr.bf16.gmra.mrb[0].mxu0 %v2128
      %v5111 = vpop.f32.mrb[0].mxu0
      %v5112 = vadd.f32 %v5015, %v5111
      %v5113 = vpop.f32.mrb[0].mxu0
      %v5114 = vpop.f32.mrb[0].mxu0
      %v5115 = vadd.f32 %v5018, %v5114
      %v5116 = vpop.f32.mrb[0].mxu0
      %5117 = vmatprep.mubr.bf16.mxu0 %v2161
      %5118 = vmatmul.mubr.bf16.gmra.mrb[0].mxu0 %v2160
      %v5119 = vpop.f32.mrb[0].mxu0
      %v5120 = vadd.f32 %v5023, %v5119
      %v5121 = vpop.f32.mrb[0].mxu0
      %v5122 = vpop.f32.mrb[0].mxu0
      %v5123 = vadd.f32 %v5026, %v5122
      %v5124 = vpop.f32.mrb[0].mxu0
      %5125 = vdwg.mxu0
      %5126 = vmatprep.subr.bf16.mxu0 0
      %5127 = vmatpush1.bf16.msra.mxu0 %v3642
      %5128 = vmatprep.subr.bf16.mxu0 0
      %5129 = vmatpush1.bf16.msra.mxu0 %v3643
      %5130 = vmatprep.subr.bf16.mxu0 0
      %5131 = vmatpush1.bf16.msra.mxu0 %v3644
      %5132 = vmatprep.subr.bf16.mxu0 0
      %5133 = vmatpush1.bf16.msra.mxu0 %v3645
      %5134 = vmatprep.subr.bf16.mxu0 0
      %5135 = vmatpush1.bf16.msra.mxu0 %v3646
      %5136 = vmatprep.subr.bf16.mxu0 0
      %5137 = vmatpush1.bf16.msra.mxu0 %v3647
      %5138 = vmatprep.subr.bf16.mxu0 0
      %5139 = vmatpush1.bf16.msra.mxu0 %v3648
      %5140 = vmatprep.subr.bf16.mxu0 0
      %5141 = vmatpush1.bf16.msra.mxu0 %v3649
      %5142 = vmatprep.subr.bf16.mxu0 0
      %5143 = vmatpush1.bf16.msra.mxu0 %v3650
      %5144 = vmatprep.subr.bf16.mxu0 0
      %5145 = vmatpush1.bf16.msra.mxu0 %v3651
      %5146 = vmatprep.subr.bf16.mxu0 0
      %5147 = vmatpush1.bf16.msra.mxu0 %v3652
      %5148 = vmatprep.subr.bf16.mxu0 0
      %5149 = vmatpush1.bf16.msra.mxu0 %v3653
      %5150 = vmatprep.subr.bf16.mxu0 0
      %5151 = vmatpush1.bf16.msra.mxu0 %v3654
      %5152 = vmatprep.subr.bf16.mxu0 0
      %5153 = vmatpush1.bf16.msra.mxu0 %v3655
      %5154 = vmatprep.subr.bf16.mxu0 0
      %5155 = vmatpush1.bf16.msra.mxu0 %v3656
      %5156 = vmatprep.subr.bf16.mxu0 0
      %5157 = vmatpush1.bf16.msra.mxu0 %v3657
      %5158 = vmatprep.mubr.bf16.mxu0 %v1939
      %5159 = vmatmul.mubr.bf16.gmra.mrb[0].mxu0 %v1938
      %v5160 = vpop.f32.mrb[0].mxu0
      %v5161 = vadd.f32 %v5064, %v5160
      %v5162 = vpop.f32.mrb[0].mxu0
      %v5163 = vpop.f32.mrb[0].mxu0
      %v5164 = vadd.f32 %v5067, %v5163
      %v5165 = vpop.f32.mrb[0].mxu0
      %5166 = vmatprep.mubr.bf16.mxu0 %v1971
      %5167 = vmatmul.mubr.bf16.gmra.mrb[0].mxu0 %v1970
      %v5168 = vpop.f32.mrb[0].mxu0
      %v5169 = vadd.f32 %v5072, %v5168
      %v5170 = vpop.f32.mrb[0].mxu0
      %v5171 = vpop.f32.mrb[0].mxu0
      %v5172 = vadd.f32 %v5075, %v5171
      %v5173 = vpop.f32.mrb[0].mxu0
      %5174 = vmatprep.mubr.bf16.mxu0 %v2003
      %5175 = vmatmul.mubr.bf16.gmra.mrb[0].mxu0 %v2002
      %v5176 = vpop.f32.mrb[0].mxu0
      %v5177 = vadd.f32 %v5080, %v5176
      %v5178 = vpop.f32.mrb[0].mxu0
      %v5179 = vpop.f32.mrb[0].mxu0
      %v5180 = vadd.f32 %v5083, %v5179
      %v5181 = vpop.f32.mrb[0].mxu0
      %5182 = vmatprep.mubr.bf16.mxu0 %v2035
      %5183 = vmatmul.mubr.bf16.gmra.mrb[0].mxu0 %v2034
      %v5184 = vpop.f32.mrb[0].mxu0
      %v5185 = vadd.f32 %v5088, %v5184
      %v5186 = vpop.f32.mrb[0].mxu0
      %v5187 = vpop.f32.mrb[0].mxu0
      %v5188 = vadd.f32 %v5091, %v5187
      %v5189 = vpop.f32.mrb[0].mxu0
      %5190 = vmatprep.mubr.bf16.mxu0 %v2067
      %5191 = vmatmul.mubr.bf16.gmra.mrb[0].mxu0 %v2066
      %v5192 = vpop.f32.mrb[0].mxu0
      %v5193 = vadd.f32 %v5096, %v5192
      %v5194 = vpop.f32.mrb[0].mxu0
      %v5195 = vpop.f32.mrb[0].mxu0
      %v5196 = vadd.f32 %v5099, %v5195
      %v5197 = vpop.f32.mrb[0].mxu0
      %5198 = vmatprep.mubr.bf16.mxu0 %v2099
      %5199 = vmatmul.mubr.bf16.gmra.mrb[0].mxu0 %v2098
      %v5200 = vpop.f32.mrb[0].mxu0
      %v5201 = vadd.f32 %v5104, %v5200
      %v5202 = vpop.f32.mrb[0].mxu0
      %v5203 = vpop.f32.mrb[0].mxu0
      %v5204 = vadd.f32 %v5107, %v5203
      %v5205 = vpop.f32.mrb[0].mxu0
      %5206 = vmatprep.mubr.bf16.mxu0 %v2131
      %5207 = vmatmul.mubr.bf16.gmra.mrb[0].mxu0 %v2130
      %v5208 = vpop.f32.mrb[0].mxu0
      %v5209 = vadd.f32 %v5112, %v5208
      %v5210 = vpop.f32.mrb[0].mxu0
      %v5211 = vpop.f32.mrb[0].mxu0
      %v5212 = vadd.f32 %v5115, %v5211
      %v5213 = vpop.f32.mrb[0].mxu0
      %5214 = vmatprep.mubr.bf16.mxu0 %v2163
      %5215 = vmatmul.mubr.bf16.gmra.mrb[0].mxu0 %v2162
      %v5216 = vpop.f32.mrb[0].mxu0
      %v5217 = vadd.f32 %v5120, %v5216
      %v5218 = vpop.f32.mrb[0].mxu0
      %v5219 = vpop.f32.mrb[0].mxu0
      %v5220 = vadd.f32 %v5123, %v5219
      %v5221 = vpop.f32.mrb[0].mxu0
      %5222 = vdwg.mxu0
      %5223 = vmatprep.subr.bf16.mxu0 0
      %5224 = vmatpush1.bf16.msra.mxu0 %v3658
      %5225 = vmatprep.subr.bf16.mxu0 0
      %5226 = vmatpush1.bf16.msra.mxu0 %v3659
      %5227 = vmatprep.subr.bf16.mxu0 0
      %5228 = vmatpush1.bf16.msra.mxu0 %v3660
      %5229 = vmatprep.subr.bf16.mxu0 0
      %5230 = vmatpush1.bf16.msra.mxu0 %v3661
      %5231 = vmatprep.subr.bf16.mxu0 0
      %5232 = vmatpush1.bf16.msra.mxu0 %v3662
      %5233 = vmatprep.subr.bf16.mxu0 0
      %5234 = vmatpush1.bf16.msra.mxu0 %v3663
      %5235 = vmatprep.subr.bf16.mxu0 0
      %5236 = vmatpush1.bf16.msra.mxu0 %v3664
      %5237 = vmatprep.subr.bf16.mxu0 0
      %5238 = vmatpush1.bf16.msra.mxu0 %v3665
      %5239 = vmatprep.subr.bf16.mxu0 0
      %5240 = vmatpush1.bf16.msra.mxu0 %v3666
      %5241 = vmatprep.subr.bf16.mxu0 0
      %5242 = vmatpush1.bf16.msra.mxu0 %v3667
      %5243 = vmatprep.subr.bf16.mxu0 0
      %5244 = vmatpush1.bf16.msra.mxu0 %v3668
      %5245 = vmatprep.subr.bf16.mxu0 0
      %5246 = vmatpush1.bf16.msra.mxu0 %v3669
      %5247 = vmatprep.subr.bf16.mxu0 0
      %5248 = vmatpush1.bf16.msra.mxu0 %v3670
      %5249 = vmatprep.subr.bf16.mxu0 0
      %5250 = vmatpush1.bf16.msra.mxu0 %v3671
      %5251 = vmatprep.subr.bf16.mxu0 0
      %5252 = vmatpush1.bf16.msra.mxu0 %v3672
      %5253 = vmatprep.subr.bf16.mxu0 0
      %5254 = vmatpush1.bf16.msra.mxu0 %v3673
      %5255 = vmatprep.mubr.bf16.mxu0 %v1941
      %5256 = vmatmul.mubr.bf16.gmra.mrb[0].mxu0 %v1940
      %v5257 = vpop.f32.mrb[0].mxu0
      %v5258 = vadd.f32 %v5161, %v5257
      %v5259 = vpop.f32.mrb[0].mxu0
      %v5260 = vpop.f32.mrb[0].mxu0
      %v5261 = vadd.f32 %v5164, %v5260
      %v5262 = vpop.f32.mrb[0].mxu0
      %5263 = vmatprep.mubr.bf16.mxu0 %v1973
      %5264 = vmatmul.mubr.bf16.gmra.mrb[0].mxu0 %v1972
      %v5265 = vpop.f32.mrb[0].mxu0
      %v5266 = vadd.f32 %v5169, %v5265
      %v5267 = vpop.f32.mrb[0].mxu0
      %v5268 = vpop.f32.mrb[0].mxu0
      %v5269 = vadd.f32 %v5172, %v5268
      %v5270 = vpop.f32.mrb[0].mxu0
      %5271 = vmatprep.mubr.bf16.mxu0 %v2005
      %5272 = vmatmul.mubr.bf16.gmra.mrb[0].mxu0 %v2004
      %v5273 = vpop.f32.mrb[0].mxu0
      %v5274 = vadd.f32 %v5177, %v5273
      %v5275 = vpop.f32.mrb[0].mxu0
      %v5276 = vpop.f32.mrb[0].mxu0
      %v5277 = vadd.f32 %v5180, %v5276
      %v5278 = vpop.f32.mrb[0].mxu0
      %5279 = vmatprep.mubr.bf16.mxu0 %v2037
      %5280 = vmatmul.mubr.bf16.gmra.mrb[0].mxu0 %v2036
      %v5281 = vpop.f32.mrb[0].mxu0
      %v5282 = vadd.f32 %v5185, %v5281
      %v5283 = vpop.f32.mrb[0].mxu0
      %v5284 = vpop.f32.mrb[0].mxu0
      %v5285 = vadd.f32 %v5188, %v5284
      %v5286 = vpop.f32.mrb[0].mxu0
      %5287 = vmatprep.mubr.bf16.mxu0 %v2069
      %5288 = vmatmul.mubr.bf16.gmra.mrb[0].mxu0 %v2068
      %v5289 = vpop.f32.mrb[0].mxu0
      %v5290 = vadd.f32 %v5193, %v5289
      %v5291 = vpop.f32.mrb[0].mxu0
      %v5292 = vpop.f32.mrb[0].mxu0
      %v5293 = vadd.f32 %v5196, %v5292
      %v5294 = vpop.f32.mrb[0].mxu0
      %5295 = vmatprep.mubr.bf16.mxu0 %v2101
      %5296 = vmatmul.mubr.bf16.gmra.mrb[0].mxu0 %v2100
      %v5297 = vpop.f32.mrb[0].mxu0
      %v5298 = vadd.f32 %v5201, %v5297
      %v5299 = vpop.f32.mrb[0].mxu0
      %v5300 = vpop.f32.mrb[0].mxu0
      %v5301 = vadd.f32 %v5204, %v5300
      %v5302 = vpop.f32.mrb[0].mxu0
      %5303 = vmatprep.mubr.bf16.mxu0 %v2133
      %5304 = vmatmul.mubr.bf16.gmra.mrb[0].mxu0 %v2132
      %v5305 = vpop.f32.mrb[0].mxu0
      %v5306 = vadd.f32 %v5209, %v5305
      %v5307 = vpop.f32.mrb[0].mxu0
      %v5308 = vpop.f32.mrb[0].mxu0
      %v5309 = vadd.f32 %v5212, %v5308
      %v5310 = vpop.f32.mrb[0].mxu0
      %5311 = vmatprep.mubr.bf16.mxu0 %v2165
      %5312 = vmatmul.mubr.bf16.gmra.mrb[0].mxu0 %v2164
      %v5313 = vpop.f32.mrb[0].mxu0
      %v5314 = vadd.f32 %v5217, %v5313
      %v5315 = vpop.f32.mrb[0].mxu0
      %v5316 = vpop.f32.mrb[0].mxu0
      %v5317 = vadd.f32 %v5220, %v5316
      %v5318 = vpop.f32.mrb[0].mxu0
      %5319 = vdwg.mxu0
      %5320 = vmatprep.subr.bf16.mxu0 0
      %5321 = vmatpush1.bf16.msra.mxu0 %v3674
      %5322 = vmatprep.subr.bf16.mxu0 0
      %5323 = vmatpush1.bf16.msra.mxu0 %v3675
      %5324 = vmatprep.subr.bf16.mxu0 0
      %5325 = vmatpush1.bf16.msra.mxu0 %v3676
      %5326 = vmatprep.subr.bf16.mxu0 0
      %5327 = vmatpush1.bf16.msra.mxu0 %v3677
      %5328 = vmatprep.subr.bf16.mxu0 0
      %5329 = vmatpush1.bf16.msra.mxu0 %v3678
      %5330 = vmatprep.subr.bf16.mxu0 0
      %5331 = vmatpush1.bf16.msra.mxu0 %v3679
      %5332 = vmatprep.subr.bf16.mxu0 0
      %5333 = vmatpush1.bf16.msra.mxu0 %v3680
      %5334 = vmatprep.subr.bf16.mxu0 0
      %5335 = vmatpush1.bf16.msra.mxu0 %v3681
      %5336 = vmatprep.subr.bf16.mxu0 0
      %5337 = vmatpush1.bf16.msra.mxu0 %v3682
      %5338 = vmatprep.subr.bf16.mxu0 0
      %5339 = vmatpush1.bf16.msra.mxu0 %v3683
      %5340 = vmatprep.subr.bf16.mxu0 0
      %5341 = vmatpush1.bf16.msra.mxu0 %v3684
      %5342 = vmatprep.subr.bf16.mxu0 0
      %5343 = vmatpush1.bf16.msra.mxu0 %v3685
      %5344 = vmatprep.subr.bf16.mxu0 0
      %5345 = vmatpush1.bf16.msra.mxu0 %v3686
      %5346 = vmatprep.subr.bf16.mxu0 0
      %5347 = vmatpush1.bf16.msra.mxu0 %v3687
      %5348 = vmatprep.subr.bf16.mxu0 0
      %5349 = vmatpush1.bf16.msra.mxu0 %v3688
      %5350 = vmatprep.subr.bf16.mxu0 0
      %5351 = vmatpush1.bf16.msra.mxu0 %v3689
      %5352 = vmatprep.mubr.bf16.mxu0 %v1943
      %5353 = vmatmul.mubr.bf16.gmra.mrb[0].mxu0 %v1942
      %v5354 = vpop.f32.mrb[0].mxu0
      %v5355 = vadd.f32 %v5258, %v5354
      %v5356 = vpop.f32.mrb[0].mxu0
      %v5357 = vpop.f32.mrb[0].mxu0
      %v5358 = vadd.f32 %v5261, %v5357
      %v5359 = vpop.f32.mrb[0].mxu0
      %5360 = vmatprep.mubr.bf16.mxu0 %v1975
      %5361 = vmatmul.mubr.bf16.gmra.mrb[0].mxu0 %v1974
      %v5362 = vpop.f32.mrb[0].mxu0
      %v5363 = vadd.f32 %v5266, %v5362
      %v5364 = vpop.f32.mrb[0].mxu0
      %v5365 = vpop.f32.mrb[0].mxu0
      %v5366 = vadd.f32 %v5269, %v5365
      %v5367 = vpop.f32.mrb[0].mxu0
      %5368 = vmatprep.mubr.bf16.mxu0 %v2007
      %5369 = vmatmul.mubr.bf16.gmra.mrb[0].mxu0 %v2006
      %v5370 = vpop.f32.mrb[0].mxu0
      %v5371 = vadd.f32 %v5274, %v5370
      %v5372 = vpop.f32.mrb[0].mxu0
      %v5373 = vpop.f32.mrb[0].mxu0
      %v5374 = vadd.f32 %v5277, %v5373
      %v5375 = vpop.f32.mrb[0].mxu0
      %5376 = vmatprep.mubr.bf16.mxu0 %v2039
      %5377 = vmatmul.mubr.bf16.gmra.mrb[0].mxu0 %v2038
      %v5378 = vpop.f32.mrb[0].mxu0
      %v5379 = vadd.f32 %v5282, %v5378
      %v5380 = vpop.f32.mrb[0].mxu0
      %v5381 = vpop.f32.mrb[0].mxu0
      %v5382 = vadd.f32 %v5285, %v5381
      %v5383 = vpop.f32.mrb[0].mxu0
      %5384 = vmatprep.mubr.bf16.mxu0 %v2071
      %5385 = vmatmul.mubr.bf16.gmra.mrb[0].mxu0 %v2070
      %v5386 = vpop.f32.mrb[0].mxu0
      %v5387 = vadd.f32 %v5290, %v5386
      %v5388 = vpop.f32.mrb[0].mxu0
      %v5389 = vpop.f32.mrb[0].mxu0
      %v5390 = vadd.f32 %v5293, %v5389
      %v5391 = vpop.f32.mrb[0].mxu0
      %5392 = vmatprep.mubr.bf16.mxu0 %v2103
      %5393 = vmatmul.mubr.bf16.gmra.mrb[0].mxu0 %v2102
      %v5394 = vpop.f32.mrb[0].mxu0
      %v5395 = vadd.f32 %v5298, %v5394
      %v5396 = vpop.f32.mrb[0].mxu0
      %v5397 = vpop.f32.mrb[0].mxu0
      %v5398 = vadd.f32 %v5301, %v5397
      %v5399 = vpop.f32.mrb[0].mxu0
      %5400 = vmatprep.mubr.bf16.mxu0 %v2135
      %5401 = vmatmul.mubr.bf16.gmra.mrb[0].mxu0 %v2134
      %v5402 = vpop.f32.mrb[0].mxu0
      %v5403 = vadd.f32 %v5306, %v5402
      %v5404 = vpop.f32.mrb[0].mxu0
      %v5405 = vpop.f32.mrb[0].mxu0
      %v5406 = vadd.f32 %v5309, %v5405
      %v5407 = vpop.f32.mrb[0].mxu0
      %5408 = vmatprep.mubr.bf16.mxu0 %v2167
      %5409 = vmatmul.mubr.bf16.gmra.mrb[0].mxu0 %v2166
      %v5410 = vpop.f32.mrb[0].mxu0
      %v5411 = vadd.f32 %v5314, %v5410
      %v5412 = vpop.f32.mrb[0].mxu0
      %v5413 = vpop.f32.mrb[0].mxu0
      %v5414 = vadd.f32 %v5317, %v5413
      %v5415 = vpop.f32.mrb[0].mxu0
      %5416 = vdwg.mxu0
      %5417 = vmatprep.subr.bf16.mxu0 0
      %5418 = vmatpush1.bf16.msra.mxu0 %v3690
      %5419 = vmatprep.subr.bf16.mxu0 0
      %5420 = vmatpush1.bf16.msra.mxu0 %v3691
      %5421 = vmatprep.subr.bf16.mxu0 0
      %5422 = vmatpush1.bf16.msra.mxu0 %v3692
      %5423 = vmatprep.subr.bf16.mxu0 0
      %5424 = vmatpush1.bf16.msra.mxu0 %v3693
      %5425 = vmatprep.subr.bf16.mxu0 0
      %5426 = vmatpush1.bf16.msra.mxu0 %v3694
      %5427 = vmatprep.subr.bf16.mxu0 0
      %5428 = vmatpush1.bf16.msra.mxu0 %v3695
      %5429 = vmatprep.subr.bf16.mxu0 0
      %5430 = vmatpush1.bf16.msra.mxu0 %v3696
      %5431 = vmatprep.subr.bf16.mxu0 0
      %5432 = vmatpush1.bf16.msra.mxu0 %v3697
      %5433 = vmatprep.subr.bf16.mxu0 0
      %5434 = vmatpush1.bf16.msra.mxu0 %v3698
      %5435 = vmatprep.subr.bf16.mxu0 0
      %5436 = vmatpush1.bf16.msra.mxu0 %v3699
      %5437 = vmatprep.subr.bf16.mxu0 0
      %5438 = vmatpush1.bf16.msra.mxu0 %v3700
      %5439 = vmatprep.subr.bf16.mxu0 0
      %5440 = vmatpush1.bf16.msra.mxu0 %v3701
      %5441 = vmatprep.subr.bf16.mxu0 0
      %5442 = vmatpush1.bf16.msra.mxu0 %v3702
      %5443 = vmatprep.subr.bf16.mxu0 0
      %5444 = vmatpush1.bf16.msra.mxu0 %v3703
      %5445 = vmatprep.subr.bf16.mxu0 0
      %5446 = vmatpush1.bf16.msra.mxu0 %v3704
      %5447 = vmatprep.subr.bf16.mxu0 0
      %5448 = vmatpush1.bf16.msra.mxu0 %v3705
      %5449 = vmatprep.mubr.bf16.mxu0 %v1945
      %5450 = vmatmul.mubr.bf16.gmra.mrb[0].mxu0 %v1944
      %v5451 = vpop.f32.mrb[0].mxu0
      %v5452 = vadd.f32 %v5355, %v5451
      %v5453 = vpop.f32.mrb[0].mxu0
      %v5454 = vpop.f32.mrb[0].mxu0
      %v5455 = vadd.f32 %v5358, %v5454
      %v5456 = vpop.f32.mrb[0].mxu0
      %5457 = vmatprep.mubr.bf16.mxu0 %v1977
      %5458 = vmatmul.mubr.bf16.gmra.mrb[0].mxu0 %v1976
      %v5459 = vpop.f32.mrb[0].mxu0
      %v5460 = vadd.f32 %v5363, %v5459
      %v5461 = vpop.f32.mrb[0].mxu0
      %v5462 = vpop.f32.mrb[0].mxu0
      %v5463 = vadd.f32 %v5366, %v5462
      %v5464 = vpop.f32.mrb[0].mxu0
      %5465 = vmatprep.mubr.bf16.mxu0 %v2009
      %5466 = vmatmul.mubr.bf16.gmra.mrb[0].mxu0 %v2008
      %v5467 = vpop.f32.mrb[0].mxu0
      %v5468 = vadd.f32 %v5371, %v5467
      %v5469 = vpop.f32.mrb[0].mxu0
      %v5470 = vpop.f32.mrb[0].mxu0
      %v5471 = vadd.f32 %v5374, %v5470
      %v5472 = vpop.f32.mrb[0].mxu0
      %5473 = vmatprep.mubr.bf16.mxu0 %v2041
      %5474 = vmatmul.mubr.bf16.gmra.mrb[0].mxu0 %v2040
      %v5475 = vpop.f32.mrb[0].mxu0
      %v5476 = vadd.f32 %v5379, %v5475
      %v5477 = vpop.f32.mrb[0].mxu0
      %v5478 = vpop.f32.mrb[0].mxu0
      %v5479 = vadd.f32 %v5382, %v5478
      %v5480 = vpop.f32.mrb[0].mxu0
      %5481 = vmatprep.mubr.bf16.mxu0 %v2073
      %5482 = vmatmul.mubr.bf16.gmra.mrb[0].mxu0 %v2072
      %v5483 = vpop.f32.mrb[0].mxu0
      %v5484 = vadd.f32 %v5387, %v5483
      %v5485 = vpop.f32.mrb[0].mxu0
      %v5486 = vpop.f32.mrb[0].mxu0
      %v5487 = vadd.f32 %v5390, %v5486
      %v5488 = vpop.f32.mrb[0].mxu0
      %5489 = vmatprep.mubr.bf16.mxu0 %v2105
      %5490 = vmatmul.mubr.bf16.gmra.mrb[0].mxu0 %v2104
      %v5491 = vpop.f32.mrb[0].mxu0
      %v5492 = vadd.f32 %v5395, %v5491
      %v5493 = vpop.f32.mrb[0].mxu0
      %v5494 = vpop.f32.mrb[0].mxu0
      %v5495 = vadd.f32 %v5398, %v5494
      %v5496 = vpop.f32.mrb[0].mxu0
      %5497 = vmatprep.mubr.bf16.mxu0 %v2137
      %5498 = vmatmul.mubr.bf16.gmra.mrb[0].mxu0 %v2136
      %v5499 = vpop.f32.mrb[0].mxu0
      %v5500 = vadd.f32 %v5403, %v5499
      %v5501 = vpop.f32.mrb[0].mxu0
      %v5502 = vpop.f32.mrb[0].mxu0
      %v5503 = vadd.f32 %v5406, %v5502
      %v5504 = vpop.f32.mrb[0].mxu0
      %5505 = vmatprep.mubr.bf16.mxu0 %v2169
      %5506 = vmatmul.mubr.bf16.gmra.mrb[0].mxu0 %v2168
      %v5507 = vpop.f32.mrb[0].mxu0
      %v5508 = vadd.f32 %v5411, %v5507
      %v5509 = vpop.f32.mrb[0].mxu0
      %v5510 = vpop.f32.mrb[0].mxu0
      %v5511 = vadd.f32 %v5414, %v5510
      %v5512 = vpop.f32.mrb[0].mxu0
      %5513 = vdwg.mxu0
      %p5514 = scmp.eq.s32.totalorder %s22, 0
      // Predicated region
      $region33: #{a_call__.12} parent=31 // pred_check
        %p5515 = pneg %p5514
      $region34: #{a_call__.12} parent=31 // pred_check_branch
        %5517 = sbr.rel (%p5515) target = $region36
      $region35: #{a_call__.12} parent=31 // pred_region
        %vm5518 = vcmask 7168
        %5519 = vst.msk [vmem:[%s275] sm:$0xff] %vm5518, 0.0
        %5520 = vst.msk [vmem:[%s275 + $0x8] sm:$0xff] %vm5518, 0.0
        %5521 = vst.msk [vmem:[%s275 + $0x10] sm:$0xff] %vm5518, 0.0
        %5522 = vst.msk [vmem:[%s275 + $0x18] sm:$0xff] %vm5518, 0.0
        %5523 = vst.msk [vmem:[%s275 + $0x20] sm:$0xff] %vm5518, 0.0
        %5524 = vst.msk [vmem:[%s275 + $0x28] sm:$0xff] %vm5518, 0.0
        %5525 = vst.msk [vmem:[%s275 + $0x30] sm:$0xff] %vm5518, 0.0
        %5526 = vst.msk [vmem:[%s275 + $0x38] sm:$0xff] %vm5518, 0.0
        %5527 = vst.msk [vmem:[%s275 + $0x40] sm:$0xff] %vm5518, 0.0
        %5528 = vst.msk [vmem:[%s275 + $0x48] sm:$0xff] %vm5518, 0.0
        %5529 = vst.msk [vmem:[%s275 + $0x50] sm:$0xff] %vm5518, 0.0
        %5530 = vst.msk [vmem:[%s275 + $0x58] sm:$0xff] %vm5518, 0.0
        %5531 = vst.msk [vmem:[%s275 + $0x60] sm:$0xff] %vm5518, 0.0
        %5532 = vst.msk [vmem:[%s275 + $0x68] sm:$0xff] %vm5518, 0.0
        %5533 = vst.msk [vmem:[%s275 + $0x70] sm:$0xff] %vm5518, 0.0
        %5534 = vst.msk [vmem:[%s275 + $0x78] sm:$0xff] %vm5518, 0.0
        %5535 = vst.msk [vmem:[%s280] sm:$0xff] %vm5518, 0.0
        %5536 = vst.msk [vmem:[%s280 + $0x8] sm:$0xff] %vm5518, 0.0
        %5537 = vst.msk [vmem:[%s280 + $0x10] sm:$0xff] %vm5518, 0.0
        %5538 = vst.msk [vmem:[%s280 + $0x18] sm:$0xff] %vm5518, 0.0
        %5539 = vst.msk [vmem:[%s280 + $0x20] sm:$0xff] %vm5518, 0.0
        %5540 = vst.msk [vmem:[%s280 + $0x28] sm:$0xff] %vm5518, 0.0
        %5541 = vst.msk [vmem:[%s280 + $0x30] sm:$0xff] %vm5518, 0.0
        %5542 = vst.msk [vmem:[%s280 + $0x38] sm:$0xff] %vm5518, 0.0
        %5543 = vst.msk [vmem:[%s280 + $0x40] sm:$0xff] %vm5518, 0.0
        %5544 = vst.msk [vmem:[%s280 + $0x48] sm:$0xff] %vm5518, 0.0
        %5545 = vst.msk [vmem:[%s280 + $0x50] sm:$0xff] %vm5518, 0.0
        %5546 = vst.msk [vmem:[%s280 + $0x58] sm:$0xff] %vm5518, 0.0
        %5547 = vst.msk [vmem:[%s280 + $0x60] sm:$0xff] %vm5518, 0.0
        %5548 = vst.msk [vmem:[%s280 + $0x68] sm:$0xff] %vm5518, 0.0
        %5549 = vst.msk [vmem:[%s280 + $0x70] sm:$0xff] %vm5518, 0.0
        %5550 = vst.msk [vmem:[%s280 + $0x78] sm:$0xff] %vm5518, 0.0
      $region36: #{a_call__.12} parent=31 // pred_fallthru
        _
      %v5551 = vld [vmem:[%s275] sm:$0xff]
      %v5552 = vld [vmem:[%s275 + $0x8] sm:$0xff]
      %v5553 = vld [vmem:[%s275 + $0x10] sm:$0xff]
      %v5554 = vld [vmem:[%s275 + $0x18] sm:$0xff]
      %v5555 = vld [vmem:[%s275 + $0x20] sm:$0xff]
      %v5556 = vld [vmem:[%s275 + $0x28] sm:$0xff]
      %v5557 = vld [vmem:[%s275 + $0x30] sm:$0xff]
      %v5558 = vld [vmem:[%s275 + $0x38] sm:$0xff]
      %v5559 = vld [vmem:[%s275 + $0x40] sm:$0xff]
      %v5560 = vld [vmem:[%s275 + $0x48] sm:$0xff]
      %v5561 = vld [vmem:[%s275 + $0x50] sm:$0xff]
      %v5562 = vld [vmem:[%s275 + $0x58] sm:$0xff]
      %v5563 = vld [vmem:[%s275 + $0x60] sm:$0xff]
      %v5564 = vld [vmem:[%s275 + $0x68] sm:$0xff]
      %v5565 = vld [vmem:[%s275 + $0x70] sm:$0xff]
      %v5566 = vld [vmem:[%s275 + $0x78] sm:$0xff]
      %5567 = vadd.xlane.f32.xlu0 %v5452
      %v5568 = vpop.xlane.xlu0 %5567
      %5569 = vadd.xlane.f32.xlu0 %v5455
      %v5570 = vpop.xlane.xlu0 %5569
      %5571 = vadd.xlane.f32.xlu0 %v5460
      %v5572 = vpop.xlane.xlu0 %5571
      %5573 = vadd.xlane.f32.xlu0 %v5463
      %v5574 = vpop.xlane.xlu0 %5573
      %5575 = vadd.xlane.f32.xlu0 %v5468
      %v5576 = vpop.xlane.xlu0 %5575
      %5577 = vadd.xlane.f32.xlu0 %v5471
      %v5578 = vpop.xlane.xlu0 %5577
      %5579 = vadd.xlane.f32.xlu0 %v5476
      %v5580 = vpop.xlane.xlu0 %5579
      %5581 = vadd.xlane.f32.xlu0 %v5479
      %v5582 = vpop.xlane.xlu0 %5581
      %5583 = vadd.xlane.f32.xlu0 %v5484
      %v5584 = vpop.xlane.xlu0 %5583
      %5585 = vadd.xlane.f32.xlu0 %v5487
      %v5586 = vpop.xlane.xlu0 %5585
      %5587 = vadd.xlane.f32.xlu0 %v5492
      %v5588 = vpop.xlane.xlu0 %5587
      %5589 = vadd.xlane.f32.xlu0 %v5495
      %v5590 = vpop.xlane.xlu0 %5589
      %5591 = vadd.xlane.f32.xlu0 %v5500
      %v5592 = vpop.xlane.xlu0 %5591
      %5593 = vadd.xlane.f32.xlu0 %v5503
      %v5594 = vpop.xlane.xlu0 %5593
      %5595 = vadd.xlane.f32.xlu0 %v5508
      %v5596 = vpop.xlane.xlu0 %5595
      %5597 = vadd.xlane.f32.xlu0 %v5511
      %v5598 = vpop.xlane.xlu0 %5597
      %v5599 = vadd.f32 %v5551, %v5568
      %v5600 = vadd.f32 %v5552, %v5570
      %v5601 = vadd.f32 %v5553, %v5572
      %v5602 = vadd.f32 %v5554, %v5574
      %v5603 = vadd.f32 %v5555, %v5576
      %v5604 = vadd.f32 %v5556, %v5578
      %v5605 = vadd.f32 %v5557, %v5580
      %v5606 = vadd.f32 %v5558, %v5582
      %v5607 = vadd.f32 %v5559, %v5584
      %v5608 = vadd.f32 %v5560, %v5586
      %v5609 = vadd.f32 %v5561, %v5588
      %v5610 = vadd.f32 %v5562, %v5590
      %v5611 = vadd.f32 %v5563, %v5592
      %v5612 = vadd.f32 %v5564, %v5594
      %v5613 = vadd.f32 %v5565, %v5596
      %v5614 = vadd.f32 %v5566, %v5598
      %vm5615 = vcmask 7168
      %5616 = vst.msk [vmem:[%s275] sm:$0xff] %vm5615, %v5599
      %5617 = vst.msk [vmem:[%s275 + $0x8] sm:$0xff] %vm5615, %v5600
      %5618 = vst.msk [vmem:[%s275 + $0x10] sm:$0xff] %vm5615, %v5601
      %5619 = vst.msk [vmem:[%s275 + $0x18] sm:$0xff] %vm5615, %v5602
      %5620 = vst.msk [vmem:[%s275 + $0x20] sm:$0xff] %vm5615, %v5603
      %5621 = vst.msk [vmem:[%s275 + $0x28] sm:$0xff] %vm5615, %v5604
      %5622 = vst.msk [vmem:[%s275 + $0x30] sm:$0xff] %vm5615, %v5605
      %5623 = vst.msk [vmem:[%s275 + $0x38] sm:$0xff] %vm5615, %v5606
      %5624 = vst.msk [vmem:[%s275 + $0x40] sm:$0xff] %vm5615, %v5607
      %5625 = vst.msk [vmem:[%s275 + $0x48] sm:$0xff] %vm5615, %v5608
      %5626 = vst.msk [vmem:[%s275 + $0x50] sm:$0xff] %vm5615, %v5609
      %5627 = vst.msk [vmem:[%s275 + $0x58] sm:$0xff] %vm5615, %v5610
      %5628 = vst.msk [vmem:[%s275 + $0x60] sm:$0xff] %vm5615, %v5611
      %5629 = vst.msk [vmem:[%s275 + $0x68] sm:$0xff] %vm5615, %v5612
      %5630 = vst.msk [vmem:[%s275 + $0x70] sm:$0xff] %vm5615, %v5613
      %5631 = vst.msk [vmem:[%s275 + $0x78] sm:$0xff] %vm5615, %v5614
      %v5632 = vld [vmem:[%s280] sm:$0xff]
      %v5633 = vld [vmem:[%s280 + $0x8] sm:$0xff]
      %v5634 = vld [vmem:[%s280 + $0x10] sm:$0xff]
      %v5635 = vld [vmem:[%s280 + $0x18] sm:$0xff]
      %v5636 = vld [vmem:[%s280 + $0x20] sm:$0xff]
      %v5637 = vld [vmem:[%s280 + $0x28] sm:$0xff]
      %v5638 = vld [vmem:[%s280 + $0x30] sm:$0xff]
      %v5639 = vld [vmem:[%s280 + $0x38] sm:$0xff]
      %v5640 = vld [vmem:[%s280 + $0x40] sm:$0xff]
      %v5641 = vld [vmem:[%s280 + $0x48] sm:$0xff]
      %v5642 = vld [vmem:[%s280 + $0x50] sm:$0xff]
      %v5643 = vld [vmem:[%s280 + $0x58] sm:$0xff]
      %v5644 = vld [vmem:[%s280 + $0x60] sm:$0xff]
      %v5645 = vld [vmem:[%s280 + $0x68] sm:$0xff]
      %v5646 = vld [vmem:[%s280 + $0x70] sm:$0xff]
      %v5647 = vld [vmem:[%s280 + $0x78] sm:$0xff]
      %v5648 = vmul.f32 %v5452, %v5452
      %v5649 = vmul.f32 %v5455, %v5455
      %v5650 = vmul.f32 %v5460, %v5460
      %v5651 = vmul.f32 %v5463, %v5463
      %v5652 = vmul.f32 %v5468, %v5468
      %v5653 = vmul.f32 %v5471, %v5471
      %v5654 = vmul.f32 %v5476, %v5476
      %v5655 = vmul.f32 %v5479, %v5479
      %v5656 = vmul.f32 %v5484, %v5484
      %v5657 = vmul.f32 %v5487, %v5487
      %v5658 = vmul.f32 %v5492, %v5492
      %v5659 = vmul.f32 %v5495, %v5495
      %v5660 = vmul.f32 %v5500, %v5500
      %v5661 = vmul.f32 %v5503, %v5503
      %v5662 = vmul.f32 %v5508, %v5508
      %v5663 = vmul.f32 %v5511, %v5511
      %5664 = vadd.xlane.f32.xlu0 %v5648
      %v5665 = vpop.xlane.xlu0 %5664
      %5666 = vadd.xlane.f32.xlu0 %v5649
      %v5667 = vpop.xlane.xlu0 %5666
      %5668 = vadd.xlane.f32.xlu0 %v5650
      %v5669 = vpop.xlane.xlu0 %5668
      %5670 = vadd.xlane.f32.xlu0 %v5651
      %v5671 = vpop.xlane.xlu0 %5670
      %5672 = vadd.xlane.f32.xlu0 %v5652
      %v5673 = vpop.xlane.xlu0 %5672
      %5674 = vadd.xlane.f32.xlu0 %v5653
      %v5675 = vpop.xlane.xlu0 %5674
      %5676 = vadd.xlane.f32.xlu0 %v5654
      %v5677 = vpop.xlane.xlu0 %5676
      %5678 = vadd.xlane.f32.xlu0 %v5655
      %v5679 = vpop.xlane.xlu0 %5678
      %5680 = vadd.xlane.f32.xlu0 %v5656
      %v5681 = vpop.xlane.xlu0 %5680
      %5682 = vadd.xlane.f32.xlu0 %v5657
      %v5683 = vpop.xlane.xlu0 %5682
      %5684 = vadd.xlane.f32.xlu0 %v5658
      %v5685 = vpop.xlane.xlu0 %5684
      %5686 = vadd.xlane.f32.xlu0 %v5659
      %v5687 = vpop.xlane.xlu0 %5686
      %5688 = vadd.xlane.f32.xlu0 %v5660
      %v5689 = vpop.xlane.xlu0 %5688
      %5690 = vadd.xlane.f32.xlu0 %v5661
      %v5691 = vpop.xlane.xlu0 %5690
      %5692 = vadd.xlane.f32.xlu0 %v5662
      %v5693 = vpop.xlane.xlu0 %5692
      %5694 = vadd.xlane.f32.xlu0 %v5663
      %v5695 = vpop.xlane.xlu0 %5694
      %v5696 = vadd.f32 %v5632, %v5665
      %v5697 = vadd.f32 %v5633, %v5667
      %v5698 = vadd.f32 %v5634, %v5669
      %v5699 = vadd.f32 %v5635, %v5671
      %v5700 = vadd.f32 %v5636, %v5673
      %v5701 = vadd.f32 %v5637, %v5675
      %v5702 = vadd.f32 %v5638, %v5677
      %v5703 = vadd.f32 %v5639, %v5679
      %v5704 = vadd.f32 %v5640, %v5681
      %v5705 = vadd.f32 %v5641, %v5683
      %v5706 = vadd.f32 %v5642, %v5685
      %v5707 = vadd.f32 %v5643, %v5687
      %v5708 = vadd.f32 %v5644, %v5689
      %v5709 = vadd.f32 %v5645, %v5691
      %v5710 = vadd.f32 %v5646, %v5693
      %v5711 = vadd.f32 %v5647, %v5695
      %5712 = vst.msk [vmem:[%s280] sm:$0xff] %vm5615, %v5696
      %5713 = vst.msk [vmem:[%s280 + $0x8] sm:$0xff] %vm5615, %v5697
      %5714 = vst.msk [vmem:[%s280 + $0x10] sm:$0xff] %vm5615, %v5698
      %5715 = vst.msk [vmem:[%s280 + $0x18] sm:$0xff] %vm5615, %v5699
      %5716 = vst.msk [vmem:[%s280 + $0x20] sm:$0xff] %vm5615, %v5700
      %5717 = vst.msk [vmem:[%s280 + $0x28] sm:$0xff] %vm5615, %v5701
      %5718 = vst.msk [vmem:[%s280 + $0x30] sm:$0xff] %vm5615, %v5702
      %5719 = vst.msk [vmem:[%s280 + $0x38] sm:$0xff] %vm5615, %v5703
      %5720 = vst.msk [vmem:[%s280 + $0x40] sm:$0xff] %vm5615, %v5704
      %5721 = vst.msk [vmem:[%s280 + $0x48] sm:$0xff] %vm5615, %v5705
      %5722 = vst.msk [vmem:[%s280 + $0x50] sm:$0xff] %vm5615, %v5706
      %5723 = vst.msk [vmem:[%s280 + $0x58] sm:$0xff] %vm5615, %v5707
      %5724 = vst.msk [vmem:[%s280 + $0x60] sm:$0xff] %vm5615, %v5708
      %5725 = vst.msk [vmem:[%s280 + $0x68] sm:$0xff] %vm5615, %v5709
      %5726 = vst.msk [vmem:[%s280 + $0x70] sm:$0xff] %vm5615, %v5710
      %5727 = vst.msk [vmem:[%s280 + $0x78] sm:$0xff] %vm5615, %v5711
      %v5728 = vpack.c.bf16 %v5455, %v5452
      %v5729 = vpack.c.bf16 %v5463, %v5460
      %v5730 = vpack.c.bf16 %v5471, %v5468
      %v5731 = vpack.c.bf16 %v5479, %v5476
      %v5732 = vpack.c.bf16 %v5487, %v5484
      %v5733 = vpack.c.bf16 %v5495, %v5492
      %v5734 = vpack.c.bf16 %v5503, %v5500
      %v5735 = vpack.c.bf16 %v5511, %v5508
      %v5744 = vunpack.c.l.b16 %v5728
      %v5745 = vunpack.c.h.b16 %v5728
      %v5746 = vunpack.c.l.b16 %v5729
      %v5747 = vunpack.c.h.b16 %v5729
      %v5748 = vunpack.c.l.b16 %v5730
      %v5749 = vunpack.c.h.b16 %v5730
      %v5750 = vunpack.c.l.b16 %v5731
      %v5751 = vunpack.c.h.b16 %v5731
      %v5752 = vunpack.c.l.b16 %v5732
      %v5753 = vunpack.c.h.b16 %v5732
      %v5754 = vunpack.c.l.b16 %v5733
      %v5755 = vunpack.c.h.b16 %v5733
      %v5756 = vunpack.c.l.b16 %v5734
      %v5757 = vunpack.c.h.b16 %v5734
      %v5758 = vunpack.c.l.b16 %v5735
      %v5759 = vunpack.c.h.b16 %v5735
      %v5760 = vpack.c.b16 %v5744, %v5744
      %v5761 = vpack.c.b16 %v5745, %v5745
      %v5762 = vpack.c.b16 %v5746, %v5746
      %v5763 = vpack.c.b16 %v5747, %v5747
      %v5764 = vpack.c.b16 %v5748, %v5748
      %v5765 = vpack.c.b16 %v5749, %v5749
      %v5766 = vpack.c.b16 %v5750, %v5750
      %v5767 = vpack.c.b16 %v5751, %v5751
      %v5768 = vpack.c.b16 %v5752, %v5752
      %v5769 = vpack.c.b16 %v5753, %v5753
      %v5770 = vpack.c.b16 %v5754, %v5754
      %v5771 = vpack.c.b16 %v5755, %v5755
      %v5772 = vpack.c.b16 %v5756, %v5756
      %v5773 = vpack.c.b16 %v5757, %v5757
      %v5774 = vpack.c.b16 %v5758, %v5758
      %v5775 = vpack.c.b16 %v5759, %v5759
      %5792 = vst [vmem:[%s270] sm:$0xf] %v5760
      %5793 = vst [vmem:[%s270 + $0x4] sm:$0xf] %v5761
      %5794 = vst [vmem:[%s270 + $0x8] sm:$0xf] %v5762
      %5795 = vst [vmem:[%s270 + $0xc] sm:$0xf] %v5763
      %5796 = vst [vmem:[%s270 + $0x10] sm:$0xf] %v5764
      %5797 = vst [vmem:[%s270 + $0x14] sm:$0xf] %v5765
      %5798 = vst [vmem:[%s270 + $0x18] sm:$0xf] %v5766
      %5799 = vst [vmem:[%s270 + $0x1c] sm:$0xf] %v5767
      %5800 = vst [vmem:[%s270 + $0x20] sm:$0xf] %v5768
      %5801 = vst [vmem:[%s270 + $0x24] sm:$0xf] %v5769
      %5802 = vst [vmem:[%s270 + $0x28] sm:$0xf] %v5770
      %5803 = vst [vmem:[%s270 + $0x2c] sm:$0xf] %v5771
      %5804 = vst [vmem:[%s270 + $0x30] sm:$0xf] %v5772
      %5805 = vst [vmem:[%s270 + $0x34] sm:$0xf] %v5773
      %5806 = vst [vmem:[%s270 + $0x38] sm:$0xf] %v5774
      %5807 = vst [vmem:[%s270 + $0x3c] sm:$0xf] %v5775
      %p5808 = scmp.lt.s32.totalorder %s21, 1
      %s5809 = scalar_select %p5808, %s21, 1
      %p5810 = scmp.lt.s32.totalorder %s22, 0
      %s5811 = scalar_select %p5810, %s22, 0
      %s5812 = smul.addr %s5809, 16
      %s5813 = sadd.s32 %s5811, %s5812
      %s5814 = smul.addr %s5813, 4
      %s5815 = scalar_lea.vmem %s3, %s5814
      %p5816 = scmp.lt.s32.totalorder %s21, 1
      %s5817 = scalar_select %p5816, %s21, 1
      %s5818 = smul.addr %s5817, 16
      %s5819 = smul.addr %s5818, 8
      %s5820 = scalar_lea.vmem %s4, %s5819
      %p5821 = scmp.lt.s32.totalorder %s21, 1
      %s5822 = scalar_select %p5821, %s21, 1
      %s5823 = smul.addr %s5822, 16
      %s5824 = smul.addr %s5823, 8
      %s5825 = scalar_lea.vmem %s5, %s5824
      // Predicated region
      $region37: #{a_call__.12} parent=31 // pred_check
        %p5826 = pneg %p119
      $region38: #{a_call__.12} parent=31 // pred_check_branch
        %5828 = sbr.rel (%p5826) target = $region40
      $region39: #{a_call__.12} parent=31 // pred_region
        _
      $region40: #{a_call__.12} parent=31 // pred_fallthru
        _
      // Predicated region
      $region41: #{a_call__.12} parent=31 // pred_check
        %p5829 = pneg %p145
      $region42: #{a_call__.12} parent=31 // pred_check_branch
        %5831 = sbr.rel (%p5829) target = $region44
      $region43: #{a_call__.12} parent=31 // pred_region
        _
      $region44: #{a_call__.12} parent=31 // pred_fallthru
        _
      // Predicated region
      $region45: #{a_call__.12} parent=31 // pred_check
        %p5832 = pneg %p171
      $region46: #{a_call__.12} parent=31 // pred_check_branch
        %5834 = sbr.rel (%p5832) target = $region48
      $region47: #{a_call__.12} parent=31 // pred_region
        _
      $region48: #{a_call__.12} parent=31 // pred_fallthru
        _
    $region32: #{a_call__.12} parent=5 // pred_fallthru
      _
    %p5835 = scmp.le.s32.totalorder 2, %s12
    // Predicated region
    $region49: #{a_call__.12} parent=5 // pred_check
      %p5836 = pneg %p5835
    $region50: #{a_call__.12} parent=5 // pred_check_branch
      %5838 = sbr.rel (%p5836) target = $region52
    $region51: #{a_call__.12} parent=5 // pred_region
      %s5839 = ssub.s32 %s12, 2
      // Predicated region
      $region53: #{a_call__.12} parent=51 // pred_check
        %p5840 = pneg %p125
      $region54: #{a_call__.12} parent=51 // pred_check_branch
        %5842 = sbr.rel (%p5840) target = $region56
      $region55: #{a_call__.12} parent=51 // pred_region
        %p5843 = scmp.lt.s32.totalorder %s23, 1
        %s5844 = scalar_select %p5843, %s23, 1
        %p5845 = scmp.lt.s32.totalorder %s24, 0
        %s5846 = scalar_select %p5845, %s24, 0
        %s5847 = smul.addr %s5844, 16
        %s5848 = sadd.s32 %s5846, %s5847
        %s5849 = smul.addr %s5848, 4
        %s5850 = scalar_lea.vmem %s3, %s5849
      $region56: #{a_call__.12} parent=51 // pred_fallthru
        _
      // Predicated region
      $region57: #{a_call__.12} parent=51 // pred_check
        %p5851 = pneg %p151
      $region58: #{a_call__.12} parent=51 // pred_check_branch
        %5853 = sbr.rel (%p5851) target = $region60
      $region59: #{a_call__.12} parent=51 // pred_region
        %p5854 = scmp.lt.s32.totalorder %s23, 1
        %s5855 = scalar_select %p5854, %s23, 1
        %s5856 = smul.addr %s5855, 16
        %s5857 = smul.addr %s5856, 8
        %s5858 = scalar_lea.vmem %s4, %s5857
      $region60: #{a_call__.12} parent=51 // pred_fallthru
        _
      // Predicated region
      $region61: #{a_call__.12} parent=51 // pred_check
        %p5859 = pneg %p177
      $region62: #{a_call__.12} parent=51 // pred_check_branch
        %5861 = sbr.rel (%p5859) target = $region64
      $region63: #{a_call__.12} parent=51 // pred_region
        %p5862 = scmp.lt.s32.totalorder %s23, 1
        %s5863 = scalar_select %p5862, %s23, 1
        %s5864 = smul.addr %s5863, 16
        %s5865 = smul.addr %s5864, 8
        %s5866 = scalar_lea.vmem %s5, %s5865
      $region64: #{a_call__.12} parent=51 // pred_fallthru
        _
    $region52: #{a_call__.12} parent=5 // pred_fallthru
      _
  $region6: #{a_call__.12} parent=0 // loop_footer
    %s16 = sadd.s32 1, %s12
  $region7: #{a_call__.12} parent=0 // loop_footer_branch
    %11 = sbr.rel target = $region3
  $region8: #{a_call__.12} parent=0 // loop_exit
    _

// kernel: a_call__.13
$region0: #{a_call__.13}
  #allocation0 [shape = 'u32[]', space=smem, size = 0x4, offset = 0x4, fixed_abs, tag = 'smem constant byte address 0x4 - core index']
  #allocation1 [shape = 'u32[144,128]{1,0:T(1,128)}', space=vmem, size = 0x12000, scoped, tag = 'internal scratch']
  %s0 = inlined_call_operand.vmem [shape: bf16[2,128,128], index: 0, kind: input, shape index: {}]
  %s1 = inlined_call_operand.vmem [shape: f32[2,128,1], index: 1, kind: input, shape index: {}]
  %s2 = inlined_call_operand.vmem [shape: f32[2,128,1], index: 2, kind: input, shape index: {}]
  %s3 = inlined_call_operand.vmem [shape: bf16[2,128,128], index: 3, kind: output, shape index: {}]
  %s4 = sld [smem:[#allocation0]]
  $region45: #{a_call__.13} parent=0
    _
  %s6 = ssub.s32 1, %s4
  %s7 = scalar_select 0, %s6, %s4
  loop: start=0, step=1, limit=4
  $region2: #{a_call__.13} parent=0 // loop_pre_header
    _
  $region3: #{a_call__.13} parent=0 // loop_header
    %s9 = sphi 0, %s13
    %p10 = scmp.ge.s32.totalorder %s9, 4
    %s16 = sphi 0, %s28
    %s17 = sphi 0, %s24
    %s18 = sphi 0, %s16
    %s19 = sphi 0, %s17
    %s20 = sphi 0, %s18
    %s21 = sphi 0, %s19
    %s33 = sphi 0, %s35
    %s36 = sphi 0, %s33
    %s37 = sphi 0, %s36
    %s53 = sphi 0, %s37
    %s59 = sphi 0, %s61
    %s62 = sphi 0, %s59
    %s63 = sphi 0, %s62
    %s79 = sphi 0, %s63
    %s85 = sphi 0, %s87
    %s88 = sphi 0, %s85
    %s89 = sphi 0, %s88
    %s105 = sphi 0, %s89
    %s113 = sphi 0, %s115
    %s116 = sphi 0, %s113
    %s117 = sphi 0, %s116
    %s133 = sphi 0, %s117
  $region4: #{a_call__.13} parent=0 // loop_header_branch
    %12 = sbr.rel (%p10) target = $region8
  $region5: #{a_call__.13} parent=0 // loop_body
    %s14 = ssub.s32 %s9, 1
    %s15 = ssub.s32 %s9, 2
    %s22 = sadd.s32 1, %s17
    %p23 = scmp.ge.s32.totalorder %s22, 1
    %s24 = scalar_select %p23, 0, %s22
    %s25 = sadd.s32 1, %s16
    %s26 = scalar_select %p23, %s25, %s16
    %p27 = scmp.ge.s32.totalorder %s26, 2
    %s28 = scalar_select %p27, 0, %s26
    %s29 = ssub.s32 %s16, %s28
    %s30 = ssub.s32 %s17, %s24
    %s31 = sor.u32 %s29, %s30
    %p32 = scmp.eq.s32.totalorder %s31, 0
    %s34 = sadd.s32 %s33, 1
    %s35 = scalar_select %p32, %s33, %s34
    %p38 = pneg %p32
    %p39 = scmp.eq.s32.totalorder %s9, 1
    %p40 = por %p38, %p39
    %p41 = scmp.ne.s32.totalorder %s33, %s36
    %p42 = scmp.eq.s32.totalorder %s9, 0
    %p43 = por %p41, %p42
    %p44 = scmp.ne.s32.totalorder %s33, %s36
    %p45 = scmp.eq.s32.totalorder %s14, 1
    %p46 = por %p44, %p45
    %p47 = scmp.ne.s32.totalorder %s36, %s37
    %p48 = scmp.eq.s32.totalorder %s14, 0
    %p49 = por %p47, %p48
    %p50 = scmp.ne.s32.totalorder %s36, %s37
    %p51 = scmp.eq.s32.totalorder %s15, 1
    %p52 = por %p50, %p51
    %p54 = scmp.ne.s32.totalorder %s37, %s53
    %p55 = scmp.eq.s32.totalorder %s15, 0
    %p56 = por %p54, %p55
    %s57 = ssub.s32 %s16, %s28
    %p58 = scmp.eq.s32.totalorder %s57, 0
    %s60 = sadd.s32 %s59, 1
    %s61 = scalar_select %p58, %s59, %s60
    %p64 = pneg %p58
    %p65 = scmp.eq.s32.totalorder %s9, 1
    %p66 = por %p64, %p65
    %p67 = scmp.ne.s32.totalorder %s59, %s62
    %p68 = scmp.eq.s32.totalorder %s9, 0
    %p69 = por %p67, %p68
    %p70 = scmp.ne.s32.totalorder %s59, %s62
    %p71 = scmp.eq.s32.totalorder %s14, 1
    %p72 = por %p70, %p71
    %p73 = scmp.ne.s32.totalorder %s62, %s63
    %p74 = scmp.eq.s32.totalorder %s14, 0
    %p75 = por %p73, %p74
    %p76 = scmp.ne.s32.totalorder %s62, %s63
    %p77 = scmp.eq.s32.totalorder %s15, 1
    %p78 = por %p76, %p77
    %p80 = scmp.ne.s32.totalorder %s63, %s79
    %p81 = scmp.eq.s32.totalorder %s15, 0
    %p82 = por %p80, %p81
    %s83 = ssub.s32 %s16, %s28
    %p84 = scmp.eq.s32.totalorder %s83, 0
    %s86 = sadd.s32 %s85, 1
    %s87 = scalar_select %p84, %s85, %s86
    %p90 = pneg %p84
    %p91 = scmp.eq.s32.totalorder %s9, 1
    %p92 = por %p90, %p91
    %p93 = scmp.ne.s32.totalorder %s85, %s88
    %p94 = scmp.eq.s32.totalorder %s9, 0
    %p95 = por %p93, %p94
    %p96 = scmp.ne.s32.totalorder %s85, %s88
    %p97 = scmp.eq.s32.totalorder %s14, 1
    %p98 = por %p96, %p97
    %p99 = scmp.ne.s32.totalorder %s88, %s89
    %p100 = scmp.eq.s32.totalorder %s14, 0
    %p101 = por %p99, %p100
    %p102 = scmp.ne.s32.totalorder %s88, %s89
    %p103 = scmp.eq.s32.totalorder %s15, 1
    %p104 = por %p102, %p103
    %p106 = scmp.ne.s32.totalorder %s89, %s105
    %p107 = scmp.eq.s32.totalorder %s15, 0
    %p108 = por %p106, %p107
    %s109 = ssub.s32 %s16, %s28
    %s110 = ssub.s32 %s17, %s24
    %s111 = sor.u32 %s109, %s110
    %p112 = scmp.eq.s32.totalorder %s111, 0
    %s114 = sadd.s32 %s113, 1
    %s115 = scalar_select %p112, %s113, %s114
    %p118 = pneg %p112
    %p119 = scmp.eq.s32.totalorder %s9, 1
    %p120 = por %p118, %p119
    %p121 = scmp.ne.s32.totalorder %s113, %s116
    %p122 = scmp.eq.s32.totalorder %s9, 0
    %p123 = por %p121, %p122
    %p124 = scmp.ne.s32.totalorder %s113, %s116
    %p125 = scmp.eq.s32.totalorder %s14, 1
    %p126 = por %p124, %p125
    %p127 = scmp.ne.s32.totalorder %s116, %s117
    %p128 = scmp.eq.s32.totalorder %s14, 0
    %p129 = por %p127, %p128
    %p130 = scmp.ne.s32.totalorder %s116, %s117
    %p131 = scmp.eq.s32.totalorder %s15, 1
    %p132 = por %p130, %p131
    %p134 = scmp.ne.s32.totalorder %s117, %s133
    %p135 = scmp.eq.s32.totalorder %s15, 0
    %p136 = por %p134, %p135
    %p137 = scmp.le.s32.totalorder 1, %s9
    %p138 = scmp.lt.s32.totalorder %s9, 3
    %p139 = pnand %p137, %p138
    %p140 = pneg %p139
    // Predicated region
    $region9: #{a_call__.13} parent=5 // pred_check
      _
    $region10: #{a_call__.13} parent=5 // pred_check_branch
      %142 = sbr.rel (%p139) target = $region12
    $region11: #{a_call__.13} parent=5 // pred_region
      %s143 = ssub.s32 %s9, 1
    $region12: #{a_call__.13} parent=5 // pred_fallthru
      _
    %p144 = scmp.lt.s32.totalorder %s9, 2
    // Predicated region
    $region13: #{a_call__.13} parent=5 // pred_check
      %p145 = pneg %p144
    $region14: #{a_call__.13} parent=5 // pred_check_branch
      %147 = sbr.rel (%p145) target = $region16
    $region15: #{a_call__.13} parent=5 // pred_region
      // Predicated region
      $region17: #{a_call__.13} parent=15 // pred_check
        %p148 = pneg %p43
      $region18: #{a_call__.13} parent=15 // pred_check_branch
        %150 = sbr.rel (%p148) target = $region20
      $region19: #{a_call__.13} parent=15 // pred_region
        %p151 = scmp.lt.s32.totalorder %s16, 1
        %s152 = scalar_select %p151, %s16, 1
        %p153 = scmp.lt.s32.totalorder %s17, 0
        %s154 = scalar_select %p153, %s17, 0
        %s155 = smul.addr %s152, 16
        %s156 = sadd.s32 %s154, %s155
        %s157 = smul.addr %s156, 4
        %s158 = scalar_lea.vmem %s0, %s157
      $region20: #{a_call__.13} parent=15 // pred_fallthru
        _
      // Predicated region
      $region21: #{a_call__.13} parent=15 // pred_check
        %p159 = pneg %p69
      $region22: #{a_call__.13} parent=15 // pred_check_branch
        %161 = sbr.rel (%p159) target = $region24
      $region23: #{a_call__.13} parent=15 // pred_region
        %p162 = scmp.lt.s32.totalorder %s16, 1
        %s163 = scalar_select %p162, %s16, 1
        %s164 = smul.addr %s163, 16
        %s165 = smul.addr %s164, 8
        %s166 = scalar_lea.vmem %s1, %s165
      $region24: #{a_call__.13} parent=15 // pred_fallthru
        _
      // Predicated region
      $region25: #{a_call__.13} parent=15 // pred_check
        %p167 = pneg %p95
      $region26: #{a_call__.13} parent=15 // pred_check_branch
        %169 = sbr.rel (%p167) target = $region28
      $region27: #{a_call__.13} parent=15 // pred_region
        %p170 = scmp.lt.s32.totalorder %s16, 1
        %s171 = scalar_select %p170, %s16, 1
        %s172 = smul.addr %s171, 16
        %s173 = smul.addr %s172, 8
        %s174 = scalar_lea.vmem %s2, %s173
      $region28: #{a_call__.13} parent=15 // pred_fallthru
        _
    $region16: #{a_call__.13} parent=5 // pred_fallthru
      _
    %p175 = scmp.le.s32.totalorder 1, %s9
    %p176 = scmp.lt.s32.totalorder %s9, 3
    %p177 = pnand %p175, %p176
    %p178 = pneg %p177
    // Predicated region
    $region29: #{a_call__.13} parent=5 // pred_check
      _
    $region30: #{a_call__.13} parent=5 // pred_check_branch
      %180 = sbr.rel (%p177) target = $region32
    $region31: #{a_call__.13} parent=5 // pred_region
      %s181 = ssub.s32 %s9, 1
      %p182 = scmp.lt.s32.totalorder %s18, 1
      %s183 = scalar_select %p182, %s18, 1
      %p184 = scmp.lt.s32.totalorder %s19, 0
      %s185 = scalar_select %p184, %s19, 0
      %s186 = smul.addr %s183, 16
      %s187 = sadd.s32 %s185, %s186
      %s188 = smul.addr %s187, 4
      %s189 = scalar_lea.vmem %s0, %s188
      %p190 = pneg %p49
      %p191 = pneg %p46
      %p192 = scmp.lt.s32.totalorder %s18, 1
      %s193 = scalar_select %p192, %s18, 1
      %s194 = smul.addr %s193, 16
      %s195 = smul.addr %s194, 8
      %s196 = scalar_lea.vmem %s1, %s195
      %p197 = pneg %p75
      %p198 = pneg %p72
      %p199 = scmp.lt.s32.totalorder %s18, 1
      %s200 = scalar_select %p199, %s18, 1
      %s201 = smul.addr %s200, 16
      %s202 = smul.addr %s201, 8
      %s203 = scalar_lea.vmem %s2, %s202
      %p204 = pneg %p101
      %p205 = pneg %p98
      %p206 = pneg %p129
      %p207 = pneg %p126
      %p208 = scmp.lt.s32.totalorder %s18, 1
      %s209 = scalar_select %p208, %s18, 1
      %p210 = scmp.lt.s32.totalorder %s19, 0
      %s211 = scalar_select %p210, %s19, 0
      %s212 = smul.addr %s209, 16
      %s213 = sadd.s32 %s211, %s212
      %s214 = smul.addr %s213, 4
      %s215 = scalar_lea.vmem %s3, %s214
      %p216 = scmp.lt.s32.totalorder %s18, 1
      %s217 = scalar_select %p216, %s18, 1
      %p218 = scmp.lt.s32.totalorder %s19, 0
      %s219 = scalar_select %p218, %s19, 0
      %s220 = smul.addr %s217, 16
      %s221 = sadd.s32 %s219, %s220
      %s222 = smul.addr %s221, 4
      %s223 = scalar_lea.vmem %s0, %s222
      %p224 = scmp.lt.s32.totalorder %s18, 1
      %s225 = scalar_select %p224, %s18, 1
      %s226 = smul.addr %s225, 16
      %s227 = smul.addr %s226, 8
      %s228 = scalar_lea.vmem %s1, %s227
      %p229 = scmp.lt.s32.totalorder %s18, 1
      %s230 = scalar_select %p229, %s18, 1
      %s231 = smul.addr %s230, 16
      %s232 = smul.addr %s231, 8
      %s233 = scalar_lea.vmem %s2, %s232
      %p234 = scmp.lt.s32.totalorder %s18, 1
      %s235 = scalar_select %p234, %s18, 1
      %p236 = scmp.lt.s32.totalorder %s19, 0
      %s237 = scalar_select %p236, %s19, 0
      %s238 = smul.addr %s235, 16
      %s239 = sadd.s32 %s237, %s238
      %s240 = smul.addr %s239, 4
      %s241 = scalar_lea.vmem %s3, %s240
      %v242 = vld [vmem:[%s223] sm:$0xf]
      %v243 = vld [vmem:[%s223 + $0x4] sm:$0xf]
      %v244 = vld [vmem:[%s223 + $0x8] sm:$0xf]
      %v245 = vld [vmem:[%s223 + $0xc] sm:$0xf]
      %v246 = vld [vmem:[%s223 + $0x10] sm:$0xf]
      %v247 = vld [vmem:[%s223 + $0x14] sm:$0xf]
      %v248 = vld [vmem:[%s223 + $0x18] sm:$0xf]
      %v249 = vld [vmem:[%s223 + $0x1c] sm:$0xf]
      %v250 = vld [vmem:[%s223 + $0x20] sm:$0xf]
      %v251 = vld [vmem:[%s223 + $0x24] sm:$0xf]
      %v252 = vld [vmem:[%s223 + $0x28] sm:$0xf]
      %v253 = vld [vmem:[%s223 + $0x2c] sm:$0xf]
      %v254 = vld [vmem:[%s223 + $0x30] sm:$0xf]
      %v255 = vld [vmem:[%s223 + $0x34] sm:$0xf]
      %v256 = vld [vmem:[%s223 + $0x38] sm:$0xf]
      %v257 = vld [vmem:[%s223 + $0x3c] sm:$0xf]
      %v258 = vunpack.c.l.bf16 %v242
      %v259 = vunpack.c.l.bf16 %v243
      %v260 = vunpack.c.l.bf16 %v244
      %v261 = vunpack.c.l.bf16 %v245
      %v262 = vunpack.c.l.bf16 %v246
      %v263 = vunpack.c.l.bf16 %v247
      %v264 = vunpack.c.l.bf16 %v248
      %v265 = vunpack.c.l.bf16 %v249
      %v266 = vunpack.c.l.bf16 %v250
      %v267 = vunpack.c.l.bf16 %v251
      %v268 = vunpack.c.l.bf16 %v252
      %v269 = vunpack.c.l.bf16 %v253
      %v270 = vunpack.c.l.bf16 %v254
      %v271 = vunpack.c.l.bf16 %v255
      %v272 = vunpack.c.l.bf16 %v256
      %v273 = vunpack.c.l.bf16 %v257
      %v274 = vld [vmem:[%s228] sm:$0xff]
      %v275 = vld [vmem:[%s228 + $0x8] sm:$0xff]
      %v276 = vld [vmem:[%s228 + $0x10] sm:$0xff]
      %v277 = vld [vmem:[%s228 + $0x18] sm:$0xff]
      %v278 = vld [vmem:[%s228 + $0x20] sm:$0xff]
      %v279 = vld [vmem:[%s228 + $0x28] sm:$0xff]
      %v280 = vld [vmem:[%s228 + $0x30] sm:$0xff]
      %v281 = vld [vmem:[%s228 + $0x38] sm:$0xff]
      %v282 = vld [vmem:[%s228 + $0x40] sm:$0xff]
      %v283 = vld [vmem:[%s228 + $0x48] sm:$0xff]
      %v284 = vld [vmem:[%s228 + $0x50] sm:$0xff]
      %v285 = vld [vmem:[%s228 + $0x58] sm:$0xff]
      %v286 = vld [vmem:[%s228 + $0x60] sm:$0xff]
      %v287 = vld [vmem:[%s228 + $0x68] sm:$0xff]
      %v288 = vld [vmem:[%s228 + $0x70] sm:$0xff]
      %v289 = vld [vmem:[%s228 + $0x78] sm:$0xff]
      %v290 = vmul.f32 %v274, 0.125
      %v291 = vmul.f32 %v275, 0.125
      %v292 = vmul.f32 %v276, 0.125
      %v293 = vmul.f32 %v277, 0.125
      %v294 = vmul.f32 %v278, 0.125
      %v295 = vmul.f32 %v279, 0.125
      %v296 = vmul.f32 %v280, 0.125
      %v297 = vmul.f32 %v281, 0.125
      %v298 = vmul.f32 %v282, 0.125
      %v299 = vmul.f32 %v283, 0.125
      %v300 = vmul.f32 %v284, 0.125
      %v301 = vmul.f32 %v285, 0.125
      %v302 = vmul.f32 %v286, 0.125
      %v303 = vmul.f32 %v287, 0.125
      %v304 = vmul.f32 %v288, 0.125
      %v305 = vmul.f32 %v289, 0.125
      %v306 = vld [vmem:[%s233] sm:$0xff]
      %v307 = vld [vmem:[%s233 + $0x8] sm:$0xff]
      %v308 = vld [vmem:[%s233 + $0x10] sm:$0xff]
      %v309 = vld [vmem:[%s233 + $0x18] sm:$0xff]
      %v310 = vld [vmem:[%s233 + $0x20] sm:$0xff]
      %v311 = vld [vmem:[%s233 + $0x28] sm:$0xff]
      %v312 = vld [vmem:[%s233 + $0x30] sm:$0xff]
      %v313 = vld [vmem:[%s233 + $0x38] sm:$0xff]
      %v314 = vld [vmem:[%s233 + $0x40] sm:$0xff]
      %v315 = vld [vmem:[%s233 + $0x48] sm:$0xff]
      %v316 = vld [vmem:[%s233 + $0x50] sm:$0xff]
      %v317 = vld [vmem:[%s233 + $0x58] sm:$0xff]
      %v318 = vld [vmem:[%s233 + $0x60] sm:$0xff]
      %v319 = vld [vmem:[%s233 + $0x68] sm:$0xff]
      %v320 = vld [vmem:[%s233 + $0x70] sm:$0xff]
      %v321 = vld [vmem:[%s233 + $0x78] sm:$0xff]
      %v322 = vmul.f32 %v306, 0.125
      %v323 = vmul.f32 %v307, 0.125
      %v324 = vmul.f32 %v308, 0.125
      %v325 = vmul.f32 %v309, 0.125
      %v326 = vmul.f32 %v310, 0.125
      %v327 = vmul.f32 %v311, 0.125
      %v328 = vmul.f32 %v312, 0.125
      %v329 = vmul.f32 %v313, 0.125
      %v330 = vmul.f32 %v314, 0.125
      %v331 = vmul.f32 %v315, 0.125
      %v332 = vmul.f32 %v316, 0.125
      %v333 = vmul.f32 %v317, 0.125
      %v334 = vmul.f32 %v318, 0.125
      %v335 = vmul.f32 %v319, 0.125
      %v336 = vmul.f32 %v320, 0.125
      %v337 = vmul.f32 %v321, 0.125
      %v338 = vmul.f32 %v290, %v290
      %v339 = vmul.f32 %v291, %v291
      %v340 = vmul.f32 %v292, %v292
      %v341 = vmul.f32 %v293, %v293
      %v342 = vmul.f32 %v294, %v294
      %v343 = vmul.f32 %v295, %v295
      %v344 = vmul.f32 %v296, %v296
      %v345 = vmul.f32 %v297, %v297
      %v346 = vmul.f32 %v298, %v298
      %v347 = vmul.f32 %v299, %v299
      %v348 = vmul.f32 %v300, %v300
      %v349 = vmul.f32 %v301, %v301
      %v350 = vmul.f32 %v302, %v302
      %v351 = vmul.f32 %v303, %v303
      %v352 = vmul.f32 %v304, %v304
      %v353 = vmul.f32 %v305, %v305
      %v354 = vsub.f32 %v322, %v338
      %v355 = vsub.f32 %v323, %v339
      %v356 = vsub.f32 %v324, %v340
      %v357 = vsub.f32 %v325, %v341
      %v358 = vsub.f32 %v326, %v342
      %v359 = vsub.f32 %v327, %v343
      %v360 = vsub.f32 %v328, %v344
      %v361 = vsub.f32 %v329, %v345
      %v362 = vsub.f32 %v330, %v346
      %v363 = vsub.f32 %v331, %v347
      %v364 = vsub.f32 %v332, %v348
      %v365 = vsub.f32 %v333, %v349
      %v366 = vsub.f32 %v334, %v350
      %v367 = vsub.f32 %v335, %v351
      %v368 = vsub.f32 %v336, %v352
      %v369 = vsub.f32 %v337, %v353
      %v370 = vmax.f32 %v354, 0.0
      %v371 = vmax.f32 %v355, 0.0
      %v372 = vmax.f32 %v356, 0.0
      %v373 = vmax.f32 %v357, 0.0
      %v374 = vmax.f32 %v358, 0.0
      %v375 = vmax.f32 %v359, 0.0
      %v376 = vmax.f32 %v360, 0.0
      %v377 = vmax.f32 %v361, 0.0
      %v378 = vmax.f32 %v362, 0.0
      %v379 = vmax.f32 %v363, 0.0
      %v380 = vmax.f32 %v364, 0.0
      %v381 = vmax.f32 %v365, 0.0
      %v382 = vmax.f32 %v366, 0.0
      %v383 = vmax.f32 %v367, 0.0
      %v384 = vmax.f32 %v368, 0.0
      %v385 = vmax.f32 %v369, 0.0
      %387 = vset.pattern.permute.xlu0 0
      %388 = vperm.xlu0 %387, %v290
      %v389 = vpop.permute.xlu0 %388
      %392 = vset.pattern.permute.xlu0 0
      %393 = vperm.xlu0 %392, %v291
      %v394 = vpop.permute.xlu0 %393
      %397 = vset.pattern.permute.xlu0 0
      %398 = vperm.xlu0 %397, %v292
      %v399 = vpop.permute.xlu0 %398
      %402 = vset.pattern.permute.xlu0 0
      %403 = vperm.xlu0 %402, %v293
      %v404 = vpop.permute.xlu0 %403
      %407 = vset.pattern.permute.xlu0 0
      %408 = vperm.xlu0 %407, %v294
      %v409 = vpop.permute.xlu0 %408
      %412 = vset.pattern.permute.xlu0 0
      %413 = vperm.xlu0 %412, %v295
      %v414 = vpop.permute.xlu0 %413
      %417 = vset.pattern.permute.xlu0 0
      %418 = vperm.xlu0 %417, %v296
      %v419 = vpop.permute.xlu0 %418
      %422 = vset.pattern.permute.xlu0 0
      %423 = vperm.xlu0 %422, %v297
      %v424 = vpop.permute.xlu0 %423
      %427 = vset.pattern.permute.xlu0 0
      %428 = vperm.xlu0 %427, %v298
      %v429 = vpop.permute.xlu0 %428
      %432 = vset.pattern.permute.xlu0 0
      %433 = vperm.xlu0 %432, %v299
      %v434 = vpop.permute.xlu0 %433
      %437 = vset.pattern.permute.xlu0 0
      %438 = vperm.xlu0 %437, %v300
      %v439 = vpop.permute.xlu0 %438
      %442 = vset.pattern.permute.xlu0 0
      %443 = vperm.xlu0 %442, %v301
      %v444 = vpop.permute.xlu0 %443
      %447 = vset.pattern.permute.xlu0 0
      %448 = vperm.xlu0 %447, %v302
      %v449 = vpop.permute.xlu0 %448
      %452 = vset.pattern.permute.xlu0 0
      %453 = vperm.xlu0 %452, %v303
      %v454 = vpop.permute.xlu0 %453
      %457 = vset.pattern.permute.xlu0 0
      %458 = vperm.xlu0 %457, %v304
      %v459 = vpop.permute.xlu0 %458
      %462 = vset.pattern.permute.xlu0 0
      %463 = vperm.xlu0 %462, %v305
      %v464 = vpop.permute.xlu0 %463
      %v466 = vsub.f32 %v258, %v389
      %v467 = vsub.f32 %v259, %v394
      %v468 = vsub.f32 %v260, %v399
      %v469 = vsub.f32 %v261, %v404
      %v470 = vsub.f32 %v262, %v409
      %v471 = vsub.f32 %v263, %v414
      %v472 = vsub.f32 %v264, %v419
      %v473 = vsub.f32 %v265, %v424
      %v474 = vsub.f32 %v266, %v429
      %v475 = vsub.f32 %v267, %v434
      %v476 = vsub.f32 %v268, %v439
      %v477 = vsub.f32 %v269, %v444
      %v478 = vsub.f32 %v270, %v449
      %v479 = vsub.f32 %v271, %v454
      %v480 = vsub.f32 %v272, %v459
      %v481 = vsub.f32 %v273, %v464
      %v482 = vadd.f32 %v370, 1e-05
      %v483 = vadd.f32 %v371, 1e-05
      %v484 = vadd.f32 %v372, 1e-05
      %v485 = vadd.f32 %v373, 1e-05
      %v486 = vadd.f32 %v374, 1e-05
      %v487 = vadd.f32 %v375, 1e-05
      %v488 = vadd.f32 %v376, 1e-05
      %v489 = vadd.f32 %v377, 1e-05
      %v490 = vadd.f32 %v378, 1e-05
      %v491 = vadd.f32 %v379, 1e-05
      %v492 = vadd.f32 %v380, 1e-05
      %v493 = vadd.f32 %v381, 1e-05
      %v494 = vadd.f32 %v382, 1e-05
      %v495 = vadd.f32 %v383, 1e-05
      %v496 = vadd.f32 %v384, 1e-05
      %v497 = vadd.f32 %v385, 1e-05
      %v498 = vrsqrt.pop %v482
      %v499 = vrsqrt.pop %v483
      %v500 = vrsqrt.pop %v484
      %v501 = vrsqrt.pop %v485
      %v502 = vrsqrt.pop %v486
      %v503 = vrsqrt.pop %v487
      %v504 = vrsqrt.pop %v488
      %v505 = vrsqrt.pop %v489
      %v506 = vrsqrt.pop %v490
      %v507 = vrsqrt.pop %v491
      %v508 = vrsqrt.pop %v492
      %v509 = vrsqrt.pop %v493
      %v510 = vrsqrt.pop %v494
      %v511 = vrsqrt.pop %v495
      %v512 = vrsqrt.pop %v496
      %v513 = vrsqrt.pop %v497
      %515 = vset.pattern.permute.xlu0 0
      %516 = vperm.xlu0 %515, %v498
      %v517 = vpop.permute.xlu0 %516
      %520 = vset.pattern.permute.xlu0 0
      %521 = vperm.xlu0 %520, %v499
      %v522 = vpop.permute.xlu0 %521
      %525 = vset.pattern.permute.xlu0 0
      %526 = vperm.xlu0 %525, %v500
      %v527 = vpop.permute.xlu0 %526
      %530 = vset.pattern.permute.xlu0 0
      %531 = vperm.xlu0 %530, %v501
      %v532 = vpop.permute.xlu0 %531
      %535 = vset.pattern.permute.xlu0 0
      %536 = vperm.xlu0 %535, %v502
      %v537 = vpop.permute.xlu0 %536
      %540 = vset.pattern.permute.xlu0 0
      %541 = vperm.xlu0 %540, %v503
      %v542 = vpop.permute.xlu0 %541
      %545 = vset.pattern.permute.xlu0 0
      %546 = vperm.xlu0 %545, %v504
      %v547 = vpop.permute.xlu0 %546
      %550 = vset.pattern.permute.xlu0 0
      %551 = vperm.xlu0 %550, %v505
      %v552 = vpop.permute.xlu0 %551
      %555 = vset.pattern.permute.xlu0 0
      %556 = vperm.xlu0 %555, %v506
      %v557 = vpop.permute.xlu0 %556
      %560 = vset.pattern.permute.xlu0 0
      %561 = vperm.xlu0 %560, %v507
      %v562 = vpop.permute.xlu0 %561
      %565 = vset.pattern.permute.xlu0 0
      %566 = vperm.xlu0 %565, %v508
      %v567 = vpop.permute.xlu0 %566
      %570 = vset.pattern.permute.xlu0 0
      %571 = vperm.xlu0 %570, %v509
      %v572 = vpop.permute.xlu0 %571
      %575 = vset.pattern.permute.xlu0 0
      %576 = vperm.xlu0 %575, %v510
      %v577 = vpop.permute.xlu0 %576
      %580 = vset.pattern.permute.xlu0 0
      %581 = vperm.xlu0 %580, %v511
      %v582 = vpop.permute.xlu0 %581
      %585 = vset.pattern.permute.xlu0 0
      %586 = vperm.xlu0 %585, %v512
      %v587 = vpop.permute.xlu0 %586
      %590 = vset.pattern.permute.xlu0 0
      %591 = vperm.xlu0 %590, %v513
      %v592 = vpop.permute.xlu0 %591
      %v594 = vmul.f32 %v466, %v517
      %v595 = vmul.f32 %v467, %v522
      %v596 = vmul.f32 %v468, %v527
      %v597 = vmul.f32 %v469, %v532
      %v598 = vmul.f32 %v470, %v537
      %v599 = vmul.f32 %v471, %v542
      %v600 = vmul.f32 %v472, %v547
      %v601 = vmul.f32 %v473, %v552
      %v602 = vmul.f32 %v474, %v557
      %v603 = vmul.f32 %v475, %v562
      %v604 = vmul.f32 %v476, %v567
      %v605 = vmul.f32 %v477, %v572
      %v606 = vmul.f32 %v478, %v577
      %v607 = vmul.f32 %v479, %v582
      %v608 = vmul.f32 %v480, %v587
      %v609 = vmul.f32 %v481, %v592
      %vm610 = vcmp.ge.f32.partialorder %v594, 0.0
      %vm611 = vcmp.ge.f32.partialorder %v595, 0.0
      %vm612 = vcmp.ge.f32.partialorder %v596, 0.0
      %vm613 = vcmp.ge.f32.partialorder %v597, 0.0
      %vm614 = vcmp.ge.f32.partialorder %v598, 0.0
      %vm615 = vcmp.ge.f32.partialorder %v599, 0.0
      %vm616 = vcmp.ge.f32.partialorder %v600, 0.0
      %vm617 = vcmp.ge.f32.partialorder %v601, 0.0
      %vm618 = vcmp.ge.f32.partialorder %v602, 0.0
      %vm619 = vcmp.ge.f32.partialorder %v603, 0.0
      %vm620 = vcmp.ge.f32.partialorder %v604, 0.0
      %vm621 = vcmp.ge.f32.partialorder %v605, 0.0
      %vm622 = vcmp.ge.f32.partialorder %v606, 0.0
      %vm623 = vcmp.ge.f32.partialorder %v607, 0.0
      %vm624 = vcmp.ge.f32.partialorder %v608, 0.0
      %vm625 = vcmp.ge.f32.partialorder %v609, 0.0
      %v626 = vmul.f32 %v594, 0.2
      %v627 = vmul.f32 %v595, 0.2
      %v628 = vmul.f32 %v596, 0.2
      %v629 = vmul.f32 %v597, 0.2
      %v630 = vmul.f32 %v598, 0.2
      %v631 = vmul.f32 %v599, 0.2
      %v632 = vmul.f32 %v600, 0.2
      %v633 = vmul.f32 %v601, 0.2
      %v634 = vmul.f32 %v602, 0.2
      %v635 = vmul.f32 %v603, 0.2
      %v636 = vmul.f32 %v604, 0.2
      %v637 = vmul.f32 %v605, 0.2
      %v638 = vmul.f32 %v606, 0.2
      %v639 = vmul.f32 %v607, 0.2
      %v640 = vmul.f32 %v608, 0.2
      %v641 = vmul.f32 %v609, 0.2
      %v642 = vsel %vm610, %v594, %v626
      %v643 = vsel %vm611, %v595, %v627
      %v644 = vsel %vm612, %v596, %v628
      %v645 = vsel %vm613, %v597, %v629
      %v646 = vsel %vm614, %v598, %v630
      %v647 = vsel %vm615, %v599, %v631
      %v648 = vsel %vm616, %v600, %v632
      %v649 = vsel %vm617, %v601, %v633
      %v650 = vsel %vm618, %v602, %v634
      %v651 = vsel %vm619, %v603, %v635
      %v652 = vsel %vm620, %v604, %v636
      %v653 = vsel %vm621, %v605, %v637
      %v654 = vsel %vm622, %v606, %v638
      %v655 = vsel %vm623, %v607, %v639
      %v656 = vsel %vm624, %v608, %v640
      %v657 = vsel %vm625, %v609, %v641
      %v658 = vpack.c.bf16 %v643, %v642
      %v659 = vpack.c.bf16 %v645, %v644
      %v660 = vpack.c.bf16 %v647, %v646
      %v661 = vpack.c.bf16 %v649, %v648
      %v662 = vpack.c.bf16 %v651, %v650
      %v663 = vpack.c.bf16 %v653, %v652
      %v664 = vpack.c.bf16 %v655, %v654
      %v665 = vpack.c.bf16 %v657, %v656
      %v674 = vunpack.c.l.b16 %v658
      %v675 = vunpack.c.h.b16 %v658
      %v676 = vunpack.c.l.b16 %v659
      %v677 = vunpack.c.h.b16 %v659
      %v678 = vunpack.c.l.b16 %v660
      %v679 = vunpack.c.h.b16 %v660
      %v680 = vunpack.c.l.b16 %v661
      %v681 = vunpack.c.h.b16 %v661
      %v682 = vunpack.c.l.b16 %v662
      %v683 = vunpack.c.h.b16 %v662
      %v684 = vunpack.c.l.b16 %v663
      %v685 = vunpack.c.h.b16 %v663
      %v686 = vunpack.c.l.b16 %v664
      %v687 = vunpack.c.h.b16 %v664
      %v688 = vunpack.c.l.b16 %v665
      %v689 = vunpack.c.h.b16 %v665
      %v690 = vpack.c.b16 %v674, %v674
      %v691 = vpack.c.b16 %v675, %v675
      %v692 = vpack.c.b16 %v676, %v676
      %v693 = vpack.c.b16 %v677, %v677
      %v694 = vpack.c.b16 %v678, %v678
      %v695 = vpack.c.b16 %v679, %v679
      %v696 = vpack.c.b16 %v680, %v680
      %v697 = vpack.c.b16 %v681, %v681
      %v698 = vpack.c.b16 %v682, %v682
      %v699 = vpack.c.b16 %v683, %v683
      %v700 = vpack.c.b16 %v684, %v684
      %v701 = vpack.c.b16 %v685, %v685
      %v702 = vpack.c.b16 %v686, %v686
      %v703 = vpack.c.b16 %v687, %v687
      %v704 = vpack.c.b16 %v688, %v688
      %v705 = vpack.c.b16 %v689, %v689
      %722 = vst [vmem:[%s241] sm:$0xf] %v690
      %723 = vst [vmem:[%s241 + $0x4] sm:$0xf] %v691
      %724 = vst [vmem:[%s241 + $0x8] sm:$0xf] %v692
      %725 = vst [vmem:[%s241 + $0xc] sm:$0xf] %v693
      %726 = vst [vmem:[%s241 + $0x10] sm:$0xf] %v694
      %727 = vst [vmem:[%s241 + $0x14] sm:$0xf] %v695
      %728 = vst [vmem:[%s241 + $0x18] sm:$0xf] %v696
      %729 = vst [vmem:[%s241 + $0x1c] sm:$0xf] %v697
      %730 = vst [vmem:[%s241 + $0x20] sm:$0xf] %v698
      %731 = vst [vmem:[%s241 + $0x24] sm:$0xf] %v699
      %732 = vst [vmem:[%s241 + $0x28] sm:$0xf] %v700
      %733 = vst [vmem:[%s241 + $0x2c] sm:$0xf] %v701
      %734 = vst [vmem:[%s241 + $0x30] sm:$0xf] %v702
      %735 = vst [vmem:[%s241 + $0x34] sm:$0xf] %v703
      %736 = vst [vmem:[%s241 + $0x38] sm:$0xf] %v704
      %737 = vst [vmem:[%s241 + $0x3c] sm:$0xf] %v705
      %p738 = scmp.lt.s32.totalorder %s18, 1
      %s739 = scalar_select %p738, %s18, 1
      %p740 = scmp.lt.s32.totalorder %s19, 0
      %s741 = scalar_select %p740, %s19, 0
      %s742 = smul.addr %s739, 16
      %s743 = sadd.s32 %s741, %s742
      %s744 = smul.addr %s743, 4
      %s745 = scalar_lea.vmem %s3, %s744
      // Predicated region
      $region33: #{a_call__.13} parent=31 // pred_check
        %p746 = pneg %p126
      $region34: #{a_call__.13} parent=31 // pred_check_branch
        %748 = sbr.rel (%p746) target = $region36
      $region35: #{a_call__.13} parent=31 // pred_region
        _
      $region36: #{a_call__.13} parent=31 // pred_fallthru
        _
    $region32: #{a_call__.13} parent=5 // pred_fallthru
      _
    %p749 = scmp.le.s32.totalorder 2, %s9
    // Predicated region
    $region37: #{a_call__.13} parent=5 // pred_check
      %p750 = pneg %p749
    $region38: #{a_call__.13} parent=5 // pred_check_branch
      %752 = sbr.rel (%p750) target = $region40
    $region39: #{a_call__.13} parent=5 // pred_region
      %s753 = ssub.s32 %s9, 2
      // Predicated region
      $region41: #{a_call__.13} parent=39 // pred_check
        %p754 = pneg %p132
      $region42: #{a_call__.13} parent=39 // pred_check_branch
        %756 = sbr.rel (%p754) target = $region44
      $region43: #{a_call__.13} parent=39 // pred_region
        %p757 = scmp.lt.s32.totalorder %s20, 1
        %s758 = scalar_select %p757, %s20, 1
        %p759 = scmp.lt.s32.totalorder %s21, 0
        %s760 = scalar_select %p759, %s21, 0
        %s761 = smul.addr %s758, 16
        %s762 = sadd.s32 %s760, %s761
        %s763 = smul.addr %s762, 4
        %s764 = scalar_lea.vmem %s3, %s763
      $region44: #{a_call__.13} parent=39 // pred_fallthru
        _
    $region40: #{a_call__.13} parent=5 // pred_fallthru
      _
  $region6: #{a_call__.13} parent=0 // loop_footer
    %s13 = sadd.s32 1, %s9
  $region7: #{a_call__.13} parent=0 // loop_footer_branch
    %8 = sbr.rel target = $region3
  $region8: #{a_call__.13} parent=0 // loop_exit
    _

</llo_original>
